<compile_context>
chip_gen: v5e
topology: v5e:2x2
jax: 0.10.0
libtpu: 0.0.40
codegen_flags: <defaults>
</compile_context>

<pallas_src>
import jax
import jax.numpy as jnp
from jax.experimental import pallas as pl
from jax.experimental.pallas import tpu as pltpu


def _conv3x3_dyfold(pad_h_ref, pad_x_ref, wh_ref, wx_ref, b_ref,
                    row0, n_rows, W):
    """3x3 SAME conv evaluated on `n_rows` output rows, reading the zero/halo-
    padded bf16 scratches starting at scratch row `row0`.

    pad_*_ref : (R, W+2, C) bf16 scratch, R >= row0 + n_rows + 2
    wh_ref    : (3, 3*Ch, Cout) bf16  (dx folded into K, h channels)
    wx_ref    : (3, 3*Cx, Cout) bf16  (dx folded into K, x channels)
    b_ref     : (1, Cout) f32
    returns   : (n_rows, W, Cout) f32
    """
    cout = wh_ref.shape[2]
    # Bias folded into the accumulator init (saves a full-tile VPU add).
    acc = jnp.broadcast_to(b_ref[0][None, None, :].astype(jnp.float32),
                           (n_rows, W, cout))
    groups = [(pad_h_ref, wh_ref), (pad_x_ref, wx_ref)]
    # Larger-K (more channels) group first: slightly friendlier pass ordering
    # on v5e's 128-wide MXU when Ch != Cx.
    groups = sorted(groups, key=lambda g: g[0].shape[-1], reverse=True)
    for dy in range(3):
        for pref, wref in groups:
            # Mini im2col over dx: (n_rows, W, 3*C) bf16 patch -> one matmul.
            patch = jnp.concatenate(
                [pref[row0 + dy:row0 + dy + n_rows, dx:dx + W, :]
                 for dx in range(3)], axis=-1)
            acc = acc + jax.lax.dot_general(
                patch, wref[dy],
                dimension_numbers=(((2,), (0,)), ((), ())),
                preferred_element_type=jnp.float32)
    return acc


def convgru_kernel(h_ref, x_ref, hhalo_ref, xhalo_ref,
                   wzrh_ref, wzrx_ref, wqh_ref, wqx_ref,
                   bzr_ref, bq_ref, out_ref, pad_h, pad_x):
    tH, W, Ch = h_ref.shape[1], h_ref.shape[2], h_ref.shape[3]
    Cx = x_ref.shape[3]
    R = tH + 4                       # scratch rows: tile + 2-row halo per side
    bf16 = jnp.bfloat16

    # ---- build the zero/halo-padded bf16 scratches --------------------------
    # Every scratch element is rewritten each step, so the kernel stays correct
    # under any grid sharding (megacore / v7x).
    pad_h[:, 0:1, :] = jnp.zeros((R, 1, Ch), bf16)
    pad_h[:, W + 1:W + 2, :] = jnp.zeros((R, 1, Ch), bf16)
    pad_x[:, 0:1, :] = jnp.zeros((R, 1, Cx), bf16)
    pad_x[:, W + 1:W + 2, :] = jnp.zeros((R, 1, Cx), bf16)
    # H-direction halo rows (precomputed on the host; zeros at image borders).
    pad_h[0:2, 1:W + 1, :] = hhalo_ref[0, 0:2]
    pad_h[tH + 2:tH + 4, 1:W + 1, :] = hhalo_ref[0, 2:4]
    pad_x[0:2, 1:W + 1, :] = xhalo_ref[0, 0:2]
    pad_x[tH + 2:tH + 4, 1:W + 1, :] = xhalo_ref[0, 2:4]
    # Interior rows.
    h = h_ref[0]                                     # (tH, W, Ch) f32
    pad_h[2:tH + 2, 1:W + 1, :] = h.astype(bf16)
    pad_x[2:tH + 2, 1:W + 1, :] = x_ref[0]           # already bf16

    # ---- fused z|r conv on tH+2 rows (tile +/- 1 row) ------------------------
    zr = _conv3x3_dyfold(pad_h, pad_x, wzrh_ref, wzrx_ref, bzr_ref,
                         row0=0, n_rows=tH + 2, W=W)          # (tH+2, W, 2Ch)
    z = jax.nn.sigmoid(zr[1:tH + 1, :, 0:Ch])                 # (tH, W, Ch)
    r = jax.nn.sigmoid(zr[:, :, Ch:2 * Ch])                   # (tH+2, W, Ch)

    # Overwrite the h scratch rows [1, tH+3) with r*h; the x scratch and the
    # zero halo are reused untouched by the q conv.
    h_ext = pad_h[1:tH + 3, 1:W + 1, :].astype(jnp.float32)
    pad_h[1:tH + 3, 1:W + 1, :] = (r * h_ext).astype(bf16)

    # ---- q conv on the central tH rows ---------------------------------------
    q = jnp.tanh(_conv3x3_dyfold(pad_h, pad_x, wqh_ref, wqx_ref, bq_ref,
                                 row0=1, n_rows=tH, W=W))     # (tH, W, Ch)

    # Gate update in f32.  With Ch a multiple of 128 this store is lane-dense.
    # TODO(synk): for Ch not a multiple of 128, reshape the output block to
    # (tH, W*Ch) in the out_spec to keep the epilogue stores unmasked.
    out_ref[0] = ((1.0 - z) * h + z * q).astype(out_ref.dtype)


def convgru_pallas(h, x, wz, wr, wq, bz, br, bq, row_tile=32):
    """h: (N,H,W,Ch) f32, x: (N,H,W,Cx); w*: (9, Cin, Ch); b*: (1, Ch)."""
    N, H, W, Ch = h.shape
    Cx = x.shape[3]
    Cin = Ch + Cx
    assert wz.shape == (9, Cin, Ch) and wr.shape == (9, Cin, Ch)
    assert wq.shape == (9, Cin, Ch)

    # ---- pick an H tile (largest divisor of H <= row_tile) -------------------
    tH = H
    if H > row_tile:
        tH = 1
        for cand in range(row_tile, 0, -1):
            if H % cand == 0:
                tH = cand
                break
        if tH < 8:
            # TODO(synk): support a ragged last H-tile instead of falling back.
            tH = H
    nH = H // tH

    # ---- host-side weight prep ------------------------------------------------
    # Fuse convz|convr along Cout, fold dx into K, split h/x channel groups,
    # cast to bf16 for the MXU (f32 accumulation in-kernel).
    def split_taps(w9, cout):
        w4 = w9.reshape(3, 3, Cin, cout)
        wh = w4[:, :, :Ch, :].reshape(3, 3 * Ch, cout).astype(jnp.bfloat16)
        wx = w4[:, :, Ch:, :].reshape(3, 3 * Cx, cout).astype(jnp.bfloat16)
        return wh, wx

    wzr9 = jnp.concatenate([wz, wr], axis=-1)                  # (9, Cin, 2Ch)
    wzr_h, wzr_x = split_taps(wzr9, 2 * Ch)
    wq_h, wq_x = split_taps(wq, Ch)
    bzr = jnp.concatenate([bz, br], axis=-1).astype(jnp.float32)   # (1, 2Ch)
    bq_f = bq.astype(jnp.float32)                                   # (1, Ch)

    # ---- host-side activation prep -------------------------------------------
    x_bf = x.astype(jnp.bfloat16)
    # Two halo rows above/below every H tile (zeros at the image border).
    hp = jnp.pad(h.astype(jnp.bfloat16), ((0, 0), (2, 2), (0, 0), (0, 0)))
    xp = jnp.pad(x_bf, ((0, 0), (2, 2), (0, 0), (0, 0)))
    starts = jnp.arange(nH) * tH
    idx = starts[:, None] + jnp.array([0, 1, tH + 2, tH + 3])[None, :]
    h_halo = hp[:, idx].reshape(N * nH, 4, W, Ch)
    x_halo = xp[:, idx].reshape(N * nH, 4, W, Cx)

    # ---- VMEM budget -> raise the scoped-VMEM default when shapes are big ----
    bf2, f4 = 2, 4
    scratch_b = (tH + 4) * (W + 2) * (Ch + Cx) * bf2
    blocks_b = (tH * W * Ch * f4            # h block (f32)
                + tH * W * Cx * bf2         # x block (bf16)
                + 4 * W * (Ch + Cx) * bf2   # halo blocks
                + 9 * Cin * 3 * Ch * bf2    # the four weight blocks
                + 3 * Ch * f4               # biases
                + tH * W * Ch * f4)         # out block
    temps_b = (tH + 4) * W * (3 * Cin * bf2 + 2 * Ch * f4 * 2 + Ch * f4 * 5)
    vmem_need = scratch_b + 2 * blocks_b + temps_b
    vmem_limit = int(min(max(2 * vmem_need, 32 * 1024 * 1024),
                         64 * 1024 * 1024))

    hmap = lambda n, i: (n, i, 0, 0)
    halomap = lambda n, i: (n * nH + i, 0, 0, 0)
    w3 = lambda n, i: (0, 0, 0)
    b2 = lambda n, i: (0, 0)

    grid_spec = pltpu.PrefetchScalarGridSpec(
        num_scalar_prefetch=0,
        grid=(N, nH),
        in_specs=[
            pl.BlockSpec((1, tH, W, Ch), hmap),          # h (f32)
            pl.BlockSpec((1, tH, W, Cx), hmap),          # x (bf16)
            pl.BlockSpec((1, 4, W, Ch), halomap),        # h halo rows (bf16)
            pl.BlockSpec((1, 4, W, Cx), halomap),        # x halo rows (bf16)
            pl.BlockSpec((3, 3 * Ch, 2 * Ch), w3),       # wzr (h channels)
            pl.BlockSpec((3, 3 * Cx, 2 * Ch), w3),       # wzr (x channels)
            pl.BlockSpec((3, 3 * Ch, Ch), w3),           # wq  (h channels)
            pl.BlockSpec((3, 3 * Cx, Ch), w3),           # wq  (x channels)
            pl.BlockSpec((1, 2 * Ch), b2),               # bzr
            pl.BlockSpec((1, Ch), b2),                   # bq
        ],
        out_specs=pl.BlockSpec((1, tH, W, Ch), hmap),
        scratch_shapes=[
            pltpu.VMEM((tH + 4, W + 2, Ch), jnp.bfloat16),   # padded h / r*h
            pltpu.VMEM((tH + 4, W + 2, Cx), jnp.bfloat16),   # padded x
        ],
    )

    return pl.pallas_call(
        convgru_kernel,
        out_shape=jax.ShapeDtypeStruct((N, H, W, Ch), h.dtype),
        grid_spec=grid_spec,
        input_output_aliases={0: 0},     # h' written back into the h buffer
        compiler_params=pltpu.CompilerParams(
            dimension_semantics=("parallel", "parallel"),
            vmem_limit_bytes=vmem_limit),
    )(h, x_bf, h_halo, x_halo, wzr_h, wzr_x, wq_h, wq_x, bzr, bq_f)


# ---------------- pure-JAX reference (for correctness check) ----------------
def _conv_ref(inp, w9, b):
    Cin, Cout = w9.shape[1], w9.shape[2]
    w4 = w9.reshape(3, 3, Cin, Cout)  # HWIO
    y = jax.lax.conv_general_dilated(
        inp, w4, window_strides=(1, 1), padding="SAME",
        dimension_numbers=("NHWC", "HWIO", "NHWC"))
    return y + b[0][None, None, None, :]


def convgru_ref(h, x, wz, wr, wq, bz, br, bq):
    hx = jnp.concatenate([h, x], axis=-1)
    z = jax.nn.sigmoid(_conv_ref(hx, wz, bz))
    r = jax.nn.sigmoid(_conv_ref(hx, wr, br))
    q = jnp.tanh(_conv_ref(jnp.concatenate([r * h, x], axis=-1), wq, bq))
    return (1.0 - z) * h + z * q


if __name__ == "__main__":
    # Small shapes consistent with the module: hidden_dim=128 (module default,
    # keeps channel slices lane-dense); input_dim kept small (128).
    N, H, W = 2, 16, 16
    hidden_dim, input_dim = 128, 128
    Cin = hidden_dim + input_dim

    key = jax.random.PRNGKey(0)
    kh, kx, k1, k2, k3, k4, k5, k6 = jax.random.split(key, 8)

    h = jax.random.normal(kh, (N, H, W, hidden_dim), jnp.float32)
    x = jax.random.normal(kx, (N, H, W, input_dim), jnp.float32)

    scale = 0.02
    wz = scale * jax.random.normal(k1, (9, Cin, hidden_dim), jnp.float32)
    wr = scale * jax.random.normal(k2, (9, Cin, hidden_dim), jnp.float32)
    wq = scale * jax.random.normal(k3, (9, Cin, hidden_dim), jnp.float32)
    bz = scale * jax.random.normal(k4, (1, hidden_dim), jnp.float32)
    br = scale * jax.random.normal(k5, (1, hidden_dim), jnp.float32)
    bq = scale * jax.random.normal(k6, (1, hidden_dim), jnp.float32)

    # Reference first (the kernel aliases its output with the h buffer).
    ref = jax.block_until_ready(convgru_ref(h, x, wz, wr, wq, bz, br, bq))

    # row_tile=8 -> 2 H-tiles: exercises the halo-tiling path at small shapes.
    out = convgru_pallas(h, x, wz, wr, wq, bz, br, bq, row_tile=8)
    out = jax.block_until_ready(out)

    assert out.shape == (N, H, W, hidden_dim)
    max_err = float(jnp.max(jnp.abs(out - ref)))
    # bf16 inputs/weights at the MXU (f32 accumulation) -> widened tolerance.
    assert jnp.allclose(out, ref, atol=5e-2, rtol=5e-2), max_err

    print("KERNEL_OK")
</pallas_src>

<mosaic_0001>
module attributes {stable_mosaic.version = 11 : i64} {
  func.func @convgru_kernel(%arg0: i32, %arg1: i32, %arg2: memref<1x8x16x128xf32, #tpu.memory_space<vmem>>, %arg3: memref<1x8x16x128xbf16, #tpu.memory_space<vmem>>, %arg4: memref<1x4x16x128xbf16, #tpu.memory_space<vmem>>, %arg5: memref<1x4x16x128xbf16, #tpu.memory_space<vmem>>, %arg6: memref<3x384x256xbf16, #tpu.memory_space<vmem>>, %arg7: memref<3x384x256xbf16, #tpu.memory_space<vmem>>, %arg8: memref<3x384x128xbf16, #tpu.memory_space<vmem>>, %arg9: memref<3x384x128xbf16, #tpu.memory_space<vmem>>, %arg10: memref<1x256xf32, #tpu.memory_space<vmem>>, %arg11: memref<1x128xf32, #tpu.memory_space<vmem>>, %arg12: memref<1x8x16x128xf32, #tpu.memory_space<vmem>>, %arg13: memref<12x18x128xbf16, #tpu.memory_space<vmem>>, %arg14: memref<12x18x128xbf16, #tpu.memory_space<vmem>>) attributes {dimension_semantics = [#tpu.dimension_semantics<parallel>, #tpu.dimension_semantics<parallel>], iteration_bounds = array<i64: 2, 2>, scalar_prefetch = 0 : i64, scratch_operands = 2 : i64, tpu.core_type = #tpu.core_type<tc>, window_params = [{transform_indices = @transform_0, window_bounds = array<i64: 1, 8, 16, 128>}, {transform_indices = @transform_1, window_bounds = array<i64: 1, 8, 16, 128>}, {transform_indices = @transform_2, window_bounds = array<i64: 1, 4, 16, 128>}, {transform_indices = @transform_3, window_bounds = array<i64: 1, 4, 16, 128>}, {pipeline_mode = #tpu.pipeline_mode<synchronous>, transform_indices = @transform_4, window_bounds = array<i64: 3, 384, 256>}, {pipeline_mode = #tpu.pipeline_mode<synchronous>, transform_indices = @transform_5, window_bounds = array<i64: 3, 384, 256>}, {pipeline_mode = #tpu.pipeline_mode<synchronous>, transform_indices = @transform_6, window_bounds = array<i64: 3, 384, 128>}, {pipeline_mode = #tpu.pipeline_mode<synchronous>, transform_indices = @transform_7, window_bounds = array<i64: 3, 384, 128>}, {pipeline_mode = #tpu.pipeline_mode<synchronous>, transform_indices = @transform_8, window_bounds = array<i64: 1, 256>}, {pipeline_mode = #tpu.pipeline_mode<synchronous>, transform_indices = @transform_9, window_bounds = array<i64: 1, 128>}, {transform_indices = @transform_10, window_bounds = array<i64: 1, 8, 16, 128>}]} {
    %cst = arith.constant 0.000000e+00 : bf16
    %0 = vector.broadcast %cst : bf16 to vector<12x1x128xbf16>
    %c0 = arith.constant 0 : index
    %c0_0 = arith.constant 0 : index
    %c0_1 = arith.constant 0 : index
    %1 = vector.load %arg13[%c0, %c0_0, %c0_1] : memref<12x18x128xbf16, #tpu.memory_space<vmem>>, vector<12x1x128xbf16>
    tpu.vector_store %arg13[%c0, %c0_0, %c0_1], %0 {strides = array<i32>} : memref<12x18x128xbf16, #tpu.memory_space<vmem>>, vector<12x1x128xbf16>,
    %cst_2 = arith.constant 0.000000e+00 : bf16
    %2 = vector.broadcast %cst_2 : bf16 to vector<12x1x128xbf16>
    %c0_3 = arith.constant 0 : index
    %c17 = arith.constant 17 : index
    %c0_4 = arith.constant 0 : index
    %3 = vector.load %arg13[%c0_3, %c17, %c0_4] : memref<12x18x128xbf16, #tpu.memory_space<vmem>>, vector<12x1x128xbf16>
    tpu.vector_store %arg13[%c0_3, %c17, %c0_4], %2 {strides = array<i32>} : memref<12x18x128xbf16, #tpu.memory_space<vmem>>, vector<12x1x128xbf16>,
    %cst_5 = arith.constant 0.000000e+00 : bf16
    %4 = vector.broadcast %cst_5 : bf16 to vector<12x1x128xbf16>
    %c0_6 = arith.constant 0 : index
    %c0_7 = arith.constant 0 : index
    %c0_8 = arith.constant 0 : index
    %5 = vector.load %arg14[%c0_6, %c0_7, %c0_8] : memref<12x18x128xbf16, #tpu.memory_space<vmem>>, vector<12x1x128xbf16>
    tpu.vector_store %arg14[%c0_6, %c0_7, %c0_8], %4 {strides = array<i32>} : memref<12x18x128xbf16, #tpu.memory_space<vmem>>, vector<12x1x128xbf16>,
    %cst_9 = arith.constant 0.000000e+00 : bf16
    %6 = vector.broadcast %cst_9 : bf16 to vector<12x1x128xbf16>
    %c0_10 = arith.constant 0 : index
    %c17_11 = arith.constant 17 : index
    %c0_12 = arith.constant 0 : index
    %7 = vector.load %arg14[%c0_10, %c17_11, %c0_12] : memref<12x18x128xbf16, #tpu.memory_space<vmem>>, vector<12x1x128xbf16>
    tpu.vector_store %arg14[%c0_10, %c17_11, %c0_12], %6 {strides = array<i32>} : memref<12x18x128xbf16, #tpu.memory_space<vmem>>, vector<12x1x128xbf16>,
    %c0_13 = arith.constant 0 : index
    %c0_14 = arith.constant 0 : index
    %c0_15 = arith.constant 0 : index
    %c0_16 = arith.constant 0 : index
    %8 = vector.load %arg4[%c0_13, %c0_14, %c0_15, %c0_16] : memref<1x4x16x128xbf16, #tpu.memory_space<vmem>>, vector<1x2x16x128xbf16>
    %9 = vector.shape_cast %8 : vector<1x2x16x128xbf16> to vector<2x16x128xbf16>
    %c0_17 = arith.constant 0 : index
    %c1 = arith.constant 1 : index
    %c0_18 = arith.constant 0 : index
    %10 = vector.load %arg13[%c0_17, %c1, %c0_18] : memref<12x18x128xbf16, #tpu.memory_space<vmem>>, vector<2x16x128xbf16>
    tpu.vector_store %arg13[%c0_17, %c1, %c0_18], %9 {strides = array<i32>} : memref<12x18x128xbf16, #tpu.memory_space<vmem>>, vector<2x16x128xbf16>,
    %c0_19 = arith.constant 0 : index
    %c2 = arith.constant 2 : index
    %c0_20 = arith.constant 0 : index
    %c0_21 = arith.constant 0 : index
    %11 = vector.load %arg4[%c0_19, %c2, %c0_20, %c0_21] : memref<1x4x16x128xbf16, #tpu.memory_space<vmem>>, vector<1x2x16x128xbf16>
    %12 = vector.shape_cast %11 : vector<1x2x16x128xbf16> to vector<2x16x128xbf16>
    %c10 = arith.constant 10 : index
    %c1_22 = arith.constant 1 : index
    %c0_23 = arith.constant 0 : index
    %13 = vector.load %arg13[%c10, %c1_22, %c0_23] : memref<12x18x128xbf16, #tpu.memory_space<vmem>>, vector<2x16x128xbf16>
    tpu.vector_store %arg13[%c10, %c1_22, %c0_23], %12 {strides = array<i32>} : memref<12x18x128xbf16, #tpu.memory_space<vmem>>, vector<2x16x128xbf16>,
    %c0_24 = arith.constant 0 : index
    %c0_25 = arith.constant 0 : index
    %c0_26 = arith.constant 0 : index
    %c0_27 = arith.constant 0 : index
    %14 = vector.load %arg5[%c0_24, %c0_25, %c0_26, %c0_27] : memref<1x4x16x128xbf16, #tpu.memory_space<vmem>>, vector<1x2x16x128xbf16>
    %15 = vector.shape_cast %14 : vector<1x2x16x128xbf16> to vector<2x16x128xbf16>
    %c0_28 = arith.constant 0 : index
    %c1_29 = arith.constant 1 : index
    %c0_30 = arith.constant 0 : index
    %16 = vector.load %arg14[%c0_28, %c1_29, %c0_30] : memref<12x18x128xbf16, #tpu.memory_space<vmem>>, vector<2x16x128xbf16>
    tpu.vector_store %arg14[%c0_28, %c1_29, %c0_30], %15 {strides = array<i32>} : memref<12x18x128xbf16, #tpu.memory_space<vmem>>, vector<2x16x128xbf16>,
    %c0_31 = arith.constant 0 : index
    %c2_32 = arith.constant 2 : index
    %c0_33 = arith.constant 0 : index
    %c0_34 = arith.constant 0 : index
    %17 = vector.load %arg5[%c0_31, %c2_32, %c0_33, %c0_34] : memref<1x4x16x128xbf16, #tpu.memory_space<vmem>>, vector<1x2x16x128xbf16>
    %18 = vector.shape_cast %17 : vector<1x2x16x128xbf16> to vector<2x16x128xbf16>
    %c10_35 = arith.constant 10 : index
    %c1_36 = arith.constant 1 : index
    %c0_37 = arith.constant 0 : index
    %19 = vector.load %arg14[%c10_35, %c1_36, %c0_37] : memref<12x18x128xbf16, #tpu.memory_space<vmem>>, vector<2x16x128xbf16>
    tpu.vector_store %arg14[%c10_35, %c1_36, %c0_37], %18 {strides = array<i32>} : memref<12x18x128xbf16, #tpu.memory_space<vmem>>, vector<2x16x128xbf16>,
    %c0_38 = arith.constant 0 : index
    %c0_39 = arith.constant 0 : index
    %c0_40 = arith.constant 0 : index
    %c0_41 = arith.constant 0 : index
    %20 = vector.load %arg2[%c0_38, %c0_39, %c0_40, %c0_41] : memref<1x8x16x128xf32, #tpu.memory_space<vmem>>, vector<1x8x16x128xf32>
    %21 = vector.shape_cast %20 : vector<1x8x16x128xf32> to vector<8x16x128xf32>
    %22 = arith.truncf %21 : vector<8x16x128xf32> to vector<8x16x128xbf16>
    %c2_42 = arith.constant 2 : index
    %c1_43 = arith.constant 1 : index
    %c0_44 = arith.constant 0 : index
    %23 = vector.load %arg13[%c2_42, %c1_43, %c0_44] : memref<12x18x128xbf16, #tpu.memory_space<vmem>>, vector<8x16x128xbf16>
    tpu.vector_store %arg13[%c2_42, %c1_43, %c0_44], %22 {strides = array<i32>} : memref<12x18x128xbf16, #tpu.memory_space<vmem>>, vector<8x16x128xbf16>,
    %c0_45 = arith.constant 0 : index
    %c0_46 = arith.constant 0 : index
    %c0_47 = arith.constant 0 : index
    %c0_48 = arith.constant 0 : index
    %24 = vector.load %arg3[%c0_45, %c0_46, %c0_47, %c0_48] : memref<1x8x16x128xbf16, #tpu.memory_space<vmem>>, vector<1x8x16x128xbf16>
    %25 = vector.shape_cast %24 : vector<1x8x16x128xbf16> to vector<8x16x128xbf16>
    %c2_49 = arith.constant 2 : index
    %c1_50 = arith.constant 1 : index
    %c0_51 = arith.constant 0 : index
    %26 = vector.load %arg14[%c2_49, %c1_50, %c0_51] : memref<12x18x128xbf16, #tpu.memory_space<vmem>>, vector<8x16x128xbf16>
    tpu.vector_store %arg14[%c2_49, %c1_50, %c0_51], %25 {strides = array<i32>} : memref<12x18x128xbf16, #tpu.memory_space<vmem>>, vector<8x16x128xbf16>,
    %c0_52 = arith.constant 0 : index
    %c0_53 = arith.constant 0 : index
    %27 = vector.load %arg10[%c0_52, %c0_53] : memref<1x256xf32, #tpu.memory_space<vmem>>, vector<1x256xf32>
    %28 = vector.shape_cast %27 : vector<1x256xf32> to vector<256xf32>
    %29 = vector.shape_cast %28 : vector<256xf32> to vector<1x1x256xf32>
    %30 = vector.shape_cast %29 : vector<1x1x256xf32> to vector<1x1x256xf32>
    %31 = vector.broadcast %30 : vector<1x1x256xf32> to vector<10x16x256xf32>
    %c0_54 = arith.constant 0 : index
    %c0_55 = arith.constant 0 : index
    %c0_56 = arith.constant 0 : index
    %32 = vector.load %arg13[%c0_54, %c0_55, %c0_56] : memref<12x18x128xbf16, #tpu.memory_space<vmem>>, vector<10x16x128xbf16>
    %c0_57 = arith.constant 0 : index
    %c1_58 = arith.constant 1 : index
    %c0_59 = arith.constant 0 : index
    %33 = vector.load %arg13[%c0_57, %c1_58, %c0_59] : memref<12x18x128xbf16, #tpu.memory_space<vmem>>, vector<10x16x128xbf16>
    %c0_60 = arith.constant 0 : index
    %c2_61 = arith.constant 2 : index
    %c0_62 = arith.constant 0 : index
    %34 = vector.load %arg13[%c0_60, %c2_61, %c0_62] : memref<12x18x128xbf16, #tpu.memory_space<vmem>>, vector<10x16x128xbf16>
    %35 = tpu.concatenate %32, %33, %34 in 2 : vector<10x16x128xbf16>, vector<10x16x128xbf16>, vector<10x16x128xbf16> -> vector<10x16x384xbf16>
    %c0_63 = arith.constant 0 : index
    %c0_64 = arith.constant 0 : index
    %c0_65 = arith.constant 0 : index
    %36 = vector.load %arg6[%c0_63, %c0_64, %c0_65] : memref<3x384x256xbf16, #tpu.memory_space<vmem>>, vector<1x384x256xbf16>
    %37 = vector.shape_cast %36 : vector<1x384x256xbf16> to vector<384x256xbf16>
    %cst_66 = arith.constant dense<0.000000e+00> : vector<10x16x256xf32>
    %38 = tpu.matmul %35, %37, %cst_66 {dimension_numbers = #tpu.dot_dimension_numbers<[2], [0], [0, 1], [1], [0, 0, 0, 1, 1, 1], [], []>} : vector<10x16x384xbf16>, vector<384x256xbf16>, vector<10x16x256xf32> -> vector<10x16x256xf32>
    %39 = arith.addf %31, %38 : vector<10x16x256xf32>
    %c0_67 = arith.constant 0 : index
    %c0_68 = arith.constant 0 : index
    %c0_69 = arith.constant 0 : index
    %40 = vector.load %arg14[%c0_67, %c0_68, %c0_69] : memref<12x18x128xbf16, #tpu.memory_space<vmem>>, vector<10x16x128xbf16>
    %c0_70 = arith.constant 0 : index
    %c1_71 = arith.constant 1 : index
    %c0_72 = arith.constant 0 : index
    %41 = vector.load %arg14[%c0_70, %c1_71, %c0_72] : memref<12x18x128xbf16, #tpu.memory_space<vmem>>, vector<10x16x128xbf16>
    %c0_73 = arith.constant 0 : index
    %c2_74 = arith.constant 2 : index
    %c0_75 = arith.constant 0 : index
    %42 = vector.load %arg14[%c0_73, %c2_74, %c0_75] : memref<12x18x128xbf16, #tpu.memory_space<vmem>>, vector<10x16x128xbf16>
    %43 = tpu.concatenate %40, %41, %42 in 2 : vector<10x16x128xbf16>, vector<10x16x128xbf16>, vector<10x16x128xbf16> -> vector<10x16x384xbf16>
    %c0_76 = arith.constant 0 : index
    %c0_77 = arith.constant 0 : index
    %c0_78 = arith.constant 0 : index
    %44 = vector.load %arg7[%c0_76, %c0_77, %c0_78] : memref<3x384x256xbf16, #tpu.memory_space<vmem>>, vector<1x384x256xbf16>
    %45 = vector.shape_cast %44 : vector<1x384x256xbf16> to vector<384x256xbf16>
    %cst_79 = arith.constant dense<0.000000e+00> : vector<10x16x256xf32>
    %46 = tpu.matmul %43, %45, %cst_79 {dimension_numbers = #tpu.dot_dimension_numbers<[2], [0], [0, 1], [1], [0, 0, 0, 1, 1, 1], [], []>} : vector<10x16x384xbf16>, vector<384x256xbf16>, vector<10x16x256xf32> -> vector<10x16x256xf32>
    %47 = arith.addf %39, %46 : vector<10x16x256xf32>
    %c1_80 = arith.constant 1 : index
    %c0_81 = arith.constant 0 : index
    %c0_82 = arith.constant 0 : index
    %48 = vector.load %arg13[%c1_80, %c0_81, %c0_82] : memref<12x18x128xbf16, #tpu.memory_space<vmem>>, vector<10x16x128xbf16>
    %c1_83 = arith.constant 1 : index
    %c1_84 = arith.constant 1 : index
    %c0_85 = arith.constant 0 : index
    %49 = vector.load %arg13[%c1_83, %c1_84, %c0_85] : memref<12x18x128xbf16, #tpu.memory_space<vmem>>, vector<10x16x128xbf16>
    %c1_86 = arith.constant 1 : index
    %c2_87 = arith.constant 2 : index
    %c0_88 = arith.constant 0 : index
    %50 = vector.load %arg13[%c1_86, %c2_87, %c0_88] : memref<12x18x128xbf16, #tpu.memory_space<vmem>>, vector<10x16x128xbf16>
    %51 = tpu.concatenate %48, %49, %50 in 2 : vector<10x16x128xbf16>, vector<10x16x128xbf16>, vector<10x16x128xbf16> -> vector<10x16x384xbf16>
    %c1_89 = arith.constant 1 : index
    %c0_90 = arith.constant 0 : index
    %c0_91 = arith.constant 0 : index
    %52 = vector.load %arg6[%c1_89, %c0_90, %c0_91] : memref<3x384x256xbf16, #tpu.memory_space<vmem>>, vector<1x384x256xbf16>
    %53 = vector.shape_cast %52 : vector<1x384x256xbf16> to vector<384x256xbf16>
    %cst_92 = arith.constant dense<0.000000e+00> : vector<10x16x256xf32>
    %54 = tpu.matmul %51, %53, %cst_92 {dimension_numbers = #tpu.dot_dimension_numbers<[2], [0], [0, 1], [1], [0, 0, 0, 1, 1, 1], [], []>} : vector<10x16x384xbf16>, vector<384x256xbf16>, vector<10x16x256xf32> -> vector<10x16x256xf32>
    %55 = arith.addf %47, %54 : vector<10x16x256xf32>
    %c1_93 = arith.constant 1 : index
    %c0_94 = arith.constant 0 : index
    %c0_95 = arith.constant 0 : index
    %56 = vector.load %arg14[%c1_93, %c0_94, %c0_95] : memref<12x18x128xbf16, #tpu.memory_space<vmem>>, vector<10x16x128xbf16>
    %c1_96 = arith.constant 1 : index
    %c1_97 = arith.constant 1 : index
    %c0_98 = arith.constant 0 : index
    %57 = vector.load %arg14[%c1_96, %c1_97, %c0_98] : memref<12x18x128xbf16, #tpu.memory_space<vmem>>, vector<10x16x128xbf16>
    %c1_99 = arith.constant 1 : index
    %c2_100 = arith.constant 2 : index
    %c0_101 = arith.constant 0 : index
    %58 = vector.load %arg14[%c1_99, %c2_100, %c0_101] : memref<12x18x128xbf16, #tpu.memory_space<vmem>>, vector<10x16x128xbf16>
    %59 = tpu.concatenate %56, %57, %58 in 2 : vector<10x16x128xbf16>, vector<10x16x128xbf16>, vector<10x16x128xbf16> -> vector<10x16x384xbf16>
    %c1_102 = arith.constant 1 : index
    %c0_103 = arith.constant 0 : index
    %c0_104 = arith.constant 0 : index
    %60 = vector.load %arg7[%c1_102, %c0_103, %c0_104] : memref<3x384x256xbf16, #tpu.memory_space<vmem>>, vector<1x384x256xbf16>
    %61 = vector.shape_cast %60 : vector<1x384x256xbf16> to vector<384x256xbf16>
    %cst_105 = arith.constant dense<0.000000e+00> : vector<10x16x256xf32>
    %62 = tpu.matmul %59, %61, %cst_105 {dimension_numbers = #tpu.dot_dimension_numbers<[2], [0], [0, 1], [1], [0, 0, 0, 1, 1, 1], [], []>} : vector<10x16x384xbf16>, vector<384x256xbf16>, vector<10x16x256xf32> -> vector<10x16x256xf32>
    %63 = arith.addf %55, %62 : vector<10x16x256xf32>
    %c2_106 = arith.constant 2 : index
    %c0_107 = arith.constant 0 : index
    %c0_108 = arith.constant 0 : index
    %64 = vector.load %arg13[%c2_106, %c0_107, %c0_108] : memref<12x18x128xbf16, #tpu.memory_space<vmem>>, vector<10x16x128xbf16>
    %c2_109 = arith.constant 2 : index
    %c1_110 = arith.constant 1 : index
    %c0_111 = arith.constant 0 : index
    %65 = vector.load %arg13[%c2_109, %c1_110, %c0_111] : memref<12x18x128xbf16, #tpu.memory_space<vmem>>, vector<10x16x128xbf16>
    %c2_112 = arith.constant 2 : index
    %c2_113 = arith.constant 2 : index
    %c0_114 = arith.constant 0 : index
    %66 = vector.load %arg13[%c2_112, %c2_113, %c0_114] : memref<12x18x128xbf16, #tpu.memory_space<vmem>>, vector<10x16x128xbf16>
    %67 = tpu.concatenate %64, %65, %66 in 2 : vector<10x16x128xbf16>, vector<10x16x128xbf16>, vector<10x16x128xbf16> -> vector<10x16x384xbf16>
    %c2_115 = arith.constant 2 : index
    %c0_116 = arith.constant 0 : index
    %c0_117 = arith.constant 0 : index
    %68 = vector.load %arg6[%c2_115, %c0_116, %c0_117] : memref<3x384x256xbf16, #tpu.memory_space<vmem>>, vector<1x384x256xbf16>
    %69 = vector.shape_cast %68 : vector<1x384x256xbf16> to vector<384x256xbf16>
    %cst_118 = arith.constant dense<0.000000e+00> : vector<10x16x256xf32>
    %70 = tpu.matmul %67, %69, %cst_118 {dimension_numbers = #tpu.dot_dimension_numbers<[2], [0], [0, 1], [1], [0, 0, 0, 1, 1, 1], [], []>} : vector<10x16x384xbf16>, vector<384x256xbf16>, vector<10x16x256xf32> -> vector<10x16x256xf32>
    %71 = arith.addf %63, %70 : vector<10x16x256xf32>
    %c2_119 = arith.constant 2 : index
    %c0_120 = arith.constant 0 : index
    %c0_121 = arith.constant 0 : index
    %72 = vector.load %arg14[%c2_119, %c0_120, %c0_121] : memref<12x18x128xbf16, #tpu.memory_space<vmem>>, vector<10x16x128xbf16>
    %c2_122 = arith.constant 2 : index
    %c1_123 = arith.constant 1 : index
    %c0_124 = arith.constant 0 : index
    %73 = vector.load %arg14[%c2_122, %c1_123, %c0_124] : memref<12x18x128xbf16, #tpu.memory_space<vmem>>, vector<10x16x128xbf16>
    %c2_125 = arith.constant 2 : index
    %c2_126 = arith.constant 2 : index
    %c0_127 = arith.constant 0 : index
    %74 = vector.load %arg14[%c2_125, %c2_126, %c0_127] : memref<12x18x128xbf16, #tpu.memory_space<vmem>>, vector<10x16x128xbf16>
    %75 = tpu.concatenate %72, %73, %74 in 2 : vector<10x16x128xbf16>, vector<10x16x128xbf16>, vector<10x16x128xbf16> -> vector<10x16x384xbf16>
    %c2_128 = arith.constant 2 : index
    %c0_129 = arith.constant 0 : index
    %c0_130 = arith.constant 0 : index
    %76 = vector.load %arg7[%c2_128, %c0_129, %c0_130] : memref<3x384x256xbf16, #tpu.memory_space<vmem>>, vector<1x384x256xbf16>
    %77 = vector.shape_cast %76 : vector<1x384x256xbf16> to vector<384x256xbf16>
    %cst_131 = arith.constant dense<0.000000e+00> : vector<10x16x256xf32>
    %78 = tpu.matmul %75, %77, %cst_131 {dimension_numbers = #tpu.dot_dimension_numbers<[2], [0], [0, 1], [1], [0, 0, 0, 1, 1, 1], [], []>} : vector<10x16x384xbf16>, vector<384x256xbf16>, vector<10x16x256xf32> -> vector<10x16x256xf32>
    %79 = arith.addf %71, %78 : vector<10x16x256xf32>
    %80 = vector.extract_strided_slice %79 {offsets = [1, 0, 0], sizes = [8, 16, 128], strides = [1, 1, 1]} : vector<10x16x256xf32> to vector<8x16x128xf32>
    %81 = arith.negf %80 : vector<8x16x128xf32>
    %82 = math.exp %81 : vector<8x16x128xf32>
    %cst_132 = arith.constant 1.000000e+00 : f32
    %83 = vector.broadcast %cst_132 : f32 to vector<8x16x128xf32>
    %84 = arith.addf %83, %82 : vector<8x16x128xf32>
    %85 = arith.divf %83, %84 : vector<8x16x128xf32>
    %86 = vector.extract_strided_slice %79 {offsets = [0, 0, 128], sizes = [10, 16, 128], strides = [1, 1, 1]} : vector<10x16x256xf32> to vector<10x16x128xf32>
    %87 = arith.negf %86 : vector<10x16x128xf32>
    %88 = math.exp %87 : vector<10x16x128xf32>
    %cst_133 = arith.constant 1.000000e+00 : f32
    %89 = vector.broadcast %cst_133 : f32 to vector<10x16x128xf32>
    %90 = arith.addf %89, %88 : vector<10x16x128xf32>
    %91 = arith.divf %89, %90 : vector<10x16x128xf32>
    %c1_134 = arith.constant 1 : index
    %c1_135 = arith.constant 1 : index
    %c0_136 = arith.constant 0 : index
    %92 = vector.load %arg13[%c1_134, %c1_135, %c0_136] : memref<12x18x128xbf16, #tpu.memory_space<vmem>>, vector<10x16x128xbf16>
    %93 = arith.extf %92 : vector<10x16x128xbf16> to vector<10x16x128xf32>
    %94 = arith.mulf %91, %93 : vector<10x16x128xf32>
    %95 = arith.truncf %94 : vector<10x16x128xf32> to vector<10x16x128xbf16>
    %c1_137 = arith.constant 1 : index
    %c1_138 = arith.constant 1 : index
    %c0_139 = arith.constant 0 : index
    %96 = vector.load %arg13[%c1_137, %c1_138, %c0_139] : memref<12x18x128xbf16, #tpu.memory_space<vmem>>, vector<10x16x128xbf16>
    tpu.vector_store %arg13[%c1_137, %c1_138, %c0_139], %95 {strides = array<i32>} : memref<12x18x128xbf16, #tpu.memory_space<vmem>>, vector<10x16x128xbf16>,
    %c0_140 = arith.constant 0 : index
    %c0_141 = arith.constant 0 : index
    %97 = vector.load %arg11[%c0_140, %c0_141] : memref<1x128xf32, #tpu.memory_space<vmem>>, vector<1x128xf32>
    %98 = vector.shape_cast %97 : vector<1x128xf32> to vector<128xf32>
    %99 = vector.shape_cast %98 : vector<128xf32> to vector<1x1x128xf32>
    %100 = vector.shape_cast %99 : vector<1x1x128xf32> to vector<1x1x128xf32>
    %101 = vector.broadcast %100 : vector<1x1x128xf32> to vector<8x16x128xf32>
    %c1_142 = arith.constant 1 : index
    %c0_143 = arith.constant 0 : index
    %c0_144 = arith.constant 0 : index
    %102 = vector.load %arg13[%c1_142, %c0_143, %c0_144] : memref<12x18x128xbf16, #tpu.memory_space<vmem>>, vector<8x16x128xbf16>
    %c1_145 = arith.constant 1 : index
    %c1_146 = arith.constant 1 : index
    %c0_147 = arith.constant 0 : index
    %103 = vector.load %arg13[%c1_145, %c1_146, %c0_147] : memref<12x18x128xbf16, #tpu.memory_space<vmem>>, vector<8x16x128xbf16>
    %c1_148 = arith.constant 1 : index
    %c2_149 = arith.constant 2 : index
    %c0_150 = arith.constant 0 : index
    %104 = vector.load %arg13[%c1_148, %c2_149, %c0_150] : memref<12x18x128xbf16, #tpu.memory_space<vmem>>, vector<8x16x128xbf16>
    %105 = tpu.concatenate %102, %103, %104 in 2 : vector<8x16x128xbf16>, vector<8x16x128xbf16>, vector<8x16x128xbf16> -> vector<8x16x384xbf16>
    %c0_151 = arith.constant 0 : index
    %c0_152 = arith.constant 0 : index
    %c0_153 = arith.constant 0 : index
    %106 = vector.load %arg8[%c0_151, %c0_152, %c0_153] : memref<3x384x128xbf16, #tpu.memory_space<vmem>>, vector<1x384x128xbf16>
    %107 = vector.shape_cast %106 : vector<1x384x128xbf16> to vector<384x128xbf16>
    %cst_154 = arith.constant dense<0.000000e+00> : vector<8x16x128xf32>
    %108 = tpu.matmul %105, %107, %cst_154 {dimension_numbers = #tpu.dot_dimension_numbers<[2], [0], [0, 1], [1], [0, 0, 0, 1, 1, 1], [], []>} : vector<8x16x384xbf16>, vector<384x128xbf16>, vector<8x16x128xf32> -> vector<8x16x128xf32>
    %109 = arith.addf %101, %108 : vector<8x16x128xf32>
    %c1_155 = arith.constant 1 : index
    %c0_156 = arith.constant 0 : index
    %c0_157 = arith.constant 0 : index
    %110 = vector.load %arg14[%c1_155, %c0_156, %c0_157] : memref<12x18x128xbf16, #tpu.memory_space<vmem>>, vector<8x16x128xbf16>
    %c1_158 = arith.constant 1 : index
    %c1_159 = arith.constant 1 : index
    %c0_160 = arith.constant 0 : index
    %111 = vector.load %arg14[%c1_158, %c1_159, %c0_160] : memref<12x18x128xbf16, #tpu.memory_space<vmem>>, vector<8x16x128xbf16>
    %c1_161 = arith.constant 1 : index
    %c2_162 = arith.constant 2 : index
    %c0_163 = arith.constant 0 : index
    %112 = vector.load %arg14[%c1_161, %c2_162, %c0_163] : memref<12x18x128xbf16, #tpu.memory_space<vmem>>, vector<8x16x128xbf16>
    %113 = tpu.concatenate %110, %111, %112 in 2 : vector<8x16x128xbf16>, vector<8x16x128xbf16>, vector<8x16x128xbf16> -> vector<8x16x384xbf16>
    %c0_164 = arith.constant 0 : index
    %c0_165 = arith.constant 0 : index
    %c0_166 = arith.constant 0 : index
    %114 = vector.load %arg9[%c0_164, %c0_165, %c0_166] : memref<3x384x128xbf16, #tpu.memory_space<vmem>>, vector<1x384x128xbf16>
    %115 = vector.shape_cast %114 : vector<1x384x128xbf16> to vector<384x128xbf16>
    %cst_167 = arith.constant dense<0.000000e+00> : vector<8x16x128xf32>
    %116 = tpu.matmul %113, %115, %cst_167 {dimension_numbers = #tpu.dot_dimension_numbers<[2], [0], [0, 1], [1], [0, 0, 0, 1, 1, 1], [], []>} : vector<8x16x384xbf16>, vector<384x128xbf16>, vector<8x16x128xf32> -> vector<8x16x128xf32>
    %117 = arith.addf %109, %116 : vector<8x16x128xf32>
    %c2_168 = arith.constant 2 : index
    %c0_169 = arith.constant 0 : index
    %c0_170 = arith.constant 0 : index
    %118 = vector.load %arg13[%c2_168, %c0_169, %c0_170] : memref<12x18x128xbf16, #tpu.memory_space<vmem>>, vector<8x16x128xbf16>
    %c2_171 = arith.constant 2 : index
    %c1_172 = arith.constant 1 : index
    %c0_173 = arith.constant 0 : index
    %119 = vector.load %arg13[%c2_171, %c1_172, %c0_173] : memref<12x18x128xbf16, #tpu.memory_space<vmem>>, vector<8x16x128xbf16>
    %c2_174 = arith.constant 2 : index
    %c2_175 = arith.constant 2 : index
    %c0_176 = arith.constant 0 : index
    %120 = vector.load %arg13[%c2_174, %c2_175, %c0_176] : memref<12x18x128xbf16, #tpu.memory_space<vmem>>, vector<8x16x128xbf16>
    %121 = tpu.concatenate %118, %119, %120 in 2 : vector<8x16x128xbf16>, vector<8x16x128xbf16>, vector<8x16x128xbf16> -> vector<8x16x384xbf16>
    %c1_177 = arith.constant 1 : index
    %c0_178 = arith.constant 0 : index
    %c0_179 = arith.constant 0 : index
    %122 = vector.load %arg8[%c1_177, %c0_178, %c0_179] : memref<3x384x128xbf16, #tpu.memory_space<vmem>>, vector<1x384x128xbf16>
    %123 = vector.shape_cast %122 : vector<1x384x128xbf16> to vector<384x128xbf16>
    %cst_180 = arith.constant dense<0.000000e+00> : vector<8x16x128xf32>
    %124 = tpu.matmul %121, %123, %cst_180 {dimension_numbers = #tpu.dot_dimension_numbers<[2], [0], [0, 1], [1], [0, 0, 0, 1, 1, 1], [], []>} : vector<8x16x384xbf16>, vector<384x128xbf16>, vector<8x16x128xf32> -> vector<8x16x128xf32>
    %125 = arith.addf %117, %124 : vector<8x16x128xf32>
    %c2_181 = arith.constant 2 : index
    %c0_182 = arith.constant 0 : index
    %c0_183 = arith.constant 0 : index
    %126 = vector.load %arg14[%c2_181, %c0_182, %c0_183] : memref<12x18x128xbf16, #tpu.memory_space<vmem>>, vector<8x16x128xbf16>
    %c2_184 = arith.constant 2 : index
    %c1_185 = arith.constant 1 : index
    %c0_186 = arith.constant 0 : index
    %127 = vector.load %arg14[%c2_184, %c1_185, %c0_186] : memref<12x18x128xbf16, #tpu.memory_space<vmem>>, vector<8x16x128xbf16>
    %c2_187 = arith.constant 2 : index
    %c2_188 = arith.constant 2 : index
    %c0_189 = arith.constant 0 : index
    %128 = vector.load %arg14[%c2_187, %c2_188, %c0_189] : memref<12x18x128xbf16, #tpu.memory_space<vmem>>, vector<8x16x128xbf16>
    %129 = tpu.concatenate %126, %127, %128 in 2 : vector<8x16x128xbf16>, vector<8x16x128xbf16>, vector<8x16x128xbf16> -> vector<8x16x384xbf16>
    %c1_190 = arith.constant 1 : index
    %c0_191 = arith.constant 0 : index
    %c0_192 = arith.constant 0 : index
    %130 = vector.load %arg9[%c1_190, %c0_191, %c0_192] : memref<3x384x128xbf16, #tpu.memory_space<vmem>>, vector<1x384x128xbf16>
    %131 = vector.shape_cast %130 : vector<1x384x128xbf16> to vector<384x128xbf16>
    %cst_193 = arith.constant dense<0.000000e+00> : vector<8x16x128xf32>
    %132 = tpu.matmul %129, %131, %cst_193 {dimension_numbers = #tpu.dot_dimension_numbers<[2], [0], [0, 1], [1], [0, 0, 0, 1, 1, 1], [], []>} : vector<8x16x384xbf16>, vector<384x128xbf16>, vector<8x16x128xf32> -> vector<8x16x128xf32>
    %133 = arith.addf %125, %132 : vector<8x16x128xf32>
    %c3 = arith.constant 3 : index
    %c0_194 = arith.constant 0 : index
    %c0_195 = arith.constant 0 : index
    %134 = vector.load %arg13[%c3, %c0_194, %c0_195] : memref<12x18x128xbf16, #tpu.memory_space<vmem>>, vector<8x16x128xbf16>
    %c3_196 = arith.constant 3 : index
    %c1_197 = arith.constant 1 : index
    %c0_198 = arith.constant 0 : index
    %135 = vector.load %arg13[%c3_196, %c1_197, %c0_198] : memref<12x18x128xbf16, #tpu.memory_space<vmem>>, vector<8x16x128xbf16>
    %c3_199 = arith.constant 3 : index
    %c2_200 = arith.constant 2 : index
    %c0_201 = arith.constant 0 : index
    %136 = vector.load %arg13[%c3_199, %c2_200, %c0_201] : memref<12x18x128xbf16, #tpu.memory_space<vmem>>, vector<8x16x128xbf16>
    %137 = tpu.concatenate %134, %135, %136 in 2 : vector<8x16x128xbf16>, vector<8x16x128xbf16>, vector<8x16x128xbf16> -> vector<8x16x384xbf16>
    %c2_202 = arith.constant 2 : index
    %c0_203 = arith.constant 0 : index
    %c0_204 = arith.constant 0 : index
    %138 = vector.load %arg8[%c2_202, %c0_203, %c0_204] : memref<3x384x128xbf16, #tpu.memory_space<vmem>>, vector<1x384x128xbf16>
    %139 = vector.shape_cast %138 : vector<1x384x128xbf16> to vector<384x128xbf16>
    %cst_205 = arith.constant dense<0.000000e+00> : vector<8x16x128xf32>
    %140 = tpu.matmul %137, %139, %cst_205 {dimension_numbers = #tpu.dot_dimension_numbers<[2], [0], [0, 1], [1], [0, 0, 0, 1, 1, 1], [], []>} : vector<8x16x384xbf16>, vector<384x128xbf16>, vector<8x16x128xf32> -> vector<8x16x128xf32>
    %141 = arith.addf %133, %140 : vector<8x16x128xf32>
    %c3_206 = arith.constant 3 : index
    %c0_207 = arith.constant 0 : index
    %c0_208 = arith.constant 0 : index
    %142 = vector.load %arg14[%c3_206, %c0_207, %c0_208] : memref<12x18x128xbf16, #tpu.memory_space<vmem>>, vector<8x16x128xbf16>
    %c3_209 = arith.constant 3 : index
    %c1_210 = arith.constant 1 : index
    %c0_211 = arith.constant 0 : index
    %143 = vector.load %arg14[%c3_209, %c1_210, %c0_211] : memref<12x18x128xbf16, #tpu.memory_space<vmem>>, vector<8x16x128xbf16>
    %c3_212 = arith.constant 3 : index
    %c2_213 = arith.constant 2 : index
    %c0_214 = arith.constant 0 : index
    %144 = vector.load %arg14[%c3_212, %c2_213, %c0_214] : memref<12x18x128xbf16, #tpu.memory_space<vmem>>, vector<8x16x128xbf16>
    %145 = tpu.concatenate %142, %143, %144 in 2 : vector<8x16x128xbf16>, vector<8x16x128xbf16>, vector<8x16x128xbf16> -> vector<8x16x384xbf16>
    %c2_215 = arith.constant 2 : index
    %c0_216 = arith.constant 0 : index
    %c0_217 = arith.constant 0 : index
    %146 = vector.load %arg9[%c2_215, %c0_216, %c0_217] : memref<3x384x128xbf16, #tpu.memory_space<vmem>>, vector<1x384x128xbf16>
    %147 = vector.shape_cast %146 : vector<1x384x128xbf16> to vector<384x128xbf16>
    %cst_218 = arith.constant dense<0.000000e+00> : vector<8x16x128xf32>
    %148 = tpu.matmul %145, %147, %cst_218 {dimension_numbers = #tpu.dot_dimension_numbers<[2], [0], [0, 1], [1], [0, 0, 0, 1, 1, 1], [], []>} : vector<8x16x384xbf16>, vector<384x128xbf16>, vector<8x16x128xf32> -> vector<8x16x128xf32>
    %149 = arith.addf %141, %148 : vector<8x16x128xf32>
    %150 = math.tanh %149 : vector<8x16x128xf32>
    %cst_219 = arith.constant 1.000000e+00 : f32
    %151 = vector.broadcast %cst_219 : f32 to vector<8x16x128xf32>
    %152 = arith.subf %151, %85 : vector<8x16x128xf32>
    %153 = arith.mulf %152, %21 : vector<8x16x128xf32>
    %154 = arith.mulf %85, %150 : vector<8x16x128xf32>
    %155 = arith.addf %153, %154 : vector<8x16x128xf32>
    %c0_220 = arith.constant 0 : index
    %c0_221 = arith.constant 0 : index
    %c0_222 = arith.constant 0 : index
    %c0_223 = arith.constant 0 : index
    %156 = vector.load %arg12[%c0_220, %c0_221, %c0_222, %c0_223] : memref<1x8x16x128xf32, #tpu.memory_space<vmem>>, vector<1x8x16x128xf32>
    %157 = vector.shape_cast %156 : vector<1x8x16x128xf32> to vector<8x16x128xf32>
    %158 = vector.shape_cast %155 : vector<8x16x128xf32> to vector<1x8x16x128xf32>
    tpu.vector_store %arg12[%c0_220, %c0_221, %c0_222, %c0_223], %158 {strides = array<i32>} : memref<1x8x16x128xf32, #tpu.memory_space<vmem>>, vector<1x8x16x128xf32>,
    return
  }
  func.func @transform_0(%arg0: i32, %arg1: i32) -> (i32, i32, i32, i32) {
    %c0_i32 = arith.constant 0 : i32
    %c0_i32_0 = arith.constant 0 : i32
    %c0_i32_1 = arith.constant 0 : i32
    return %arg0, %arg1, %c0_i32, %c0_i32_0 : i32, i32, i32, i32
  }
  func.func @transform_1(%arg0: i32, %arg1: i32) -> (i32, i32, i32, i32) {
    %c0_i32 = arith.constant 0 : i32
    %c0_i32_0 = arith.constant 0 : i32
    %c0_i32_1 = arith.constant 0 : i32
    return %arg0, %arg1, %c0_i32, %c0_i32_0 : i32, i32, i32, i32
  }
  func.func @transform_2(%arg0: i32, %arg1: i32) -> (i32, i32, i32, i32) {
    %c2_i32 = arith.constant 2 : i32
    %0 = arith.muli %arg0, %c2_i32 : i32
    %1 = arith.addi %0, %arg1 : i32
    %c0_i32 = arith.constant 0 : i32
    %c0_i32_0 = arith.constant 0 : i32
    %c0_i32_1 = arith.constant 0 : i32
    %c0_i32_2 = arith.constant 0 : i32
    return %1, %c0_i32, %c0_i32_0, %c0_i32_1 : i32, i32, i32, i32
  }
  func.func @transform_3(%arg0: i32, %arg1: i32) -> (i32, i32, i32, i32) {
    %c2_i32 = arith.constant 2 : i32
    %0 = arith.muli %arg0, %c2_i32 : i32
    %1 = arith.addi %0, %arg1 : i32
    %c0_i32 = arith.constant 0 : i32
    %c0_i32_0 = arith.constant 0 : i32
    %c0_i32_1 = arith.constant 0 : i32
    %c0_i32_2 = arith.constant 0 : i32
    return %1, %c0_i32, %c0_i32_0, %c0_i32_1 : i32, i32, i32, i32
  }
  func.func @transform_4(%arg0: i32, %arg1: i32) -> (i32, i32, i32) {
    %c0_i32 = arith.constant 0 : i32
    %c0_i32_0 = arith.constant 0 : i32
    %c0_i32_1 = arith.constant 0 : i32
    %c0_i32_2 = arith.constant 0 : i32
    return %c0_i32, %c0_i32_0, %c0_i32_1 : i32, i32, i32
  }
  func.func @transform_5(%arg0: i32, %arg1: i32) -> (i32, i32, i32) {
    %c0_i32 = arith.constant 0 : i32
    %c0_i32_0 = arith.constant 0 : i32
    %c0_i32_1 = arith.constant 0 : i32
    %c0_i32_2 = arith.constant 0 : i32
    return %c0_i32, %c0_i32_0, %c0_i32_1 : i32, i32, i32
  }
  func.func @transform_6(%arg0: i32, %arg1: i32) -> (i32, i32, i32) {
    %c0_i32 = arith.constant 0 : i32
    %c0_i32_0 = arith.constant 0 : i32
    %c0_i32_1 = arith.constant 0 : i32
    %c0_i32_2 = arith.constant 0 : i32
    return %c0_i32, %c0_i32_0, %c0_i32_1 : i32, i32, i32
  }
  func.func @transform_7(%arg0: i32, %arg1: i32) -> (i32, i32, i32) {
    %c0_i32 = arith.constant 0 : i32
    %c0_i32_0 = arith.constant 0 : i32
    %c0_i32_1 = arith.constant 0 : i32
    %c0_i32_2 = arith.constant 0 : i32
    return %c0_i32, %c0_i32_0, %c0_i32_1 : i32, i32, i32
  }
  func.func @transform_8(%arg0: i32, %arg1: i32) -> (i32, i32) {
    %c0_i32 = arith.constant 0 : i32
    %c0_i32_0 = arith.constant 0 : i32
    %c0_i32_1 = arith.constant 0 : i32
    return %c0_i32, %c0_i32_0 : i32, i32
  }
  func.func @transform_9(%arg0: i32, %arg1: i32) -> (i32, i32) {
    %c0_i32 = arith.constant 0 : i32
    %c0_i32_0 = arith.constant 0 : i32
    %c0_i32_1 = arith.constant 0 : i32
    return %c0_i32, %c0_i32_0 : i32, i32
  }
  func.func @transform_10(%arg0: i32, %arg1: i32) -> (i32, i32, i32, i32) {
    %c0_i32 = arith.constant 0 : i32
    %c0_i32_0 = arith.constant 0 : i32
    %c0_i32_1 = arith.constant 0 : i32
    return %arg0, %arg1, %c0_i32, %c0_i32_0 : i32, i32, i32, i32
  }
}

</mosaic_0001>

<llo_original>
// kernel: tpu_custom_call.1
$region0: #{tpu_custom_call.1}
  #allocation0 [shape = 'u32[]', space=smem, size = 0x4, offset = 0x4, fixed_abs, tag = 'smem constant byte address 0x4 - core index']
  #allocation1 [shape = 'u32[72,128]{1,0:T(1,128)}', space=vmem, size = 0x9000, scoped, tag = 'internal scratch']
  #allocation2 [shape = 'bf16[12,18,128]{2,1,0:T(8,128)(2,1)}', space=vmem, size = 0x12000, scoped, tag = 'scratch operand']
  #allocation3 [shape = 'bf16[12,18,128]{2,1,0:T(8,128)(2,1)}', space=vmem, size = 0x12000, scoped, tag = 'scratch operand']
  %s0 = inlined_call_operand.hbm [shape: f32[2,16,16,128], index: 0, kind: input, shape index: {}, may-alias: {0,10}]
  %s1 = inlined_call_operand.vmem [shape: bf16[2,16,16,128], index: 1, kind: input, shape index: {}]
  %s2 = inlined_call_operand.vmem [shape: bf16[4,4,16,128], index: 2, kind: input, shape index: {}]
  %s3 = inlined_call_operand.hbm [shape: bf16[4,4,16,128], index: 3, kind: input, shape index: {}]
  %s4 = inlined_call_operand.hbm [shape: bf16[3,384,256], index: 4, kind: input, shape index: {}]
  %s5 = inlined_call_operand.hbm [shape: bf16[3,384,256], index: 5, kind: input, shape index: {}]
  %s6 = inlined_call_operand.vmem [shape: bf16[3,384,128], index: 6, kind: input, shape index: {}]
  %s7 = inlined_call_operand.hbm [shape: bf16[3,384,128], index: 7, kind: input, shape index: {}]
  %s8 = inlined_call_operand.vmem [shape: f32[1,256], index: 8, kind: input, shape index: {}]
  %s9 = inlined_call_operand.vmem [shape: f32[1,128], index: 9, kind: input, shape index: {}]
  %s10 = inlined_call_operand.hbm [shape: f32[2,16,16,128], index: 10, kind: output, shape index: {}, may-alias: {0,10}]
  %s11 = sld [smem:[#allocation0]]
  $region93: #{tpu_custom_call.1} parent=0
    _
  %s13 = ssub.s32 1, %s11
  %s14 = scalar_select 0, %s13, %s11
  $region1: #{tpu_custom_call.1} parent=0
    #allocation4 [shape = 'u8[131072]{0}', space=vmem, size = 0x20000, scoped, tag = 'input window, operand 0']
    #allocation5 [shape = 's32[2]{0}', space=sflag, size = 0x8, scoped, tag = 'scoped memory for tpu_custom_call.1']
    #allocation6 [shape = 's32[2]{0}', space=sflag, size = 0x8, scoped, tag = 'scoped memory for tpu_custom_call.1']
    #allocation7 [shape = 'u8[32768]{0}', space=vmem, size = 0x8000, scoped, tag = 'input window, operand 3']
    #allocation8 [shape = 's32[2]{0}', space=sflag, size = 0x8, scoped, tag = 'scoped memory for tpu_custom_call.1']
    #allocation9 [shape = 'u8[589824]{0}', space=vmem, size = 0x90000, scoped, tag = 'input window, operand 4, single buffered']
    #allocation10 [shape = 'u8[589824]{0}', space=vmem, size = 0x90000, scoped, tag = 'input window, operand 5, single buffered']
    #allocation11 [shape = 's32[1]{0}', space=sflag, size = 0x4, scoped, tag = 'scoped memory for tpu_custom_call.1']
    #allocation12 [shape = 'u8[294912]{0}', space=vmem, size = 0x48000, scoped, tag = 'input window, operand 7, single buffered']
    #allocation13 [shape = 'u8[131072]{0}', space=vmem, size = 0x20000, scoped, tag = 'output window, operand 0']
    %15 = vsyncpa [#allocation5], 0
    %s16 = scalar_lea.sflag [#allocation5], 1
    %17 = vsyncpa %s16, 0
    %18 = vsyncpa [#allocation8], 0
    %s19 = scalar_lea.sflag [#allocation8], 1
    %20 = vsyncpa %s19, 0
    %21 = vsyncpa [#allocation11], 0
    %22 = vsyncpa [#allocation6], 0
    %s23 = scalar_lea.sflag [#allocation6], 1
    %24 = vsyncpa %s23, 0
    loop: start=0, step=1, limit=6
    $region2: #{tpu_custom_call.1} parent=1 // loop_pre_header
      _
    $region3: #{tpu_custom_call.1} parent=1 // loop_header
      %s26 = sphi 0, %s30
      %p27 = scmp.ge.s32.totalorder %s26, 6
      %s33 = sphi 0, %s45
      %s34 = sphi 0, %s41
      %s35 = sphi 0, %s33
      %s36 = sphi 0, %s34
      %s37 = sphi 0, %s35
      %s38 = sphi 0, %s36
      %s50 = sphi 0, %s52
      %s53 = sphi 0, %s50
      %s54 = sphi 0, %s53
      %s70 = sphi 0, %s54
      %s78 = sphi 0, %s80
      %s81 = sphi 0, %s78
      %s82 = sphi 0, %s81
      %s98 = sphi 0, %s82
      %s108 = sphi 0, %s110
      %s111 = sphi 0, %s108
      %s112 = sphi 0, %s111
      %s128 = sphi 0, %s112
      %s138 = sphi 0, %s140
      %s141 = sphi 0, %s138
      %s142 = sphi 0, %s141
      %s158 = sphi 0, %s142
      %s162 = sphi 0, %s162
      %s164 = sphi 0, %s162
      %s165 = sphi 0, %s164
      %s179 = sphi 0, %s165
      %s183 = sphi 0, %s183
      %s185 = sphi 0, %s183
      %s186 = sphi 0, %s185
      %s200 = sphi 0, %s186
      %s204 = sphi 0, %s204
      %s206 = sphi 0, %s204
      %s207 = sphi 0, %s206
      %s221 = sphi 0, %s207
      %s225 = sphi 0, %s225
      %s227 = sphi 0, %s225
      %s228 = sphi 0, %s227
      %s242 = sphi 0, %s228
      %s246 = sphi 0, %s246
      %s248 = sphi 0, %s246
      %s249 = sphi 0, %s248
      %s263 = sphi 0, %s249
      %s267 = sphi 0, %s267
      %s269 = sphi 0, %s267
      %s270 = sphi 0, %s269
      %s284 = sphi 0, %s270
      %s292 = sphi 0, %s294
      %s295 = sphi 0, %s292
      %s296 = sphi 0, %s295
      %s312 = sphi 0, %s296
    $region4: #{tpu_custom_call.1} parent=1 // loop_header_branch
      %29 = sbr.rel (%p27) target = $region8
    $region5: #{tpu_custom_call.1} parent=1 // loop_body
      %s31 = ssub.s32 %s26, 1
      %s32 = ssub.s32 %s26, 2
      %s39 = sadd.s32 1, %s34
      %p40 = scmp.ge.s32.totalorder %s39, 2
      %s41 = scalar_select %p40, 0, %s39
      %s42 = sadd.s32 1, %s33
      %s43 = scalar_select %p40, %s42, %s33
      %p44 = scmp.ge.s32.totalorder %s43, 2
      %s45 = scalar_select %p44, 0, %s43
      %s46 = ssub.s32 %s33, %s45
      %s47 = ssub.s32 %s34, %s41
      %s48 = sor.u32 %s46, %s47
      %p49 = scmp.eq.s32.totalorder %s48, 0
      %s51 = sadd.s32 %s50, 1
      %s52 = scalar_select %p49, %s50, %s51
      %p55 = pneg %p49
      %p56 = scmp.eq.s32.totalorder %s26, 3
      %p57 = por %p55, %p56
      %p58 = scmp.ne.s32.totalorder %s50, %s53
      %p59 = scmp.eq.s32.totalorder %s26, 0
      %p60 = por %p58, %p59
      %p61 = scmp.ne.s32.totalorder %s50, %s53
      %p62 = scmp.eq.s32.totalorder %s31, 3
      %p63 = por %p61, %p62
      %p64 = scmp.ne.s32.totalorder %s53, %s54
      %p65 = scmp.eq.s32.totalorder %s31, 0
      %p66 = por %p64, %p65
      %p67 = scmp.ne.s32.totalorder %s53, %s54
      %p68 = scmp.eq.s32.totalorder %s32, 3
      %p69 = por %p67, %p68
      %p71 = scmp.ne.s32.totalorder %s54, %s70
      %p72 = scmp.eq.s32.totalorder %s32, 0
      %p73 = por %p71, %p72
      %s74 = ssub.s32 %s33, %s45
      %s75 = ssub.s32 %s34, %s41
      %s76 = sor.u32 %s74, %s75
      %p77 = scmp.eq.s32.totalorder %s76, 0
      %s79 = sadd.s32 %s78, 1
      %s80 = scalar_select %p77, %s78, %s79
      %p83 = pneg %p77
      %p84 = scmp.eq.s32.totalorder %s26, 3
      %p85 = por %p83, %p84
      %p86 = scmp.ne.s32.totalorder %s78, %s81
      %p87 = scmp.eq.s32.totalorder %s26, 0
      %p88 = por %p86, %p87
      %p89 = scmp.ne.s32.totalorder %s78, %s81
      %p90 = scmp.eq.s32.totalorder %s31, 3
      %p91 = por %p89, %p90
      %p92 = scmp.ne.s32.totalorder %s81, %s82
      %p93 = scmp.eq.s32.totalorder %s31, 0
      %p94 = por %p92, %p93
      %p95 = scmp.ne.s32.totalorder %s81, %s82
      %p96 = scmp.eq.s32.totalorder %s32, 3
      %p97 = por %p95, %p96
      %p99 = scmp.ne.s32.totalorder %s82, %s98
      %p100 = scmp.eq.s32.totalorder %s32, 0
      %p101 = por %p99, %p100
      %s102 = smul.u32 %s33, 2
      %s103 = sadd.s32 %s102, %s34
      %s104 = smul.u32 %s45, 2
      %s105 = sadd.s32 %s104, %s41
      %s106 = ssub.s32 %s103, %s105
      %p107 = scmp.eq.s32.totalorder %s106, 0
      %s109 = sadd.s32 %s108, 1
      %s110 = scalar_select %p107, %s108, %s109
      %p113 = pneg %p107
      %p114 = scmp.eq.s32.totalorder %s26, 3
      %p115 = por %p113, %p114
      %p116 = scmp.ne.s32.totalorder %s108, %s111
      %p117 = scmp.eq.s32.totalorder %s26, 0
      %p118 = por %p116, %p117
      %p119 = scmp.ne.s32.totalorder %s108, %s111
      %p120 = scmp.eq.s32.totalorder %s31, 3
      %p121 = por %p119, %p120
      %p122 = scmp.ne.s32.totalorder %s111, %s112
      %p123 = scmp.eq.s32.totalorder %s31, 0
      %p124 = por %p122, %p123
      %p125 = scmp.ne.s32.totalorder %s111, %s112
      %p126 = scmp.eq.s32.totalorder %s32, 3
      %p127 = por %p125, %p126
      %p129 = scmp.ne.s32.totalorder %s112, %s128
      %p130 = scmp.eq.s32.totalorder %s32, 0
      %p131 = por %p129, %p130
      %s132 = smul.u32 %s33, 2
      %s133 = sadd.s32 %s132, %s34
      %s134 = smul.u32 %s45, 2
      %s135 = sadd.s32 %s134, %s41
      %s136 = ssub.s32 %s133, %s135
      %p137 = scmp.eq.s32.totalorder %s136, 0
      %s139 = sadd.s32 %s138, 1
      %s140 = scalar_select %p137, %s138, %s139
      %p143 = pneg %p137
      %p144 = scmp.eq.s32.totalorder %s26, 3
      %p145 = por %p143, %p144
      %p146 = scmp.ne.s32.totalorder %s138, %s141
      %p147 = scmp.eq.s32.totalorder %s26, 0
      %p148 = por %p146, %p147
      %p149 = scmp.ne.s32.totalorder %s138, %s141
      %p150 = scmp.eq.s32.totalorder %s31, 3
      %p151 = por %p149, %p150
      %p152 = scmp.ne.s32.totalorder %s141, %s142
      %p153 = scmp.eq.s32.totalorder %s31, 0
      %p154 = por %p152, %p153
      %p155 = scmp.ne.s32.totalorder %s141, %s142
      %p156 = scmp.eq.s32.totalorder %s32, 3
      %p157 = por %p155, %p156
      %p159 = scmp.ne.s32.totalorder %s142, %s158
      %p160 = scmp.eq.s32.totalorder %s32, 0
      %p161 = por %p159, %p160
      %s163 = sadd.s32 %s162, 1
      %p166 = scmp.eq.s32.totalorder %s26, 3
      %p167 = scmp.ne.s32.totalorder %s162, %s164
      %p168 = scmp.eq.s32.totalorder %s26, 0
      %p169 = por %p167, %p168
      %p170 = scmp.ne.s32.totalorder %s162, %s164
      %p171 = scmp.eq.s32.totalorder %s31, 3
      %p172 = por %p170, %p171
      %p173 = scmp.ne.s32.totalorder %s164, %s165
      %p174 = scmp.eq.s32.totalorder %s31, 0
      %p175 = por %p173, %p174
      %p176 = scmp.ne.s32.totalorder %s164, %s165
      %p177 = scmp.eq.s32.totalorder %s32, 3
      %p178 = por %p176, %p177
      %p180 = scmp.ne.s32.totalorder %s165, %s179
      %p181 = scmp.eq.s32.totalorder %s32, 0
      %p182 = por %p180, %p181
      %s184 = sadd.s32 %s183, 1
      %p187 = scmp.eq.s32.totalorder %s26, 3
      %p188 = scmp.ne.s32.totalorder %s183, %s185
      %p189 = scmp.eq.s32.totalorder %s26, 0
      %p190 = por %p188, %p189
      %p191 = scmp.ne.s32.totalorder %s183, %s185
      %p192 = scmp.eq.s32.totalorder %s31, 3
      %p193 = por %p191, %p192
      %p194 = scmp.ne.s32.totalorder %s185, %s186
      %p195 = scmp.eq.s32.totalorder %s31, 0
      %p196 = por %p194, %p195
      %p197 = scmp.ne.s32.totalorder %s185, %s186
      %p198 = scmp.eq.s32.totalorder %s32, 3
      %p199 = por %p197, %p198
      %p201 = scmp.ne.s32.totalorder %s186, %s200
      %p202 = scmp.eq.s32.totalorder %s32, 0
      %p203 = por %p201, %p202
      %s205 = sadd.s32 %s204, 1
      %p208 = scmp.eq.s32.totalorder %s26, 3
      %p209 = scmp.ne.s32.totalorder %s204, %s206
      %p210 = scmp.eq.s32.totalorder %s26, 0
      %p211 = por %p209, %p210
      %p212 = scmp.ne.s32.totalorder %s204, %s206
      %p213 = scmp.eq.s32.totalorder %s31, 3
      %p214 = por %p212, %p213
      %p215 = scmp.ne.s32.totalorder %s206, %s207
      %p216 = scmp.eq.s32.totalorder %s31, 0
      %p217 = por %p215, %p216
      %p218 = scmp.ne.s32.totalorder %s206, %s207
      %p219 = scmp.eq.s32.totalorder %s32, 3
      %p220 = por %p218, %p219
      %p222 = scmp.ne.s32.totalorder %s207, %s221
      %p223 = scmp.eq.s32.totalorder %s32, 0
      %p224 = por %p222, %p223
      %s226 = sadd.s32 %s225, 1
      %p229 = scmp.eq.s32.totalorder %s26, 3
      %p230 = scmp.ne.s32.totalorder %s225, %s227
      %p231 = scmp.eq.s32.totalorder %s26, 0
      %p232 = por %p230, %p231
      %p233 = scmp.ne.s32.totalorder %s225, %s227
      %p234 = scmp.eq.s32.totalorder %s31, 3
      %p235 = por %p233, %p234
      %p236 = scmp.ne.s32.totalorder %s227, %s228
      %p237 = scmp.eq.s32.totalorder %s31, 0
      %p238 = por %p236, %p237
      %p239 = scmp.ne.s32.totalorder %s227, %s228
      %p240 = scmp.eq.s32.totalorder %s32, 3
      %p241 = por %p239, %p240
      %p243 = scmp.ne.s32.totalorder %s228, %s242
      %p244 = scmp.eq.s32.totalorder %s32, 0
      %p245 = por %p243, %p244
      %s247 = sadd.s32 %s246, 1
      %p250 = scmp.eq.s32.totalorder %s26, 3
      %p251 = scmp.ne.s32.totalorder %s246, %s248
      %p252 = scmp.eq.s32.totalorder %s26, 0
      %p253 = por %p251, %p252
      %p254 = scmp.ne.s32.totalorder %s246, %s248
      %p255 = scmp.eq.s32.totalorder %s31, 3
      %p256 = por %p254, %p255
      %p257 = scmp.ne.s32.totalorder %s248, %s249
      %p258 = scmp.eq.s32.totalorder %s31, 0
      %p259 = por %p257, %p258
      %p260 = scmp.ne.s32.totalorder %s248, %s249
      %p261 = scmp.eq.s32.totalorder %s32, 3
      %p262 = por %p260, %p261
      %p264 = scmp.ne.s32.totalorder %s249, %s263
      %p265 = scmp.eq.s32.totalorder %s32, 0
      %p266 = por %p264, %p265
      %s268 = sadd.s32 %s267, 1
      %p271 = scmp.eq.s32.totalorder %s26, 3
      %p272 = scmp.ne.s32.totalorder %s267, %s269
      %p273 = scmp.eq.s32.totalorder %s26, 0
      %p274 = por %p272, %p273
      %p275 = scmp.ne.s32.totalorder %s267, %s269
      %p276 = scmp.eq.s32.totalorder %s31, 3
      %p277 = por %p275, %p276
      %p278 = scmp.ne.s32.totalorder %s269, %s270
      %p279 = scmp.eq.s32.totalorder %s31, 0
      %p280 = por %p278, %p279
      %p281 = scmp.ne.s32.totalorder %s269, %s270
      %p282 = scmp.eq.s32.totalorder %s32, 3
      %p283 = por %p281, %p282
      %p285 = scmp.ne.s32.totalorder %s270, %s284
      %p286 = scmp.eq.s32.totalorder %s32, 0
      %p287 = por %p285, %p286
      %s288 = ssub.s32 %s33, %s45
      %s289 = ssub.s32 %s34, %s41
      %s290 = sor.u32 %s288, %s289
      %p291 = scmp.eq.s32.totalorder %s290, 0
      %s293 = sadd.s32 %s292, 1
      %s294 = scalar_select %p291, %s292, %s293
      %p297 = pneg %p291
      %p298 = scmp.eq.s32.totalorder %s26, 3
      %p299 = por %p297, %p298
      %p300 = scmp.ne.s32.totalorder %s292, %s295
      %p301 = scmp.eq.s32.totalorder %s26, 0
      %p302 = por %p300, %p301
      %p303 = scmp.ne.s32.totalorder %s292, %s295
      %p304 = scmp.eq.s32.totalorder %s31, 3
      %p305 = por %p303, %p304
      %p306 = scmp.ne.s32.totalorder %s295, %s296
      %p307 = scmp.eq.s32.totalorder %s31, 0
      %p308 = por %p306, %p307
      %p309 = scmp.ne.s32.totalorder %s295, %s296
      %p310 = scmp.eq.s32.totalorder %s32, 3
      %p311 = por %p309, %p310
      %p313 = scmp.ne.s32.totalorder %s296, %s312
      %p314 = scmp.eq.s32.totalorder %s32, 0
      %p315 = por %p313, %p314
      %p316 = scmp.le.s32.totalorder 1, %s26
      %p317 = scmp.lt.s32.totalorder %s26, 5
      %p318 = pnand %p316, %p317
      %p319 = pneg %p318
      // Predicated region
      $region9: #{tpu_custom_call.1} parent=5 // pred_check
        _
      $region10: #{tpu_custom_call.1} parent=5 // pred_check_branch
        %321 = sbr.rel (%p318) target = $region12
      $region11: #{tpu_custom_call.1} parent=5 // pred_region
        %s322 = ssub.s32 %s26, 1
        // Predicated region
        $region13: #{tpu_custom_call.1} parent=11 // pred_check
          %p323 = pneg %p175
        $region14: #{tpu_custom_call.1} parent=11 // pred_check_branch
          %325 = sbr.rel (%p323) target = $region16
        $region15: #{tpu_custom_call.1} parent=11 // pred_region
          %327 = vsyncadd [#allocation8], 0
          %s328 = sshll.u32 %s4, 4
          %s329 = int_to_ptr.hbm [resolvable:$true] %s328
          %s330 = sshll.u32 [#allocation9], 4
          %s331 = int_to_ptr.vmem [resolvable:$true] %s330
          %336 = dma.hbm_to_vmem [thread:$0]  %s329, 18432, %s331, [#allocation8], 128, 128, 8
        $region16: #{tpu_custom_call.1} parent=11 // pred_fallthru
          _
        // Predicated region
        $region17: #{tpu_custom_call.1} parent=11 // pred_check
          %p337 = pneg %p196
        $region18: #{tpu_custom_call.1} parent=11 // pred_check_branch
          %339 = sbr.rel (%p337) target = $region20
        $region19: #{tpu_custom_call.1} parent=11 // pred_region
          %341 = vsyncadd [#allocation11], 0
          %s342 = sshll.u32 %s5, 4
          %s343 = int_to_ptr.hbm [resolvable:$true] %s342
          %s344 = sshll.u32 [#allocation10], 4
          %s345 = int_to_ptr.vmem [resolvable:$true] %s344
          %350 = dma.hbm_to_vmem [thread:$0]  %s343, 18432, %s345, [#allocation11], 128, 128, 8
        $region20: #{tpu_custom_call.1} parent=11 // pred_fallthru
          _
        // Predicated region
        $region21: #{tpu_custom_call.1} parent=11 // pred_check
          %p351 = pneg %p217
        $region22: #{tpu_custom_call.1} parent=11 // pred_check_branch
          %353 = sbr.rel (%p351) target = $region24
        $region23: #{tpu_custom_call.1} parent=11 // pred_region
          _
        $region24: #{tpu_custom_call.1} parent=11 // pred_fallthru
          _
        // Predicated region
        $region25: #{tpu_custom_call.1} parent=11 // pred_check
          %p354 = pneg %p238
        $region26: #{tpu_custom_call.1} parent=11 // pred_check_branch
          %356 = sbr.rel (%p354) target = $region28
        $region27: #{tpu_custom_call.1} parent=11 // pred_region
          %358 = vsyncadd [#allocation11], 0
          %s359 = sshll.u32 %s7, 4
          %s360 = int_to_ptr.hbm [resolvable:$true] %s359
          %s361 = sshll.u32 [#allocation12], 4
          %s362 = int_to_ptr.vmem [resolvable:$true] %s361
          %367 = dma.hbm_to_vmem [thread:$0]  %s360, 9216, %s362, [#allocation11], 64, 64, 4
        $region28: #{tpu_custom_call.1} parent=11 // pred_fallthru
          _
        // Predicated region
        $region29: #{tpu_custom_call.1} parent=11 // pred_check
          %p368 = pneg %p259
        $region30: #{tpu_custom_call.1} parent=11 // pred_check_branch
          %370 = sbr.rel (%p368) target = $region32
        $region31: #{tpu_custom_call.1} parent=11 // pred_region
          _
        $region32: #{tpu_custom_call.1} parent=11 // pred_fallthru
          _
        // Predicated region
        $region33: #{tpu_custom_call.1} parent=11 // pred_check
          %p371 = pneg %p280
        $region34: #{tpu_custom_call.1} parent=11 // pred_check_branch
          %373 = sbr.rel (%p371) target = $region36
        $region35: #{tpu_custom_call.1} parent=11 // pred_region
          _
        $region36: #{tpu_custom_call.1} parent=11 // pred_fallthru
          _
      $region12: #{tpu_custom_call.1} parent=5 // pred_fallthru
        _
      %p374 = scmp.lt.s32.totalorder %s26, 4
      // Predicated region
      $region37: #{tpu_custom_call.1} parent=5 // pred_check
        %p375 = pneg %p374
      $region38: #{tpu_custom_call.1} parent=5 // pred_check_branch
        %377 = sbr.rel (%p375) target = $region40
      $region39: #{tpu_custom_call.1} parent=5 // pred_region
        // Predicated region
        $region41: #{tpu_custom_call.1} parent=39 // pred_check
          %p378 = pneg %p60
        $region42: #{tpu_custom_call.1} parent=39 // pred_check_branch
          %380 = sbr.rel (%p378) target = $region44
        $region43: #{tpu_custom_call.1} parent=39 // pred_region
          %s381 = sand.u32 %s50, 1
          %s382 = scalar_lea.sflag [#allocation5], %s381
          %s383 = sand.u32 %s50, 1
          %s384 = smul.addr %s383, 128
          %s385 = scalar_lea.vmem [#allocation4], %s384
          %s386 = smul.u32 8, %s34
          %388 = vsyncadd %s382, 0
          %s389 = smul.addr %s386, 2
          %s390 = smul.addr %s33, 32
          %s391 = sadd.s32 %s389, %s390
          %s392 = smul.addr %s391, 8
          %s393 = scalar_lea.hbm %s0, %s392
          %s394 = sshll.u32 %s393, 4
          %s395 = int_to_ptr.hbm [resolvable:$true] %s394
          %s396 = sshll.u32 %s385, 4
          %s397 = int_to_ptr.vmem [resolvable:$true] %s396
          %402 = dma.hbm_to_vmem [thread:$0]  %s395, 2048, %s397, %s382, 128, 128, 8
        $region44: #{tpu_custom_call.1} parent=39 // pred_fallthru
          _
        // Predicated region
        $region45: #{tpu_custom_call.1} parent=39 // pred_check
          %p403 = pneg %p88
        $region46: #{tpu_custom_call.1} parent=39 // pred_check_branch
          %405 = sbr.rel (%p403) target = $region48
        $region47: #{tpu_custom_call.1} parent=39 // pred_region
          %s406 = smul.u32 8, %s34
          %p407 = scmp.lt.s32.totalorder %s33, 1
          %s408 = scalar_select %p407, %s33, 1
          %p409 = scmp.lt.s32.totalorder %s406, 15
          %s410 = scalar_select %p409, %s406, 15
          %s411 = smul.addr %s410, 2
          %s412 = smul.addr %s408, 32
          %s413 = sadd.s32 %s411, %s412
          %s414 = smul.addr %s413, 4
          %s415 = scalar_lea.vmem %s1, %s414
          %s416 = smul.u32 8, %s34
        $region48: #{tpu_custom_call.1} parent=39 // pred_fallthru
          _
        // Predicated region
        $region49: #{tpu_custom_call.1} parent=39 // pred_check
          %p417 = pneg %p118
        $region50: #{tpu_custom_call.1} parent=39 // pred_check_branch
          %419 = sbr.rel (%p417) target = $region52
        $region51: #{tpu_custom_call.1} parent=39 // pred_region
          %s420 = smul.u32 %s33, 2
          %s421 = sadd.s32 %s420, %s34
          %p422 = scmp.lt.s32.totalorder %s421, 3
          %s423 = scalar_select %p422, %s421, 3
          %s424 = smul.addr %s423, 8
          %s425 = smul.addr %s424, 4
          %s426 = scalar_lea.vmem %s2, %s425
          %s427 = smul.u32 %s33, 2
          %s428 = sadd.s32 %s427, %s34
        $region52: #{tpu_custom_call.1} parent=39 // pred_fallthru
          _
        // Predicated region
        $region53: #{tpu_custom_call.1} parent=39 // pred_check
          %p429 = pneg %p148
        $region54: #{tpu_custom_call.1} parent=39 // pred_check_branch
          %431 = sbr.rel (%p429) target = $region56
        $region55: #{tpu_custom_call.1} parent=39 // pred_region
          %s432 = sand.u32 %s26, 1
          %s433 = scalar_lea.sflag [#allocation8], %s432
          %s434 = sand.u32 %s138, 1
          %s435 = smul.addr %s434, 32
          %s436 = scalar_lea.vmem [#allocation7], %s435
          %s437 = smul.u32 %s33, 2
          %s438 = sadd.s32 %s437, %s34
          %440 = vsyncadd %s433, 0
          %s441 = smul.addr %s438, 8
          %s442 = smul.addr %s441, 4
          %s443 = scalar_lea.hbm %s3, %s442
          %s444 = sshll.u32 %s443, 4
          %s445 = int_to_ptr.hbm [resolvable:$true] %s444
          %s446 = sshll.u32 %s436, 4
          %s447 = int_to_ptr.vmem [resolvable:$true] %s446
          %452 = dma.hbm_to_vmem [thread:$0]  %s445, 512, %s447, %s433, 64, 64, 4
        $region56: #{tpu_custom_call.1} parent=39 // pred_fallthru
          _
      $region40: #{tpu_custom_call.1} parent=5 // pred_fallthru
        _
      %p453 = scmp.le.s32.totalorder 1, %s26
      %p454 = scmp.lt.s32.totalorder %s26, 5
      %p455 = pnand %p453, %p454
      %p456 = pneg %p455
      // Predicated region
      $region57: #{tpu_custom_call.1} parent=5 // pred_check
        _
      $region58: #{tpu_custom_call.1} parent=5 // pred_check_branch
        %458 = sbr.rel (%p455) target = $region60
      $region59: #{tpu_custom_call.1} parent=5 // pred_region
        %s459 = ssub.s32 %s26, 1
        %s460 = sand.u32 %s53, 1
        %s461 = scalar_lea.sflag [#allocation5], %s460
        %s462 = sand.u32 %s53, 1
        %s463 = smul.addr %s462, 128
        %s464 = scalar_lea.vmem [#allocation4], %s463
        // Predicated region
        $region61: #{tpu_custom_call.1} parent=59 // pred_check
          %p465 = pneg %p66
        $region62: #{tpu_custom_call.1} parent=59 // pred_check_branch
          %467 = sbr.rel (%p465) target = $region64
        $region63: #{tpu_custom_call.1} parent=59 // pred_region
          %469 = dma.done %s461, 2048
        $region64: #{tpu_custom_call.1} parent=59 // pred_fallthru
          _
        %s470 = sand.u32 %s31, 1
        %s471 = scalar_lea.sflag [#allocation8], %s470
        %s472 = sand.u32 %s141, 1
        %s473 = smul.addr %s472, 32
        %s474 = scalar_lea.vmem [#allocation7], %s473
        // Predicated region
        $region65: #{tpu_custom_call.1} parent=59 // pred_check
          %p475 = pneg %p154
        $region66: #{tpu_custom_call.1} parent=59 // pred_check_branch
          %477 = sbr.rel (%p475) target = $region68
        $region67: #{tpu_custom_call.1} parent=59 // pred_region
          %479 = dma.done %s471, 512
        $region68: #{tpu_custom_call.1} parent=59 // pred_fallthru
          _
        // Predicated region
        $region69: #{tpu_custom_call.1} parent=59 // pred_check
          %p480 = pneg %p175
        $region70: #{tpu_custom_call.1} parent=59 // pred_check_branch
          %482 = sbr.rel (%p480) target = $region72
        $region71: #{tpu_custom_call.1} parent=59 // pred_region
          %484 = dma.done [#allocation8], 18432
        $region72: #{tpu_custom_call.1} parent=59 // pred_fallthru
          _
        // Predicated region
        $region73: #{tpu_custom_call.1} parent=59 // pred_check
          %p485 = pneg %p196
        $region74: #{tpu_custom_call.1} parent=59 // pred_check_branch
          %487 = sbr.rel (%p485) target = $region76
        $region75: #{tpu_custom_call.1} parent=59 // pred_region
          %489 = dma.done [#allocation11], 18432
        $region76: #{tpu_custom_call.1} parent=59 // pred_fallthru
          _
        // Predicated region
        $region77: #{tpu_custom_call.1} parent=59 // pred_check
          %p490 = pneg %p238
        $region78: #{tpu_custom_call.1} parent=59 // pred_check_branch
          %492 = sbr.rel (%p490) target = $region80
        $region79: #{tpu_custom_call.1} parent=59 // pred_region
          %494 = dma.done [#allocation11], 9216
        $region80: #{tpu_custom_call.1} parent=59 // pred_fallthru
          _
        %s495 = sand.u32 %s53, 1
        %s496 = scalar_lea.sflag [#allocation5], %s495
        %s497 = sand.u32 %s53, 1
        %s498 = smul.addr %s497, 128
        %s499 = scalar_lea.vmem [#allocation4], %s498
        %p500 = pneg %p66
        %p501 = pneg %p63
        %s502 = smul.u32 8, %s36
        %p503 = scmp.lt.s32.totalorder %s35, 1
        %s504 = scalar_select %p503, %s35, 1
        %p505 = scmp.lt.s32.totalorder %s502, 15
        %s506 = scalar_select %p505, %s502, 15
        %s507 = smul.addr %s506, 2
        %s508 = smul.addr %s504, 32
        %s509 = sadd.s32 %s507, %s508
        %s510 = smul.addr %s509, 4
        %s511 = scalar_lea.vmem %s1, %s510
        %p512 = pneg %p94
        %p513 = pneg %p91
        %s514 = smul.u32 %s35, 2
        %s515 = sadd.s32 %s514, %s36
        %p516 = scmp.lt.s32.totalorder %s515, 3
        %s517 = scalar_select %p516, %s515, 3
        %s518 = smul.addr %s517, 8
        %s519 = smul.addr %s518, 4
        %s520 = scalar_lea.vmem %s2, %s519
        %p521 = pneg %p124
        %p522 = pneg %p121
        %s523 = sand.u32 %s31, 1
        %s524 = scalar_lea.sflag [#allocation8], %s523
        %s525 = sand.u32 %s141, 1
        %s526 = smul.addr %s525, 32
        %s527 = scalar_lea.vmem [#allocation7], %s526
        %p528 = pneg %p154
        %p529 = pneg %p151
        %p530 = pneg %p175
        %p531 = pneg %p172
        %p532 = pneg %p196
        %p533 = pneg %p193
        %p534 = pneg %p217
        %p535 = pneg %p214
        %p536 = pneg %p238
        %p537 = pneg %p235
        %p538 = pneg %p259
        %p539 = pneg %p256
        %p540 = pneg %p280
        %p541 = pneg %p277
        %p542 = pneg %p308
        %p543 = pneg %p305
        %s544 = sand.u32 %s295, 1
        %s545 = scalar_lea.sflag [#allocation6], %s544
        %s546 = sand.u32 %s295, 1
        %s547 = smul.addr %s546, 128
        %s548 = scalar_lea.vmem [#allocation13], %s547
        %s549 = smul.u32 8, %s36
        %s550 = smul.u32 8, %s36
        %p551 = scmp.lt.s32.totalorder %s35, 1
        %s552 = scalar_select %p551, %s35, 1
        %p553 = scmp.lt.s32.totalorder %s550, 15
        %s554 = scalar_select %p553, %s550, 15
        %s555 = smul.addr %s554, 2
        %s556 = smul.addr %s552, 32
        %s557 = sadd.s32 %s555, %s556
        %s558 = smul.addr %s557, 4
        %s559 = scalar_lea.vmem %s1, %s558
        %s560 = smul.u32 8, %s36
        %s561 = smul.u32 %s35, 2
        %s562 = sadd.s32 %s561, %s36
        %p563 = scmp.lt.s32.totalorder %s562, 3
        %s564 = scalar_select %p563, %s562, 3
        %s565 = smul.addr %s564, 8
        %s566 = smul.addr %s565, 4
        %s567 = scalar_lea.vmem %s2, %s566
        %s568 = smul.u32 %s35, 2
        %s569 = sadd.s32 %s568, %s36
        %s570 = smul.u32 %s35, 2
        %s571 = sadd.s32 %s570, %s36
        %s572 = smul.u32 8, %s36
        %vm574 = vcmask 1040384
        %vm575 = vsmask.f32 256
        %vm576 = vmand %vm574, %vm575
        %v577 = vld [vmem:[#allocation2] sm:$0x1]
        %v578 = vsel %vm576, 0, %v577
        %579 = vst [vmem:[#allocation2] sm:$0x1] %v578
        %v580 = vld [vmem:[#allocation2 + $0xc] sm:$0x1]
        %v581 = vsel %vm576, 0, %v580
        %582 = vst [vmem:[#allocation2 + $0xc] sm:$0x1] %v581
        %v583 = vld [vmem:[#allocation2 + $0x18] sm:$0x1]
        %v584 = vsel %vm576, 0, %v583
        %585 = vst [vmem:[#allocation2 + $0x18] sm:$0x1] %v584
        %v586 = vld [vmem:[#allocation2 + $0x24] sm:$0x1]
        %v587 = vsel %vm576, 0, %v586
        %588 = vst [vmem:[#allocation2 + $0x24] sm:$0x1] %v587
        %v589 = vld [vmem:[#allocation2 + $0x30] sm:$0x1]
        %v590 = vsel %vm576, 0, %v589
        %591 = vst [vmem:[#allocation2 + $0x30] sm:$0x1] %v590
        %v592 = vld [vmem:[#allocation2 + $0x3c] sm:$0x1]
        %v593 = vsel %vm576, 0, %v592
        %594 = vst [vmem:[#allocation2 + $0x3c] sm:$0x1] %v593
        %v595 = vld [vmem:[#allocation2 + $0x48] sm:$0x1]
        %v596 = vsel %vm576, 0, %v595
        %597 = vst [vmem:[#allocation2 + $0x48] sm:$0x1] %v596
        %v598 = vld [vmem:[#allocation2 + $0x54] sm:$0x1]
        %v599 = vsel %vm576, 0, %v598
        %600 = vst [vmem:[#allocation2 + $0x54] sm:$0x1] %v599
        %v601 = vld [vmem:[#allocation2 + $0x60] sm:$0x1]
        %v602 = vsel %vm576, 0, %v601
        %603 = vst [vmem:[#allocation2 + $0x60] sm:$0x1] %v602
        %v604 = vld [vmem:[#allocation2 + $0x6c] sm:$0x1]
        %v605 = vsel %vm576, 0, %v604
        %606 = vst [vmem:[#allocation2 + $0x6c] sm:$0x1] %v605
        %v607 = vld [vmem:[#allocation2 + $0x78] sm:$0x1]
        %v608 = vsel %vm576, 0, %v607
        %609 = vst [vmem:[#allocation2 + $0x78] sm:$0x1] %v608
        %v610 = vld [vmem:[#allocation2 + $0x84] sm:$0x1]
        %v611 = vsel %vm576, 0, %v610
        %612 = vst [vmem:[#allocation2 + $0x84] sm:$0x1] %v611
        %vm613 = vsmask.f32 7938
        %vm614 = vmand %vm574, %vm613
        %v615 = vld [vmem:[#allocation2 + $0x8] sm:$0x1]
        %v616 = vsel %vm614, 0, %v615
        %617 = vst [vmem:[#allocation2 + $0x8] sm:$0x1] %v616
        %v618 = vld [vmem:[#allocation2 + $0x14] sm:$0x1]
        %v619 = vsel %vm614, 0, %v618
        %620 = vst [vmem:[#allocation2 + $0x14] sm:$0x1] %v619
        %v621 = vld [vmem:[#allocation2 + $0x20] sm:$0x1]
        %v622 = vsel %vm614, 0, %v621
        %623 = vst [vmem:[#allocation2 + $0x20] sm:$0x1] %v622
        %v624 = vld [vmem:[#allocation2 + $0x2c] sm:$0x1]
        %v625 = vsel %vm614, 0, %v624
        %626 = vst [vmem:[#allocation2 + $0x2c] sm:$0x1] %v625
        %v627 = vld [vmem:[#allocation2 + $0x38] sm:$0x1]
        %v628 = vsel %vm614, 0, %v627
        %629 = vst [vmem:[#allocation2 + $0x38] sm:$0x1] %v628
        %v630 = vld [vmem:[#allocation2 + $0x44] sm:$0x1]
        %v631 = vsel %vm614, 0, %v630
        %632 = vst [vmem:[#allocation2 + $0x44] sm:$0x1] %v631
        %v633 = vld [vmem:[#allocation2 + $0x50] sm:$0x1]
        %v634 = vsel %vm614, 0, %v633
        %635 = vst [vmem:[#allocation2 + $0x50] sm:$0x1] %v634
        %v636 = vld [vmem:[#allocation2 + $0x5c] sm:$0x1]
        %v637 = vsel %vm614, 0, %v636
        %638 = vst [vmem:[#allocation2 + $0x5c] sm:$0x1] %v637
        %v639 = vld [vmem:[#allocation2 + $0x68] sm:$0x1]
        %v640 = vsel %vm614, 0, %v639
        %641 = vst [vmem:[#allocation2 + $0x68] sm:$0x1] %v640
        %v642 = vld [vmem:[#allocation2 + $0x74] sm:$0x1]
        %v643 = vsel %vm614, 0, %v642
        %644 = vst [vmem:[#allocation2 + $0x74] sm:$0x1] %v643
        %v645 = vld [vmem:[#allocation2 + $0x80] sm:$0x1]
        %v646 = vsel %vm614, 0, %v645
        %647 = vst [vmem:[#allocation2 + $0x80] sm:$0x1] %v646
        %v648 = vld [vmem:[#allocation2 + $0x8c] sm:$0x1]
        %v649 = vsel %vm614, 0, %v648
        %650 = vst [vmem:[#allocation2 + $0x8c] sm:$0x1] %v649
        %v651 = vld [vmem:[#allocation3] sm:$0x1]
        %v652 = vsel %vm576, 0, %v651
        %653 = vst [vmem:[#allocation3] sm:$0x1] %v652
        %v654 = vld [vmem:[#allocation3 + $0xc] sm:$0x1]
        %v655 = vsel %vm576, 0, %v654
        %656 = vst [vmem:[#allocation3 + $0xc] sm:$0x1] %v655
        %v657 = vld [vmem:[#allocation3 + $0x18] sm:$0x1]
        %v658 = vsel %vm576, 0, %v657
        %659 = vst [vmem:[#allocation3 + $0x18] sm:$0x1] %v658
        %v660 = vld [vmem:[#allocation3 + $0x24] sm:$0x1]
        %v661 = vsel %vm576, 0, %v660
        %662 = vst [vmem:[#allocation3 + $0x24] sm:$0x1] %v661
        %v663 = vld [vmem:[#allocation3 + $0x30] sm:$0x1]
        %v664 = vsel %vm576, 0, %v663
        %665 = vst [vmem:[#allocation3 + $0x30] sm:$0x1] %v664
        %v666 = vld [vmem:[#allocation3 + $0x3c] sm:$0x1]
        %v667 = vsel %vm576, 0, %v666
        %668 = vst [vmem:[#allocation3 + $0x3c] sm:$0x1] %v667
        %v669 = vld [vmem:[#allocation3 + $0x48] sm:$0x1]
        %v670 = vsel %vm576, 0, %v669
        %671 = vst [vmem:[#allocation3 + $0x48] sm:$0x1] %v670
        %v672 = vld [vmem:[#allocation3 + $0x54] sm:$0x1]
        %v673 = vsel %vm576, 0, %v672
        %674 = vst [vmem:[#allocation3 + $0x54] sm:$0x1] %v673
        %v675 = vld [vmem:[#allocation3 + $0x60] sm:$0x1]
        %v676 = vsel %vm576, 0, %v675
        %677 = vst [vmem:[#allocation3 + $0x60] sm:$0x1] %v676
        %v678 = vld [vmem:[#allocation3 + $0x6c] sm:$0x1]
        %v679 = vsel %vm576, 0, %v678
        %680 = vst [vmem:[#allocation3 + $0x6c] sm:$0x1] %v679
        %v681 = vld [vmem:[#allocation3 + $0x78] sm:$0x1]
        %v682 = vsel %vm576, 0, %v681
        %683 = vst [vmem:[#allocation3 + $0x78] sm:$0x1] %v682
        %v684 = vld [vmem:[#allocation3 + $0x84] sm:$0x1]
        %v685 = vsel %vm576, 0, %v684
        %686 = vst [vmem:[#allocation3 + $0x84] sm:$0x1] %v685
        %v687 = vld [vmem:[#allocation3 + $0x8] sm:$0x1]
        %v688 = vsel %vm614, 0, %v687
        %689 = vst [vmem:[#allocation3 + $0x8] sm:$0x1] %v688
        %v690 = vld [vmem:[#allocation3 + $0x14] sm:$0x1]
        %v691 = vsel %vm614, 0, %v690
        %692 = vst [vmem:[#allocation3 + $0x14] sm:$0x1] %v691
        %v693 = vld [vmem:[#allocation3 + $0x20] sm:$0x1]
        %v694 = vsel %vm614, 0, %v693
        %695 = vst [vmem:[#allocation3 + $0x20] sm:$0x1] %v694
        %v696 = vld [vmem:[#allocation3 + $0x2c] sm:$0x1]
        %v697 = vsel %vm614, 0, %v696
        %698 = vst [vmem:[#allocation3 + $0x2c] sm:$0x1] %v697
        %v699 = vld [vmem:[#allocation3 + $0x38] sm:$0x1]
        %v700 = vsel %vm614, 0, %v699
        %701 = vst [vmem:[#allocation3 + $0x38] sm:$0x1] %v700
        %v702 = vld [vmem:[#allocation3 + $0x44] sm:$0x1]
        %v703 = vsel %vm614, 0, %v702
        %704 = vst [vmem:[#allocation3 + $0x44] sm:$0x1] %v703
        %v705 = vld [vmem:[#allocation3 + $0x50] sm:$0x1]
        %v706 = vsel %vm614, 0, %v705
        %707 = vst [vmem:[#allocation3 + $0x50] sm:$0x1] %v706
        %v708 = vld [vmem:[#allocation3 + $0x5c] sm:$0x1]
        %v709 = vsel %vm614, 0, %v708
        %710 = vst [vmem:[#allocation3 + $0x5c] sm:$0x1] %v709
        %v711 = vld [vmem:[#allocation3 + $0x68] sm:$0x1]
        %v712 = vsel %vm614, 0, %v711
        %713 = vst [vmem:[#allocation3 + $0x68] sm:$0x1] %v712
        %v714 = vld [vmem:[#allocation3 + $0x74] sm:$0x1]
        %v715 = vsel %vm614, 0, %v714
        %716 = vst [vmem:[#allocation3 + $0x74] sm:$0x1] %v715
        %v717 = vld [vmem:[#allocation3 + $0x80] sm:$0x1]
        %v718 = vsel %vm614, 0, %v717
        %719 = vst [vmem:[#allocation3 + $0x80] sm:$0x1] %v718
        %v720 = vld [vmem:[#allocation3 + $0x8c] sm:$0x1]
        %v721 = vsel %vm614, 0, %v720
        %722 = vst [vmem:[#allocation3 + $0x8c] sm:$0x1] %v721
        %v723 = vld [vmem:[%s567] sm:$0xf]
        %v724 = vld [vmem:[%s567 + $0x4] sm:$0xf]
        %v725 = vld [vmem:[%s567 + $0x8] sm:$0xf]
        %v726 = vld [vmem:[%s567 + $0xc] sm:$0xf]
        %vm727 = vsmask.f32 4368
        %vm728 = vmor %vm575, %vm727
        %v730 = vshrl.u32 %v723, 16
        %v732 = vrot.slane %v730, 7
        %v733 = vshll.u32 %v723, 16
        %v735 = vor.u32 %v732, %v733
        %v736 = vrot.slane %v732, 4
        %v738 = vshrl.u32 %v724, 16
        %v740 = vrot.slane %v738, 7
        %v741 = vshll.u32 %v724, 16
        %v743 = vor.u32 %v740, %v741
        %v744 = vsel %vm728, %v736, %v743
        %v745 = vrot.slane %v740, 4
        %v747 = vshrl.u32 %v725, 16
        %v749 = vrot.slane %v747, 7
        %v750 = vshll.u32 %v725, 16
        %v752 = vor.u32 %v749, %v750
        %v753 = vrot.slane %v749, 4
        %v755 = vshrl.u32 %v726, 16
        %v757 = vrot.slane %v755, 7
        %v758 = vshll.u32 %v726, 16
        %v760 = vor.u32 %v757, %v758
        %v761 = vsel %vm728, %v753, %v760
        %v762 = vrot.slane %v757, 4
        %vm769 = vcmask 1043456
        %vm770 = vmand %vm769, %vm613
        %v771 = vld [vmem:[#allocation2] sm:$0xf]
        %v772 = vsel %vm770, %v735, %v771
        %773 = vst [vmem:[#allocation2] sm:$0xf] %v772
        %774 = vst [vmem:[#allocation2 + $0x4] sm:$0xf] %v744
        %v775 = vld [vmem:[#allocation2 + $0x8] sm:$0x1]
        %v776 = vsel %vm576, %v745, %v775
        %777 = vst [vmem:[#allocation2 + $0x8] sm:$0x1] %v776
        %v778 = vld [vmem:[#allocation2 + $0xc] sm:$0xf]
        %v779 = vsel %vm770, %v752, %v778
        %780 = vst [vmem:[#allocation2 + $0xc] sm:$0xf] %v779
        %781 = vst [vmem:[#allocation2 + $0x10] sm:$0xf] %v761
        %v782 = vld [vmem:[#allocation2 + $0x14] sm:$0x1]
        %v783 = vsel %vm576, %v762, %v782
        %784 = vst [vmem:[#allocation2 + $0x14] sm:$0x1] %v783
        %s785 = scalar_lea.vmem %s567, 16
        %v786 = vld [vmem:[%s785] sm:$0xf]
        %v787 = vld [vmem:[%s785 + $0x4] sm:$0xf]
        %v788 = vld [vmem:[%s785 + $0x8] sm:$0xf]
        %v789 = vld [vmem:[%s785 + $0xc] sm:$0xf]
        %v791 = vshrl.u32 %v786, 16
        %v793 = vrot.slane %v791, 7
        %v794 = vshll.u32 %v786, 16
        %v796 = vor.u32 %v793, %v794
        %v797 = vrot.slane %v793, 4
        %v799 = vshrl.u32 %v787, 16
        %v801 = vrot.slane %v799, 7
        %v802 = vshll.u32 %v787, 16
        %v804 = vor.u32 %v801, %v802
        %v805 = vsel %vm728, %v797, %v804
        %v806 = vrot.slane %v801, 4
        %v808 = vshrl.u32 %v788, 16
        %v810 = vrot.slane %v808, 7
        %v811 = vshll.u32 %v788, 16
        %v813 = vor.u32 %v810, %v811
        %v814 = vrot.slane %v810, 4
        %v816 = vshrl.u32 %v789, 16
        %v818 = vrot.slane %v816, 7
        %v819 = vshll.u32 %v789, 16
        %v821 = vor.u32 %v818, %v819
        %v822 = vsel %vm728, %v814, %v821
        %v823 = vrot.slane %v818, 4
        %s830 = scalar_lea.vmem [#allocation2], 120
        %v831 = vld [vmem:[%s830] sm:$0xf]
        %v832 = vsel %vm770, %v796, %v831
        %833 = vst [vmem:[%s830] sm:$0xf] %v832
        %834 = vst [vmem:[%s830 + $0x4] sm:$0xf] %v805
        %v835 = vld [vmem:[%s830 + $0x8] sm:$0x1]
        %v836 = vsel %vm576, %v806, %v835
        %837 = vst [vmem:[%s830 + $0x8] sm:$0x1] %v836
        %v838 = vld [vmem:[%s830 + $0xc] sm:$0xf]
        %v839 = vsel %vm770, %v813, %v838
        %840 = vst [vmem:[%s830 + $0xc] sm:$0xf] %v839
        %841 = vst [vmem:[%s830 + $0x10] sm:$0xf] %v822
        %v842 = vld [vmem:[%s830 + $0x14] sm:$0x1]
        %v843 = vsel %vm576, %v823, %v842
        %844 = vst [vmem:[%s830 + $0x14] sm:$0x1] %v843
        %v845 = vld [vmem:[%s474] sm:$0xf]
        %v846 = vld [vmem:[%s474 + $0x4] sm:$0xf]
        %v847 = vld [vmem:[%s474 + $0x8] sm:$0xf]
        %v848 = vld [vmem:[%s474 + $0xc] sm:$0xf]
        %v850 = vshrl.u32 %v845, 16
        %v852 = vrot.slane %v850, 7
        %v853 = vshll.u32 %v845, 16
        %v855 = vor.u32 %v852, %v853
        %v856 = vrot.slane %v852, 4
        %v858 = vshrl.u32 %v846, 16
        %v860 = vrot.slane %v858, 7
        %v861 = vshll.u32 %v846, 16
        %v863 = vor.u32 %v860, %v861
        %v864 = vsel %vm728, %v856, %v863
        %v865 = vrot.slane %v860, 4
        %v867 = vshrl.u32 %v847, 16
        %v869 = vrot.slane %v867, 7
        %v870 = vshll.u32 %v847, 16
        %v872 = vor.u32 %v869, %v870
        %v873 = vrot.slane %v869, 4
        %v875 = vshrl.u32 %v848, 16
        %v877 = vrot.slane %v875, 7
        %v878 = vshll.u32 %v848, 16
        %v880 = vor.u32 %v877, %v878
        %v881 = vsel %vm728, %v873, %v880
        %v882 = vrot.slane %v877, 4
        %v889 = vld [vmem:[#allocation3] sm:$0xf]
        %v890 = vsel %vm770, %v855, %v889
        %891 = vst [vmem:[#allocation3] sm:$0xf] %v890
        %892 = vst [vmem:[#allocation3 + $0x4] sm:$0xf] %v864
        %v893 = vld [vmem:[#allocation3 + $0x8] sm:$0x1]
        %v894 = vsel %vm576, %v865, %v893
        %895 = vst [vmem:[#allocation3 + $0x8] sm:$0x1] %v894
        %v896 = vld [vmem:[#allocation3 + $0xc] sm:$0xf]
        %v897 = vsel %vm770, %v872, %v896
        %898 = vst [vmem:[#allocation3 + $0xc] sm:$0xf] %v897
        %899 = vst [vmem:[#allocation3 + $0x10] sm:$0xf] %v881
        %v900 = vld [vmem:[#allocation3 + $0x14] sm:$0x1]
        %v901 = vsel %vm576, %v882, %v900
        %902 = vst [vmem:[#allocation3 + $0x14] sm:$0x1] %v901
        %s903 = scalar_lea.vmem %s474, 16 [#allocation7]
        %v904 = vld [vmem:[%s903] sm:$0xf]
        %v905 = vld [vmem:[%s903 + $0x4] sm:$0xf]
        %v906 = vld [vmem:[%s903 + $0x8] sm:$0xf]
        %v907 = vld [vmem:[%s903 + $0xc] sm:$0xf]
        %v909 = vshrl.u32 %v904, 16
        %v911 = vrot.slane %v909, 7
        %v912 = vshll.u32 %v904, 16
        %v914 = vor.u32 %v911, %v912
        %v915 = vrot.slane %v911, 4
        %v917 = vshrl.u32 %v905, 16
        %v919 = vrot.slane %v917, 7
        %v920 = vshll.u32 %v905, 16
        %v922 = vor.u32 %v919, %v920
        %v923 = vsel %vm728, %v915, %v922
        %v924 = vrot.slane %v919, 4
        %v926 = vshrl.u32 %v906, 16
        %v928 = vrot.slane %v926, 7
        %v929 = vshll.u32 %v906, 16
        %v931 = vor.u32 %v928, %v929
        %v932 = vrot.slane %v928, 4
        %v934 = vshrl.u32 %v907, 16
        %v936 = vrot.slane %v934, 7
        %v937 = vshll.u32 %v907, 16
        %v939 = vor.u32 %v936, %v937
        %v940 = vsel %vm728, %v932, %v939
        %v941 = vrot.slane %v936, 4
        %s948 = scalar_lea.vmem [#allocation3], 120
        %v949 = vld [vmem:[%s948] sm:$0xf]
        %v950 = vsel %vm770, %v914, %v949
        %951 = vst [vmem:[%s948] sm:$0xf] %v950
        %952 = vst [vmem:[%s948 + $0x4] sm:$0xf] %v923
        %v953 = vld [vmem:[%s948 + $0x8] sm:$0x1]
        %v954 = vsel %vm576, %v924, %v953
        %955 = vst [vmem:[%s948 + $0x8] sm:$0x1] %v954
        %v956 = vld [vmem:[%s948 + $0xc] sm:$0xf]
        %v957 = vsel %vm770, %v931, %v956
        %958 = vst [vmem:[%s948 + $0xc] sm:$0xf] %v957
        %959 = vst [vmem:[%s948 + $0x10] sm:$0xf] %v940
        %v960 = vld [vmem:[%s948 + $0x14] sm:$0x1]
        %v961 = vsel %vm576, %v941, %v960
        %962 = vst [vmem:[%s948 + $0x14] sm:$0x1] %v961
        %v963 = vld [vmem:[%s464] sm:$0xff]
        %v964 = vld [vmem:[%s464 + $0x8] sm:$0xff]
        %v965 = vld [vmem:[%s464 + $0x10] sm:$0xff]
        %v966 = vld [vmem:[%s464 + $0x18] sm:$0xff]
        %v967 = vld [vmem:[%s464 + $0x20] sm:$0xff]
        %v968 = vld [vmem:[%s464 + $0x28] sm:$0xff]
        %v969 = vld [vmem:[%s464 + $0x30] sm:$0xff]
        %v970 = vld [vmem:[%s464 + $0x38] sm:$0xff]
        %v971 = vld [vmem:[%s464 + $0x40] sm:$0xff]
        %v972 = vld [vmem:[%s464 + $0x48] sm:$0xff]
        %v973 = vld [vmem:[%s464 + $0x50] sm:$0xff]
        %v974 = vld [vmem:[%s464 + $0x58] sm:$0xff]
        %v975 = vld [vmem:[%s464 + $0x60] sm:$0xff]
        %v976 = vld [vmem:[%s464 + $0x68] sm:$0xff]
        %v977 = vld [vmem:[%s464 + $0x70] sm:$0xff]
        %v978 = vld [vmem:[%s464 + $0x78] sm:$0xff]
        %v979 = vpack.c.bf16 %v963, %v963
        %v980 = vpack.c.bf16 %v964, %v964
        %v981 = vpack.c.bf16 %v965, %v965
        %v982 = vpack.c.bf16 %v966, %v966
        %v983 = vpack.c.bf16 %v967, %v967
        %v984 = vpack.c.bf16 %v968, %v968
        %v985 = vpack.c.bf16 %v969, %v969
        %v986 = vpack.c.bf16 %v970, %v970
        %v987 = vpack.c.bf16 %v971, %v971
        %v988 = vpack.c.bf16 %v972, %v972
        %v989 = vpack.c.bf16 %v973, %v973
        %v990 = vpack.c.bf16 %v974, %v974
        %v991 = vpack.c.bf16 %v975, %v975
        %v992 = vpack.c.bf16 %v976, %v976
        %v993 = vpack.c.bf16 %v977, %v977
        %v994 = vpack.c.bf16 %v978, %v978
        %v996 = vshrl.u32 %v979, 16
        %v998 = vrot.slane %v996, 7
        %v999 = vshll.u32 %v979, 16
        %v1001 = vor.u32 %v998, %v999
        %v1002 = vrot.slane %v998, 4
        %v1004 = vshrl.u32 %v980, 16
        %v1006 = vrot.slane %v1004, 7
        %v1007 = vshll.u32 %v980, 16
        %v1009 = vor.u32 %v1006, %v1007
        %v1010 = vsel %vm728, %v1002, %v1009
        %v1011 = vrot.slane %v1006, 4
        %v1013 = vshrl.u32 %v981, 16
        %v1015 = vrot.slane %v1013, 7
        %v1016 = vshll.u32 %v981, 16
        %v1018 = vor.u32 %v1015, %v1016
        %v1019 = vrot.slane %v1015, 4
        %v1021 = vshrl.u32 %v982, 16
        %v1023 = vrot.slane %v1021, 7
        %v1024 = vshll.u32 %v982, 16
        %v1026 = vor.u32 %v1023, %v1024
        %v1027 = vsel %vm728, %v1019, %v1026
        %v1028 = vrot.slane %v1023, 4
        %v1030 = vshrl.u32 %v983, 16
        %v1032 = vrot.slane %v1030, 7
        %v1033 = vshll.u32 %v983, 16
        %v1035 = vor.u32 %v1032, %v1033
        %v1036 = vrot.slane %v1032, 4
        %v1038 = vshrl.u32 %v984, 16
        %v1040 = vrot.slane %v1038, 7
        %v1041 = vshll.u32 %v984, 16
        %v1043 = vor.u32 %v1040, %v1041
        %v1044 = vsel %vm728, %v1036, %v1043
        %v1045 = vrot.slane %v1040, 4
        %v1047 = vshrl.u32 %v985, 16
        %v1049 = vrot.slane %v1047, 7
        %v1050 = vshll.u32 %v985, 16
        %v1052 = vor.u32 %v1049, %v1050
        %v1053 = vrot.slane %v1049, 4
        %v1055 = vshrl.u32 %v986, 16
        %v1057 = vrot.slane %v1055, 7
        %v1058 = vshll.u32 %v986, 16
        %v1060 = vor.u32 %v1057, %v1058
        %v1061 = vsel %vm728, %v1053, %v1060
        %v1062 = vrot.slane %v1057, 4
        %v1064 = vshrl.u32 %v987, 16
        %v1066 = vrot.slane %v1064, 7
        %v1067 = vshll.u32 %v987, 16
        %v1069 = vor.u32 %v1066, %v1067
        %v1070 = vrot.slane %v1066, 4
        %v1072 = vshrl.u32 %v988, 16
        %v1074 = vrot.slane %v1072, 7
        %v1075 = vshll.u32 %v988, 16
        %v1077 = vor.u32 %v1074, %v1075
        %v1078 = vsel %vm728, %v1070, %v1077
        %v1079 = vrot.slane %v1074, 4
        %v1081 = vshrl.u32 %v989, 16
        %v1083 = vrot.slane %v1081, 7
        %v1084 = vshll.u32 %v989, 16
        %v1086 = vor.u32 %v1083, %v1084
        %v1087 = vrot.slane %v1083, 4
        %v1089 = vshrl.u32 %v990, 16
        %v1091 = vrot.slane %v1089, 7
        %v1092 = vshll.u32 %v990, 16
        %v1094 = vor.u32 %v1091, %v1092
        %v1095 = vsel %vm728, %v1087, %v1094
        %v1096 = vrot.slane %v1091, 4
        %v1098 = vshrl.u32 %v991, 16
        %v1100 = vrot.slane %v1098, 7
        %v1101 = vshll.u32 %v991, 16
        %v1103 = vor.u32 %v1100, %v1101
        %v1104 = vrot.slane %v1100, 4
        %v1106 = vshrl.u32 %v992, 16
        %v1108 = vrot.slane %v1106, 7
        %v1109 = vshll.u32 %v992, 16
        %v1111 = vor.u32 %v1108, %v1109
        %v1112 = vsel %vm728, %v1104, %v1111
        %v1113 = vrot.slane %v1108, 4
        %v1115 = vshrl.u32 %v993, 16
        %v1117 = vrot.slane %v1115, 7
        %v1118 = vshll.u32 %v993, 16
        %v1120 = vor.u32 %v1117, %v1118
        %v1121 = vrot.slane %v1117, 4
        %v1123 = vshrl.u32 %v994, 16
        %v1125 = vrot.slane %v1123, 7
        %v1126 = vshll.u32 %v994, 16
        %v1128 = vor.u32 %v1125, %v1126
        %v1129 = vsel %vm728, %v1121, %v1128
        %v1130 = vrot.slane %v1125, 4
        %s1155 = scalar_lea.vmem [#allocation2], 24
        %v1156 = vld [vmem:[%s1155] sm:$0xf]
        %v1157 = vsel %vm770, %v1001, %v1156
        %1158 = vst [vmem:[%s1155] sm:$0xf] %v1157
        %1159 = vst [vmem:[%s1155 + $0x4] sm:$0xf] %v1010
        %v1160 = vld [vmem:[%s1155 + $0x8] sm:$0x1]
        %v1161 = vsel %vm576, %v1011, %v1160
        %1162 = vst [vmem:[%s1155 + $0x8] sm:$0x1] %v1161
        %v1163 = vld [vmem:[%s1155 + $0xc] sm:$0xf]
        %v1164 = vsel %vm770, %v1018, %v1163
        %1165 = vst [vmem:[%s1155 + $0xc] sm:$0xf] %v1164
        %1166 = vst [vmem:[%s1155 + $0x10] sm:$0xf] %v1027
        %v1167 = vld [vmem:[%s1155 + $0x14] sm:$0x1]
        %v1168 = vsel %vm576, %v1028, %v1167
        %1169 = vst [vmem:[%s1155 + $0x14] sm:$0x1] %v1168
        %v1170 = vld [vmem:[%s1155 + $0x18] sm:$0xf]
        %v1171 = vsel %vm770, %v1035, %v1170
        %1172 = vst [vmem:[%s1155 + $0x18] sm:$0xf] %v1171
        %1173 = vst [vmem:[%s1155 + $0x1c] sm:$0xf] %v1044
        %v1174 = vld [vmem:[%s1155 + $0x20] sm:$0x1]
        %v1175 = vsel %vm576, %v1045, %v1174
        %1176 = vst [vmem:[%s1155 + $0x20] sm:$0x1] %v1175
        %v1177 = vld [vmem:[%s1155 + $0x24] sm:$0xf]
        %v1178 = vsel %vm770, %v1052, %v1177
        %1179 = vst [vmem:[%s1155 + $0x24] sm:$0xf] %v1178
        %1180 = vst [vmem:[%s1155 + $0x28] sm:$0xf] %v1061
        %v1181 = vld [vmem:[%s1155 + $0x2c] sm:$0x1]
        %v1182 = vsel %vm576, %v1062, %v1181
        %1183 = vst [vmem:[%s1155 + $0x2c] sm:$0x1] %v1182
        %v1184 = vld [vmem:[%s1155 + $0x30] sm:$0xf]
        %v1185 = vsel %vm770, %v1069, %v1184
        %1186 = vst [vmem:[%s1155 + $0x30] sm:$0xf] %v1185
        %1187 = vst [vmem:[%s1155 + $0x34] sm:$0xf] %v1078
        %v1188 = vld [vmem:[%s1155 + $0x38] sm:$0x1]
        %v1189 = vsel %vm576, %v1079, %v1188
        %1190 = vst [vmem:[%s1155 + $0x38] sm:$0x1] %v1189
        %v1191 = vld [vmem:[%s1155 + $0x3c] sm:$0xf]
        %v1192 = vsel %vm770, %v1086, %v1191
        %1193 = vst [vmem:[%s1155 + $0x3c] sm:$0xf] %v1192
        %1194 = vst [vmem:[%s1155 + $0x40] sm:$0xf] %v1095
        %v1195 = vld [vmem:[%s1155 + $0x44] sm:$0x1]
        %v1196 = vsel %vm576, %v1096, %v1195
        %1197 = vst [vmem:[%s1155 + $0x44] sm:$0x1] %v1196
        %v1198 = vld [vmem:[%s1155 + $0x48] sm:$0xf]
        %v1199 = vsel %vm770, %v1103, %v1198
        %1200 = vst [vmem:[%s1155 + $0x48] sm:$0xf] %v1199
        %1201 = vst [vmem:[%s1155 + $0x4c] sm:$0xf] %v1112
        %v1202 = vld [vmem:[%s1155 + $0x50] sm:$0x1]
        %v1203 = vsel %vm576, %v1113, %v1202
        %1204 = vst [vmem:[%s1155 + $0x50] sm:$0x1] %v1203
        %v1205 = vld [vmem:[%s1155 + $0x54] sm:$0xf]
        %v1206 = vsel %vm770, %v1120, %v1205
        %1207 = vst [vmem:[%s1155 + $0x54] sm:$0xf] %v1206
        %1208 = vst [vmem:[%s1155 + $0x58] sm:$0xf] %v1129
        %v1209 = vld [vmem:[%s1155 + $0x5c] sm:$0x1]
        %v1210 = vsel %vm576, %v1130, %v1209
        %1211 = vst [vmem:[%s1155 + $0x5c] sm:$0x1] %v1210
        %v1212 = vld [vmem:[%s559] sm:$0xf]
        %v1213 = vld [vmem:[%s559 + $0x4] sm:$0xf]
        %v1214 = vld [vmem:[%s559 + $0x8] sm:$0xf]
        %v1215 = vld [vmem:[%s559 + $0xc] sm:$0xf]
        %v1216 = vld [vmem:[%s559 + $0x10] sm:$0xf]
        %v1217 = vld [vmem:[%s559 + $0x14] sm:$0xf]
        %v1218 = vld [vmem:[%s559 + $0x18] sm:$0xf]
        %v1219 = vld [vmem:[%s559 + $0x1c] sm:$0xf]
        %v1220 = vld [vmem:[%s559 + $0x20] sm:$0xf]
        %v1221 = vld [vmem:[%s559 + $0x24] sm:$0xf]
        %v1222 = vld [vmem:[%s559 + $0x28] sm:$0xf]
        %v1223 = vld [vmem:[%s559 + $0x2c] sm:$0xf]
        %v1224 = vld [vmem:[%s559 + $0x30] sm:$0xf]
        %v1225 = vld [vmem:[%s559 + $0x34] sm:$0xf]
        %v1226 = vld [vmem:[%s559 + $0x38] sm:$0xf]
        %v1227 = vld [vmem:[%s559 + $0x3c] sm:$0xf]
        %v1229 = vshrl.u32 %v1212, 16
        %v1231 = vrot.slane %v1229, 7
        %v1232 = vshll.u32 %v1212, 16
        %v1234 = vor.u32 %v1231, %v1232
        %v1235 = vrot.slane %v1231, 4
        %v1237 = vshrl.u32 %v1213, 16
        %v1239 = vrot.slane %v1237, 7
        %v1240 = vshll.u32 %v1213, 16
        %v1242 = vor.u32 %v1239, %v1240
        %v1243 = vsel %vm728, %v1235, %v1242
        %v1244 = vrot.slane %v1239, 4
        %v1246 = vshrl.u32 %v1214, 16
        %v1248 = vrot.slane %v1246, 7
        %v1249 = vshll.u32 %v1214, 16
        %v1251 = vor.u32 %v1248, %v1249
        %v1252 = vrot.slane %v1248, 4
        %v1254 = vshrl.u32 %v1215, 16
        %v1256 = vrot.slane %v1254, 7
        %v1257 = vshll.u32 %v1215, 16
        %v1259 = vor.u32 %v1256, %v1257
        %v1260 = vsel %vm728, %v1252, %v1259
        %v1261 = vrot.slane %v1256, 4
        %v1263 = vshrl.u32 %v1216, 16
        %v1265 = vrot.slane %v1263, 7
        %v1266 = vshll.u32 %v1216, 16
        %v1268 = vor.u32 %v1265, %v1266
        %v1269 = vrot.slane %v1265, 4
        %v1271 = vshrl.u32 %v1217, 16
        %v1273 = vrot.slane %v1271, 7
        %v1274 = vshll.u32 %v1217, 16
        %v1276 = vor.u32 %v1273, %v1274
        %v1277 = vsel %vm728, %v1269, %v1276
        %v1278 = vrot.slane %v1273, 4
        %v1280 = vshrl.u32 %v1218, 16
        %v1282 = vrot.slane %v1280, 7
        %v1283 = vshll.u32 %v1218, 16
        %v1285 = vor.u32 %v1282, %v1283
        %v1286 = vrot.slane %v1282, 4
        %v1288 = vshrl.u32 %v1219, 16
        %v1290 = vrot.slane %v1288, 7
        %v1291 = vshll.u32 %v1219, 16
        %v1293 = vor.u32 %v1290, %v1291
        %v1294 = vsel %vm728, %v1286, %v1293
        %v1295 = vrot.slane %v1290, 4
        %v1297 = vshrl.u32 %v1220, 16
        %v1299 = vrot.slane %v1297, 7
        %v1300 = vshll.u32 %v1220, 16
        %v1302 = vor.u32 %v1299, %v1300
        %v1303 = vrot.slane %v1299, 4
        %v1305 = vshrl.u32 %v1221, 16
        %v1307 = vrot.slane %v1305, 7
        %v1308 = vshll.u32 %v1221, 16
        %v1310 = vor.u32 %v1307, %v1308
        %v1311 = vsel %vm728, %v1303, %v1310
        %v1312 = vrot.slane %v1307, 4
        %v1314 = vshrl.u32 %v1222, 16
        %v1316 = vrot.slane %v1314, 7
        %v1317 = vshll.u32 %v1222, 16
        %v1319 = vor.u32 %v1316, %v1317
        %v1320 = vrot.slane %v1316, 4
        %v1322 = vshrl.u32 %v1223, 16
        %v1324 = vrot.slane %v1322, 7
        %v1325 = vshll.u32 %v1223, 16
        %v1327 = vor.u32 %v1324, %v1325
        %v1328 = vsel %vm728, %v1320, %v1327
        %v1329 = vrot.slane %v1324, 4
        %v1331 = vshrl.u32 %v1224, 16
        %v1333 = vrot.slane %v1331, 7
        %v1334 = vshll.u32 %v1224, 16
        %v1336 = vor.u32 %v1333, %v1334
        %v1337 = vrot.slane %v1333, 4
        %v1339 = vshrl.u32 %v1225, 16
        %v1341 = vrot.slane %v1339, 7
        %v1342 = vshll.u32 %v1225, 16
        %v1344 = vor.u32 %v1341, %v1342
        %v1345 = vsel %vm728, %v1337, %v1344
        %v1346 = vrot.slane %v1341, 4
        %v1348 = vshrl.u32 %v1226, 16
        %v1350 = vrot.slane %v1348, 7
        %v1351 = vshll.u32 %v1226, 16
        %v1353 = vor.u32 %v1350, %v1351
        %v1354 = vrot.slane %v1350, 4
        %v1356 = vshrl.u32 %v1227, 16
        %v1358 = vrot.slane %v1356, 7
        %v1359 = vshll.u32 %v1227, 16
        %v1361 = vor.u32 %v1358, %v1359
        %v1362 = vsel %vm728, %v1354, %v1361
        %v1363 = vrot.slane %v1358, 4
        %s1388 = scalar_lea.vmem [#allocation3], 24
        %v1389 = vld [vmem:[%s1388] sm:$0xf]
        %v1390 = vsel %vm770, %v1234, %v1389
        %1391 = vst [vmem:[%s1388] sm:$0xf] %v1390
        %1392 = vst [vmem:[%s1388 + $0x4] sm:$0xf] %v1243
        %v1393 = vld [vmem:[%s1388 + $0x8] sm:$0x1]
        %v1394 = vsel %vm576, %v1244, %v1393
        %1395 = vst [vmem:[%s1388 + $0x8] sm:$0x1] %v1394
        %v1396 = vld [vmem:[%s1388 + $0xc] sm:$0xf]
        %v1397 = vsel %vm770, %v1251, %v1396
        %1398 = vst [vmem:[%s1388 + $0xc] sm:$0xf] %v1397
        %1399 = vst [vmem:[%s1388 + $0x10] sm:$0xf] %v1260
        %v1400 = vld [vmem:[%s1388 + $0x14] sm:$0x1]
        %v1401 = vsel %vm576, %v1261, %v1400
        %1402 = vst [vmem:[%s1388 + $0x14] sm:$0x1] %v1401
        %v1403 = vld [vmem:[%s1388 + $0x18] sm:$0xf]
        %v1404 = vsel %vm770, %v1268, %v1403
        %1405 = vst [vmem:[%s1388 + $0x18] sm:$0xf] %v1404
        %1406 = vst [vmem:[%s1388 + $0x1c] sm:$0xf] %v1277
        %v1407 = vld [vmem:[%s1388 + $0x20] sm:$0x1]
        %v1408 = vsel %vm576, %v1278, %v1407
        %1409 = vst [vmem:[%s1388 + $0x20] sm:$0x1] %v1408
        %v1410 = vld [vmem:[%s1388 + $0x24] sm:$0xf]
        %v1411 = vsel %vm770, %v1285, %v1410
        %1412 = vst [vmem:[%s1388 + $0x24] sm:$0xf] %v1411
        %1413 = vst [vmem:[%s1388 + $0x28] sm:$0xf] %v1294
        %v1414 = vld [vmem:[%s1388 + $0x2c] sm:$0x1]
        %v1415 = vsel %vm576, %v1295, %v1414
        %1416 = vst [vmem:[%s1388 + $0x2c] sm:$0x1] %v1415
        %v1417 = vld [vmem:[%s1388 + $0x30] sm:$0xf]
        %v1418 = vsel %vm770, %v1302, %v1417
        %1419 = vst [vmem:[%s1388 + $0x30] sm:$0xf] %v1418
        %1420 = vst [vmem:[%s1388 + $0x34] sm:$0xf] %v1311
        %v1421 = vld [vmem:[%s1388 + $0x38] sm:$0x1]
        %v1422 = vsel %vm576, %v1312, %v1421
        %1423 = vst [vmem:[%s1388 + $0x38] sm:$0x1] %v1422
        %v1424 = vld [vmem:[%s1388 + $0x3c] sm:$0xf]
        %v1425 = vsel %vm770, %v1319, %v1424
        %1426 = vst [vmem:[%s1388 + $0x3c] sm:$0xf] %v1425
        %1427 = vst [vmem:[%s1388 + $0x40] sm:$0xf] %v1328
        %v1428 = vld [vmem:[%s1388 + $0x44] sm:$0x1]
        %v1429 = vsel %vm576, %v1329, %v1428
        %1430 = vst [vmem:[%s1388 + $0x44] sm:$0x1] %v1429
        %v1431 = vld [vmem:[%s1388 + $0x48] sm:$0xf]
        %v1432 = vsel %vm770, %v1336, %v1431
        %1433 = vst [vmem:[%s1388 + $0x48] sm:$0xf] %v1432
        %1434 = vst [vmem:[%s1388 + $0x4c] sm:$0xf] %v1345
        %v1435 = vld [vmem:[%s1388 + $0x50] sm:$0x1]
        %v1436 = vsel %vm576, %v1346, %v1435
        %1437 = vst [vmem:[%s1388 + $0x50] sm:$0x1] %v1436
        %v1438 = vld [vmem:[%s1388 + $0x54] sm:$0xf]
        %v1439 = vsel %vm770, %v1353, %v1438
        %1440 = vst [vmem:[%s1388 + $0x54] sm:$0xf] %v1439
        %1441 = vst [vmem:[%s1388 + $0x58] sm:$0xf] %v1362
        %v1442 = vld [vmem:[%s1388 + $0x5c] sm:$0x1]
        %v1443 = vsel %vm576, %v1363, %v1442
        %1444 = vst [vmem:[%s1388 + $0x5c] sm:$0x1] %v1443
        %v1445 = vld [vmem:[%s8] sm:$0x3]
        %v1447 = vperm.slane %v1445, 0
        %v1448 = vperm.slane %v1445, 1
        %v1451 = vld [vmem:[#allocation2] sm:$0xf]
        %v1452 = vld [vmem:[#allocation2 + $0x4] sm:$0xf]
        %v1453 = vld [vmem:[#allocation2 + $0xc] sm:$0xf]
        %v1454 = vld [vmem:[#allocation2 + $0x10] sm:$0xf]
        %v1455 = vld [vmem:[#allocation2 + $0x18] sm:$0xf]
        %v1456 = vld [vmem:[#allocation2 + $0x1c] sm:$0xf]
        %v1457 = vld [vmem:[#allocation2 + $0x24] sm:$0xf]
        %v1458 = vld [vmem:[#allocation2 + $0x28] sm:$0xf]
        %v1459 = vld [vmem:[#allocation2 + $0x30] sm:$0xf]
        %v1460 = vld [vmem:[#allocation2 + $0x34] sm:$0xf]
        %v1461 = vld [vmem:[#allocation2 + $0x3c] sm:$0xf]
        %v1462 = vld [vmem:[#allocation2 + $0x40] sm:$0xf]
        %v1463 = vld [vmem:[#allocation2 + $0x48] sm:$0xf]
        %v1464 = vld [vmem:[#allocation2 + $0x4c] sm:$0xf]
        %v1465 = vld [vmem:[#allocation2 + $0x54] sm:$0xf]
        %v1466 = vld [vmem:[#allocation2 + $0x58] sm:$0xf]
        %v1467 = vld [vmem:[#allocation2 + $0x60] sm:$0xf]
        %v1468 = vld [vmem:[#allocation2 + $0x64] sm:$0xf]
        %v1469 = vld [vmem:[#allocation2 + $0x6c] sm:$0xf]
        %v1470 = vld [vmem:[#allocation2 + $0x70] sm:$0xf]
        %v1471 = vld [vmem:[#allocation2 + $0x8] sm:$0x1]
        %v1472 = vld [vmem:[#allocation2 + $0x14] sm:$0x1]
        %v1473 = vld [vmem:[#allocation2 + $0x20] sm:$0x1]
        %v1474 = vld [vmem:[#allocation2 + $0x2c] sm:$0x1]
        %v1475 = vld [vmem:[#allocation2 + $0x38] sm:$0x1]
        %v1476 = vld [vmem:[#allocation2 + $0x44] sm:$0x1]
        %v1477 = vld [vmem:[#allocation2 + $0x50] sm:$0x1]
        %v1478 = vld [vmem:[#allocation2 + $0x5c] sm:$0x1]
        %v1479 = vld [vmem:[#allocation2 + $0x68] sm:$0x1]
        %v1480 = vld [vmem:[#allocation2 + $0x74] sm:$0x1]
        %v1481 = vld [vmem:[#allocation2] sm:$0xe]
        %v1482 = vld [vmem:[#allocation2 + $0xc] sm:$0xe]
        %v1483 = vld [vmem:[#allocation2 + $0x18] sm:$0xe]
        %v1484 = vld [vmem:[#allocation2 + $0x24] sm:$0xe]
        %v1485 = vld [vmem:[#allocation2 + $0x30] sm:$0xe]
        %v1486 = vld [vmem:[#allocation2 + $0x3c] sm:$0xe]
        %v1487 = vld [vmem:[#allocation2 + $0x48] sm:$0xe]
        %v1488 = vld [vmem:[#allocation2 + $0x54] sm:$0xe]
        %v1489 = vld [vmem:[#allocation2 + $0x60] sm:$0xe]
        %v1490 = vld [vmem:[#allocation2 + $0x6c] sm:$0xe]
        %v1511 = vunpack.c.l.b16 %v1451
        %v1512 = vunpack.c.l.b16 %v1452
        %v1513 = vunpack.c.l.b16 %v1453
        %v1514 = vunpack.c.l.b16 %v1454
        %v1515 = vunpack.c.l.b16 %v1455
        %v1516 = vunpack.c.l.b16 %v1456
        %v1517 = vunpack.c.l.b16 %v1457
        %v1518 = vunpack.c.l.b16 %v1458
        %v1519 = vunpack.c.l.b16 %v1459
        %v1520 = vunpack.c.l.b16 %v1460
        %v1521 = vunpack.c.l.b16 %v1461
        %v1522 = vunpack.c.l.b16 %v1462
        %v1523 = vunpack.c.l.b16 %v1463
        %v1524 = vunpack.c.l.b16 %v1464
        %v1525 = vunpack.c.l.b16 %v1465
        %v1526 = vunpack.c.l.b16 %v1466
        %v1527 = vunpack.c.l.b16 %v1467
        %v1528 = vunpack.c.l.b16 %v1468
        %v1529 = vunpack.c.l.b16 %v1469
        %v1530 = vunpack.c.l.b16 %v1470
        %v1531 = vpack.c.b16 %v1512, %v1511
        %v1532 = vpack.c.b16 %v1514, %v1513
        %v1533 = vpack.c.b16 %v1516, %v1515
        %v1534 = vpack.c.b16 %v1518, %v1517
        %v1535 = vpack.c.b16 %v1520, %v1519
        %v1536 = vpack.c.b16 %v1522, %v1521
        %v1537 = vpack.c.b16 %v1524, %v1523
        %v1538 = vpack.c.b16 %v1526, %v1525
        %v1539 = vpack.c.b16 %v1528, %v1527
        %v1540 = vpack.c.b16 %v1530, %v1529
        %v1561 = vunpack.c.l.b16 %v1471
        %v1562 = vunpack.c.l.b16 %v1472
        %v1563 = vunpack.c.l.b16 %v1473
        %v1564 = vunpack.c.l.b16 %v1474
        %v1565 = vunpack.c.l.b16 %v1475
        %v1566 = vunpack.c.l.b16 %v1476
        %v1567 = vunpack.c.l.b16 %v1477
        %v1568 = vunpack.c.l.b16 %v1478
        %v1569 = vunpack.c.l.b16 %v1479
        %v1570 = vunpack.c.l.b16 %v1480
        %v1571 = vpack.c.b16 %v1561, %v1561
        %v1572 = vpack.c.b16 %v1562, %v1562
        %v1573 = vpack.c.b16 %v1563, %v1563
        %v1574 = vpack.c.b16 %v1564, %v1564
        %v1575 = vpack.c.b16 %v1565, %v1565
        %v1576 = vpack.c.b16 %v1566, %v1566
        %v1577 = vpack.c.b16 %v1567, %v1567
        %v1578 = vpack.c.b16 %v1568, %v1568
        %v1579 = vpack.c.b16 %v1569, %v1569
        %v1580 = vpack.c.b16 %v1570, %v1570
        %vm1581 = vsmask.f32 7424
        %v1583 = vshrl.u32 %v1531, 16
        %v1585 = vshll.u32 %v1531, 16
        %v1587 = vrot.slane %v1585, 1
        %v1588 = vor.u32 %v1583, %v1587
        %v1590 = vshll.u32 %v1571, 16
        %v1592 = vrot.slane %v1590, 1
        %v1593 = vsel %vm1581, %v1588, %v1592
        %v1595 = vshrl.u32 %v1532, 16
        %v1597 = vshll.u32 %v1532, 16
        %v1599 = vrot.slane %v1597, 1
        %v1600 = vor.u32 %v1595, %v1599
        %v1602 = vshll.u32 %v1572, 16
        %v1604 = vrot.slane %v1602, 1
        %v1605 = vsel %vm1581, %v1600, %v1604
        %v1607 = vshrl.u32 %v1533, 16
        %v1609 = vshll.u32 %v1533, 16
        %v1611 = vrot.slane %v1609, 1
        %v1612 = vor.u32 %v1607, %v1611
        %v1614 = vshll.u32 %v1573, 16
        %v1616 = vrot.slane %v1614, 1
        %v1617 = vsel %vm1581, %v1612, %v1616
        %v1619 = vshrl.u32 %v1534, 16
        %v1621 = vshll.u32 %v1534, 16
        %v1623 = vrot.slane %v1621, 1
        %v1624 = vor.u32 %v1619, %v1623
        %v1626 = vshll.u32 %v1574, 16
        %v1628 = vrot.slane %v1626, 1
        %v1629 = vsel %vm1581, %v1624, %v1628
        %v1631 = vshrl.u32 %v1535, 16
        %v1633 = vshll.u32 %v1535, 16
        %v1635 = vrot.slane %v1633, 1
        %v1636 = vor.u32 %v1631, %v1635
        %v1638 = vshll.u32 %v1575, 16
        %v1640 = vrot.slane %v1638, 1
        %v1641 = vsel %vm1581, %v1636, %v1640
        %v1643 = vshrl.u32 %v1536, 16
        %v1645 = vshll.u32 %v1536, 16
        %v1647 = vrot.slane %v1645, 1
        %v1648 = vor.u32 %v1643, %v1647
        %v1650 = vshll.u32 %v1576, 16
        %v1652 = vrot.slane %v1650, 1
        %v1653 = vsel %vm1581, %v1648, %v1652
        %v1655 = vshrl.u32 %v1537, 16
        %v1657 = vshll.u32 %v1537, 16
        %v1659 = vrot.slane %v1657, 1
        %v1660 = vor.u32 %v1655, %v1659
        %v1662 = vshll.u32 %v1577, 16
        %v1664 = vrot.slane %v1662, 1
        %v1665 = vsel %vm1581, %v1660, %v1664
        %v1667 = vshrl.u32 %v1538, 16
        %v1669 = vshll.u32 %v1538, 16
        %v1671 = vrot.slane %v1669, 1
        %v1672 = vor.u32 %v1667, %v1671
        %v1674 = vshll.u32 %v1578, 16
        %v1676 = vrot.slane %v1674, 1
        %v1677 = vsel %vm1581, %v1672, %v1676
        %v1679 = vshrl.u32 %v1539, 16
        %v1681 = vshll.u32 %v1539, 16
        %v1683 = vrot.slane %v1681, 1
        %v1684 = vor.u32 %v1679, %v1683
        %v1686 = vshll.u32 %v1579, 16
        %v1688 = vrot.slane %v1686, 1
        %v1689 = vsel %vm1581, %v1684, %v1688
        %v1691 = vshrl.u32 %v1540, 16
        %v1693 = vshll.u32 %v1540, 16
        %v1695 = vrot.slane %v1693, 1
        %v1696 = vor.u32 %v1691, %v1695
        %v1698 = vshll.u32 %v1580, 16
        %v1700 = vrot.slane %v1698, 1
        %v1701 = vsel %vm1581, %v1696, %v1700
        %v1722 = vunpack.c.l.b16 %v1481
        %v1723 = vunpack.c.l.b16 %v1482
        %v1724 = vunpack.c.l.b16 %v1483
        %v1725 = vunpack.c.l.b16 %v1484
        %v1726 = vunpack.c.l.b16 %v1485
        %v1727 = vunpack.c.l.b16 %v1486
        %v1728 = vunpack.c.l.b16 %v1487
        %v1729 = vunpack.c.l.b16 %v1488
        %v1730 = vunpack.c.l.b16 %v1489
        %v1731 = vunpack.c.l.b16 %v1490
        %v1732 = vpack.c.b16 %v1512, %v1722
        %v1733 = vpack.c.b16 %v1514, %v1723
        %v1734 = vpack.c.b16 %v1516, %v1724
        %v1735 = vpack.c.b16 %v1518, %v1725
        %v1736 = vpack.c.b16 %v1520, %v1726
        %v1737 = vpack.c.b16 %v1522, %v1727
        %v1738 = vpack.c.b16 %v1524, %v1728
        %v1739 = vpack.c.b16 %v1526, %v1729
        %v1740 = vpack.c.b16 %v1528, %v1730
        %v1741 = vpack.c.b16 %v1530, %v1731
        %vm1742 = vcmask 1046528
        %v1743 = vrot.slane %v1732, 1
        %v1744 = vrot.slane %v1571, 1
        %v1745 = vsel %vm1742, %v1743, %v1744
        %v1746 = vrot.slane %v1733, 1
        %v1747 = vrot.slane %v1572, 1
        %v1748 = vsel %vm1742, %v1746, %v1747
        %v1749 = vrot.slane %v1734, 1
        %v1750 = vrot.slane %v1573, 1
        %v1751 = vsel %vm1742, %v1749, %v1750
        %v1752 = vrot.slane %v1735, 1
        %v1753 = vrot.slane %v1574, 1
        %v1754 = vsel %vm1742, %v1752, %v1753
        %v1755 = vrot.slane %v1736, 1
        %v1756 = vrot.slane %v1575, 1
        %v1757 = vsel %vm1742, %v1755, %v1756
        %v1758 = vrot.slane %v1737, 1
        %v1759 = vrot.slane %v1576, 1
        %v1760 = vsel %vm1742, %v1758, %v1759
        %v1761 = vrot.slane %v1738, 1
        %v1762 = vrot.slane %v1577, 1
        %v1763 = vsel %vm1742, %v1761, %v1762
        %v1764 = vrot.slane %v1739, 1
        %v1765 = vrot.slane %v1578, 1
        %v1766 = vsel %vm1742, %v1764, %v1765
        %v1767 = vrot.slane %v1740, 1
        %v1768 = vrot.slane %v1579, 1
        %v1769 = vsel %vm1742, %v1767, %v1768
        %v1770 = vrot.slane %v1741, 1
        %v1771 = vrot.slane %v1580, 1
        %v1772 = vsel %vm1742, %v1770, %v1771
        %v1783 = vld [vmem:[#allocation9] sm:$0xff]
        %v1784 = vld [vmem:[#allocation9 + $0x8] sm:$0xff]
        %v1785 = vld [vmem:[#allocation9 + $0x10] sm:$0xff]
        %v1786 = vld [vmem:[#allocation9 + $0x18] sm:$0xff]
        %v1787 = vld [vmem:[#allocation9 + $0x20] sm:$0xff]
        %v1788 = vld [vmem:[#allocation9 + $0x28] sm:$0xff]
        %v1789 = vld [vmem:[#allocation9 + $0x30] sm:$0xff]
        %v1790 = vld [vmem:[#allocation9 + $0x38] sm:$0xff]
        %v1791 = vld [vmem:[#allocation9 + $0x40] sm:$0xff]
        %v1792 = vld [vmem:[#allocation9 + $0x48] sm:$0xff]
        %v1793 = vld [vmem:[#allocation9 + $0x50] sm:$0xff]
        %v1794 = vld [vmem:[#allocation9 + $0x58] sm:$0xff]
        %v1795 = vld [vmem:[#allocation9 + $0x60] sm:$0xff]
        %v1796 = vld [vmem:[#allocation9 + $0x68] sm:$0xff]
        %v1797 = vld [vmem:[#allocation9 + $0x70] sm:$0xff]
        %v1798 = vld [vmem:[#allocation9 + $0x78] sm:$0xff]
        %v1799 = vld [vmem:[#allocation9 + $0x80] sm:$0xff]
        %v1800 = vld [vmem:[#allocation9 + $0x88] sm:$0xff]
        %v1801 = vld [vmem:[#allocation9 + $0x90] sm:$0xff]
        %v1802 = vld [vmem:[#allocation9 + $0x98] sm:$0xff]
        %v1803 = vld [vmem:[#allocation9 + $0xa0] sm:$0xff]
        %v1804 = vld [vmem:[#allocation9 + $0xa8] sm:$0xff]
        %v1805 = vld [vmem:[#allocation9 + $0xb0] sm:$0xff]
        %v1806 = vld [vmem:[#allocation9 + $0xb8] sm:$0xff]
        %v1807 = vld [vmem:[#allocation9 + $0xc0] sm:$0xff]
        %v1808 = vld [vmem:[#allocation9 + $0xc8] sm:$0xff]
        %v1809 = vld [vmem:[#allocation9 + $0xd0] sm:$0xff]
        %v1810 = vld [vmem:[#allocation9 + $0xd8] sm:$0xff]
        %v1811 = vld [vmem:[#allocation9 + $0xe0] sm:$0xff]
        %v1812 = vld [vmem:[#allocation9 + $0xe8] sm:$0xff]
        %v1813 = vld [vmem:[#allocation9 + $0xf0] sm:$0xff]
        %v1814 = vld [vmem:[#allocation9 + $0xf8] sm:$0xff]
        %v1815 = vld [vmem:[#allocation9 + $0x100] sm:$0xff]
        %v1816 = vld [vmem:[#allocation9 + $0x108] sm:$0xff]
        %v1817 = vld [vmem:[#allocation9 + $0x110] sm:$0xff]
        %v1818 = vld [vmem:[#allocation9 + $0x118] sm:$0xff]
        %v1819 = vld [vmem:[#allocation9 + $0x120] sm:$0xff]
        %v1820 = vld [vmem:[#allocation9 + $0x128] sm:$0xff]
        %v1821 = vld [vmem:[#allocation9 + $0x130] sm:$0xff]
        %v1822 = vld [vmem:[#allocation9 + $0x138] sm:$0xff]
        %v1823 = vld [vmem:[#allocation9 + $0x140] sm:$0xff]
        %v1824 = vld [vmem:[#allocation9 + $0x148] sm:$0xff]
        %v1825 = vld [vmem:[#allocation9 + $0x150] sm:$0xff]
        %v1826 = vld [vmem:[#allocation9 + $0x158] sm:$0xff]
        %v1827 = vld [vmem:[#allocation9 + $0x160] sm:$0xff]
        %v1828 = vld [vmem:[#allocation9 + $0x168] sm:$0xff]
        %v1829 = vld [vmem:[#allocation9 + $0x170] sm:$0xff]
        %v1830 = vld [vmem:[#allocation9 + $0x178] sm:$0xff]
        %v1879 = vunpack.c.l.b16 %v1783
        %v1880 = vunpack.c.h.b16 %v1783
        %v1881 = vunpack.c.l.b16 %v1784
        %v1882 = vunpack.c.h.b16 %v1784
        %v1883 = vunpack.c.l.b16 %v1785
        %v1884 = vunpack.c.h.b16 %v1785
        %v1885 = vunpack.c.l.b16 %v1786
        %v1886 = vunpack.c.h.b16 %v1786
        %v1887 = vunpack.c.l.b16 %v1787
        %v1888 = vunpack.c.h.b16 %v1787
        %v1889 = vunpack.c.l.b16 %v1788
        %v1890 = vunpack.c.h.b16 %v1788
        %v1891 = vunpack.c.l.b16 %v1789
        %v1892 = vunpack.c.h.b16 %v1789
        %v1893 = vunpack.c.l.b16 %v1790
        %v1894 = vunpack.c.h.b16 %v1790
        %v1895 = vunpack.c.l.b16 %v1791
        %v1896 = vunpack.c.h.b16 %v1791
        %v1897 = vunpack.c.l.b16 %v1792
        %v1898 = vunpack.c.h.b16 %v1792
        %v1899 = vunpack.c.l.b16 %v1793
        %v1900 = vunpack.c.h.b16 %v1793
        %v1901 = vunpack.c.l.b16 %v1794
        %v1902 = vunpack.c.h.b16 %v1794
        %v1903 = vunpack.c.l.b16 %v1795
        %v1904 = vunpack.c.h.b16 %v1795
        %v1905 = vunpack.c.l.b16 %v1796
        %v1906 = vunpack.c.h.b16 %v1796
        %v1907 = vunpack.c.l.b16 %v1797
        %v1908 = vunpack.c.h.b16 %v1797
        %v1909 = vunpack.c.l.b16 %v1798
        %v1910 = vunpack.c.h.b16 %v1798
        %v1911 = vunpack.c.l.b16 %v1799
        %v1912 = vunpack.c.h.b16 %v1799
        %v1913 = vunpack.c.l.b16 %v1800
        %v1914 = vunpack.c.h.b16 %v1800
        %v1915 = vunpack.c.l.b16 %v1801
        %v1916 = vunpack.c.h.b16 %v1801
        %v1917 = vunpack.c.l.b16 %v1802
        %v1918 = vunpack.c.h.b16 %v1802
        %v1919 = vunpack.c.l.b16 %v1803
        %v1920 = vunpack.c.h.b16 %v1803
        %v1921 = vunpack.c.l.b16 %v1804
        %v1922 = vunpack.c.h.b16 %v1804
        %v1923 = vunpack.c.l.b16 %v1805
        %v1924 = vunpack.c.h.b16 %v1805
        %v1925 = vunpack.c.l.b16 %v1806
        %v1926 = vunpack.c.h.b16 %v1806
        %v1927 = vunpack.c.l.b16 %v1807
        %v1928 = vunpack.c.h.b16 %v1807
        %v1929 = vunpack.c.l.b16 %v1808
        %v1930 = vunpack.c.h.b16 %v1808
        %v1931 = vunpack.c.l.b16 %v1809
        %v1932 = vunpack.c.h.b16 %v1809
        %v1933 = vunpack.c.l.b16 %v1810
        %v1934 = vunpack.c.h.b16 %v1810
        %v1935 = vunpack.c.l.b16 %v1811
        %v1936 = vunpack.c.h.b16 %v1811
        %v1937 = vunpack.c.l.b16 %v1812
        %v1938 = vunpack.c.h.b16 %v1812
        %v1939 = vunpack.c.l.b16 %v1813
        %v1940 = vunpack.c.h.b16 %v1813
        %v1941 = vunpack.c.l.b16 %v1814
        %v1942 = vunpack.c.h.b16 %v1814
        %v1943 = vunpack.c.l.b16 %v1815
        %v1944 = vunpack.c.h.b16 %v1815
        %v1945 = vunpack.c.l.b16 %v1816
        %v1946 = vunpack.c.h.b16 %v1816
        %v1947 = vunpack.c.l.b16 %v1817
        %v1948 = vunpack.c.h.b16 %v1817
        %v1949 = vunpack.c.l.b16 %v1818
        %v1950 = vunpack.c.h.b16 %v1818
        %v1951 = vunpack.c.l.b16 %v1819
        %v1952 = vunpack.c.h.b16 %v1819
        %v1953 = vunpack.c.l.b16 %v1820
        %v1954 = vunpack.c.h.b16 %v1820
        %v1955 = vunpack.c.l.b16 %v1821
        %v1956 = vunpack.c.h.b16 %v1821
        %v1957 = vunpack.c.l.b16 %v1822
        %v1958 = vunpack.c.h.b16 %v1822
        %v1959 = vunpack.c.l.b16 %v1823
        %v1960 = vunpack.c.h.b16 %v1823
        %v1961 = vunpack.c.l.b16 %v1824
        %v1962 = vunpack.c.h.b16 %v1824
        %v1963 = vunpack.c.l.b16 %v1825
        %v1964 = vunpack.c.h.b16 %v1825
        %v1965 = vunpack.c.l.b16 %v1826
        %v1966 = vunpack.c.h.b16 %v1826
        %v1967 = vunpack.c.l.b16 %v1827
        %v1968 = vunpack.c.h.b16 %v1827
        %v1969 = vunpack.c.l.b16 %v1828
        %v1970 = vunpack.c.h.b16 %v1828
        %v1971 = vunpack.c.l.b16 %v1829
        %v1972 = vunpack.c.h.b16 %v1829
        %v1973 = vunpack.c.l.b16 %v1830
        %v1974 = vunpack.c.h.b16 %v1830
        %v1975 = vpack.c.b16 %v1881, %v1879
        %v1976 = vpack.c.b16 %v1882, %v1880
        %v1977 = vpack.c.b16 %v1885, %v1883
        %v1978 = vpack.c.b16 %v1886, %v1884
        %v1979 = vpack.c.b16 %v1889, %v1887
        %v1980 = vpack.c.b16 %v1890, %v1888
        %v1981 = vpack.c.b16 %v1893, %v1891
        %v1982 = vpack.c.b16 %v1894, %v1892
        %v1983 = vpack.c.b16 %v1897, %v1895
        %v1984 = vpack.c.b16 %v1898, %v1896
        %v1985 = vpack.c.b16 %v1901, %v1899
        %v1986 = vpack.c.b16 %v1902, %v1900
        %v1987 = vpack.c.b16 %v1905, %v1903
        %v1988 = vpack.c.b16 %v1906, %v1904
        %v1989 = vpack.c.b16 %v1909, %v1907
        %v1990 = vpack.c.b16 %v1910, %v1908
        %v1991 = vpack.c.b16 %v1913, %v1911
        %v1992 = vpack.c.b16 %v1914, %v1912
        %v1993 = vpack.c.b16 %v1917, %v1915
        %v1994 = vpack.c.b16 %v1918, %v1916
        %v1995 = vpack.c.b16 %v1921, %v1919
        %v1996 = vpack.c.b16 %v1922, %v1920
        %v1997 = vpack.c.b16 %v1925, %v1923
        %v1998 = vpack.c.b16 %v1926, %v1924
        %v1999 = vpack.c.b16 %v1929, %v1927
        %v2000 = vpack.c.b16 %v1930, %v1928
        %v2001 = vpack.c.b16 %v1933, %v1931
        %v2002 = vpack.c.b16 %v1934, %v1932
        %v2003 = vpack.c.b16 %v1937, %v1935
        %v2004 = vpack.c.b16 %v1938, %v1936
        %v2005 = vpack.c.b16 %v1941, %v1939
        %v2006 = vpack.c.b16 %v1942, %v1940
        %v2007 = vpack.c.b16 %v1945, %v1943
        %v2008 = vpack.c.b16 %v1946, %v1944
        %v2009 = vpack.c.b16 %v1949, %v1947
        %v2010 = vpack.c.b16 %v1950, %v1948
        %v2011 = vpack.c.b16 %v1953, %v1951
        %v2012 = vpack.c.b16 %v1954, %v1952
        %v2013 = vpack.c.b16 %v1957, %v1955
        %v2014 = vpack.c.b16 %v1958, %v1956
        %v2015 = vpack.c.b16 %v1961, %v1959
        %v2016 = vpack.c.b16 %v1962, %v1960
        %v2017 = vpack.c.b16 %v1965, %v1963
        %v2018 = vpack.c.b16 %v1966, %v1964
        %v2019 = vpack.c.b16 %v1969, %v1967
        %v2020 = vpack.c.b16 %v1970, %v1968
        %v2021 = vpack.c.b16 %v1973, %v1971
        %v2022 = vpack.c.b16 %v1974, %v1972
        %2071 = vmatpush.bf16.msra.mxu0 %v1989
        %2072 = vmatpush.bf16.msra.mxu0 %v1987
        %2073 = vmatpush.bf16.msra.mxu0 %v1985
        %2074 = vmatpush.bf16.msra.mxu0 %v1983
        %2075 = vmatpush.bf16.msra.mxu0 %v1981
        %2076 = vmatpush.bf16.msra.mxu0 %v1979
        %2077 = vmatpush.bf16.msra.mxu0 %v1977
        %2078 = vmatpush.bf16.msra.mxu0 %v1975
        %2079 = vmatmul.bf16.gmra.mxu0 %v1531
        %v2080 = vpop.f32.mrf.mxu0
        %v2081 = vpop.f32.mrf.mxu0
        %2082 = vmatmul.bf16.gmra.mxu0 %v1532
        %v2083 = vpop.f32.mrf.mxu0
        %v2084 = vadd.f32 0.0, %v2083
        %v2085 = vpop.f32.mrf.mxu0
        %v2086 = vadd.f32 0.0, %v2085
        %2087 = vmatmul.bf16.gmra.mxu0 %v1533
        %v2088 = vpop.f32.mrf.mxu0
        %v2089 = vadd.f32 0.0, %v2088
        %v2090 = vpop.f32.mrf.mxu0
        %v2091 = vadd.f32 0.0, %v2090
        %2092 = vmatmul.bf16.gmra.mxu0 %v1534
        %v2093 = vpop.f32.mrf.mxu0
        %v2094 = vadd.f32 0.0, %v2093
        %v2095 = vpop.f32.mrf.mxu0
        %v2096 = vadd.f32 0.0, %v2095
        %2097 = vmatmul.bf16.gmra.mxu0 %v1535
        %v2098 = vpop.f32.mrf.mxu0
        %v2099 = vadd.f32 0.0, %v2098
        %v2100 = vpop.f32.mrf.mxu0
        %v2101 = vadd.f32 0.0, %v2100
        %2102 = vmatmul.bf16.gmra.mxu0 %v1536
        %v2103 = vpop.f32.mrf.mxu0
        %v2104 = vadd.f32 0.0, %v2103
        %v2105 = vpop.f32.mrf.mxu0
        %v2106 = vadd.f32 0.0, %v2105
        %2107 = vmatmul.bf16.gmra.mxu0 %v1537
        %v2108 = vpop.f32.mrf.mxu0
        %v2109 = vadd.f32 0.0, %v2108
        %v2110 = vpop.f32.mrf.mxu0
        %v2111 = vadd.f32 0.0, %v2110
        %2112 = vmatmul.bf16.gmra.mxu0 %v1538
        %v2113 = vpop.f32.mrf.mxu0
        %v2114 = vadd.f32 0.0, %v2113
        %v2115 = vpop.f32.mrf.mxu0
        %v2116 = vadd.f32 0.0, %v2115
        %2117 = vmatmul.bf16.gmra.mxu0 %v1539
        %v2118 = vpop.f32.mrf.mxu0
        %v2119 = vadd.f32 0.0, %v2118
        %v2120 = vpop.f32.mrf.mxu0
        %v2121 = vadd.f32 0.0, %v2120
        %2122 = vmatmul.bf16.gmra.mxu0 %v1540
        %v2123 = vpop.f32.mrf.mxu0
        %v2124 = vpop.f32.mrf.mxu0
        %2125 = vdwg.mxu0
        %2126 = vmatpush.bf16.msra.mxu0 %v2005
        %2127 = vmatpush.bf16.msra.mxu0 %v2003
        %2128 = vmatpush.bf16.msra.mxu0 %v2001
        %2129 = vmatpush.bf16.msra.mxu0 %v1999
        %2130 = vmatpush.bf16.msra.mxu0 %v1997
        %2131 = vmatpush.bf16.msra.mxu0 %v1995
        %2132 = vmatpush.bf16.msra.mxu0 %v1993
        %2133 = vmatpush.bf16.msra.mxu0 %v1991
        %2134 = vmatmul.bf16.gmra.mxu0 %v1593
        %v2135 = vpop.f32.mrf.mxu0
        %v2136 = vpop.f32.mrf.mxu0
        %2137 = vmatmul.bf16.gmra.mxu0 %v1605
        %v2138 = vpop.f32.mrf.mxu0
        %v2139 = vadd.f32 %v2084, %v2138
        %v2140 = vpop.f32.mrf.mxu0
        %v2141 = vadd.f32 %v2086, %v2140
        %2142 = vmatmul.bf16.gmra.mxu0 %v1617
        %v2143 = vpop.f32.mrf.mxu0
        %v2144 = vadd.f32 %v2089, %v2143
        %v2145 = vpop.f32.mrf.mxu0
        %v2146 = vadd.f32 %v2091, %v2145
        %2147 = vmatmul.bf16.gmra.mxu0 %v1629
        %v2148 = vpop.f32.mrf.mxu0
        %v2149 = vadd.f32 %v2094, %v2148
        %v2150 = vpop.f32.mrf.mxu0
        %v2151 = vadd.f32 %v2096, %v2150
        %2152 = vmatmul.bf16.gmra.mxu0 %v1641
        %v2153 = vpop.f32.mrf.mxu0
        %v2154 = vadd.f32 %v2099, %v2153
        %v2155 = vpop.f32.mrf.mxu0
        %v2156 = vadd.f32 %v2101, %v2155
        %2157 = vmatmul.bf16.gmra.mxu0 %v1653
        %v2158 = vpop.f32.mrf.mxu0
        %v2159 = vadd.f32 %v2104, %v2158
        %v2160 = vpop.f32.mrf.mxu0
        %v2161 = vadd.f32 %v2106, %v2160
        %2162 = vmatmul.bf16.gmra.mxu0 %v1665
        %v2163 = vpop.f32.mrf.mxu0
        %v2164 = vadd.f32 %v2109, %v2163
        %v2165 = vpop.f32.mrf.mxu0
        %v2166 = vadd.f32 %v2111, %v2165
        %2167 = vmatmul.bf16.gmra.mxu0 %v1677
        %v2168 = vpop.f32.mrf.mxu0
        %v2169 = vadd.f32 %v2114, %v2168
        %v2170 = vpop.f32.mrf.mxu0
        %v2171 = vadd.f32 %v2116, %v2170
        %2172 = vmatmul.bf16.gmra.mxu0 %v1689
        %v2173 = vpop.f32.mrf.mxu0
        %v2174 = vadd.f32 %v2119, %v2173
        %v2175 = vpop.f32.mrf.mxu0
        %v2176 = vadd.f32 %v2121, %v2175
        %2177 = vmatmul.bf16.gmra.mxu0 %v1701
        %v2178 = vpop.f32.mrf.mxu0
        %v2179 = vpop.f32.mrf.mxu0
        %2180 = vdwg.mxu0
        %2181 = vmatpush.bf16.msra.mxu0 %v2021
        %2182 = vmatpush.bf16.msra.mxu0 %v2019
        %2183 = vmatpush.bf16.msra.mxu0 %v2017
        %2184 = vmatpush.bf16.msra.mxu0 %v2015
        %2185 = vmatpush.bf16.msra.mxu0 %v2013
        %2186 = vmatpush.bf16.msra.mxu0 %v2011
        %2187 = vmatpush.bf16.msra.mxu0 %v2009
        %2188 = vmatpush.bf16.msra.mxu0 %v2007
        %2189 = vmatmul.bf16.gmra.mxu0 %v1745
        %v2190 = vpop.f32.mrf.mxu0
        %v2191 = vpop.f32.mrf.mxu0
        %2192 = vmatmul.bf16.gmra.mxu0 %v1748
        %v2193 = vpop.f32.mrf.mxu0
        %v2194 = vadd.f32 %v2139, %v2193
        %v2195 = vpop.f32.mrf.mxu0
        %v2196 = vadd.f32 %v2141, %v2195
        %2197 = vmatmul.bf16.gmra.mxu0 %v1751
        %v2198 = vpop.f32.mrf.mxu0
        %v2199 = vadd.f32 %v2144, %v2198
        %v2200 = vpop.f32.mrf.mxu0
        %v2201 = vadd.f32 %v2146, %v2200
        %2202 = vmatmul.bf16.gmra.mxu0 %v1754
        %v2203 = vpop.f32.mrf.mxu0
        %v2204 = vadd.f32 %v2149, %v2203
        %v2205 = vpop.f32.mrf.mxu0
        %v2206 = vadd.f32 %v2151, %v2205
        %2207 = vmatmul.bf16.gmra.mxu0 %v1757
        %v2208 = vpop.f32.mrf.mxu0
        %v2209 = vadd.f32 %v2154, %v2208
        %v2210 = vpop.f32.mrf.mxu0
        %v2211 = vadd.f32 %v2156, %v2210
        %2212 = vmatmul.bf16.gmra.mxu0 %v1760
        %v2213 = vpop.f32.mrf.mxu0
        %v2214 = vadd.f32 %v2159, %v2213
        %v2215 = vpop.f32.mrf.mxu0
        %v2216 = vadd.f32 %v2161, %v2215
        %2217 = vmatmul.bf16.gmra.mxu0 %v1763
        %v2218 = vpop.f32.mrf.mxu0
        %v2219 = vadd.f32 %v2164, %v2218
        %v2220 = vpop.f32.mrf.mxu0
        %v2221 = vadd.f32 %v2166, %v2220
        %2222 = vmatmul.bf16.gmra.mxu0 %v1766
        %v2223 = vpop.f32.mrf.mxu0
        %v2224 = vadd.f32 %v2169, %v2223
        %v2225 = vpop.f32.mrf.mxu0
        %v2226 = vadd.f32 %v2171, %v2225
        %2227 = vmatmul.bf16.gmra.mxu0 %v1769
        %v2228 = vpop.f32.mrf.mxu0
        %v2229 = vadd.f32 %v2174, %v2228
        %v2230 = vpop.f32.mrf.mxu0
        %v2231 = vadd.f32 %v2176, %v2230
        %2232 = vmatmul.bf16.gmra.mxu0 %v1772
        %v2233 = vpop.f32.mrf.mxu0
        %v2234 = vpop.f32.mrf.mxu0
        %2235 = vdwg.mxu0
        %2236 = vmatpush.bf16.msra.mxu0 %v1990
        %2237 = vmatpush.bf16.msra.mxu0 %v1988
        %2238 = vmatpush.bf16.msra.mxu0 %v1986
        %2239 = vmatpush.bf16.msra.mxu0 %v1984
        %2240 = vmatpush.bf16.msra.mxu0 %v1982
        %2241 = vmatpush.bf16.msra.mxu0 %v1980
        %2242 = vmatpush.bf16.msra.mxu0 %v1978
        %2243 = vmatpush.bf16.msra.mxu0 %v1976
        %2244 = vmatmul.bf16.gmra.mxu0 %v1531
        %v2245 = vpop.f32.mrf.mxu0
        %v2246 = vadd.f32 0.0, %v2245
        %v2247 = vpop.f32.mrf.mxu0
        %v2248 = vadd.f32 0.0, %v2247
        %2249 = vmatmul.bf16.gmra.mxu0 %v1532
        %v2250 = vpop.f32.mrf.mxu0
        %v2251 = vadd.f32 0.0, %v2250
        %v2252 = vpop.f32.mrf.mxu0
        %v2253 = vadd.f32 0.0, %v2252
        %2254 = vmatmul.bf16.gmra.mxu0 %v1533
        %v2255 = vpop.f32.mrf.mxu0
        %v2256 = vadd.f32 0.0, %v2255
        %v2257 = vpop.f32.mrf.mxu0
        %v2258 = vadd.f32 0.0, %v2257
        %2259 = vmatmul.bf16.gmra.mxu0 %v1534
        %v2260 = vpop.f32.mrf.mxu0
        %v2261 = vadd.f32 0.0, %v2260
        %v2262 = vpop.f32.mrf.mxu0
        %v2263 = vadd.f32 0.0, %v2262
        %2264 = vmatmul.bf16.gmra.mxu0 %v1535
        %v2265 = vpop.f32.mrf.mxu0
        %v2266 = vadd.f32 0.0, %v2265
        %v2267 = vpop.f32.mrf.mxu0
        %v2268 = vadd.f32 0.0, %v2267
        %2269 = vmatmul.bf16.gmra.mxu0 %v1536
        %v2270 = vpop.f32.mrf.mxu0
        %v2271 = vadd.f32 0.0, %v2270
        %v2272 = vpop.f32.mrf.mxu0
        %v2273 = vadd.f32 0.0, %v2272
        %2274 = vmatmul.bf16.gmra.mxu0 %v1537
        %v2275 = vpop.f32.mrf.mxu0
        %v2276 = vadd.f32 0.0, %v2275
        %v2277 = vpop.f32.mrf.mxu0
        %v2278 = vadd.f32 0.0, %v2277
        %2279 = vmatmul.bf16.gmra.mxu0 %v1538
        %v2280 = vpop.f32.mrf.mxu0
        %v2281 = vadd.f32 0.0, %v2280
        %v2282 = vpop.f32.mrf.mxu0
        %v2283 = vadd.f32 0.0, %v2282
        %2284 = vmatmul.bf16.gmra.mxu0 %v1539
        %v2285 = vpop.f32.mrf.mxu0
        %v2286 = vadd.f32 0.0, %v2285
        %v2287 = vpop.f32.mrf.mxu0
        %v2288 = vadd.f32 0.0, %v2287
        %2289 = vmatmul.bf16.gmra.mxu0 %v1540
        %v2290 = vpop.f32.mrf.mxu0
        %v2291 = vadd.f32 0.0, %v2290
        %v2292 = vpop.f32.mrf.mxu0
        %v2293 = vadd.f32 0.0, %v2292
        %2294 = vdwg.mxu0
        %2295 = vmatpush.bf16.msra.mxu0 %v2006
        %2296 = vmatpush.bf16.msra.mxu0 %v2004
        %2297 = vmatpush.bf16.msra.mxu0 %v2002
        %2298 = vmatpush.bf16.msra.mxu0 %v2000
        %2299 = vmatpush.bf16.msra.mxu0 %v1998
        %2300 = vmatpush.bf16.msra.mxu0 %v1996
        %2301 = vmatpush.bf16.msra.mxu0 %v1994
        %2302 = vmatpush.bf16.msra.mxu0 %v1992
        %2303 = vmatmul.bf16.gmra.mxu0 %v1593
        %v2304 = vpop.f32.mrf.mxu0
        %v2305 = vadd.f32 %v2246, %v2304
        %v2306 = vpop.f32.mrf.mxu0
        %v2307 = vadd.f32 %v2248, %v2306
        %2308 = vmatmul.bf16.gmra.mxu0 %v1605
        %v2309 = vpop.f32.mrf.mxu0
        %v2310 = vadd.f32 %v2251, %v2309
        %v2311 = vpop.f32.mrf.mxu0
        %v2312 = vadd.f32 %v2253, %v2311
        %2313 = vmatmul.bf16.gmra.mxu0 %v1617
        %v2314 = vpop.f32.mrf.mxu0
        %v2315 = vadd.f32 %v2256, %v2314
        %v2316 = vpop.f32.mrf.mxu0
        %v2317 = vadd.f32 %v2258, %v2316
        %2318 = vmatmul.bf16.gmra.mxu0 %v1629
        %v2319 = vpop.f32.mrf.mxu0
        %v2320 = vadd.f32 %v2261, %v2319
        %v2321 = vpop.f32.mrf.mxu0
        %v2322 = vadd.f32 %v2263, %v2321
        %2323 = vmatmul.bf16.gmra.mxu0 %v1641
        %v2324 = vpop.f32.mrf.mxu0
        %v2325 = vadd.f32 %v2266, %v2324
        %v2326 = vpop.f32.mrf.mxu0
        %v2327 = vadd.f32 %v2268, %v2326
        %2328 = vmatmul.bf16.gmra.mxu0 %v1653
        %v2329 = vpop.f32.mrf.mxu0
        %v2330 = vadd.f32 %v2271, %v2329
        %v2331 = vpop.f32.mrf.mxu0
        %v2332 = vadd.f32 %v2273, %v2331
        %2333 = vmatmul.bf16.gmra.mxu0 %v1665
        %v2334 = vpop.f32.mrf.mxu0
        %v2335 = vadd.f32 %v2276, %v2334
        %v2336 = vpop.f32.mrf.mxu0
        %v2337 = vadd.f32 %v2278, %v2336
        %2338 = vmatmul.bf16.gmra.mxu0 %v1677
        %v2339 = vpop.f32.mrf.mxu0
        %v2340 = vadd.f32 %v2281, %v2339
        %v2341 = vpop.f32.mrf.mxu0
        %v2342 = vadd.f32 %v2283, %v2341
        %2343 = vmatmul.bf16.gmra.mxu0 %v1689
        %v2344 = vpop.f32.mrf.mxu0
        %v2345 = vadd.f32 %v2286, %v2344
        %v2346 = vpop.f32.mrf.mxu0
        %v2347 = vadd.f32 %v2288, %v2346
        %2348 = vmatmul.bf16.gmra.mxu0 %v1701
        %v2349 = vpop.f32.mrf.mxu0
        %v2350 = vadd.f32 %v2291, %v2349
        %v2351 = vpop.f32.mrf.mxu0
        %v2352 = vadd.f32 %v2293, %v2351
        %2353 = vdwg.mxu0
        %2354 = vmatpush.bf16.msra.mxu0 %v2022
        %2355 = vmatpush.bf16.msra.mxu0 %v2020
        %2356 = vmatpush.bf16.msra.mxu0 %v2018
        %2357 = vmatpush.bf16.msra.mxu0 %v2016
        %2358 = vmatpush.bf16.msra.mxu0 %v2014
        %2359 = vmatpush.bf16.msra.mxu0 %v2012
        %2360 = vmatpush.bf16.msra.mxu0 %v2010
        %2361 = vmatpush.bf16.msra.mxu0 %v2008
        %2362 = vmatmul.bf16.gmra.mxu0 %v1745
        %v2363 = vpop.f32.mrf.mxu0
        %v2364 = vadd.f32 %v2305, %v2363
        %v2365 = vpop.f32.mrf.mxu0
        %v2366 = vadd.f32 %v2307, %v2365
        %2367 = vmatmul.bf16.gmra.mxu0 %v1748
        %v2368 = vpop.f32.mrf.mxu0
        %v2369 = vadd.f32 %v2310, %v2368
        %v2370 = vpop.f32.mrf.mxu0
        %v2371 = vadd.f32 %v2312, %v2370
        %2372 = vmatmul.bf16.gmra.mxu0 %v1751
        %v2373 = vpop.f32.mrf.mxu0
        %v2374 = vadd.f32 %v2315, %v2373
        %v2375 = vpop.f32.mrf.mxu0
        %v2376 = vadd.f32 %v2317, %v2375
        %2377 = vmatmul.bf16.gmra.mxu0 %v1754
        %v2378 = vpop.f32.mrf.mxu0
        %v2379 = vadd.f32 %v2320, %v2378
        %v2380 = vpop.f32.mrf.mxu0
        %v2381 = vadd.f32 %v2322, %v2380
        %2382 = vmatmul.bf16.gmra.mxu0 %v1757
        %v2383 = vpop.f32.mrf.mxu0
        %v2384 = vadd.f32 %v2325, %v2383
        %v2385 = vpop.f32.mrf.mxu0
        %v2386 = vadd.f32 %v2327, %v2385
        %2387 = vmatmul.bf16.gmra.mxu0 %v1760
        %v2388 = vpop.f32.mrf.mxu0
        %v2389 = vadd.f32 %v2330, %v2388
        %v2390 = vpop.f32.mrf.mxu0
        %v2391 = vadd.f32 %v2332, %v2390
        %2392 = vmatmul.bf16.gmra.mxu0 %v1763
        %v2393 = vpop.f32.mrf.mxu0
        %v2394 = vadd.f32 %v2335, %v2393
        %v2395 = vpop.f32.mrf.mxu0
        %v2396 = vadd.f32 %v2337, %v2395
        %2397 = vmatmul.bf16.gmra.mxu0 %v1766
        %v2398 = vpop.f32.mrf.mxu0
        %v2399 = vadd.f32 %v2340, %v2398
        %v2400 = vpop.f32.mrf.mxu0
        %v2401 = vadd.f32 %v2342, %v2400
        %2402 = vmatmul.bf16.gmra.mxu0 %v1769
        %v2403 = vpop.f32.mrf.mxu0
        %v2404 = vadd.f32 %v2345, %v2403
        %v2405 = vpop.f32.mrf.mxu0
        %v2406 = vadd.f32 %v2347, %v2405
        %2407 = vmatmul.bf16.gmra.mxu0 %v1772
        %v2408 = vpop.f32.mrf.mxu0
        %v2409 = vadd.f32 %v2350, %v2408
        %v2410 = vpop.f32.mrf.mxu0
        %v2411 = vadd.f32 %v2352, %v2410
        %2412 = vdwg.mxu0
        %v2413 = vadd.f32 %v1448, %v2364
        %v2414 = vadd.f32 %v1448, %v2366
        %v2415 = vadd.f32 %v1447, %v2194
        %v2416 = vadd.f32 %v1448, %v2369
        %v2417 = vadd.f32 %v1447, %v2196
        %v2418 = vadd.f32 %v1448, %v2371
        %v2419 = vadd.f32 %v1447, %v2199
        %v2420 = vadd.f32 %v1448, %v2374
        %v2421 = vadd.f32 %v1447, %v2201
        %v2422 = vadd.f32 %v1448, %v2376
        %v2423 = vadd.f32 %v1447, %v2204
        %v2424 = vadd.f32 %v1448, %v2379
        %v2425 = vadd.f32 %v1447, %v2206
        %v2426 = vadd.f32 %v1448, %v2381
        %v2427 = vadd.f32 %v1447, %v2209
        %v2428 = vadd.f32 %v1448, %v2384
        %v2429 = vadd.f32 %v1447, %v2211
        %v2430 = vadd.f32 %v1448, %v2386
        %v2431 = vadd.f32 %v1447, %v2214
        %v2432 = vadd.f32 %v1448, %v2389
        %v2433 = vadd.f32 %v1447, %v2216
        %v2434 = vadd.f32 %v1448, %v2391
        %v2435 = vadd.f32 %v1447, %v2219
        %v2436 = vadd.f32 %v1448, %v2394
        %v2437 = vadd.f32 %v1447, %v2221
        %v2438 = vadd.f32 %v1448, %v2396
        %v2439 = vadd.f32 %v1447, %v2224
        %v2440 = vadd.f32 %v1448, %v2399
        %v2441 = vadd.f32 %v1447, %v2226
        %v2442 = vadd.f32 %v1448, %v2401
        %v2443 = vadd.f32 %v1447, %v2229
        %v2444 = vadd.f32 %v1448, %v2404
        %v2445 = vadd.f32 %v1447, %v2231
        %v2446 = vadd.f32 %v1448, %v2406
        %v2447 = vadd.f32 %v1448, %v2409
        %v2448 = vadd.f32 %v1448, %v2411
        %v2449 = vld [vmem:[#allocation3] sm:$0xf]
        %v2450 = vld [vmem:[#allocation3 + $0x4] sm:$0xf]
        %v2451 = vld [vmem:[#allocation3 + $0xc] sm:$0xf]
        %v2452 = vld [vmem:[#allocation3 + $0x10] sm:$0xf]
        %v2453 = vld [vmem:[#allocation3 + $0x18] sm:$0xf]
        %v2454 = vld [vmem:[#allocation3 + $0x1c] sm:$0xf]
        %v2455 = vld [vmem:[#allocation3 + $0x24] sm:$0xf]
        %v2456 = vld [vmem:[#allocation3 + $0x28] sm:$0xf]
        %v2457 = vld [vmem:[#allocation3 + $0x30] sm:$0xf]
        %v2458 = vld [vmem:[#allocation3 + $0x34] sm:$0xf]
        %v2459 = vld [vmem:[#allocation3 + $0x3c] sm:$0xf]
        %v2460 = vld [vmem:[#allocation3 + $0x40] sm:$0xf]
        %v2461 = vld [vmem:[#allocation3 + $0x48] sm:$0xf]
        %v2462 = vld [vmem:[#allocation3 + $0x4c] sm:$0xf]
        %v2463 = vld [vmem:[#allocation3 + $0x54] sm:$0xf]
        %v2464 = vld [vmem:[#allocation3 + $0x58] sm:$0xf]
        %v2465 = vld [vmem:[#allocation3 + $0x60] sm:$0xf]
        %v2466 = vld [vmem:[#allocation3 + $0x64] sm:$0xf]
        %v2467 = vld [vmem:[#allocation3 + $0x6c] sm:$0xf]
        %v2468 = vld [vmem:[#allocation3 + $0x70] sm:$0xf]
        %v2469 = vld [vmem:[#allocation3 + $0x8] sm:$0x1]
        %v2470 = vld [vmem:[#allocation3 + $0x14] sm:$0x1]
        %v2471 = vld [vmem:[#allocation3 + $0x20] sm:$0x1]
        %v2472 = vld [vmem:[#allocation3 + $0x2c] sm:$0x1]
        %v2473 = vld [vmem:[#allocation3 + $0x38] sm:$0x1]
        %v2474 = vld [vmem:[#allocation3 + $0x44] sm:$0x1]
        %v2475 = vld [vmem:[#allocation3 + $0x50] sm:$0x1]
        %v2476 = vld [vmem:[#allocation3 + $0x5c] sm:$0x1]
        %v2477 = vld [vmem:[#allocation3 + $0x68] sm:$0x1]
        %v2478 = vld [vmem:[#allocation3 + $0x74] sm:$0x1]
        %v2479 = vld [vmem:[#allocation3] sm:$0xe]
        %v2480 = vld [vmem:[#allocation3 + $0xc] sm:$0xe]
        %v2481 = vld [vmem:[#allocation3 + $0x18] sm:$0xe]
        %v2482 = vld [vmem:[#allocation3 + $0x24] sm:$0xe]
        %v2483 = vld [vmem:[#allocation3 + $0x30] sm:$0xe]
        %v2484 = vld [vmem:[#allocation3 + $0x3c] sm:$0xe]
        %v2485 = vld [vmem:[#allocation3 + $0x48] sm:$0xe]
        %v2486 = vld [vmem:[#allocation3 + $0x54] sm:$0xe]
        %v2487 = vld [vmem:[#allocation3 + $0x60] sm:$0xe]
        %v2488 = vld [vmem:[#allocation3 + $0x6c] sm:$0xe]
        %v2509 = vunpack.c.l.b16 %v2449
        %v2510 = vunpack.c.l.b16 %v2450
        %v2511 = vunpack.c.l.b16 %v2451
        %v2512 = vunpack.c.l.b16 %v2452
        %v2513 = vunpack.c.l.b16 %v2453
        %v2514 = vunpack.c.l.b16 %v2454
        %v2515 = vunpack.c.l.b16 %v2455
        %v2516 = vunpack.c.l.b16 %v2456
        %v2517 = vunpack.c.l.b16 %v2457
        %v2518 = vunpack.c.l.b16 %v2458
        %v2519 = vunpack.c.l.b16 %v2459
        %v2520 = vunpack.c.l.b16 %v2460
        %v2521 = vunpack.c.l.b16 %v2461
        %v2522 = vunpack.c.l.b16 %v2462
        %v2523 = vunpack.c.l.b16 %v2463
        %v2524 = vunpack.c.l.b16 %v2464
        %v2525 = vunpack.c.l.b16 %v2465
        %v2526 = vunpack.c.l.b16 %v2466
        %v2527 = vunpack.c.l.b16 %v2467
        %v2528 = vunpack.c.l.b16 %v2468
        %v2529 = vpack.c.b16 %v2510, %v2509
        %v2530 = vpack.c.b16 %v2512, %v2511
        %v2531 = vpack.c.b16 %v2514, %v2513
        %v2532 = vpack.c.b16 %v2516, %v2515
        %v2533 = vpack.c.b16 %v2518, %v2517
        %v2534 = vpack.c.b16 %v2520, %v2519
        %v2535 = vpack.c.b16 %v2522, %v2521
        %v2536 = vpack.c.b16 %v2524, %v2523
        %v2537 = vpack.c.b16 %v2526, %v2525
        %v2538 = vpack.c.b16 %v2528, %v2527
        %v2559 = vunpack.c.l.b16 %v2469
        %v2560 = vunpack.c.l.b16 %v2470
        %v2561 = vunpack.c.l.b16 %v2471
        %v2562 = vunpack.c.l.b16 %v2472
        %v2563 = vunpack.c.l.b16 %v2473
        %v2564 = vunpack.c.l.b16 %v2474
        %v2565 = vunpack.c.l.b16 %v2475
        %v2566 = vunpack.c.l.b16 %v2476
        %v2567 = vunpack.c.l.b16 %v2477
        %v2568 = vunpack.c.l.b16 %v2478
        %v2569 = vpack.c.b16 %v2559, %v2559
        %v2570 = vpack.c.b16 %v2560, %v2560
        %v2571 = vpack.c.b16 %v2561, %v2561
        %v2572 = vpack.c.b16 %v2562, %v2562
        %v2573 = vpack.c.b16 %v2563, %v2563
        %v2574 = vpack.c.b16 %v2564, %v2564
        %v2575 = vpack.c.b16 %v2565, %v2565
        %v2576 = vpack.c.b16 %v2566, %v2566
        %v2577 = vpack.c.b16 %v2567, %v2567
        %v2578 = vpack.c.b16 %v2568, %v2568
        %v2580 = vshrl.u32 %v2529, 16
        %v2582 = vshll.u32 %v2529, 16
        %v2584 = vrot.slane %v2582, 1
        %v2585 = vor.u32 %v2580, %v2584
        %v2587 = vshll.u32 %v2569, 16
        %v2589 = vrot.slane %v2587, 1
        %v2590 = vsel %vm1581, %v2585, %v2589
        %v2592 = vshrl.u32 %v2530, 16
        %v2594 = vshll.u32 %v2530, 16
        %v2596 = vrot.slane %v2594, 1
        %v2597 = vor.u32 %v2592, %v2596
        %v2599 = vshll.u32 %v2570, 16
        %v2601 = vrot.slane %v2599, 1
        %v2602 = vsel %vm1581, %v2597, %v2601
        %v2604 = vshrl.u32 %v2531, 16
        %v2606 = vshll.u32 %v2531, 16
        %v2608 = vrot.slane %v2606, 1
        %v2609 = vor.u32 %v2604, %v2608
        %v2611 = vshll.u32 %v2571, 16
        %v2613 = vrot.slane %v2611, 1
        %v2614 = vsel %vm1581, %v2609, %v2613
        %v2616 = vshrl.u32 %v2532, 16
        %v2618 = vshll.u32 %v2532, 16
        %v2620 = vrot.slane %v2618, 1
        %v2621 = vor.u32 %v2616, %v2620
        %v2623 = vshll.u32 %v2572, 16
        %v2625 = vrot.slane %v2623, 1
        %v2626 = vsel %vm1581, %v2621, %v2625
        %v2628 = vshrl.u32 %v2533, 16
        %v2630 = vshll.u32 %v2533, 16
        %v2632 = vrot.slane %v2630, 1
        %v2633 = vor.u32 %v2628, %v2632
        %v2635 = vshll.u32 %v2573, 16
        %v2637 = vrot.slane %v2635, 1
        %v2638 = vsel %vm1581, %v2633, %v2637
        %v2640 = vshrl.u32 %v2534, 16
        %v2642 = vshll.u32 %v2534, 16
        %v2644 = vrot.slane %v2642, 1
        %v2645 = vor.u32 %v2640, %v2644
        %v2647 = vshll.u32 %v2574, 16
        %v2649 = vrot.slane %v2647, 1
        %v2650 = vsel %vm1581, %v2645, %v2649
        %v2652 = vshrl.u32 %v2535, 16
        %v2654 = vshll.u32 %v2535, 16
        %v2656 = vrot.slane %v2654, 1
        %v2657 = vor.u32 %v2652, %v2656
        %v2659 = vshll.u32 %v2575, 16
        %v2661 = vrot.slane %v2659, 1
        %v2662 = vsel %vm1581, %v2657, %v2661
        %v2664 = vshrl.u32 %v2536, 16
        %v2666 = vshll.u32 %v2536, 16
        %v2668 = vrot.slane %v2666, 1
        %v2669 = vor.u32 %v2664, %v2668
        %v2671 = vshll.u32 %v2576, 16
        %v2673 = vrot.slane %v2671, 1
        %v2674 = vsel %vm1581, %v2669, %v2673
        %v2676 = vshrl.u32 %v2537, 16
        %v2678 = vshll.u32 %v2537, 16
        %v2680 = vrot.slane %v2678, 1
        %v2681 = vor.u32 %v2676, %v2680
        %v2683 = vshll.u32 %v2577, 16
        %v2685 = vrot.slane %v2683, 1
        %v2686 = vsel %vm1581, %v2681, %v2685
        %v2688 = vshrl.u32 %v2538, 16
        %v2690 = vshll.u32 %v2538, 16
        %v2692 = vrot.slane %v2690, 1
        %v2693 = vor.u32 %v2688, %v2692
        %v2695 = vshll.u32 %v2578, 16
        %v2697 = vrot.slane %v2695, 1
        %v2698 = vsel %vm1581, %v2693, %v2697
        %v2719 = vunpack.c.l.b16 %v2479
        %v2720 = vunpack.c.l.b16 %v2480
        %v2721 = vunpack.c.l.b16 %v2481
        %v2722 = vunpack.c.l.b16 %v2482
        %v2723 = vunpack.c.l.b16 %v2483
        %v2724 = vunpack.c.l.b16 %v2484
        %v2725 = vunpack.c.l.b16 %v2485
        %v2726 = vunpack.c.l.b16 %v2486
        %v2727 = vunpack.c.l.b16 %v2487
        %v2728 = vunpack.c.l.b16 %v2488
        %v2729 = vpack.c.b16 %v2510, %v2719
        %v2730 = vpack.c.b16 %v2512, %v2720
        %v2731 = vpack.c.b16 %v2514, %v2721
        %v2732 = vpack.c.b16 %v2516, %v2722
        %v2733 = vpack.c.b16 %v2518, %v2723
        %v2734 = vpack.c.b16 %v2520, %v2724
        %v2735 = vpack.c.b16 %v2522, %v2725
        %v2736 = vpack.c.b16 %v2524, %v2726
        %v2737 = vpack.c.b16 %v2526, %v2727
        %v2738 = vpack.c.b16 %v2528, %v2728
        %v2739 = vrot.slane %v2729, 1
        %v2740 = vrot.slane %v2569, 1
        %v2741 = vsel %vm1742, %v2739, %v2740
        %v2742 = vrot.slane %v2730, 1
        %v2743 = vrot.slane %v2570, 1
        %v2744 = vsel %vm1742, %v2742, %v2743
        %v2745 = vrot.slane %v2731, 1
        %v2746 = vrot.slane %v2571, 1
        %v2747 = vsel %vm1742, %v2745, %v2746
        %v2748 = vrot.slane %v2732, 1
        %v2749 = vrot.slane %v2572, 1
        %v2750 = vsel %vm1742, %v2748, %v2749
        %v2751 = vrot.slane %v2733, 1
        %v2752 = vrot.slane %v2573, 1
        %v2753 = vsel %vm1742, %v2751, %v2752
        %v2754 = vrot.slane %v2734, 1
        %v2755 = vrot.slane %v2574, 1
        %v2756 = vsel %vm1742, %v2754, %v2755
        %v2757 = vrot.slane %v2735, 1
        %v2758 = vrot.slane %v2575, 1
        %v2759 = vsel %vm1742, %v2757, %v2758
        %v2760 = vrot.slane %v2736, 1
        %v2761 = vrot.slane %v2576, 1
        %v2762 = vsel %vm1742, %v2760, %v2761
        %v2763 = vrot.slane %v2737, 1
        %v2764 = vrot.slane %v2577, 1
        %v2765 = vsel %vm1742, %v2763, %v2764
        %v2766 = vrot.slane %v2738, 1
        %v2767 = vrot.slane %v2578, 1
        %v2768 = vsel %vm1742, %v2766, %v2767
        %v2779 = vld [vmem:[#allocation10] sm:$0xff]
        %v2780 = vld [vmem:[#allocation10 + $0x8] sm:$0xff]
        %v2781 = vld [vmem:[#allocation10 + $0x10] sm:$0xff]
        %v2782 = vld [vmem:[#allocation10 + $0x18] sm:$0xff]
        %v2783 = vld [vmem:[#allocation10 + $0x20] sm:$0xff]
        %v2784 = vld [vmem:[#allocation10 + $0x28] sm:$0xff]
        %v2785 = vld [vmem:[#allocation10 + $0x30] sm:$0xff]
        %v2786 = vld [vmem:[#allocation10 + $0x38] sm:$0xff]
        %v2787 = vld [vmem:[#allocation10 + $0x40] sm:$0xff]
        %v2788 = vld [vmem:[#allocation10 + $0x48] sm:$0xff]
        %v2789 = vld [vmem:[#allocation10 + $0x50] sm:$0xff]
        %v2790 = vld [vmem:[#allocation10 + $0x58] sm:$0xff]
        %v2791 = vld [vmem:[#allocation10 + $0x60] sm:$0xff]
        %v2792 = vld [vmem:[#allocation10 + $0x68] sm:$0xff]
        %v2793 = vld [vmem:[#allocation10 + $0x70] sm:$0xff]
        %v2794 = vld [vmem:[#allocation10 + $0x78] sm:$0xff]
        %v2795 = vld [vmem:[#allocation10 + $0x80] sm:$0xff]
        %v2796 = vld [vmem:[#allocation10 + $0x88] sm:$0xff]
        %v2797 = vld [vmem:[#allocation10 + $0x90] sm:$0xff]
        %v2798 = vld [vmem:[#allocation10 + $0x98] sm:$0xff]
        %v2799 = vld [vmem:[#allocation10 + $0xa0] sm:$0xff]
        %v2800 = vld [vmem:[#allocation10 + $0xa8] sm:$0xff]
        %v2801 = vld [vmem:[#allocation10 + $0xb0] sm:$0xff]
        %v2802 = vld [vmem:[#allocation10 + $0xb8] sm:$0xff]
        %v2803 = vld [vmem:[#allocation10 + $0xc0] sm:$0xff]
        %v2804 = vld [vmem:[#allocation10 + $0xc8] sm:$0xff]
        %v2805 = vld [vmem:[#allocation10 + $0xd0] sm:$0xff]
        %v2806 = vld [vmem:[#allocation10 + $0xd8] sm:$0xff]
        %v2807 = vld [vmem:[#allocation10 + $0xe0] sm:$0xff]
        %v2808 = vld [vmem:[#allocation10 + $0xe8] sm:$0xff]
        %v2809 = vld [vmem:[#allocation10 + $0xf0] sm:$0xff]
        %v2810 = vld [vmem:[#allocation10 + $0xf8] sm:$0xff]
        %v2811 = vld [vmem:[#allocation10 + $0x100] sm:$0xff]
        %v2812 = vld [vmem:[#allocation10 + $0x108] sm:$0xff]
        %v2813 = vld [vmem:[#allocation10 + $0x110] sm:$0xff]
        %v2814 = vld [vmem:[#allocation10 + $0x118] sm:$0xff]
        %v2815 = vld [vmem:[#allocation10 + $0x120] sm:$0xff]
        %v2816 = vld [vmem:[#allocation10 + $0x128] sm:$0xff]
        %v2817 = vld [vmem:[#allocation10 + $0x130] sm:$0xff]
        %v2818 = vld [vmem:[#allocation10 + $0x138] sm:$0xff]
        %v2819 = vld [vmem:[#allocation10 + $0x140] sm:$0xff]
        %v2820 = vld [vmem:[#allocation10 + $0x148] sm:$0xff]
        %v2821 = vld [vmem:[#allocation10 + $0x150] sm:$0xff]
        %v2822 = vld [vmem:[#allocation10 + $0x158] sm:$0xff]
        %v2823 = vld [vmem:[#allocation10 + $0x160] sm:$0xff]
        %v2824 = vld [vmem:[#allocation10 + $0x168] sm:$0xff]
        %v2825 = vld [vmem:[#allocation10 + $0x170] sm:$0xff]
        %v2826 = vld [vmem:[#allocation10 + $0x178] sm:$0xff]
        %v2875 = vunpack.c.l.b16 %v2779
        %v2876 = vunpack.c.h.b16 %v2779
        %v2877 = vunpack.c.l.b16 %v2780
        %v2878 = vunpack.c.h.b16 %v2780
        %v2879 = vunpack.c.l.b16 %v2781
        %v2880 = vunpack.c.h.b16 %v2781
        %v2881 = vunpack.c.l.b16 %v2782
        %v2882 = vunpack.c.h.b16 %v2782
        %v2883 = vunpack.c.l.b16 %v2783
        %v2884 = vunpack.c.h.b16 %v2783
        %v2885 = vunpack.c.l.b16 %v2784
        %v2886 = vunpack.c.h.b16 %v2784
        %v2887 = vunpack.c.l.b16 %v2785
        %v2888 = vunpack.c.h.b16 %v2785
        %v2889 = vunpack.c.l.b16 %v2786
        %v2890 = vunpack.c.h.b16 %v2786
        %v2891 = vunpack.c.l.b16 %v2787
        %v2892 = vunpack.c.h.b16 %v2787
        %v2893 = vunpack.c.l.b16 %v2788
        %v2894 = vunpack.c.h.b16 %v2788
        %v2895 = vunpack.c.l.b16 %v2789
        %v2896 = vunpack.c.h.b16 %v2789
        %v2897 = vunpack.c.l.b16 %v2790
        %v2898 = vunpack.c.h.b16 %v2790
        %v2899 = vunpack.c.l.b16 %v2791
        %v2900 = vunpack.c.h.b16 %v2791
        %v2901 = vunpack.c.l.b16 %v2792
        %v2902 = vunpack.c.h.b16 %v2792
        %v2903 = vunpack.c.l.b16 %v2793
        %v2904 = vunpack.c.h.b16 %v2793
        %v2905 = vunpack.c.l.b16 %v2794
        %v2906 = vunpack.c.h.b16 %v2794
        %v2907 = vunpack.c.l.b16 %v2795
        %v2908 = vunpack.c.h.b16 %v2795
        %v2909 = vunpack.c.l.b16 %v2796
        %v2910 = vunpack.c.h.b16 %v2796
        %v2911 = vunpack.c.l.b16 %v2797
        %v2912 = vunpack.c.h.b16 %v2797
        %v2913 = vunpack.c.l.b16 %v2798
        %v2914 = vunpack.c.h.b16 %v2798
        %v2915 = vunpack.c.l.b16 %v2799
        %v2916 = vunpack.c.h.b16 %v2799
        %v2917 = vunpack.c.l.b16 %v2800
        %v2918 = vunpack.c.h.b16 %v2800
        %v2919 = vunpack.c.l.b16 %v2801
        %v2920 = vunpack.c.h.b16 %v2801
        %v2921 = vunpack.c.l.b16 %v2802
        %v2922 = vunpack.c.h.b16 %v2802
        %v2923 = vunpack.c.l.b16 %v2803
        %v2924 = vunpack.c.h.b16 %v2803
        %v2925 = vunpack.c.l.b16 %v2804
        %v2926 = vunpack.c.h.b16 %v2804
        %v2927 = vunpack.c.l.b16 %v2805
        %v2928 = vunpack.c.h.b16 %v2805
        %v2929 = vunpack.c.l.b16 %v2806
        %v2930 = vunpack.c.h.b16 %v2806
        %v2931 = vunpack.c.l.b16 %v2807
        %v2932 = vunpack.c.h.b16 %v2807
        %v2933 = vunpack.c.l.b16 %v2808
        %v2934 = vunpack.c.h.b16 %v2808
        %v2935 = vunpack.c.l.b16 %v2809
        %v2936 = vunpack.c.h.b16 %v2809
        %v2937 = vunpack.c.l.b16 %v2810
        %v2938 = vunpack.c.h.b16 %v2810
        %v2939 = vunpack.c.l.b16 %v2811
        %v2940 = vunpack.c.h.b16 %v2811
        %v2941 = vunpack.c.l.b16 %v2812
        %v2942 = vunpack.c.h.b16 %v2812
        %v2943 = vunpack.c.l.b16 %v2813
        %v2944 = vunpack.c.h.b16 %v2813
        %v2945 = vunpack.c.l.b16 %v2814
        %v2946 = vunpack.c.h.b16 %v2814
        %v2947 = vunpack.c.l.b16 %v2815
        %v2948 = vunpack.c.h.b16 %v2815
        %v2949 = vunpack.c.l.b16 %v2816
        %v2950 = vunpack.c.h.b16 %v2816
        %v2951 = vunpack.c.l.b16 %v2817
        %v2952 = vunpack.c.h.b16 %v2817
        %v2953 = vunpack.c.l.b16 %v2818
        %v2954 = vunpack.c.h.b16 %v2818
        %v2955 = vunpack.c.l.b16 %v2819
        %v2956 = vunpack.c.h.b16 %v2819
        %v2957 = vunpack.c.l.b16 %v2820
        %v2958 = vunpack.c.h.b16 %v2820
        %v2959 = vunpack.c.l.b16 %v2821
        %v2960 = vunpack.c.h.b16 %v2821
        %v2961 = vunpack.c.l.b16 %v2822
        %v2962 = vunpack.c.h.b16 %v2822
        %v2963 = vunpack.c.l.b16 %v2823
        %v2964 = vunpack.c.h.b16 %v2823
        %v2965 = vunpack.c.l.b16 %v2824
        %v2966 = vunpack.c.h.b16 %v2824
        %v2967 = vunpack.c.l.b16 %v2825
        %v2968 = vunpack.c.h.b16 %v2825
        %v2969 = vunpack.c.l.b16 %v2826
        %v2970 = vunpack.c.h.b16 %v2826
        %v2971 = vpack.c.b16 %v2877, %v2875
        %v2972 = vpack.c.b16 %v2878, %v2876
        %v2973 = vpack.c.b16 %v2881, %v2879
        %v2974 = vpack.c.b16 %v2882, %v2880
        %v2975 = vpack.c.b16 %v2885, %v2883
        %v2976 = vpack.c.b16 %v2886, %v2884
        %v2977 = vpack.c.b16 %v2889, %v2887
        %v2978 = vpack.c.b16 %v2890, %v2888
        %v2979 = vpack.c.b16 %v2893, %v2891
        %v2980 = vpack.c.b16 %v2894, %v2892
        %v2981 = vpack.c.b16 %v2897, %v2895
        %v2982 = vpack.c.b16 %v2898, %v2896
        %v2983 = vpack.c.b16 %v2901, %v2899
        %v2984 = vpack.c.b16 %v2902, %v2900
        %v2985 = vpack.c.b16 %v2905, %v2903
        %v2986 = vpack.c.b16 %v2906, %v2904
        %v2987 = vpack.c.b16 %v2909, %v2907
        %v2988 = vpack.c.b16 %v2910, %v2908
        %v2989 = vpack.c.b16 %v2913, %v2911
        %v2990 = vpack.c.b16 %v2914, %v2912
        %v2991 = vpack.c.b16 %v2917, %v2915
        %v2992 = vpack.c.b16 %v2918, %v2916
        %v2993 = vpack.c.b16 %v2921, %v2919
        %v2994 = vpack.c.b16 %v2922, %v2920
        %v2995 = vpack.c.b16 %v2925, %v2923
        %v2996 = vpack.c.b16 %v2926, %v2924
        %v2997 = vpack.c.b16 %v2929, %v2927
        %v2998 = vpack.c.b16 %v2930, %v2928
        %v2999 = vpack.c.b16 %v2933, %v2931
        %v3000 = vpack.c.b16 %v2934, %v2932
        %v3001 = vpack.c.b16 %v2937, %v2935
        %v3002 = vpack.c.b16 %v2938, %v2936
        %v3003 = vpack.c.b16 %v2941, %v2939
        %v3004 = vpack.c.b16 %v2942, %v2940
        %v3005 = vpack.c.b16 %v2945, %v2943
        %v3006 = vpack.c.b16 %v2946, %v2944
        %v3007 = vpack.c.b16 %v2949, %v2947
        %v3008 = vpack.c.b16 %v2950, %v2948
        %v3009 = vpack.c.b16 %v2953, %v2951
        %v3010 = vpack.c.b16 %v2954, %v2952
        %v3011 = vpack.c.b16 %v2957, %v2955
        %v3012 = vpack.c.b16 %v2958, %v2956
        %v3013 = vpack.c.b16 %v2961, %v2959
        %v3014 = vpack.c.b16 %v2962, %v2960
        %v3015 = vpack.c.b16 %v2965, %v2963
        %v3016 = vpack.c.b16 %v2966, %v2964
        %v3017 = vpack.c.b16 %v2969, %v2967
        %v3018 = vpack.c.b16 %v2970, %v2968
        %3067 = vmatpush.bf16.msra.mxu0 %v2985
        %3068 = vmatpush.bf16.msra.mxu0 %v2983
        %3069 = vmatpush.bf16.msra.mxu0 %v2981
        %3070 = vmatpush.bf16.msra.mxu0 %v2979
        %3071 = vmatpush.bf16.msra.mxu0 %v2977
        %3072 = vmatpush.bf16.msra.mxu0 %v2975
        %3073 = vmatpush.bf16.msra.mxu0 %v2973
        %3074 = vmatpush.bf16.msra.mxu0 %v2971
        %3075 = vmatmul.bf16.gmra.mxu0 %v2529
        %v3076 = vpop.f32.mrf.mxu0
        %v3077 = vpop.f32.mrf.mxu0
        %3078 = vmatmul.bf16.gmra.mxu0 %v2530
        %v3079 = vpop.f32.mrf.mxu0
        %v3080 = vadd.f32 0.0, %v3079
        %v3081 = vpop.f32.mrf.mxu0
        %v3082 = vadd.f32 0.0, %v3081
        %3083 = vmatmul.bf16.gmra.mxu0 %v2531
        %v3084 = vpop.f32.mrf.mxu0
        %v3085 = vadd.f32 0.0, %v3084
        %v3086 = vpop.f32.mrf.mxu0
        %v3087 = vadd.f32 0.0, %v3086
        %3088 = vmatmul.bf16.gmra.mxu0 %v2532
        %v3089 = vpop.f32.mrf.mxu0
        %v3090 = vadd.f32 0.0, %v3089
        %v3091 = vpop.f32.mrf.mxu0
        %v3092 = vadd.f32 0.0, %v3091
        %3093 = vmatmul.bf16.gmra.mxu0 %v2533
        %v3094 = vpop.f32.mrf.mxu0
        %v3095 = vadd.f32 0.0, %v3094
        %v3096 = vpop.f32.mrf.mxu0
        %v3097 = vadd.f32 0.0, %v3096
        %3098 = vmatmul.bf16.gmra.mxu0 %v2534
        %v3099 = vpop.f32.mrf.mxu0
        %v3100 = vadd.f32 0.0, %v3099
        %v3101 = vpop.f32.mrf.mxu0
        %v3102 = vadd.f32 0.0, %v3101
        %3103 = vmatmul.bf16.gmra.mxu0 %v2535
        %v3104 = vpop.f32.mrf.mxu0
        %v3105 = vadd.f32 0.0, %v3104
        %v3106 = vpop.f32.mrf.mxu0
        %v3107 = vadd.f32 0.0, %v3106
        %3108 = vmatmul.bf16.gmra.mxu0 %v2536
        %v3109 = vpop.f32.mrf.mxu0
        %v3110 = vadd.f32 0.0, %v3109
        %v3111 = vpop.f32.mrf.mxu0
        %v3112 = vadd.f32 0.0, %v3111
        %3113 = vmatmul.bf16.gmra.mxu0 %v2537
        %v3114 = vpop.f32.mrf.mxu0
        %v3115 = vadd.f32 0.0, %v3114
        %v3116 = vpop.f32.mrf.mxu0
        %v3117 = vadd.f32 0.0, %v3116
        %3118 = vmatmul.bf16.gmra.mxu0 %v2538
        %v3119 = vpop.f32.mrf.mxu0
        %v3120 = vpop.f32.mrf.mxu0
        %3121 = vdwg.mxu0
        %3122 = vmatpush.bf16.msra.mxu0 %v3001
        %3123 = vmatpush.bf16.msra.mxu0 %v2999
        %3124 = vmatpush.bf16.msra.mxu0 %v2997
        %3125 = vmatpush.bf16.msra.mxu0 %v2995
        %3126 = vmatpush.bf16.msra.mxu0 %v2993
        %3127 = vmatpush.bf16.msra.mxu0 %v2991
        %3128 = vmatpush.bf16.msra.mxu0 %v2989
        %3129 = vmatpush.bf16.msra.mxu0 %v2987
        %3130 = vmatmul.bf16.gmra.mxu0 %v2590
        %v3131 = vpop.f32.mrf.mxu0
        %v3132 = vpop.f32.mrf.mxu0
        %3133 = vmatmul.bf16.gmra.mxu0 %v2602
        %v3134 = vpop.f32.mrf.mxu0
        %v3135 = vadd.f32 %v3080, %v3134
        %v3136 = vpop.f32.mrf.mxu0
        %v3137 = vadd.f32 %v3082, %v3136
        %3138 = vmatmul.bf16.gmra.mxu0 %v2614
        %v3139 = vpop.f32.mrf.mxu0
        %v3140 = vadd.f32 %v3085, %v3139
        %v3141 = vpop.f32.mrf.mxu0
        %v3142 = vadd.f32 %v3087, %v3141
        %3143 = vmatmul.bf16.gmra.mxu0 %v2626
        %v3144 = vpop.f32.mrf.mxu0
        %v3145 = vadd.f32 %v3090, %v3144
        %v3146 = vpop.f32.mrf.mxu0
        %v3147 = vadd.f32 %v3092, %v3146
        %3148 = vmatmul.bf16.gmra.mxu0 %v2638
        %v3149 = vpop.f32.mrf.mxu0
        %v3150 = vadd.f32 %v3095, %v3149
        %v3151 = vpop.f32.mrf.mxu0
        %v3152 = vadd.f32 %v3097, %v3151
        %3153 = vmatmul.bf16.gmra.mxu0 %v2650
        %v3154 = vpop.f32.mrf.mxu0
        %v3155 = vadd.f32 %v3100, %v3154
        %v3156 = vpop.f32.mrf.mxu0
        %v3157 = vadd.f32 %v3102, %v3156
        %3158 = vmatmul.bf16.gmra.mxu0 %v2662
        %v3159 = vpop.f32.mrf.mxu0
        %v3160 = vadd.f32 %v3105, %v3159
        %v3161 = vpop.f32.mrf.mxu0
        %v3162 = vadd.f32 %v3107, %v3161
        %3163 = vmatmul.bf16.gmra.mxu0 %v2674
        %v3164 = vpop.f32.mrf.mxu0
        %v3165 = vadd.f32 %v3110, %v3164
        %v3166 = vpop.f32.mrf.mxu0
        %v3167 = vadd.f32 %v3112, %v3166
        %3168 = vmatmul.bf16.gmra.mxu0 %v2686
        %v3169 = vpop.f32.mrf.mxu0
        %v3170 = vadd.f32 %v3115, %v3169
        %v3171 = vpop.f32.mrf.mxu0
        %v3172 = vadd.f32 %v3117, %v3171
        %3173 = vmatmul.bf16.gmra.mxu0 %v2698
        %v3174 = vpop.f32.mrf.mxu0
        %v3175 = vpop.f32.mrf.mxu0
        %3176 = vdwg.mxu0
        %3177 = vmatpush.bf16.msra.mxu0 %v3017
        %3178 = vmatpush.bf16.msra.mxu0 %v3015
        %3179 = vmatpush.bf16.msra.mxu0 %v3013
        %3180 = vmatpush.bf16.msra.mxu0 %v3011
        %3181 = vmatpush.bf16.msra.mxu0 %v3009
        %3182 = vmatpush.bf16.msra.mxu0 %v3007
        %3183 = vmatpush.bf16.msra.mxu0 %v3005
        %3184 = vmatpush.bf16.msra.mxu0 %v3003
        %3185 = vmatmul.bf16.gmra.mxu0 %v2741
        %v3186 = vpop.f32.mrf.mxu0
        %v3187 = vpop.f32.mrf.mxu0
        %3188 = vmatmul.bf16.gmra.mxu0 %v2744
        %v3189 = vpop.f32.mrf.mxu0
        %v3190 = vadd.f32 %v3135, %v3189
        %v3191 = vpop.f32.mrf.mxu0
        %v3192 = vadd.f32 %v3137, %v3191
        %3193 = vmatmul.bf16.gmra.mxu0 %v2747
        %v3194 = vpop.f32.mrf.mxu0
        %v3195 = vadd.f32 %v3140, %v3194
        %v3196 = vpop.f32.mrf.mxu0
        %v3197 = vadd.f32 %v3142, %v3196
        %3198 = vmatmul.bf16.gmra.mxu0 %v2750
        %v3199 = vpop.f32.mrf.mxu0
        %v3200 = vadd.f32 %v3145, %v3199
        %v3201 = vpop.f32.mrf.mxu0
        %v3202 = vadd.f32 %v3147, %v3201
        %3203 = vmatmul.bf16.gmra.mxu0 %v2753
        %v3204 = vpop.f32.mrf.mxu0
        %v3205 = vadd.f32 %v3150, %v3204
        %v3206 = vpop.f32.mrf.mxu0
        %v3207 = vadd.f32 %v3152, %v3206
        %3208 = vmatmul.bf16.gmra.mxu0 %v2756
        %v3209 = vpop.f32.mrf.mxu0
        %v3210 = vadd.f32 %v3155, %v3209
        %v3211 = vpop.f32.mrf.mxu0
        %v3212 = vadd.f32 %v3157, %v3211
        %3213 = vmatmul.bf16.gmra.mxu0 %v2759
        %v3214 = vpop.f32.mrf.mxu0
        %v3215 = vadd.f32 %v3160, %v3214
        %v3216 = vpop.f32.mrf.mxu0
        %v3217 = vadd.f32 %v3162, %v3216
        %3218 = vmatmul.bf16.gmra.mxu0 %v2762
        %v3219 = vpop.f32.mrf.mxu0
        %v3220 = vadd.f32 %v3165, %v3219
        %v3221 = vpop.f32.mrf.mxu0
        %v3222 = vadd.f32 %v3167, %v3221
        %3223 = vmatmul.bf16.gmra.mxu0 %v2765
        %v3224 = vpop.f32.mrf.mxu0
        %v3225 = vadd.f32 %v3170, %v3224
        %v3226 = vpop.f32.mrf.mxu0
        %v3227 = vadd.f32 %v3172, %v3226
        %3228 = vmatmul.bf16.gmra.mxu0 %v2768
        %v3229 = vpop.f32.mrf.mxu0
        %v3230 = vpop.f32.mrf.mxu0
        %3231 = vdwg.mxu0
        %3232 = vmatpush.bf16.msra.mxu0 %v2986
        %3233 = vmatpush.bf16.msra.mxu0 %v2984
        %3234 = vmatpush.bf16.msra.mxu0 %v2982
        %3235 = vmatpush.bf16.msra.mxu0 %v2980
        %3236 = vmatpush.bf16.msra.mxu0 %v2978
        %3237 = vmatpush.bf16.msra.mxu0 %v2976
        %3238 = vmatpush.bf16.msra.mxu0 %v2974
        %3239 = vmatpush.bf16.msra.mxu0 %v2972
        %3240 = vmatmul.bf16.gmra.mxu0 %v2529
        %v3241 = vpop.f32.mrf.mxu0
        %v3242 = vadd.f32 0.0, %v3241
        %v3243 = vpop.f32.mrf.mxu0
        %v3244 = vadd.f32 0.0, %v3243
        %3245 = vmatmul.bf16.gmra.mxu0 %v2530
        %v3246 = vpop.f32.mrf.mxu0
        %v3247 = vadd.f32 0.0, %v3246
        %v3248 = vpop.f32.mrf.mxu0
        %v3249 = vadd.f32 0.0, %v3248
        %3250 = vmatmul.bf16.gmra.mxu0 %v2531
        %v3251 = vpop.f32.mrf.mxu0
        %v3252 = vadd.f32 0.0, %v3251
        %v3253 = vpop.f32.mrf.mxu0
        %v3254 = vadd.f32 0.0, %v3253
        %3255 = vmatmul.bf16.gmra.mxu0 %v2532
        %v3256 = vpop.f32.mrf.mxu0
        %v3257 = vadd.f32 0.0, %v3256
        %v3258 = vpop.f32.mrf.mxu0
        %v3259 = vadd.f32 0.0, %v3258
        %3260 = vmatmul.bf16.gmra.mxu0 %v2533
        %v3261 = vpop.f32.mrf.mxu0
        %v3262 = vadd.f32 0.0, %v3261
        %v3263 = vpop.f32.mrf.mxu0
        %v3264 = vadd.f32 0.0, %v3263
        %3265 = vmatmul.bf16.gmra.mxu0 %v2534
        %v3266 = vpop.f32.mrf.mxu0
        %v3267 = vadd.f32 0.0, %v3266
        %v3268 = vpop.f32.mrf.mxu0
        %v3269 = vadd.f32 0.0, %v3268
        %3270 = vmatmul.bf16.gmra.mxu0 %v2535
        %v3271 = vpop.f32.mrf.mxu0
        %v3272 = vadd.f32 0.0, %v3271
        %v3273 = vpop.f32.mrf.mxu0
        %v3274 = vadd.f32 0.0, %v3273
        %3275 = vmatmul.bf16.gmra.mxu0 %v2536
        %v3276 = vpop.f32.mrf.mxu0
        %v3277 = vadd.f32 0.0, %v3276
        %v3278 = vpop.f32.mrf.mxu0
        %v3279 = vadd.f32 0.0, %v3278
        %3280 = vmatmul.bf16.gmra.mxu0 %v2537
        %v3281 = vpop.f32.mrf.mxu0
        %v3282 = vadd.f32 0.0, %v3281
        %v3283 = vpop.f32.mrf.mxu0
        %v3284 = vadd.f32 0.0, %v3283
        %3285 = vmatmul.bf16.gmra.mxu0 %v2538
        %v3286 = vpop.f32.mrf.mxu0
        %v3287 = vadd.f32 0.0, %v3286
        %v3288 = vpop.f32.mrf.mxu0
        %v3289 = vadd.f32 0.0, %v3288
        %3290 = vdwg.mxu0
        %3291 = vmatpush.bf16.msra.mxu0 %v3002
        %3292 = vmatpush.bf16.msra.mxu0 %v3000
        %3293 = vmatpush.bf16.msra.mxu0 %v2998
        %3294 = vmatpush.bf16.msra.mxu0 %v2996
        %3295 = vmatpush.bf16.msra.mxu0 %v2994
        %3296 = vmatpush.bf16.msra.mxu0 %v2992
        %3297 = vmatpush.bf16.msra.mxu0 %v2990
        %3298 = vmatpush.bf16.msra.mxu0 %v2988
        %3299 = vmatmul.bf16.gmra.mxu0 %v2590
        %v3300 = vpop.f32.mrf.mxu0
        %v3301 = vadd.f32 %v3242, %v3300
        %v3302 = vpop.f32.mrf.mxu0
        %v3303 = vadd.f32 %v3244, %v3302
        %3304 = vmatmul.bf16.gmra.mxu0 %v2602
        %v3305 = vpop.f32.mrf.mxu0
        %v3306 = vadd.f32 %v3247, %v3305
        %v3307 = vpop.f32.mrf.mxu0
        %v3308 = vadd.f32 %v3249, %v3307
        %3309 = vmatmul.bf16.gmra.mxu0 %v2614
        %v3310 = vpop.f32.mrf.mxu0
        %v3311 = vadd.f32 %v3252, %v3310
        %v3312 = vpop.f32.mrf.mxu0
        %v3313 = vadd.f32 %v3254, %v3312
        %3314 = vmatmul.bf16.gmra.mxu0 %v2626
        %v3315 = vpop.f32.mrf.mxu0
        %v3316 = vadd.f32 %v3257, %v3315
        %v3317 = vpop.f32.mrf.mxu0
        %v3318 = vadd.f32 %v3259, %v3317
        %3319 = vmatmul.bf16.gmra.mxu0 %v2638
        %v3320 = vpop.f32.mrf.mxu0
        %v3321 = vadd.f32 %v3262, %v3320
        %v3322 = vpop.f32.mrf.mxu0
        %v3323 = vadd.f32 %v3264, %v3322
        %3324 = vmatmul.bf16.gmra.mxu0 %v2650
        %v3325 = vpop.f32.mrf.mxu0
        %v3326 = vadd.f32 %v3267, %v3325
        %v3327 = vpop.f32.mrf.mxu0
        %v3328 = vadd.f32 %v3269, %v3327
        %3329 = vmatmul.bf16.gmra.mxu0 %v2662
        %v3330 = vpop.f32.mrf.mxu0
        %v3331 = vadd.f32 %v3272, %v3330
        %v3332 = vpop.f32.mrf.mxu0
        %v3333 = vadd.f32 %v3274, %v3332
        %3334 = vmatmul.bf16.gmra.mxu0 %v2674
        %v3335 = vpop.f32.mrf.mxu0
        %v3336 = vadd.f32 %v3277, %v3335
        %v3337 = vpop.f32.mrf.mxu0
        %v3338 = vadd.f32 %v3279, %v3337
        %3339 = vmatmul.bf16.gmra.mxu0 %v2686
        %v3340 = vpop.f32.mrf.mxu0
        %v3341 = vadd.f32 %v3282, %v3340
        %v3342 = vpop.f32.mrf.mxu0
        %v3343 = vadd.f32 %v3284, %v3342
        %3344 = vmatmul.bf16.gmra.mxu0 %v2698
        %v3345 = vpop.f32.mrf.mxu0
        %v3346 = vadd.f32 %v3287, %v3345
        %v3347 = vpop.f32.mrf.mxu0
        %v3348 = vadd.f32 %v3289, %v3347
        %3349 = vdwg.mxu0
        %3350 = vmatpush.bf16.msra.mxu0 %v3018
        %3351 = vmatpush.bf16.msra.mxu0 %v3016
        %3352 = vmatpush.bf16.msra.mxu0 %v3014
        %3353 = vmatpush.bf16.msra.mxu0 %v3012
        %3354 = vmatpush.bf16.msra.mxu0 %v3010
        %3355 = vmatpush.bf16.msra.mxu0 %v3008
        %3356 = vmatpush.bf16.msra.mxu0 %v3006
        %3357 = vmatpush.bf16.msra.mxu0 %v3004
        %3358 = vmatmul.bf16.gmra.mxu0 %v2741
        %v3359 = vpop.f32.mrf.mxu0
        %v3360 = vadd.f32 %v3301, %v3359
        %v3361 = vpop.f32.mrf.mxu0
        %v3362 = vadd.f32 %v3303, %v3361
        %3363 = vmatmul.bf16.gmra.mxu0 %v2744
        %v3364 = vpop.f32.mrf.mxu0
        %v3365 = vadd.f32 %v3306, %v3364
        %v3366 = vpop.f32.mrf.mxu0
        %v3367 = vadd.f32 %v3308, %v3366
        %3368 = vmatmul.bf16.gmra.mxu0 %v2747
        %v3369 = vpop.f32.mrf.mxu0
        %v3370 = vadd.f32 %v3311, %v3369
        %v3371 = vpop.f32.mrf.mxu0
        %v3372 = vadd.f32 %v3313, %v3371
        %3373 = vmatmul.bf16.gmra.mxu0 %v2750
        %v3374 = vpop.f32.mrf.mxu0
        %v3375 = vadd.f32 %v3316, %v3374
        %v3376 = vpop.f32.mrf.mxu0
        %v3377 = vadd.f32 %v3318, %v3376
        %3378 = vmatmul.bf16.gmra.mxu0 %v2753
        %v3379 = vpop.f32.mrf.mxu0
        %v3380 = vadd.f32 %v3321, %v3379
        %v3381 = vpop.f32.mrf.mxu0
        %v3382 = vadd.f32 %v3323, %v3381
        %3383 = vmatmul.bf16.gmra.mxu0 %v2756
        %v3384 = vpop.f32.mrf.mxu0
        %v3385 = vadd.f32 %v3326, %v3384
        %v3386 = vpop.f32.mrf.mxu0
        %v3387 = vadd.f32 %v3328, %v3386
        %3388 = vmatmul.bf16.gmra.mxu0 %v2759
        %v3389 = vpop.f32.mrf.mxu0
        %v3390 = vadd.f32 %v3331, %v3389
        %v3391 = vpop.f32.mrf.mxu0
        %v3392 = vadd.f32 %v3333, %v3391
        %3393 = vmatmul.bf16.gmra.mxu0 %v2762
        %v3394 = vpop.f32.mrf.mxu0
        %v3395 = vadd.f32 %v3336, %v3394
        %v3396 = vpop.f32.mrf.mxu0
        %v3397 = vadd.f32 %v3338, %v3396
        %3398 = vmatmul.bf16.gmra.mxu0 %v2765
        %v3399 = vpop.f32.mrf.mxu0
        %v3400 = vadd.f32 %v3341, %v3399
        %v3401 = vpop.f32.mrf.mxu0
        %v3402 = vadd.f32 %v3343, %v3401
        %3403 = vmatmul.bf16.gmra.mxu0 %v2768
        %v3404 = vpop.f32.mrf.mxu0
        %v3405 = vadd.f32 %v3346, %v3404
        %v3406 = vpop.f32.mrf.mxu0
        %v3407 = vadd.f32 %v3348, %v3406
        %3408 = vdwg.mxu0
        %v3409 = vadd.f32 %v2413, %v3360
        %v3410 = vadd.f32 %v2414, %v3362
        %v3411 = vadd.f32 %v2415, %v3190
        %v3412 = vadd.f32 %v2416, %v3365
        %v3413 = vadd.f32 %v2417, %v3192
        %v3414 = vadd.f32 %v2418, %v3367
        %v3415 = vadd.f32 %v2419, %v3195
        %v3416 = vadd.f32 %v2420, %v3370
        %v3417 = vadd.f32 %v2421, %v3197
        %v3418 = vadd.f32 %v2422, %v3372
        %v3419 = vadd.f32 %v2423, %v3200
        %v3420 = vadd.f32 %v2424, %v3375
        %v3421 = vadd.f32 %v2425, %v3202
        %v3422 = vadd.f32 %v2426, %v3377
        %v3423 = vadd.f32 %v2427, %v3205
        %v3424 = vadd.f32 %v2428, %v3380
        %v3425 = vadd.f32 %v2429, %v3207
        %v3426 = vadd.f32 %v2430, %v3382
        %v3427 = vadd.f32 %v2431, %v3210
        %v3428 = vadd.f32 %v2432, %v3385
        %v3429 = vadd.f32 %v2433, %v3212
        %v3430 = vadd.f32 %v2434, %v3387
        %v3431 = vadd.f32 %v2435, %v3215
        %v3432 = vadd.f32 %v2436, %v3390
        %v3433 = vadd.f32 %v2437, %v3217
        %v3434 = vadd.f32 %v2438, %v3392
        %v3435 = vadd.f32 %v2439, %v3220
        %v3436 = vadd.f32 %v2440, %v3395
        %v3437 = vadd.f32 %v2441, %v3222
        %v3438 = vadd.f32 %v2442, %v3397
        %v3439 = vadd.f32 %v2443, %v3225
        %v3440 = vadd.f32 %v2444, %v3400
        %v3441 = vadd.f32 %v2445, %v3227
        %v3442 = vadd.f32 %v2446, %v3402
        %v3443 = vadd.f32 %v2447, %v3405
        %v3444 = vadd.f32 %v2448, %v3407
        %s3445 = scalar_lea.vmem [#allocation2], 12
        %v3446 = vld [vmem:[%s3445] sm:$0xf]
        %v3447 = vld [vmem:[%s3445 + $0x4] sm:$0xf]
        %v3448 = vld [vmem:[%s3445 + $0xc] sm:$0xf]
        %v3449 = vld [vmem:[%s3445 + $0x10] sm:$0xf]
        %v3450 = vld [vmem:[%s3445 + $0x18] sm:$0xf]
        %v3451 = vld [vmem:[%s3445 + $0x1c] sm:$0xf]
        %v3452 = vld [vmem:[%s3445 + $0x24] sm:$0xf]
        %v3453 = vld [vmem:[%s3445 + $0x28] sm:$0xf]
        %v3454 = vld [vmem:[%s3445 + $0x30] sm:$0xf]
        %v3455 = vld [vmem:[%s3445 + $0x34] sm:$0xf]
        %v3456 = vld [vmem:[%s3445 + $0x3c] sm:$0xf]
        %v3457 = vld [vmem:[%s3445 + $0x40] sm:$0xf]
        %v3458 = vld [vmem:[%s3445 + $0x48] sm:$0xf]
        %v3459 = vld [vmem:[%s3445 + $0x4c] sm:$0xf]
        %v3460 = vld [vmem:[%s3445 + $0x54] sm:$0xf]
        %v3461 = vld [vmem:[%s3445 + $0x58] sm:$0xf]
        %v3462 = vld [vmem:[%s3445 + $0x60] sm:$0xf]
        %v3463 = vld [vmem:[%s3445 + $0x64] sm:$0xf]
        %v3464 = vld [vmem:[%s3445 + $0x6c] sm:$0xf]
        %v3465 = vld [vmem:[%s3445 + $0x70] sm:$0xf]
        %v3466 = vld [vmem:[%s3445 + $0x8] sm:$0x1]
        %v3467 = vld [vmem:[%s3445 + $0x14] sm:$0x1]
        %v3468 = vld [vmem:[%s3445 + $0x20] sm:$0x1]
        %v3469 = vld [vmem:[%s3445 + $0x2c] sm:$0x1]
        %v3470 = vld [vmem:[%s3445 + $0x38] sm:$0x1]
        %v3471 = vld [vmem:[%s3445 + $0x44] sm:$0x1]
        %v3472 = vld [vmem:[%s3445 + $0x50] sm:$0x1]
        %v3473 = vld [vmem:[%s3445 + $0x5c] sm:$0x1]
        %v3474 = vld [vmem:[%s3445 + $0x68] sm:$0x1]
        %v3475 = vld [vmem:[%s3445 + $0x74] sm:$0x1]
        %v3476 = vld [vmem:[%s3445] sm:$0xe]
        %v3477 = vld [vmem:[%s3445 + $0xc] sm:$0xe]
        %v3478 = vld [vmem:[%s3445 + $0x18] sm:$0xe]
        %v3479 = vld [vmem:[%s3445 + $0x24] sm:$0xe]
        %v3480 = vld [vmem:[%s3445 + $0x30] sm:$0xe]
        %v3481 = vld [vmem:[%s3445 + $0x3c] sm:$0xe]
        %v3482 = vld [vmem:[%s3445 + $0x48] sm:$0xe]
        %v3483 = vld [vmem:[%s3445 + $0x54] sm:$0xe]
        %v3484 = vld [vmem:[%s3445 + $0x60] sm:$0xe]
        %v3485 = vld [vmem:[%s3445 + $0x6c] sm:$0xe]
        %v3506 = vunpack.c.l.b16 %v3446
        %v3507 = vunpack.c.l.b16 %v3447
        %v3508 = vunpack.c.l.b16 %v3448
        %v3509 = vunpack.c.l.b16 %v3449
        %v3510 = vunpack.c.l.b16 %v3450
        %v3511 = vunpack.c.l.b16 %v3451
        %v3512 = vunpack.c.l.b16 %v3452
        %v3513 = vunpack.c.l.b16 %v3453
        %v3514 = vunpack.c.l.b16 %v3454
        %v3515 = vunpack.c.l.b16 %v3455
        %v3516 = vunpack.c.l.b16 %v3456
        %v3517 = vunpack.c.l.b16 %v3457
        %v3518 = vunpack.c.l.b16 %v3458
        %v3519 = vunpack.c.l.b16 %v3459
        %v3520 = vunpack.c.l.b16 %v3460
        %v3521 = vunpack.c.l.b16 %v3461
        %v3522 = vunpack.c.l.b16 %v3462
        %v3523 = vunpack.c.l.b16 %v3463
        %v3524 = vunpack.c.l.b16 %v3464
        %v3525 = vunpack.c.l.b16 %v3465
        %v3526 = vpack.c.b16 %v3507, %v3506
        %v3527 = vpack.c.b16 %v3509, %v3508
        %v3528 = vpack.c.b16 %v3511, %v3510
        %v3529 = vpack.c.b16 %v3513, %v3512
        %v3530 = vpack.c.b16 %v3515, %v3514
        %v3531 = vpack.c.b16 %v3517, %v3516
        %v3532 = vpack.c.b16 %v3519, %v3518
        %v3533 = vpack.c.b16 %v3521, %v3520
        %v3534 = vpack.c.b16 %v3523, %v3522
        %v3535 = vpack.c.b16 %v3525, %v3524
        %v3556 = vunpack.c.l.b16 %v3466
        %v3557 = vunpack.c.l.b16 %v3467
        %v3558 = vunpack.c.l.b16 %v3468
        %v3559 = vunpack.c.l.b16 %v3469
        %v3560 = vunpack.c.l.b16 %v3470
        %v3561 = vunpack.c.l.b16 %v3471
        %v3562 = vunpack.c.l.b16 %v3472
        %v3563 = vunpack.c.l.b16 %v3473
        %v3564 = vunpack.c.l.b16 %v3474
        %v3565 = vunpack.c.l.b16 %v3475
        %v3566 = vpack.c.b16 %v3556, %v3556
        %v3567 = vpack.c.b16 %v3557, %v3557
        %v3568 = vpack.c.b16 %v3558, %v3558
        %v3569 = vpack.c.b16 %v3559, %v3559
        %v3570 = vpack.c.b16 %v3560, %v3560
        %v3571 = vpack.c.b16 %v3561, %v3561
        %v3572 = vpack.c.b16 %v3562, %v3562
        %v3573 = vpack.c.b16 %v3563, %v3563
        %v3574 = vpack.c.b16 %v3564, %v3564
        %v3575 = vpack.c.b16 %v3565, %v3565
        %v3577 = vshrl.u32 %v3526, 16
        %v3579 = vshll.u32 %v3526, 16
        %v3581 = vrot.slane %v3579, 1
        %v3582 = vor.u32 %v3577, %v3581
        %v3584 = vshll.u32 %v3566, 16
        %v3586 = vrot.slane %v3584, 1
        %v3587 = vsel %vm1581, %v3582, %v3586
        %v3589 = vshrl.u32 %v3527, 16
        %v3591 = vshll.u32 %v3527, 16
        %v3593 = vrot.slane %v3591, 1
        %v3594 = vor.u32 %v3589, %v3593
        %v3596 = vshll.u32 %v3567, 16
        %v3598 = vrot.slane %v3596, 1
        %v3599 = vsel %vm1581, %v3594, %v3598
        %v3601 = vshrl.u32 %v3528, 16
        %v3603 = vshll.u32 %v3528, 16
        %v3605 = vrot.slane %v3603, 1
        %v3606 = vor.u32 %v3601, %v3605
        %v3608 = vshll.u32 %v3568, 16
        %v3610 = vrot.slane %v3608, 1
        %v3611 = vsel %vm1581, %v3606, %v3610
        %v3613 = vshrl.u32 %v3529, 16
        %v3615 = vshll.u32 %v3529, 16
        %v3617 = vrot.slane %v3615, 1
        %v3618 = vor.u32 %v3613, %v3617
        %v3620 = vshll.u32 %v3569, 16
        %v3622 = vrot.slane %v3620, 1
        %v3623 = vsel %vm1581, %v3618, %v3622
        %v3625 = vshrl.u32 %v3530, 16
        %v3627 = vshll.u32 %v3530, 16
        %v3629 = vrot.slane %v3627, 1
        %v3630 = vor.u32 %v3625, %v3629
        %v3632 = vshll.u32 %v3570, 16
        %v3634 = vrot.slane %v3632, 1
        %v3635 = vsel %vm1581, %v3630, %v3634
        %v3637 = vshrl.u32 %v3531, 16
        %v3639 = vshll.u32 %v3531, 16
        %v3641 = vrot.slane %v3639, 1
        %v3642 = vor.u32 %v3637, %v3641
        %v3644 = vshll.u32 %v3571, 16
        %v3646 = vrot.slane %v3644, 1
        %v3647 = vsel %vm1581, %v3642, %v3646
        %v3649 = vshrl.u32 %v3532, 16
        %v3651 = vshll.u32 %v3532, 16
        %v3653 = vrot.slane %v3651, 1
        %v3654 = vor.u32 %v3649, %v3653
        %v3656 = vshll.u32 %v3572, 16
        %v3658 = vrot.slane %v3656, 1
        %v3659 = vsel %vm1581, %v3654, %v3658
        %v3661 = vshrl.u32 %v3533, 16
        %v3663 = vshll.u32 %v3533, 16
        %v3665 = vrot.slane %v3663, 1
        %v3666 = vor.u32 %v3661, %v3665
        %v3668 = vshll.u32 %v3573, 16
        %v3670 = vrot.slane %v3668, 1
        %v3671 = vsel %vm1581, %v3666, %v3670
        %v3673 = vshrl.u32 %v3534, 16
        %v3675 = vshll.u32 %v3534, 16
        %v3677 = vrot.slane %v3675, 1
        %v3678 = vor.u32 %v3673, %v3677
        %v3680 = vshll.u32 %v3574, 16
        %v3682 = vrot.slane %v3680, 1
        %v3683 = vsel %vm1581, %v3678, %v3682
        %v3685 = vshrl.u32 %v3535, 16
        %v3687 = vshll.u32 %v3535, 16
        %v3689 = vrot.slane %v3687, 1
        %v3690 = vor.u32 %v3685, %v3689
        %v3692 = vshll.u32 %v3575, 16
        %v3694 = vrot.slane %v3692, 1
        %v3695 = vsel %vm1581, %v3690, %v3694
        %v3716 = vunpack.c.l.b16 %v3476
        %v3717 = vunpack.c.l.b16 %v3477
        %v3718 = vunpack.c.l.b16 %v3478
        %v3719 = vunpack.c.l.b16 %v3479
        %v3720 = vunpack.c.l.b16 %v3480
        %v3721 = vunpack.c.l.b16 %v3481
        %v3722 = vunpack.c.l.b16 %v3482
        %v3723 = vunpack.c.l.b16 %v3483
        %v3724 = vunpack.c.l.b16 %v3484
        %v3725 = vunpack.c.l.b16 %v3485
        %v3726 = vpack.c.b16 %v3507, %v3716
        %v3727 = vpack.c.b16 %v3509, %v3717
        %v3728 = vpack.c.b16 %v3511, %v3718
        %v3729 = vpack.c.b16 %v3513, %v3719
        %v3730 = vpack.c.b16 %v3515, %v3720
        %v3731 = vpack.c.b16 %v3517, %v3721
        %v3732 = vpack.c.b16 %v3519, %v3722
        %v3733 = vpack.c.b16 %v3521, %v3723
        %v3734 = vpack.c.b16 %v3523, %v3724
        %v3735 = vpack.c.b16 %v3525, %v3725
        %v3736 = vrot.slane %v3726, 1
        %v3737 = vrot.slane %v3566, 1
        %v3738 = vsel %vm1742, %v3736, %v3737
        %v3739 = vrot.slane %v3727, 1
        %v3740 = vrot.slane %v3567, 1
        %v3741 = vsel %vm1742, %v3739, %v3740
        %v3742 = vrot.slane %v3728, 1
        %v3743 = vrot.slane %v3568, 1
        %v3744 = vsel %vm1742, %v3742, %v3743
        %v3745 = vrot.slane %v3729, 1
        %v3746 = vrot.slane %v3569, 1
        %v3747 = vsel %vm1742, %v3745, %v3746
        %v3748 = vrot.slane %v3730, 1
        %v3749 = vrot.slane %v3570, 1
        %v3750 = vsel %vm1742, %v3748, %v3749
        %v3751 = vrot.slane %v3731, 1
        %v3752 = vrot.slane %v3571, 1
        %v3753 = vsel %vm1742, %v3751, %v3752
        %v3754 = vrot.slane %v3732, 1
        %v3755 = vrot.slane %v3572, 1
        %v3756 = vsel %vm1742, %v3754, %v3755
        %v3757 = vrot.slane %v3733, 1
        %v3758 = vrot.slane %v3573, 1
        %v3759 = vsel %vm1742, %v3757, %v3758
        %v3760 = vrot.slane %v3734, 1
        %v3761 = vrot.slane %v3574, 1
        %v3762 = vsel %vm1742, %v3760, %v3761
        %v3763 = vrot.slane %v3735, 1
        %v3764 = vrot.slane %v3575, 1
        %v3765 = vsel %vm1742, %v3763, %v3764
        %s3776 = scalar_lea.vmem [#allocation9], 384
        %v3777 = vld [vmem:[%s3776] sm:$0xff]
        %v3778 = vld [vmem:[%s3776 + $0x8] sm:$0xff]
        %v3779 = vld [vmem:[%s3776 + $0x10] sm:$0xff]
        %v3780 = vld [vmem:[%s3776 + $0x18] sm:$0xff]
        %v3781 = vld [vmem:[%s3776 + $0x20] sm:$0xff]
        %v3782 = vld [vmem:[%s3776 + $0x28] sm:$0xff]
        %v3783 = vld [vmem:[%s3776 + $0x30] sm:$0xff]
        %v3784 = vld [vmem:[%s3776 + $0x38] sm:$0xff]
        %v3785 = vld [vmem:[%s3776 + $0x40] sm:$0xff]
        %v3786 = vld [vmem:[%s3776 + $0x48] sm:$0xff]
        %v3787 = vld [vmem:[%s3776 + $0x50] sm:$0xff]
        %v3788 = vld [vmem:[%s3776 + $0x58] sm:$0xff]
        %v3789 = vld [vmem:[%s3776 + $0x60] sm:$0xff]
        %v3790 = vld [vmem:[%s3776 + $0x68] sm:$0xff]
        %v3791 = vld [vmem:[%s3776 + $0x70] sm:$0xff]
        %v3792 = vld [vmem:[%s3776 + $0x78] sm:$0xff]
        %v3793 = vld [vmem:[%s3776 + $0x80] sm:$0xff]
        %v3794 = vld [vmem:[%s3776 + $0x88] sm:$0xff]
        %v3795 = vld [vmem:[%s3776 + $0x90] sm:$0xff]
        %v3796 = vld [vmem:[%s3776 + $0x98] sm:$0xff]
        %v3797 = vld [vmem:[%s3776 + $0xa0] sm:$0xff]
        %v3798 = vld [vmem:[%s3776 + $0xa8] sm:$0xff]
        %v3799 = vld [vmem:[%s3776 + $0xb0] sm:$0xff]
        %v3800 = vld [vmem:[%s3776 + $0xb8] sm:$0xff]
        %v3801 = vld [vmem:[%s3776 + $0xc0] sm:$0xff]
        %v3802 = vld [vmem:[%s3776 + $0xc8] sm:$0xff]
        %v3803 = vld [vmem:[%s3776 + $0xd0] sm:$0xff]
        %v3804 = vld [vmem:[%s3776 + $0xd8] sm:$0xff]
        %v3805 = vld [vmem:[%s3776 + $0xe0] sm:$0xff]
        %v3806 = vld [vmem:[%s3776 + $0xe8] sm:$0xff]
        %v3807 = vld [vmem:[%s3776 + $0xf0] sm:$0xff]
        %v3808 = vld [vmem:[%s3776 + $0xf8] sm:$0xff]
        %v3809 = vld [vmem:[%s3776 + $0x100] sm:$0xff]
        %v3810 = vld [vmem:[%s3776 + $0x108] sm:$0xff]
        %v3811 = vld [vmem:[%s3776 + $0x110] sm:$0xff]
        %v3812 = vld [vmem:[%s3776 + $0x118] sm:$0xff]
        %v3813 = vld [vmem:[%s3776 + $0x120] sm:$0xff]
        %v3814 = vld [vmem:[%s3776 + $0x128] sm:$0xff]
        %v3815 = vld [vmem:[%s3776 + $0x130] sm:$0xff]
        %v3816 = vld [vmem:[%s3776 + $0x138] sm:$0xff]
        %v3817 = vld [vmem:[%s3776 + $0x140] sm:$0xff]
        %v3818 = vld [vmem:[%s3776 + $0x148] sm:$0xff]
        %v3819 = vld [vmem:[%s3776 + $0x150] sm:$0xff]
        %v3820 = vld [vmem:[%s3776 + $0x158] sm:$0xff]
        %v3821 = vld [vmem:[%s3776 + $0x160] sm:$0xff]
        %v3822 = vld [vmem:[%s3776 + $0x168] sm:$0xff]
        %v3823 = vld [vmem:[%s3776 + $0x170] sm:$0xff]
        %v3824 = vld [vmem:[%s3776 + $0x178] sm:$0xff]
        %v3873 = vunpack.c.l.b16 %v3777
        %v3874 = vunpack.c.h.b16 %v3777
        %v3875 = vunpack.c.l.b16 %v3778
        %v3876 = vunpack.c.h.b16 %v3778
        %v3877 = vunpack.c.l.b16 %v3779
        %v3878 = vunpack.c.h.b16 %v3779
        %v3879 = vunpack.c.l.b16 %v3780
        %v3880 = vunpack.c.h.b16 %v3780
        %v3881 = vunpack.c.l.b16 %v3781
        %v3882 = vunpack.c.h.b16 %v3781
        %v3883 = vunpack.c.l.b16 %v3782
        %v3884 = vunpack.c.h.b16 %v3782
        %v3885 = vunpack.c.l.b16 %v3783
        %v3886 = vunpack.c.h.b16 %v3783
        %v3887 = vunpack.c.l.b16 %v3784
        %v3888 = vunpack.c.h.b16 %v3784
        %v3889 = vunpack.c.l.b16 %v3785
        %v3890 = vunpack.c.h.b16 %v3785
        %v3891 = vunpack.c.l.b16 %v3786
        %v3892 = vunpack.c.h.b16 %v3786
        %v3893 = vunpack.c.l.b16 %v3787
        %v3894 = vunpack.c.h.b16 %v3787
        %v3895 = vunpack.c.l.b16 %v3788
        %v3896 = vunpack.c.h.b16 %v3788
        %v3897 = vunpack.c.l.b16 %v3789
        %v3898 = vunpack.c.h.b16 %v3789
        %v3899 = vunpack.c.l.b16 %v3790
        %v3900 = vunpack.c.h.b16 %v3790
        %v3901 = vunpack.c.l.b16 %v3791
        %v3902 = vunpack.c.h.b16 %v3791
        %v3903 = vunpack.c.l.b16 %v3792
        %v3904 = vunpack.c.h.b16 %v3792
        %v3905 = vunpack.c.l.b16 %v3793
        %v3906 = vunpack.c.h.b16 %v3793
        %v3907 = vunpack.c.l.b16 %v3794
        %v3908 = vunpack.c.h.b16 %v3794
        %v3909 = vunpack.c.l.b16 %v3795
        %v3910 = vunpack.c.h.b16 %v3795
        %v3911 = vunpack.c.l.b16 %v3796
        %v3912 = vunpack.c.h.b16 %v3796
        %v3913 = vunpack.c.l.b16 %v3797
        %v3914 = vunpack.c.h.b16 %v3797
        %v3915 = vunpack.c.l.b16 %v3798
        %v3916 = vunpack.c.h.b16 %v3798
        %v3917 = vunpack.c.l.b16 %v3799
        %v3918 = vunpack.c.h.b16 %v3799
        %v3919 = vunpack.c.l.b16 %v3800
        %v3920 = vunpack.c.h.b16 %v3800
        %v3921 = vunpack.c.l.b16 %v3801
        %v3922 = vunpack.c.h.b16 %v3801
        %v3923 = vunpack.c.l.b16 %v3802
        %v3924 = vunpack.c.h.b16 %v3802
        %v3925 = vunpack.c.l.b16 %v3803
        %v3926 = vunpack.c.h.b16 %v3803
        %v3927 = vunpack.c.l.b16 %v3804
        %v3928 = vunpack.c.h.b16 %v3804
        %v3929 = vunpack.c.l.b16 %v3805
        %v3930 = vunpack.c.h.b16 %v3805
        %v3931 = vunpack.c.l.b16 %v3806
        %v3932 = vunpack.c.h.b16 %v3806
        %v3933 = vunpack.c.l.b16 %v3807
        %v3934 = vunpack.c.h.b16 %v3807
        %v3935 = vunpack.c.l.b16 %v3808
        %v3936 = vunpack.c.h.b16 %v3808
        %v3937 = vunpack.c.l.b16 %v3809
        %v3938 = vunpack.c.h.b16 %v3809
        %v3939 = vunpack.c.l.b16 %v3810
        %v3940 = vunpack.c.h.b16 %v3810
        %v3941 = vunpack.c.l.b16 %v3811
        %v3942 = vunpack.c.h.b16 %v3811
        %v3943 = vunpack.c.l.b16 %v3812
        %v3944 = vunpack.c.h.b16 %v3812
        %v3945 = vunpack.c.l.b16 %v3813
        %v3946 = vunpack.c.h.b16 %v3813
        %v3947 = vunpack.c.l.b16 %v3814
        %v3948 = vunpack.c.h.b16 %v3814
        %v3949 = vunpack.c.l.b16 %v3815
        %v3950 = vunpack.c.h.b16 %v3815
        %v3951 = vunpack.c.l.b16 %v3816
        %v3952 = vunpack.c.h.b16 %v3816
        %v3953 = vunpack.c.l.b16 %v3817
        %v3954 = vunpack.c.h.b16 %v3817
        %v3955 = vunpack.c.l.b16 %v3818
        %v3956 = vunpack.c.h.b16 %v3818
        %v3957 = vunpack.c.l.b16 %v3819
        %v3958 = vunpack.c.h.b16 %v3819
        %v3959 = vunpack.c.l.b16 %v3820
        %v3960 = vunpack.c.h.b16 %v3820
        %v3961 = vunpack.c.l.b16 %v3821
        %v3962 = vunpack.c.h.b16 %v3821
        %v3963 = vunpack.c.l.b16 %v3822
        %v3964 = vunpack.c.h.b16 %v3822
        %v3965 = vunpack.c.l.b16 %v3823
        %v3966 = vunpack.c.h.b16 %v3823
        %v3967 = vunpack.c.l.b16 %v3824
        %v3968 = vunpack.c.h.b16 %v3824
        %v3969 = vpack.c.b16 %v3875, %v3873
        %v3970 = vpack.c.b16 %v3876, %v3874
        %v3971 = vpack.c.b16 %v3879, %v3877
        %v3972 = vpack.c.b16 %v3880, %v3878
        %v3973 = vpack.c.b16 %v3883, %v3881
        %v3974 = vpack.c.b16 %v3884, %v3882
        %v3975 = vpack.c.b16 %v3887, %v3885
        %v3976 = vpack.c.b16 %v3888, %v3886
        %v3977 = vpack.c.b16 %v3891, %v3889
        %v3978 = vpack.c.b16 %v3892, %v3890
        %v3979 = vpack.c.b16 %v3895, %v3893
        %v3980 = vpack.c.b16 %v3896, %v3894
        %v3981 = vpack.c.b16 %v3899, %v3897
        %v3982 = vpack.c.b16 %v3900, %v3898
        %v3983 = vpack.c.b16 %v3903, %v3901
        %v3984 = vpack.c.b16 %v3904, %v3902
        %v3985 = vpack.c.b16 %v3907, %v3905
        %v3986 = vpack.c.b16 %v3908, %v3906
        %v3987 = vpack.c.b16 %v3911, %v3909
        %v3988 = vpack.c.b16 %v3912, %v3910
        %v3989 = vpack.c.b16 %v3915, %v3913
        %v3990 = vpack.c.b16 %v3916, %v3914
        %v3991 = vpack.c.b16 %v3919, %v3917
        %v3992 = vpack.c.b16 %v3920, %v3918
        %v3993 = vpack.c.b16 %v3923, %v3921
        %v3994 = vpack.c.b16 %v3924, %v3922
        %v3995 = vpack.c.b16 %v3927, %v3925
        %v3996 = vpack.c.b16 %v3928, %v3926
        %v3997 = vpack.c.b16 %v3931, %v3929
        %v3998 = vpack.c.b16 %v3932, %v3930
        %v3999 = vpack.c.b16 %v3935, %v3933
        %v4000 = vpack.c.b16 %v3936, %v3934
        %v4001 = vpack.c.b16 %v3939, %v3937
        %v4002 = vpack.c.b16 %v3940, %v3938
        %v4003 = vpack.c.b16 %v3943, %v3941
        %v4004 = vpack.c.b16 %v3944, %v3942
        %v4005 = vpack.c.b16 %v3947, %v3945
        %v4006 = vpack.c.b16 %v3948, %v3946
        %v4007 = vpack.c.b16 %v3951, %v3949
        %v4008 = vpack.c.b16 %v3952, %v3950
        %v4009 = vpack.c.b16 %v3955, %v3953
        %v4010 = vpack.c.b16 %v3956, %v3954
        %v4011 = vpack.c.b16 %v3959, %v3957
        %v4012 = vpack.c.b16 %v3960, %v3958
        %v4013 = vpack.c.b16 %v3963, %v3961
        %v4014 = vpack.c.b16 %v3964, %v3962
        %v4015 = vpack.c.b16 %v3967, %v3965
        %v4016 = vpack.c.b16 %v3968, %v3966
        %4065 = vmatpush.bf16.msra.mxu0 %v3983
        %4066 = vmatpush.bf16.msra.mxu0 %v3981
        %4067 = vmatpush.bf16.msra.mxu0 %v3979
        %4068 = vmatpush.bf16.msra.mxu0 %v3977
        %4069 = vmatpush.bf16.msra.mxu0 %v3975
        %4070 = vmatpush.bf16.msra.mxu0 %v3973
        %4071 = vmatpush.bf16.msra.mxu0 %v3971
        %4072 = vmatpush.bf16.msra.mxu0 %v3969
        %4073 = vmatmul.bf16.gmra.mxu0 %v3526
        %v4074 = vpop.f32.mrf.mxu0
        %v4075 = vpop.f32.mrf.mxu0
        %4076 = vmatmul.bf16.gmra.mxu0 %v3527
        %v4077 = vpop.f32.mrf.mxu0
        %v4078 = vadd.f32 0.0, %v4077
        %v4079 = vpop.f32.mrf.mxu0
        %v4080 = vadd.f32 0.0, %v4079
        %4081 = vmatmul.bf16.gmra.mxu0 %v3528
        %v4082 = vpop.f32.mrf.mxu0
        %v4083 = vadd.f32 0.0, %v4082
        %v4084 = vpop.f32.mrf.mxu0
        %v4085 = vadd.f32 0.0, %v4084
        %4086 = vmatmul.bf16.gmra.mxu0 %v3529
        %v4087 = vpop.f32.mrf.mxu0
        %v4088 = vadd.f32 0.0, %v4087
        %v4089 = vpop.f32.mrf.mxu0
        %v4090 = vadd.f32 0.0, %v4089
        %4091 = vmatmul.bf16.gmra.mxu0 %v3530
        %v4092 = vpop.f32.mrf.mxu0
        %v4093 = vadd.f32 0.0, %v4092
        %v4094 = vpop.f32.mrf.mxu0
        %v4095 = vadd.f32 0.0, %v4094
        %4096 = vmatmul.bf16.gmra.mxu0 %v3531
        %v4097 = vpop.f32.mrf.mxu0
        %v4098 = vadd.f32 0.0, %v4097
        %v4099 = vpop.f32.mrf.mxu0
        %v4100 = vadd.f32 0.0, %v4099
        %4101 = vmatmul.bf16.gmra.mxu0 %v3532
        %v4102 = vpop.f32.mrf.mxu0
        %v4103 = vadd.f32 0.0, %v4102
        %v4104 = vpop.f32.mrf.mxu0
        %v4105 = vadd.f32 0.0, %v4104
        %4106 = vmatmul.bf16.gmra.mxu0 %v3533
        %v4107 = vpop.f32.mrf.mxu0
        %v4108 = vadd.f32 0.0, %v4107
        %v4109 = vpop.f32.mrf.mxu0
        %v4110 = vadd.f32 0.0, %v4109
        %4111 = vmatmul.bf16.gmra.mxu0 %v3534
        %v4112 = vpop.f32.mrf.mxu0
        %v4113 = vadd.f32 0.0, %v4112
        %v4114 = vpop.f32.mrf.mxu0
        %v4115 = vadd.f32 0.0, %v4114
        %4116 = vmatmul.bf16.gmra.mxu0 %v3535
        %v4117 = vpop.f32.mrf.mxu0
        %v4118 = vpop.f32.mrf.mxu0
        %4119 = vdwg.mxu0
        %4120 = vmatpush.bf16.msra.mxu0 %v3999
        %4121 = vmatpush.bf16.msra.mxu0 %v3997
        %4122 = vmatpush.bf16.msra.mxu0 %v3995
        %4123 = vmatpush.bf16.msra.mxu0 %v3993
        %4124 = vmatpush.bf16.msra.mxu0 %v3991
        %4125 = vmatpush.bf16.msra.mxu0 %v3989
        %4126 = vmatpush.bf16.msra.mxu0 %v3987
        %4127 = vmatpush.bf16.msra.mxu0 %v3985
        %4128 = vmatmul.bf16.gmra.mxu0 %v3587
        %v4129 = vpop.f32.mrf.mxu0
        %v4130 = vpop.f32.mrf.mxu0
        %4131 = vmatmul.bf16.gmra.mxu0 %v3599
        %v4132 = vpop.f32.mrf.mxu0
        %v4133 = vadd.f32 %v4078, %v4132
        %v4134 = vpop.f32.mrf.mxu0
        %v4135 = vadd.f32 %v4080, %v4134
        %4136 = vmatmul.bf16.gmra.mxu0 %v3611
        %v4137 = vpop.f32.mrf.mxu0
        %v4138 = vadd.f32 %v4083, %v4137
        %v4139 = vpop.f32.mrf.mxu0
        %v4140 = vadd.f32 %v4085, %v4139
        %4141 = vmatmul.bf16.gmra.mxu0 %v3623
        %v4142 = vpop.f32.mrf.mxu0
        %v4143 = vadd.f32 %v4088, %v4142
        %v4144 = vpop.f32.mrf.mxu0
        %v4145 = vadd.f32 %v4090, %v4144
        %4146 = vmatmul.bf16.gmra.mxu0 %v3635
        %v4147 = vpop.f32.mrf.mxu0
        %v4148 = vadd.f32 %v4093, %v4147
        %v4149 = vpop.f32.mrf.mxu0
        %v4150 = vadd.f32 %v4095, %v4149
        %4151 = vmatmul.bf16.gmra.mxu0 %v3647
        %v4152 = vpop.f32.mrf.mxu0
        %v4153 = vadd.f32 %v4098, %v4152
        %v4154 = vpop.f32.mrf.mxu0
        %v4155 = vadd.f32 %v4100, %v4154
        %4156 = vmatmul.bf16.gmra.mxu0 %v3659
        %v4157 = vpop.f32.mrf.mxu0
        %v4158 = vadd.f32 %v4103, %v4157
        %v4159 = vpop.f32.mrf.mxu0
        %v4160 = vadd.f32 %v4105, %v4159
        %4161 = vmatmul.bf16.gmra.mxu0 %v3671
        %v4162 = vpop.f32.mrf.mxu0
        %v4163 = vadd.f32 %v4108, %v4162
        %v4164 = vpop.f32.mrf.mxu0
        %v4165 = vadd.f32 %v4110, %v4164
        %4166 = vmatmul.bf16.gmra.mxu0 %v3683
        %v4167 = vpop.f32.mrf.mxu0
        %v4168 = vadd.f32 %v4113, %v4167
        %v4169 = vpop.f32.mrf.mxu0
        %v4170 = vadd.f32 %v4115, %v4169
        %4171 = vmatmul.bf16.gmra.mxu0 %v3695
        %v4172 = vpop.f32.mrf.mxu0
        %v4173 = vpop.f32.mrf.mxu0
        %4174 = vdwg.mxu0
        %4175 = vmatpush.bf16.msra.mxu0 %v4015
        %4176 = vmatpush.bf16.msra.mxu0 %v4013
        %4177 = vmatpush.bf16.msra.mxu0 %v4011
        %4178 = vmatpush.bf16.msra.mxu0 %v4009
        %4179 = vmatpush.bf16.msra.mxu0 %v4007
        %4180 = vmatpush.bf16.msra.mxu0 %v4005
        %4181 = vmatpush.bf16.msra.mxu0 %v4003
        %4182 = vmatpush.bf16.msra.mxu0 %v4001
        %4183 = vmatmul.bf16.gmra.mxu0 %v3738
        %v4184 = vpop.f32.mrf.mxu0
        %v4185 = vpop.f32.mrf.mxu0
        %4186 = vmatmul.bf16.gmra.mxu0 %v3741
        %v4187 = vpop.f32.mrf.mxu0
        %v4188 = vadd.f32 %v4133, %v4187
        %v4189 = vpop.f32.mrf.mxu0
        %v4190 = vadd.f32 %v4135, %v4189
        %4191 = vmatmul.bf16.gmra.mxu0 %v3744
        %v4192 = vpop.f32.mrf.mxu0
        %v4193 = vadd.f32 %v4138, %v4192
        %v4194 = vpop.f32.mrf.mxu0
        %v4195 = vadd.f32 %v4140, %v4194
        %4196 = vmatmul.bf16.gmra.mxu0 %v3747
        %v4197 = vpop.f32.mrf.mxu0
        %v4198 = vadd.f32 %v4143, %v4197
        %v4199 = vpop.f32.mrf.mxu0
        %v4200 = vadd.f32 %v4145, %v4199
        %4201 = vmatmul.bf16.gmra.mxu0 %v3750
        %v4202 = vpop.f32.mrf.mxu0
        %v4203 = vadd.f32 %v4148, %v4202
        %v4204 = vpop.f32.mrf.mxu0
        %v4205 = vadd.f32 %v4150, %v4204
        %4206 = vmatmul.bf16.gmra.mxu0 %v3753
        %v4207 = vpop.f32.mrf.mxu0
        %v4208 = vadd.f32 %v4153, %v4207
        %v4209 = vpop.f32.mrf.mxu0
        %v4210 = vadd.f32 %v4155, %v4209
        %4211 = vmatmul.bf16.gmra.mxu0 %v3756
        %v4212 = vpop.f32.mrf.mxu0
        %v4213 = vadd.f32 %v4158, %v4212
        %v4214 = vpop.f32.mrf.mxu0
        %v4215 = vadd.f32 %v4160, %v4214
        %4216 = vmatmul.bf16.gmra.mxu0 %v3759
        %v4217 = vpop.f32.mrf.mxu0
        %v4218 = vadd.f32 %v4163, %v4217
        %v4219 = vpop.f32.mrf.mxu0
        %v4220 = vadd.f32 %v4165, %v4219
        %4221 = vmatmul.bf16.gmra.mxu0 %v3762
        %v4222 = vpop.f32.mrf.mxu0
        %v4223 = vadd.f32 %v4168, %v4222
        %v4224 = vpop.f32.mrf.mxu0
        %v4225 = vadd.f32 %v4170, %v4224
        %4226 = vmatmul.bf16.gmra.mxu0 %v3765
        %v4227 = vpop.f32.mrf.mxu0
        %v4228 = vpop.f32.mrf.mxu0
        %4229 = vdwg.mxu0
        %4230 = vmatpush.bf16.msra.mxu0 %v3984
        %4231 = vmatpush.bf16.msra.mxu0 %v3982
        %4232 = vmatpush.bf16.msra.mxu0 %v3980
        %4233 = vmatpush.bf16.msra.mxu0 %v3978
        %4234 = vmatpush.bf16.msra.mxu0 %v3976
        %4235 = vmatpush.bf16.msra.mxu0 %v3974
        %4236 = vmatpush.bf16.msra.mxu0 %v3972
        %4237 = vmatpush.bf16.msra.mxu0 %v3970
        %4238 = vmatmul.bf16.gmra.mxu0 %v3526
        %v4239 = vpop.f32.mrf.mxu0
        %v4240 = vadd.f32 0.0, %v4239
        %v4241 = vpop.f32.mrf.mxu0
        %v4242 = vadd.f32 0.0, %v4241
        %4243 = vmatmul.bf16.gmra.mxu0 %v3527
        %v4244 = vpop.f32.mrf.mxu0
        %v4245 = vadd.f32 0.0, %v4244
        %v4246 = vpop.f32.mrf.mxu0
        %v4247 = vadd.f32 0.0, %v4246
        %4248 = vmatmul.bf16.gmra.mxu0 %v3528
        %v4249 = vpop.f32.mrf.mxu0
        %v4250 = vadd.f32 0.0, %v4249
        %v4251 = vpop.f32.mrf.mxu0
        %v4252 = vadd.f32 0.0, %v4251
        %4253 = vmatmul.bf16.gmra.mxu0 %v3529
        %v4254 = vpop.f32.mrf.mxu0
        %v4255 = vadd.f32 0.0, %v4254
        %v4256 = vpop.f32.mrf.mxu0
        %v4257 = vadd.f32 0.0, %v4256
        %4258 = vmatmul.bf16.gmra.mxu0 %v3530
        %v4259 = vpop.f32.mrf.mxu0
        %v4260 = vadd.f32 0.0, %v4259
        %v4261 = vpop.f32.mrf.mxu0
        %v4262 = vadd.f32 0.0, %v4261
        %4263 = vmatmul.bf16.gmra.mxu0 %v3531
        %v4264 = vpop.f32.mrf.mxu0
        %v4265 = vadd.f32 0.0, %v4264
        %v4266 = vpop.f32.mrf.mxu0
        %v4267 = vadd.f32 0.0, %v4266
        %4268 = vmatmul.bf16.gmra.mxu0 %v3532
        %v4269 = vpop.f32.mrf.mxu0
        %v4270 = vadd.f32 0.0, %v4269
        %v4271 = vpop.f32.mrf.mxu0
        %v4272 = vadd.f32 0.0, %v4271
        %4273 = vmatmul.bf16.gmra.mxu0 %v3533
        %v4274 = vpop.f32.mrf.mxu0
        %v4275 = vadd.f32 0.0, %v4274
        %v4276 = vpop.f32.mrf.mxu0
        %v4277 = vadd.f32 0.0, %v4276
        %4278 = vmatmul.bf16.gmra.mxu0 %v3534
        %v4279 = vpop.f32.mrf.mxu0
        %v4280 = vadd.f32 0.0, %v4279
        %v4281 = vpop.f32.mrf.mxu0
        %v4282 = vadd.f32 0.0, %v4281
        %4283 = vmatmul.bf16.gmra.mxu0 %v3535
        %v4284 = vpop.f32.mrf.mxu0
        %v4285 = vadd.f32 0.0, %v4284
        %v4286 = vpop.f32.mrf.mxu0
        %v4287 = vadd.f32 0.0, %v4286
        %4288 = vdwg.mxu0
        %4289 = vmatpush.bf16.msra.mxu0 %v4000
        %4290 = vmatpush.bf16.msra.mxu0 %v3998
        %4291 = vmatpush.bf16.msra.mxu0 %v3996
        %4292 = vmatpush.bf16.msra.mxu0 %v3994
        %4293 = vmatpush.bf16.msra.mxu0 %v3992
        %4294 = vmatpush.bf16.msra.mxu0 %v3990
        %4295 = vmatpush.bf16.msra.mxu0 %v3988
        %4296 = vmatpush.bf16.msra.mxu0 %v3986
        %4297 = vmatmul.bf16.gmra.mxu0 %v3587
        %v4298 = vpop.f32.mrf.mxu0
        %v4299 = vadd.f32 %v4240, %v4298
        %v4300 = vpop.f32.mrf.mxu0
        %v4301 = vadd.f32 %v4242, %v4300
        %4302 = vmatmul.bf16.gmra.mxu0 %v3599
        %v4303 = vpop.f32.mrf.mxu0
        %v4304 = vadd.f32 %v4245, %v4303
        %v4305 = vpop.f32.mrf.mxu0
        %v4306 = vadd.f32 %v4247, %v4305
        %4307 = vmatmul.bf16.gmra.mxu0 %v3611
        %v4308 = vpop.f32.mrf.mxu0
        %v4309 = vadd.f32 %v4250, %v4308
        %v4310 = vpop.f32.mrf.mxu0
        %v4311 = vadd.f32 %v4252, %v4310
        %4312 = vmatmul.bf16.gmra.mxu0 %v3623
        %v4313 = vpop.f32.mrf.mxu0
        %v4314 = vadd.f32 %v4255, %v4313
        %v4315 = vpop.f32.mrf.mxu0
        %v4316 = vadd.f32 %v4257, %v4315
        %4317 = vmatmul.bf16.gmra.mxu0 %v3635
        %v4318 = vpop.f32.mrf.mxu0
        %v4319 = vadd.f32 %v4260, %v4318
        %v4320 = vpop.f32.mrf.mxu0
        %v4321 = vadd.f32 %v4262, %v4320
        %4322 = vmatmul.bf16.gmra.mxu0 %v3647
        %v4323 = vpop.f32.mrf.mxu0
        %v4324 = vadd.f32 %v4265, %v4323
        %v4325 = vpop.f32.mrf.mxu0
        %v4326 = vadd.f32 %v4267, %v4325
        %4327 = vmatmul.bf16.gmra.mxu0 %v3659
        %v4328 = vpop.f32.mrf.mxu0
        %v4329 = vadd.f32 %v4270, %v4328
        %v4330 = vpop.f32.mrf.mxu0
        %v4331 = vadd.f32 %v4272, %v4330
        %4332 = vmatmul.bf16.gmra.mxu0 %v3671
        %v4333 = vpop.f32.mrf.mxu0
        %v4334 = vadd.f32 %v4275, %v4333
        %v4335 = vpop.f32.mrf.mxu0
        %v4336 = vadd.f32 %v4277, %v4335
        %4337 = vmatmul.bf16.gmra.mxu0 %v3683
        %v4338 = vpop.f32.mrf.mxu0
        %v4339 = vadd.f32 %v4280, %v4338
        %v4340 = vpop.f32.mrf.mxu0
        %v4341 = vadd.f32 %v4282, %v4340
        %4342 = vmatmul.bf16.gmra.mxu0 %v3695
        %v4343 = vpop.f32.mrf.mxu0
        %v4344 = vadd.f32 %v4285, %v4343
        %v4345 = vpop.f32.mrf.mxu0
        %v4346 = vadd.f32 %v4287, %v4345
        %4347 = vdwg.mxu0
        %4348 = vmatpush.bf16.msra.mxu0 %v4016
        %4349 = vmatpush.bf16.msra.mxu0 %v4014
        %4350 = vmatpush.bf16.msra.mxu0 %v4012
        %4351 = vmatpush.bf16.msra.mxu0 %v4010
        %4352 = vmatpush.bf16.msra.mxu0 %v4008
        %4353 = vmatpush.bf16.msra.mxu0 %v4006
        %4354 = vmatpush.bf16.msra.mxu0 %v4004
        %4355 = vmatpush.bf16.msra.mxu0 %v4002
        %4356 = vmatmul.bf16.gmra.mxu0 %v3738
        %v4357 = vpop.f32.mrf.mxu0
        %v4358 = vadd.f32 %v4299, %v4357
        %v4359 = vpop.f32.mrf.mxu0
        %v4360 = vadd.f32 %v4301, %v4359
        %4361 = vmatmul.bf16.gmra.mxu0 %v3741
        %v4362 = vpop.f32.mrf.mxu0
        %v4363 = vadd.f32 %v4304, %v4362
        %v4364 = vpop.f32.mrf.mxu0
        %v4365 = vadd.f32 %v4306, %v4364
        %4366 = vmatmul.bf16.gmra.mxu0 %v3744
        %v4367 = vpop.f32.mrf.mxu0
        %v4368 = vadd.f32 %v4309, %v4367
        %v4369 = vpop.f32.mrf.mxu0
        %v4370 = vadd.f32 %v4311, %v4369
        %4371 = vmatmul.bf16.gmra.mxu0 %v3747
        %v4372 = vpop.f32.mrf.mxu0
        %v4373 = vadd.f32 %v4314, %v4372
        %v4374 = vpop.f32.mrf.mxu0
        %v4375 = vadd.f32 %v4316, %v4374
        %4376 = vmatmul.bf16.gmra.mxu0 %v3750
        %v4377 = vpop.f32.mrf.mxu0
        %v4378 = vadd.f32 %v4319, %v4377
        %v4379 = vpop.f32.mrf.mxu0
        %v4380 = vadd.f32 %v4321, %v4379
        %4381 = vmatmul.bf16.gmra.mxu0 %v3753
        %v4382 = vpop.f32.mrf.mxu0
        %v4383 = vadd.f32 %v4324, %v4382
        %v4384 = vpop.f32.mrf.mxu0
        %v4385 = vadd.f32 %v4326, %v4384
        %4386 = vmatmul.bf16.gmra.mxu0 %v3756
        %v4387 = vpop.f32.mrf.mxu0
        %v4388 = vadd.f32 %v4329, %v4387
        %v4389 = vpop.f32.mrf.mxu0
        %v4390 = vadd.f32 %v4331, %v4389
        %4391 = vmatmul.bf16.gmra.mxu0 %v3759
        %v4392 = vpop.f32.mrf.mxu0
        %v4393 = vadd.f32 %v4334, %v4392
        %v4394 = vpop.f32.mrf.mxu0
        %v4395 = vadd.f32 %v4336, %v4394
        %4396 = vmatmul.bf16.gmra.mxu0 %v3762
        %v4397 = vpop.f32.mrf.mxu0
        %v4398 = vadd.f32 %v4339, %v4397
        %v4399 = vpop.f32.mrf.mxu0
        %v4400 = vadd.f32 %v4341, %v4399
        %4401 = vmatmul.bf16.gmra.mxu0 %v3765
        %v4402 = vpop.f32.mrf.mxu0
        %v4403 = vadd.f32 %v4344, %v4402
        %v4404 = vpop.f32.mrf.mxu0
        %v4405 = vadd.f32 %v4346, %v4404
        %4406 = vdwg.mxu0
        %v4407 = vadd.f32 %v3409, %v4358
        %v4408 = vadd.f32 %v3410, %v4360
        %v4409 = vadd.f32 %v3411, %v4188
        %v4410 = vadd.f32 %v3412, %v4363
        %v4411 = vadd.f32 %v3413, %v4190
        %v4412 = vadd.f32 %v3414, %v4365
        %v4413 = vadd.f32 %v3415, %v4193
        %v4414 = vadd.f32 %v3416, %v4368
        %v4415 = vadd.f32 %v3417, %v4195
        %v4416 = vadd.f32 %v3418, %v4370
        %v4417 = vadd.f32 %v3419, %v4198
        %v4418 = vadd.f32 %v3420, %v4373
        %v4419 = vadd.f32 %v3421, %v4200
        %v4420 = vadd.f32 %v3422, %v4375
        %v4421 = vadd.f32 %v3423, %v4203
        %v4422 = vadd.f32 %v3424, %v4378
        %v4423 = vadd.f32 %v3425, %v4205
        %v4424 = vadd.f32 %v3426, %v4380
        %v4425 = vadd.f32 %v3427, %v4208
        %v4426 = vadd.f32 %v3428, %v4383
        %v4427 = vadd.f32 %v3429, %v4210
        %v4428 = vadd.f32 %v3430, %v4385
        %v4429 = vadd.f32 %v3431, %v4213
        %v4430 = vadd.f32 %v3432, %v4388
        %v4431 = vadd.f32 %v3433, %v4215
        %v4432 = vadd.f32 %v3434, %v4390
        %v4433 = vadd.f32 %v3435, %v4218
        %v4434 = vadd.f32 %v3436, %v4393
        %v4435 = vadd.f32 %v3437, %v4220
        %v4436 = vadd.f32 %v3438, %v4395
        %v4437 = vadd.f32 %v3439, %v4223
        %v4438 = vadd.f32 %v3440, %v4398
        %v4439 = vadd.f32 %v3441, %v4225
        %v4440 = vadd.f32 %v3442, %v4400
        %v4441 = vadd.f32 %v3443, %v4403
        %v4442 = vadd.f32 %v3444, %v4405
        %s4443 = scalar_lea.vmem [#allocation3], 12
        %v4444 = vld [vmem:[%s4443] sm:$0xf]
        %v4445 = vld [vmem:[%s4443 + $0x4] sm:$0xf]
        %v4446 = vld [vmem:[%s4443 + $0xc] sm:$0xf]
        %v4447 = vld [vmem:[%s4443 + $0x10] sm:$0xf]
        %v4448 = vld [vmem:[%s4443 + $0x18] sm:$0xf]
        %v4449 = vld [vmem:[%s4443 + $0x1c] sm:$0xf]
        %v4450 = vld [vmem:[%s4443 + $0x24] sm:$0xf]
        %v4451 = vld [vmem:[%s4443 + $0x28] sm:$0xf]
        %v4452 = vld [vmem:[%s4443 + $0x30] sm:$0xf]
        %v4453 = vld [vmem:[%s4443 + $0x34] sm:$0xf]
        %v4454 = vld [vmem:[%s4443 + $0x3c] sm:$0xf]
        %v4455 = vld [vmem:[%s4443 + $0x40] sm:$0xf]
        %v4456 = vld [vmem:[%s4443 + $0x48] sm:$0xf]
        %v4457 = vld [vmem:[%s4443 + $0x4c] sm:$0xf]
        %v4458 = vld [vmem:[%s4443 + $0x54] sm:$0xf]
        %v4459 = vld [vmem:[%s4443 + $0x58] sm:$0xf]
        %v4460 = vld [vmem:[%s4443 + $0x60] sm:$0xf]
        %v4461 = vld [vmem:[%s4443 + $0x64] sm:$0xf]
        %v4462 = vld [vmem:[%s4443 + $0x6c] sm:$0xf]
        %v4463 = vld [vmem:[%s4443 + $0x70] sm:$0xf]
        %v4464 = vld [vmem:[%s4443 + $0x8] sm:$0x1]
        %v4465 = vld [vmem:[%s4443 + $0x14] sm:$0x1]
        %v4466 = vld [vmem:[%s4443 + $0x20] sm:$0x1]
        %v4467 = vld [vmem:[%s4443 + $0x2c] sm:$0x1]
        %v4468 = vld [vmem:[%s4443 + $0x38] sm:$0x1]
        %v4469 = vld [vmem:[%s4443 + $0x44] sm:$0x1]
        %v4470 = vld [vmem:[%s4443 + $0x50] sm:$0x1]
        %v4471 = vld [vmem:[%s4443 + $0x5c] sm:$0x1]
        %v4472 = vld [vmem:[%s4443 + $0x68] sm:$0x1]
        %v4473 = vld [vmem:[%s4443 + $0x74] sm:$0x1]
        %v4474 = vld [vmem:[%s4443] sm:$0xe]
        %v4475 = vld [vmem:[%s4443 + $0xc] sm:$0xe]
        %v4476 = vld [vmem:[%s4443 + $0x18] sm:$0xe]
        %v4477 = vld [vmem:[%s4443 + $0x24] sm:$0xe]
        %v4478 = vld [vmem:[%s4443 + $0x30] sm:$0xe]
        %v4479 = vld [vmem:[%s4443 + $0x3c] sm:$0xe]
        %v4480 = vld [vmem:[%s4443 + $0x48] sm:$0xe]
        %v4481 = vld [vmem:[%s4443 + $0x54] sm:$0xe]
        %v4482 = vld [vmem:[%s4443 + $0x60] sm:$0xe]
        %v4483 = vld [vmem:[%s4443 + $0x6c] sm:$0xe]
        %v4504 = vunpack.c.l.b16 %v4444
        %v4505 = vunpack.c.l.b16 %v4445
        %v4506 = vunpack.c.l.b16 %v4446
        %v4507 = vunpack.c.l.b16 %v4447
        %v4508 = vunpack.c.l.b16 %v4448
        %v4509 = vunpack.c.l.b16 %v4449
        %v4510 = vunpack.c.l.b16 %v4450
        %v4511 = vunpack.c.l.b16 %v4451
        %v4512 = vunpack.c.l.b16 %v4452
        %v4513 = vunpack.c.l.b16 %v4453
        %v4514 = vunpack.c.l.b16 %v4454
        %v4515 = vunpack.c.l.b16 %v4455
        %v4516 = vunpack.c.l.b16 %v4456
        %v4517 = vunpack.c.l.b16 %v4457
        %v4518 = vunpack.c.l.b16 %v4458
        %v4519 = vunpack.c.l.b16 %v4459
        %v4520 = vunpack.c.l.b16 %v4460
        %v4521 = vunpack.c.l.b16 %v4461
        %v4522 = vunpack.c.l.b16 %v4462
        %v4523 = vunpack.c.l.b16 %v4463
        %v4524 = vpack.c.b16 %v4505, %v4504
        %v4525 = vpack.c.b16 %v4507, %v4506
        %v4526 = vpack.c.b16 %v4509, %v4508
        %v4527 = vpack.c.b16 %v4511, %v4510
        %v4528 = vpack.c.b16 %v4513, %v4512
        %v4529 = vpack.c.b16 %v4515, %v4514
        %v4530 = vpack.c.b16 %v4517, %v4516
        %v4531 = vpack.c.b16 %v4519, %v4518
        %v4532 = vpack.c.b16 %v4521, %v4520
        %v4533 = vpack.c.b16 %v4523, %v4522
        %v4554 = vunpack.c.l.b16 %v4464
        %v4555 = vunpack.c.l.b16 %v4465
        %v4556 = vunpack.c.l.b16 %v4466
        %v4557 = vunpack.c.l.b16 %v4467
        %v4558 = vunpack.c.l.b16 %v4468
        %v4559 = vunpack.c.l.b16 %v4469
        %v4560 = vunpack.c.l.b16 %v4470
        %v4561 = vunpack.c.l.b16 %v4471
        %v4562 = vunpack.c.l.b16 %v4472
        %v4563 = vunpack.c.l.b16 %v4473
        %v4564 = vpack.c.b16 %v4554, %v4554
        %v4565 = vpack.c.b16 %v4555, %v4555
        %v4566 = vpack.c.b16 %v4556, %v4556
        %v4567 = vpack.c.b16 %v4557, %v4557
        %v4568 = vpack.c.b16 %v4558, %v4558
        %v4569 = vpack.c.b16 %v4559, %v4559
        %v4570 = vpack.c.b16 %v4560, %v4560
        %v4571 = vpack.c.b16 %v4561, %v4561
        %v4572 = vpack.c.b16 %v4562, %v4562
        %v4573 = vpack.c.b16 %v4563, %v4563
        %v4575 = vshrl.u32 %v4524, 16
        %v4577 = vshll.u32 %v4524, 16
        %v4579 = vrot.slane %v4577, 1
        %v4580 = vor.u32 %v4575, %v4579
        %v4582 = vshll.u32 %v4564, 16
        %v4584 = vrot.slane %v4582, 1
        %v4585 = vsel %vm1581, %v4580, %v4584
        %v4587 = vshrl.u32 %v4525, 16
        %v4589 = vshll.u32 %v4525, 16
        %v4591 = vrot.slane %v4589, 1
        %v4592 = vor.u32 %v4587, %v4591
        %v4594 = vshll.u32 %v4565, 16
        %v4596 = vrot.slane %v4594, 1
        %v4597 = vsel %vm1581, %v4592, %v4596
        %v4599 = vshrl.u32 %v4526, 16
        %v4601 = vshll.u32 %v4526, 16
        %v4603 = vrot.slane %v4601, 1
        %v4604 = vor.u32 %v4599, %v4603
        %v4606 = vshll.u32 %v4566, 16
        %v4608 = vrot.slane %v4606, 1
        %v4609 = vsel %vm1581, %v4604, %v4608
        %v4611 = vshrl.u32 %v4527, 16
        %v4613 = vshll.u32 %v4527, 16
        %v4615 = vrot.slane %v4613, 1
        %v4616 = vor.u32 %v4611, %v4615
        %v4618 = vshll.u32 %v4567, 16
        %v4620 = vrot.slane %v4618, 1
        %v4621 = vsel %vm1581, %v4616, %v4620
        %v4623 = vshrl.u32 %v4528, 16
        %v4625 = vshll.u32 %v4528, 16
        %v4627 = vrot.slane %v4625, 1
        %v4628 = vor.u32 %v4623, %v4627
        %v4630 = vshll.u32 %v4568, 16
        %v4632 = vrot.slane %v4630, 1
        %v4633 = vsel %vm1581, %v4628, %v4632
        %v4635 = vshrl.u32 %v4529, 16
        %v4637 = vshll.u32 %v4529, 16
        %v4639 = vrot.slane %v4637, 1
        %v4640 = vor.u32 %v4635, %v4639
        %v4642 = vshll.u32 %v4569, 16
        %v4644 = vrot.slane %v4642, 1
        %v4645 = vsel %vm1581, %v4640, %v4644
        %v4647 = vshrl.u32 %v4530, 16
        %v4649 = vshll.u32 %v4530, 16
        %v4651 = vrot.slane %v4649, 1
        %v4652 = vor.u32 %v4647, %v4651
        %v4654 = vshll.u32 %v4570, 16
        %v4656 = vrot.slane %v4654, 1
        %v4657 = vsel %vm1581, %v4652, %v4656
        %v4659 = vshrl.u32 %v4531, 16
        %v4661 = vshll.u32 %v4531, 16
        %v4663 = vrot.slane %v4661, 1
        %v4664 = vor.u32 %v4659, %v4663
        %v4666 = vshll.u32 %v4571, 16
        %v4668 = vrot.slane %v4666, 1
        %v4669 = vsel %vm1581, %v4664, %v4668
        %v4671 = vshrl.u32 %v4532, 16
        %v4673 = vshll.u32 %v4532, 16
        %v4675 = vrot.slane %v4673, 1
        %v4676 = vor.u32 %v4671, %v4675
        %v4678 = vshll.u32 %v4572, 16
        %v4680 = vrot.slane %v4678, 1
        %v4681 = vsel %vm1581, %v4676, %v4680
        %v4683 = vshrl.u32 %v4533, 16
        %v4685 = vshll.u32 %v4533, 16
        %v4687 = vrot.slane %v4685, 1
        %v4688 = vor.u32 %v4683, %v4687
        %v4690 = vshll.u32 %v4573, 16
        %v4692 = vrot.slane %v4690, 1
        %v4693 = vsel %vm1581, %v4688, %v4692
        %v4714 = vunpack.c.l.b16 %v4474
        %v4715 = vunpack.c.l.b16 %v4475
        %v4716 = vunpack.c.l.b16 %v4476
        %v4717 = vunpack.c.l.b16 %v4477
        %v4718 = vunpack.c.l.b16 %v4478
        %v4719 = vunpack.c.l.b16 %v4479
        %v4720 = vunpack.c.l.b16 %v4480
        %v4721 = vunpack.c.l.b16 %v4481
        %v4722 = vunpack.c.l.b16 %v4482
        %v4723 = vunpack.c.l.b16 %v4483
        %v4724 = vpack.c.b16 %v4505, %v4714
        %v4725 = vpack.c.b16 %v4507, %v4715
        %v4726 = vpack.c.b16 %v4509, %v4716
        %v4727 = vpack.c.b16 %v4511, %v4717
        %v4728 = vpack.c.b16 %v4513, %v4718
        %v4729 = vpack.c.b16 %v4515, %v4719
        %v4730 = vpack.c.b16 %v4517, %v4720
        %v4731 = vpack.c.b16 %v4519, %v4721
        %v4732 = vpack.c.b16 %v4521, %v4722
        %v4733 = vpack.c.b16 %v4523, %v4723
        %v4734 = vrot.slane %v4724, 1
        %v4735 = vrot.slane %v4564, 1
        %v4736 = vsel %vm1742, %v4734, %v4735
        %v4737 = vrot.slane %v4725, 1
        %v4738 = vrot.slane %v4565, 1
        %v4739 = vsel %vm1742, %v4737, %v4738
        %v4740 = vrot.slane %v4726, 1
        %v4741 = vrot.slane %v4566, 1
        %v4742 = vsel %vm1742, %v4740, %v4741
        %v4743 = vrot.slane %v4727, 1
        %v4744 = vrot.slane %v4567, 1
        %v4745 = vsel %vm1742, %v4743, %v4744
        %v4746 = vrot.slane %v4728, 1
        %v4747 = vrot.slane %v4568, 1
        %v4748 = vsel %vm1742, %v4746, %v4747
        %v4749 = vrot.slane %v4729, 1
        %v4750 = vrot.slane %v4569, 1
        %v4751 = vsel %vm1742, %v4749, %v4750
        %v4752 = vrot.slane %v4730, 1
        %v4753 = vrot.slane %v4570, 1
        %v4754 = vsel %vm1742, %v4752, %v4753
        %v4755 = vrot.slane %v4731, 1
        %v4756 = vrot.slane %v4571, 1
        %v4757 = vsel %vm1742, %v4755, %v4756
        %v4758 = vrot.slane %v4732, 1
        %v4759 = vrot.slane %v4572, 1
        %v4760 = vsel %vm1742, %v4758, %v4759
        %v4761 = vrot.slane %v4733, 1
        %v4762 = vrot.slane %v4573, 1
        %v4763 = vsel %vm1742, %v4761, %v4762
        %s4774 = scalar_lea.vmem [#allocation10], 384
        %v4775 = vld [vmem:[%s4774] sm:$0xff]
        %v4776 = vld [vmem:[%s4774 + $0x8] sm:$0xff]
        %v4777 = vld [vmem:[%s4774 + $0x10] sm:$0xff]
        %v4778 = vld [vmem:[%s4774 + $0x18] sm:$0xff]
        %v4779 = vld [vmem:[%s4774 + $0x20] sm:$0xff]
        %v4780 = vld [vmem:[%s4774 + $0x28] sm:$0xff]
        %v4781 = vld [vmem:[%s4774 + $0x30] sm:$0xff]
        %v4782 = vld [vmem:[%s4774 + $0x38] sm:$0xff]
        %v4783 = vld [vmem:[%s4774 + $0x40] sm:$0xff]
        %v4784 = vld [vmem:[%s4774 + $0x48] sm:$0xff]
        %v4785 = vld [vmem:[%s4774 + $0x50] sm:$0xff]
        %v4786 = vld [vmem:[%s4774 + $0x58] sm:$0xff]
        %v4787 = vld [vmem:[%s4774 + $0x60] sm:$0xff]
        %v4788 = vld [vmem:[%s4774 + $0x68] sm:$0xff]
        %v4789 = vld [vmem:[%s4774 + $0x70] sm:$0xff]
        %v4790 = vld [vmem:[%s4774 + $0x78] sm:$0xff]
        %v4791 = vld [vmem:[%s4774 + $0x80] sm:$0xff]
        %v4792 = vld [vmem:[%s4774 + $0x88] sm:$0xff]
        %v4793 = vld [vmem:[%s4774 + $0x90] sm:$0xff]
        %v4794 = vld [vmem:[%s4774 + $0x98] sm:$0xff]
        %v4795 = vld [vmem:[%s4774 + $0xa0] sm:$0xff]
        %v4796 = vld [vmem:[%s4774 + $0xa8] sm:$0xff]
        %v4797 = vld [vmem:[%s4774 + $0xb0] sm:$0xff]
        %v4798 = vld [vmem:[%s4774 + $0xb8] sm:$0xff]
        %v4799 = vld [vmem:[%s4774 + $0xc0] sm:$0xff]
        %v4800 = vld [vmem:[%s4774 + $0xc8] sm:$0xff]
        %v4801 = vld [vmem:[%s4774 + $0xd0] sm:$0xff]
        %v4802 = vld [vmem:[%s4774 + $0xd8] sm:$0xff]
        %v4803 = vld [vmem:[%s4774 + $0xe0] sm:$0xff]
        %v4804 = vld [vmem:[%s4774 + $0xe8] sm:$0xff]
        %v4805 = vld [vmem:[%s4774 + $0xf0] sm:$0xff]
        %v4806 = vld [vmem:[%s4774 + $0xf8] sm:$0xff]
        %v4807 = vld [vmem:[%s4774 + $0x100] sm:$0xff]
        %v4808 = vld [vmem:[%s4774 + $0x108] sm:$0xff]
        %v4809 = vld [vmem:[%s4774 + $0x110] sm:$0xff]
        %v4810 = vld [vmem:[%s4774 + $0x118] sm:$0xff]
        %v4811 = vld [vmem:[%s4774 + $0x120] sm:$0xff]
        %v4812 = vld [vmem:[%s4774 + $0x128] sm:$0xff]
        %v4813 = vld [vmem:[%s4774 + $0x130] sm:$0xff]
        %v4814 = vld [vmem:[%s4774 + $0x138] sm:$0xff]
        %v4815 = vld [vmem:[%s4774 + $0x140] sm:$0xff]
        %v4816 = vld [vmem:[%s4774 + $0x148] sm:$0xff]
        %v4817 = vld [vmem:[%s4774 + $0x150] sm:$0xff]
        %v4818 = vld [vmem:[%s4774 + $0x158] sm:$0xff]
        %v4819 = vld [vmem:[%s4774 + $0x160] sm:$0xff]
        %v4820 = vld [vmem:[%s4774 + $0x168] sm:$0xff]
        %v4821 = vld [vmem:[%s4774 + $0x170] sm:$0xff]
        %v4822 = vld [vmem:[%s4774 + $0x178] sm:$0xff]
        %v4871 = vunpack.c.l.b16 %v4775
        %v4872 = vunpack.c.h.b16 %v4775
        %v4873 = vunpack.c.l.b16 %v4776
        %v4874 = vunpack.c.h.b16 %v4776
        %v4875 = vunpack.c.l.b16 %v4777
        %v4876 = vunpack.c.h.b16 %v4777
        %v4877 = vunpack.c.l.b16 %v4778
        %v4878 = vunpack.c.h.b16 %v4778
        %v4879 = vunpack.c.l.b16 %v4779
        %v4880 = vunpack.c.h.b16 %v4779
        %v4881 = vunpack.c.l.b16 %v4780
        %v4882 = vunpack.c.h.b16 %v4780
        %v4883 = vunpack.c.l.b16 %v4781
        %v4884 = vunpack.c.h.b16 %v4781
        %v4885 = vunpack.c.l.b16 %v4782
        %v4886 = vunpack.c.h.b16 %v4782
        %v4887 = vunpack.c.l.b16 %v4783
        %v4888 = vunpack.c.h.b16 %v4783
        %v4889 = vunpack.c.l.b16 %v4784
        %v4890 = vunpack.c.h.b16 %v4784
        %v4891 = vunpack.c.l.b16 %v4785
        %v4892 = vunpack.c.h.b16 %v4785
        %v4893 = vunpack.c.l.b16 %v4786
        %v4894 = vunpack.c.h.b16 %v4786
        %v4895 = vunpack.c.l.b16 %v4787
        %v4896 = vunpack.c.h.b16 %v4787
        %v4897 = vunpack.c.l.b16 %v4788
        %v4898 = vunpack.c.h.b16 %v4788
        %v4899 = vunpack.c.l.b16 %v4789
        %v4900 = vunpack.c.h.b16 %v4789
        %v4901 = vunpack.c.l.b16 %v4790
        %v4902 = vunpack.c.h.b16 %v4790
        %v4903 = vunpack.c.l.b16 %v4791
        %v4904 = vunpack.c.h.b16 %v4791
        %v4905 = vunpack.c.l.b16 %v4792
        %v4906 = vunpack.c.h.b16 %v4792
        %v4907 = vunpack.c.l.b16 %v4793
        %v4908 = vunpack.c.h.b16 %v4793
        %v4909 = vunpack.c.l.b16 %v4794
        %v4910 = vunpack.c.h.b16 %v4794
        %v4911 = vunpack.c.l.b16 %v4795
        %v4912 = vunpack.c.h.b16 %v4795
        %v4913 = vunpack.c.l.b16 %v4796
        %v4914 = vunpack.c.h.b16 %v4796
        %v4915 = vunpack.c.l.b16 %v4797
        %v4916 = vunpack.c.h.b16 %v4797
        %v4917 = vunpack.c.l.b16 %v4798
        %v4918 = vunpack.c.h.b16 %v4798
        %v4919 = vunpack.c.l.b16 %v4799
        %v4920 = vunpack.c.h.b16 %v4799
        %v4921 = vunpack.c.l.b16 %v4800
        %v4922 = vunpack.c.h.b16 %v4800
        %v4923 = vunpack.c.l.b16 %v4801
        %v4924 = vunpack.c.h.b16 %v4801
        %v4925 = vunpack.c.l.b16 %v4802
        %v4926 = vunpack.c.h.b16 %v4802
        %v4927 = vunpack.c.l.b16 %v4803
        %v4928 = vunpack.c.h.b16 %v4803
        %v4929 = vunpack.c.l.b16 %v4804
        %v4930 = vunpack.c.h.b16 %v4804
        %v4931 = vunpack.c.l.b16 %v4805
        %v4932 = vunpack.c.h.b16 %v4805
        %v4933 = vunpack.c.l.b16 %v4806
        %v4934 = vunpack.c.h.b16 %v4806
        %v4935 = vunpack.c.l.b16 %v4807
        %v4936 = vunpack.c.h.b16 %v4807
        %v4937 = vunpack.c.l.b16 %v4808
        %v4938 = vunpack.c.h.b16 %v4808
        %v4939 = vunpack.c.l.b16 %v4809
        %v4940 = vunpack.c.h.b16 %v4809
        %v4941 = vunpack.c.l.b16 %v4810
        %v4942 = vunpack.c.h.b16 %v4810
        %v4943 = vunpack.c.l.b16 %v4811
        %v4944 = vunpack.c.h.b16 %v4811
        %v4945 = vunpack.c.l.b16 %v4812
        %v4946 = vunpack.c.h.b16 %v4812
        %v4947 = vunpack.c.l.b16 %v4813
        %v4948 = vunpack.c.h.b16 %v4813
        %v4949 = vunpack.c.l.b16 %v4814
        %v4950 = vunpack.c.h.b16 %v4814
        %v4951 = vunpack.c.l.b16 %v4815
        %v4952 = vunpack.c.h.b16 %v4815
        %v4953 = vunpack.c.l.b16 %v4816
        %v4954 = vunpack.c.h.b16 %v4816
        %v4955 = vunpack.c.l.b16 %v4817
        %v4956 = vunpack.c.h.b16 %v4817
        %v4957 = vunpack.c.l.b16 %v4818
        %v4958 = vunpack.c.h.b16 %v4818
        %v4959 = vunpack.c.l.b16 %v4819
        %v4960 = vunpack.c.h.b16 %v4819
        %v4961 = vunpack.c.l.b16 %v4820
        %v4962 = vunpack.c.h.b16 %v4820
        %v4963 = vunpack.c.l.b16 %v4821
        %v4964 = vunpack.c.h.b16 %v4821
        %v4965 = vunpack.c.l.b16 %v4822
        %v4966 = vunpack.c.h.b16 %v4822
        %v4967 = vpack.c.b16 %v4873, %v4871
        %v4968 = vpack.c.b16 %v4874, %v4872
        %v4969 = vpack.c.b16 %v4877, %v4875
        %v4970 = vpack.c.b16 %v4878, %v4876
        %v4971 = vpack.c.b16 %v4881, %v4879
        %v4972 = vpack.c.b16 %v4882, %v4880
        %v4973 = vpack.c.b16 %v4885, %v4883
        %v4974 = vpack.c.b16 %v4886, %v4884
        %v4975 = vpack.c.b16 %v4889, %v4887
        %v4976 = vpack.c.b16 %v4890, %v4888
        %v4977 = vpack.c.b16 %v4893, %v4891
        %v4978 = vpack.c.b16 %v4894, %v4892
        %v4979 = vpack.c.b16 %v4897, %v4895
        %v4980 = vpack.c.b16 %v4898, %v4896
        %v4981 = vpack.c.b16 %v4901, %v4899
        %v4982 = vpack.c.b16 %v4902, %v4900
        %v4983 = vpack.c.b16 %v4905, %v4903
        %v4984 = vpack.c.b16 %v4906, %v4904
        %v4985 = vpack.c.b16 %v4909, %v4907
        %v4986 = vpack.c.b16 %v4910, %v4908
        %v4987 = vpack.c.b16 %v4913, %v4911
        %v4988 = vpack.c.b16 %v4914, %v4912
        %v4989 = vpack.c.b16 %v4917, %v4915
        %v4990 = vpack.c.b16 %v4918, %v4916
        %v4991 = vpack.c.b16 %v4921, %v4919
        %v4992 = vpack.c.b16 %v4922, %v4920
        %v4993 = vpack.c.b16 %v4925, %v4923
        %v4994 = vpack.c.b16 %v4926, %v4924
        %v4995 = vpack.c.b16 %v4929, %v4927
        %v4996 = vpack.c.b16 %v4930, %v4928
        %v4997 = vpack.c.b16 %v4933, %v4931
        %v4998 = vpack.c.b16 %v4934, %v4932
        %v4999 = vpack.c.b16 %v4937, %v4935
        %v5000 = vpack.c.b16 %v4938, %v4936
        %v5001 = vpack.c.b16 %v4941, %v4939
        %v5002 = vpack.c.b16 %v4942, %v4940
        %v5003 = vpack.c.b16 %v4945, %v4943
        %v5004 = vpack.c.b16 %v4946, %v4944
        %v5005 = vpack.c.b16 %v4949, %v4947
        %v5006 = vpack.c.b16 %v4950, %v4948
        %v5007 = vpack.c.b16 %v4953, %v4951
        %v5008 = vpack.c.b16 %v4954, %v4952
        %v5009 = vpack.c.b16 %v4957, %v4955
        %v5010 = vpack.c.b16 %v4958, %v4956
        %v5011 = vpack.c.b16 %v4961, %v4959
        %v5012 = vpack.c.b16 %v4962, %v4960
        %v5013 = vpack.c.b16 %v4965, %v4963
        %v5014 = vpack.c.b16 %v4966, %v4964
        %5063 = vmatpush.bf16.msra.mxu0 %v4981
        %5064 = vmatpush.bf16.msra.mxu0 %v4979
        %5065 = vmatpush.bf16.msra.mxu0 %v4977
        %5066 = vmatpush.bf16.msra.mxu0 %v4975
        %5067 = vmatpush.bf16.msra.mxu0 %v4973
        %5068 = vmatpush.bf16.msra.mxu0 %v4971
        %5069 = vmatpush.bf16.msra.mxu0 %v4969
        %5070 = vmatpush.bf16.msra.mxu0 %v4967
        %5071 = vmatmul.bf16.gmra.mxu0 %v4524
        %v5072 = vpop.f32.mrf.mxu0
        %v5073 = vpop.f32.mrf.mxu0
        %5074 = vmatmul.bf16.gmra.mxu0 %v4525
        %v5075 = vpop.f32.mrf.mxu0
        %v5076 = vadd.f32 0.0, %v5075
        %v5077 = vpop.f32.mrf.mxu0
        %v5078 = vadd.f32 0.0, %v5077
        %5079 = vmatmul.bf16.gmra.mxu0 %v4526
        %v5080 = vpop.f32.mrf.mxu0
        %v5081 = vadd.f32 0.0, %v5080
        %v5082 = vpop.f32.mrf.mxu0
        %v5083 = vadd.f32 0.0, %v5082
        %5084 = vmatmul.bf16.gmra.mxu0 %v4527
        %v5085 = vpop.f32.mrf.mxu0
        %v5086 = vadd.f32 0.0, %v5085
        %v5087 = vpop.f32.mrf.mxu0
        %v5088 = vadd.f32 0.0, %v5087
        %5089 = vmatmul.bf16.gmra.mxu0 %v4528
        %v5090 = vpop.f32.mrf.mxu0
        %v5091 = vadd.f32 0.0, %v5090
        %v5092 = vpop.f32.mrf.mxu0
        %v5093 = vadd.f32 0.0, %v5092
        %5094 = vmatmul.bf16.gmra.mxu0 %v4529
        %v5095 = vpop.f32.mrf.mxu0
        %v5096 = vadd.f32 0.0, %v5095
        %v5097 = vpop.f32.mrf.mxu0
        %v5098 = vadd.f32 0.0, %v5097
        %5099 = vmatmul.bf16.gmra.mxu0 %v4530
        %v5100 = vpop.f32.mrf.mxu0
        %v5101 = vadd.f32 0.0, %v5100
        %v5102 = vpop.f32.mrf.mxu0
        %v5103 = vadd.f32 0.0, %v5102
        %5104 = vmatmul.bf16.gmra.mxu0 %v4531
        %v5105 = vpop.f32.mrf.mxu0
        %v5106 = vadd.f32 0.0, %v5105
        %v5107 = vpop.f32.mrf.mxu0
        %v5108 = vadd.f32 0.0, %v5107
        %5109 = vmatmul.bf16.gmra.mxu0 %v4532
        %v5110 = vpop.f32.mrf.mxu0
        %v5111 = vadd.f32 0.0, %v5110
        %v5112 = vpop.f32.mrf.mxu0
        %v5113 = vadd.f32 0.0, %v5112
        %5114 = vmatmul.bf16.gmra.mxu0 %v4533
        %v5115 = vpop.f32.mrf.mxu0
        %v5116 = vpop.f32.mrf.mxu0
        %5117 = vdwg.mxu0
        %5118 = vmatpush.bf16.msra.mxu0 %v4997
        %5119 = vmatpush.bf16.msra.mxu0 %v4995
        %5120 = vmatpush.bf16.msra.mxu0 %v4993
        %5121 = vmatpush.bf16.msra.mxu0 %v4991
        %5122 = vmatpush.bf16.msra.mxu0 %v4989
        %5123 = vmatpush.bf16.msra.mxu0 %v4987
        %5124 = vmatpush.bf16.msra.mxu0 %v4985
        %5125 = vmatpush.bf16.msra.mxu0 %v4983
        %5126 = vmatmul.bf16.gmra.mxu0 %v4585
        %v5127 = vpop.f32.mrf.mxu0
        %v5128 = vpop.f32.mrf.mxu0
        %5129 = vmatmul.bf16.gmra.mxu0 %v4597
        %v5130 = vpop.f32.mrf.mxu0
        %v5131 = vadd.f32 %v5076, %v5130
        %v5132 = vpop.f32.mrf.mxu0
        %v5133 = vadd.f32 %v5078, %v5132
        %5134 = vmatmul.bf16.gmra.mxu0 %v4609
        %v5135 = vpop.f32.mrf.mxu0
        %v5136 = vadd.f32 %v5081, %v5135
        %v5137 = vpop.f32.mrf.mxu0
        %v5138 = vadd.f32 %v5083, %v5137
        %5139 = vmatmul.bf16.gmra.mxu0 %v4621
        %v5140 = vpop.f32.mrf.mxu0
        %v5141 = vadd.f32 %v5086, %v5140
        %v5142 = vpop.f32.mrf.mxu0
        %v5143 = vadd.f32 %v5088, %v5142
        %5144 = vmatmul.bf16.gmra.mxu0 %v4633
        %v5145 = vpop.f32.mrf.mxu0
        %v5146 = vadd.f32 %v5091, %v5145
        %v5147 = vpop.f32.mrf.mxu0
        %v5148 = vadd.f32 %v5093, %v5147
        %5149 = vmatmul.bf16.gmra.mxu0 %v4645
        %v5150 = vpop.f32.mrf.mxu0
        %v5151 = vadd.f32 %v5096, %v5150
        %v5152 = vpop.f32.mrf.mxu0
        %v5153 = vadd.f32 %v5098, %v5152
        %5154 = vmatmul.bf16.gmra.mxu0 %v4657
        %v5155 = vpop.f32.mrf.mxu0
        %v5156 = vadd.f32 %v5101, %v5155
        %v5157 = vpop.f32.mrf.mxu0
        %v5158 = vadd.f32 %v5103, %v5157
        %5159 = vmatmul.bf16.gmra.mxu0 %v4669
        %v5160 = vpop.f32.mrf.mxu0
        %v5161 = vadd.f32 %v5106, %v5160
        %v5162 = vpop.f32.mrf.mxu0
        %v5163 = vadd.f32 %v5108, %v5162
        %5164 = vmatmul.bf16.gmra.mxu0 %v4681
        %v5165 = vpop.f32.mrf.mxu0
        %v5166 = vadd.f32 %v5111, %v5165
        %v5167 = vpop.f32.mrf.mxu0
        %v5168 = vadd.f32 %v5113, %v5167
        %5169 = vmatmul.bf16.gmra.mxu0 %v4693
        %v5170 = vpop.f32.mrf.mxu0
        %v5171 = vpop.f32.mrf.mxu0
        %5172 = vdwg.mxu0
        %5173 = vmatpush.bf16.msra.mxu0 %v5013
        %5174 = vmatpush.bf16.msra.mxu0 %v5011
        %5175 = vmatpush.bf16.msra.mxu0 %v5009
        %5176 = vmatpush.bf16.msra.mxu0 %v5007
        %5177 = vmatpush.bf16.msra.mxu0 %v5005
        %5178 = vmatpush.bf16.msra.mxu0 %v5003
        %5179 = vmatpush.bf16.msra.mxu0 %v5001
        %5180 = vmatpush.bf16.msra.mxu0 %v4999
        %5181 = vmatmul.bf16.gmra.mxu0 %v4736
        %v5182 = vpop.f32.mrf.mxu0
        %v5183 = vpop.f32.mrf.mxu0
        %5184 = vmatmul.bf16.gmra.mxu0 %v4739
        %v5185 = vpop.f32.mrf.mxu0
        %v5186 = vadd.f32 %v5131, %v5185
        %v5187 = vpop.f32.mrf.mxu0
        %v5188 = vadd.f32 %v5133, %v5187
        %5189 = vmatmul.bf16.gmra.mxu0 %v4742
        %v5190 = vpop.f32.mrf.mxu0
        %v5191 = vadd.f32 %v5136, %v5190
        %v5192 = vpop.f32.mrf.mxu0
        %v5193 = vadd.f32 %v5138, %v5192
        %5194 = vmatmul.bf16.gmra.mxu0 %v4745
        %v5195 = vpop.f32.mrf.mxu0
        %v5196 = vadd.f32 %v5141, %v5195
        %v5197 = vpop.f32.mrf.mxu0
        %v5198 = vadd.f32 %v5143, %v5197
        %5199 = vmatmul.bf16.gmra.mxu0 %v4748
        %v5200 = vpop.f32.mrf.mxu0
        %v5201 = vadd.f32 %v5146, %v5200
        %v5202 = vpop.f32.mrf.mxu0
        %v5203 = vadd.f32 %v5148, %v5202
        %5204 = vmatmul.bf16.gmra.mxu0 %v4751
        %v5205 = vpop.f32.mrf.mxu0
        %v5206 = vadd.f32 %v5151, %v5205
        %v5207 = vpop.f32.mrf.mxu0
        %v5208 = vadd.f32 %v5153, %v5207
        %5209 = vmatmul.bf16.gmra.mxu0 %v4754
        %v5210 = vpop.f32.mrf.mxu0
        %v5211 = vadd.f32 %v5156, %v5210
        %v5212 = vpop.f32.mrf.mxu0
        %v5213 = vadd.f32 %v5158, %v5212
        %5214 = vmatmul.bf16.gmra.mxu0 %v4757
        %v5215 = vpop.f32.mrf.mxu0
        %v5216 = vadd.f32 %v5161, %v5215
        %v5217 = vpop.f32.mrf.mxu0
        %v5218 = vadd.f32 %v5163, %v5217
        %5219 = vmatmul.bf16.gmra.mxu0 %v4760
        %v5220 = vpop.f32.mrf.mxu0
        %v5221 = vadd.f32 %v5166, %v5220
        %v5222 = vpop.f32.mrf.mxu0
        %v5223 = vadd.f32 %v5168, %v5222
        %5224 = vmatmul.bf16.gmra.mxu0 %v4763
        %v5225 = vpop.f32.mrf.mxu0
        %v5226 = vpop.f32.mrf.mxu0
        %5227 = vdwg.mxu0
        %5228 = vmatpush.bf16.msra.mxu0 %v4982
        %5229 = vmatpush.bf16.msra.mxu0 %v4980
        %5230 = vmatpush.bf16.msra.mxu0 %v4978
        %5231 = vmatpush.bf16.msra.mxu0 %v4976
        %5232 = vmatpush.bf16.msra.mxu0 %v4974
        %5233 = vmatpush.bf16.msra.mxu0 %v4972
        %5234 = vmatpush.bf16.msra.mxu0 %v4970
        %5235 = vmatpush.bf16.msra.mxu0 %v4968
        %5236 = vmatmul.bf16.gmra.mxu0 %v4524
        %v5237 = vpop.f32.mrf.mxu0
        %v5238 = vadd.f32 0.0, %v5237
        %v5239 = vpop.f32.mrf.mxu0
        %v5240 = vadd.f32 0.0, %v5239
        %5241 = vmatmul.bf16.gmra.mxu0 %v4525
        %v5242 = vpop.f32.mrf.mxu0
        %v5243 = vadd.f32 0.0, %v5242
        %v5244 = vpop.f32.mrf.mxu0
        %v5245 = vadd.f32 0.0, %v5244
        %5246 = vmatmul.bf16.gmra.mxu0 %v4526
        %v5247 = vpop.f32.mrf.mxu0
        %v5248 = vadd.f32 0.0, %v5247
        %v5249 = vpop.f32.mrf.mxu0
        %v5250 = vadd.f32 0.0, %v5249
        %5251 = vmatmul.bf16.gmra.mxu0 %v4527
        %v5252 = vpop.f32.mrf.mxu0
        %v5253 = vadd.f32 0.0, %v5252
        %v5254 = vpop.f32.mrf.mxu0
        %v5255 = vadd.f32 0.0, %v5254
        %5256 = vmatmul.bf16.gmra.mxu0 %v4528
        %v5257 = vpop.f32.mrf.mxu0
        %v5258 = vadd.f32 0.0, %v5257
        %v5259 = vpop.f32.mrf.mxu0
        %v5260 = vadd.f32 0.0, %v5259
        %5261 = vmatmul.bf16.gmra.mxu0 %v4529
        %v5262 = vpop.f32.mrf.mxu0
        %v5263 = vadd.f32 0.0, %v5262
        %v5264 = vpop.f32.mrf.mxu0
        %v5265 = vadd.f32 0.0, %v5264
        %5266 = vmatmul.bf16.gmra.mxu0 %v4530
        %v5267 = vpop.f32.mrf.mxu0
        %v5268 = vadd.f32 0.0, %v5267
        %v5269 = vpop.f32.mrf.mxu0
        %v5270 = vadd.f32 0.0, %v5269
        %5271 = vmatmul.bf16.gmra.mxu0 %v4531
        %v5272 = vpop.f32.mrf.mxu0
        %v5273 = vadd.f32 0.0, %v5272
        %v5274 = vpop.f32.mrf.mxu0
        %v5275 = vadd.f32 0.0, %v5274
        %5276 = vmatmul.bf16.gmra.mxu0 %v4532
        %v5277 = vpop.f32.mrf.mxu0
        %v5278 = vadd.f32 0.0, %v5277
        %v5279 = vpop.f32.mrf.mxu0
        %v5280 = vadd.f32 0.0, %v5279
        %5281 = vmatmul.bf16.gmra.mxu0 %v4533
        %v5282 = vpop.f32.mrf.mxu0
        %v5283 = vadd.f32 0.0, %v5282
        %v5284 = vpop.f32.mrf.mxu0
        %v5285 = vadd.f32 0.0, %v5284
        %5286 = vdwg.mxu0
        %5287 = vmatpush.bf16.msra.mxu0 %v4998
        %5288 = vmatpush.bf16.msra.mxu0 %v4996
        %5289 = vmatpush.bf16.msra.mxu0 %v4994
        %5290 = vmatpush.bf16.msra.mxu0 %v4992
        %5291 = vmatpush.bf16.msra.mxu0 %v4990
        %5292 = vmatpush.bf16.msra.mxu0 %v4988
        %5293 = vmatpush.bf16.msra.mxu0 %v4986
        %5294 = vmatpush.bf16.msra.mxu0 %v4984
        %5295 = vmatmul.bf16.gmra.mxu0 %v4585
        %v5296 = vpop.f32.mrf.mxu0
        %v5297 = vadd.f32 %v5238, %v5296
        %v5298 = vpop.f32.mrf.mxu0
        %v5299 = vadd.f32 %v5240, %v5298
        %5300 = vmatmul.bf16.gmra.mxu0 %v4597
        %v5301 = vpop.f32.mrf.mxu0
        %v5302 = vadd.f32 %v5243, %v5301
        %v5303 = vpop.f32.mrf.mxu0
        %v5304 = vadd.f32 %v5245, %v5303
        %5305 = vmatmul.bf16.gmra.mxu0 %v4609
        %v5306 = vpop.f32.mrf.mxu0
        %v5307 = vadd.f32 %v5248, %v5306
        %v5308 = vpop.f32.mrf.mxu0
        %v5309 = vadd.f32 %v5250, %v5308
        %5310 = vmatmul.bf16.gmra.mxu0 %v4621
        %v5311 = vpop.f32.mrf.mxu0
        %v5312 = vadd.f32 %v5253, %v5311
        %v5313 = vpop.f32.mrf.mxu0
        %v5314 = vadd.f32 %v5255, %v5313
        %5315 = vmatmul.bf16.gmra.mxu0 %v4633
        %v5316 = vpop.f32.mrf.mxu0
        %v5317 = vadd.f32 %v5258, %v5316
        %v5318 = vpop.f32.mrf.mxu0
        %v5319 = vadd.f32 %v5260, %v5318
        %5320 = vmatmul.bf16.gmra.mxu0 %v4645
        %v5321 = vpop.f32.mrf.mxu0
        %v5322 = vadd.f32 %v5263, %v5321
        %v5323 = vpop.f32.mrf.mxu0
        %v5324 = vadd.f32 %v5265, %v5323
        %5325 = vmatmul.bf16.gmra.mxu0 %v4657
        %v5326 = vpop.f32.mrf.mxu0
        %v5327 = vadd.f32 %v5268, %v5326
        %v5328 = vpop.f32.mrf.mxu0
        %v5329 = vadd.f32 %v5270, %v5328
        %5330 = vmatmul.bf16.gmra.mxu0 %v4669
        %v5331 = vpop.f32.mrf.mxu0
        %v5332 = vadd.f32 %v5273, %v5331
        %v5333 = vpop.f32.mrf.mxu0
        %v5334 = vadd.f32 %v5275, %v5333
        %5335 = vmatmul.bf16.gmra.mxu0 %v4681
        %v5336 = vpop.f32.mrf.mxu0
        %v5337 = vadd.f32 %v5278, %v5336
        %v5338 = vpop.f32.mrf.mxu0
        %v5339 = vadd.f32 %v5280, %v5338
        %5340 = vmatmul.bf16.gmra.mxu0 %v4693
        %v5341 = vpop.f32.mrf.mxu0
        %v5342 = vadd.f32 %v5283, %v5341
        %v5343 = vpop.f32.mrf.mxu0
        %v5344 = vadd.f32 %v5285, %v5343
        %5345 = vdwg.mxu0
        %5346 = vmatpush.bf16.msra.mxu0 %v5014
        %5347 = vmatpush.bf16.msra.mxu0 %v5012
        %5348 = vmatpush.bf16.msra.mxu0 %v5010
        %5349 = vmatpush.bf16.msra.mxu0 %v5008
        %5350 = vmatpush.bf16.msra.mxu0 %v5006
        %5351 = vmatpush.bf16.msra.mxu0 %v5004
        %5352 = vmatpush.bf16.msra.mxu0 %v5002
        %5353 = vmatpush.bf16.msra.mxu0 %v5000
        %5354 = vmatmul.bf16.gmra.mxu0 %v4736
        %v5355 = vpop.f32.mrf.mxu0
        %v5356 = vadd.f32 %v5297, %v5355
        %v5357 = vpop.f32.mrf.mxu0
        %v5358 = vadd.f32 %v5299, %v5357
        %5359 = vmatmul.bf16.gmra.mxu0 %v4739
        %v5360 = vpop.f32.mrf.mxu0
        %v5361 = vadd.f32 %v5302, %v5360
        %v5362 = vpop.f32.mrf.mxu0
        %v5363 = vadd.f32 %v5304, %v5362
        %5364 = vmatmul.bf16.gmra.mxu0 %v4742
        %v5365 = vpop.f32.mrf.mxu0
        %v5366 = vadd.f32 %v5307, %v5365
        %v5367 = vpop.f32.mrf.mxu0
        %v5368 = vadd.f32 %v5309, %v5367
        %5369 = vmatmul.bf16.gmra.mxu0 %v4745
        %v5370 = vpop.f32.mrf.mxu0
        %v5371 = vadd.f32 %v5312, %v5370
        %v5372 = vpop.f32.mrf.mxu0
        %v5373 = vadd.f32 %v5314, %v5372
        %5374 = vmatmul.bf16.gmra.mxu0 %v4748
        %v5375 = vpop.f32.mrf.mxu0
        %v5376 = vadd.f32 %v5317, %v5375
        %v5377 = vpop.f32.mrf.mxu0
        %v5378 = vadd.f32 %v5319, %v5377
        %5379 = vmatmul.bf16.gmra.mxu0 %v4751
        %v5380 = vpop.f32.mrf.mxu0
        %v5381 = vadd.f32 %v5322, %v5380
        %v5382 = vpop.f32.mrf.mxu0
        %v5383 = vadd.f32 %v5324, %v5382
        %5384 = vmatmul.bf16.gmra.mxu0 %v4754
        %v5385 = vpop.f32.mrf.mxu0
        %v5386 = vadd.f32 %v5327, %v5385
        %v5387 = vpop.f32.mrf.mxu0
        %v5388 = vadd.f32 %v5329, %v5387
        %5389 = vmatmul.bf16.gmra.mxu0 %v4757
        %v5390 = vpop.f32.mrf.mxu0
        %v5391 = vadd.f32 %v5332, %v5390
        %v5392 = vpop.f32.mrf.mxu0
        %v5393 = vadd.f32 %v5334, %v5392
        %5394 = vmatmul.bf16.gmra.mxu0 %v4760
        %v5395 = vpop.f32.mrf.mxu0
        %v5396 = vadd.f32 %v5337, %v5395
        %v5397 = vpop.f32.mrf.mxu0
        %v5398 = vadd.f32 %v5339, %v5397
        %5399 = vmatmul.bf16.gmra.mxu0 %v4763
        %v5400 = vpop.f32.mrf.mxu0
        %v5401 = vadd.f32 %v5342, %v5400
        %v5402 = vpop.f32.mrf.mxu0
        %v5403 = vadd.f32 %v5344, %v5402
        %5404 = vdwg.mxu0
        %v5405 = vadd.f32 %v4407, %v5356
        %v5406 = vadd.f32 %v4408, %v5358
        %v5407 = vadd.f32 %v4409, %v5186
        %v5408 = vadd.f32 %v4410, %v5361
        %v5409 = vadd.f32 %v4411, %v5188
        %v5410 = vadd.f32 %v4412, %v5363
        %v5411 = vadd.f32 %v4413, %v5191
        %v5412 = vadd.f32 %v4414, %v5366
        %v5413 = vadd.f32 %v4415, %v5193
        %v5414 = vadd.f32 %v4416, %v5368
        %v5415 = vadd.f32 %v4417, %v5196
        %v5416 = vadd.f32 %v4418, %v5371
        %v5417 = vadd.f32 %v4419, %v5198
        %v5418 = vadd.f32 %v4420, %v5373
        %v5419 = vadd.f32 %v4421, %v5201
        %v5420 = vadd.f32 %v4422, %v5376
        %v5421 = vadd.f32 %v4423, %v5203
        %v5422 = vadd.f32 %v4424, %v5378
        %v5423 = vadd.f32 %v4425, %v5206
        %v5424 = vadd.f32 %v4426, %v5381
        %v5425 = vadd.f32 %v4427, %v5208
        %v5426 = vadd.f32 %v4428, %v5383
        %v5427 = vadd.f32 %v4429, %v5211
        %v5428 = vadd.f32 %v4430, %v5386
        %v5429 = vadd.f32 %v4431, %v5213
        %v5430 = vadd.f32 %v4432, %v5388
        %v5431 = vadd.f32 %v4433, %v5216
        %v5432 = vadd.f32 %v4434, %v5391
        %v5433 = vadd.f32 %v4435, %v5218
        %v5434 = vadd.f32 %v4436, %v5393
        %v5435 = vadd.f32 %v4437, %v5221
        %v5436 = vadd.f32 %v4438, %v5396
        %v5437 = vadd.f32 %v4439, %v5223
        %v5438 = vadd.f32 %v4440, %v5398
        %v5439 = vadd.f32 %v4441, %v5401
        %v5440 = vadd.f32 %v4442, %v5403
        %v5441 = vld [vmem:[%s1155] sm:$0xf]
        %v5442 = vld [vmem:[%s1155 + $0x4] sm:$0xf]
        %v5443 = vld [vmem:[%s1155 + $0xc] sm:$0xf]
        %v5444 = vld [vmem:[%s1155 + $0x10] sm:$0xf]
        %v5445 = vld [vmem:[%s1155 + $0x18] sm:$0xf]
        %v5446 = vld [vmem:[%s1155 + $0x1c] sm:$0xf]
        %v5447 = vld [vmem:[%s1155 + $0x24] sm:$0xf]
        %v5448 = vld [vmem:[%s1155 + $0x28] sm:$0xf]
        %v5449 = vld [vmem:[%s1155 + $0x30] sm:$0xf]
        %v5450 = vld [vmem:[%s1155 + $0x34] sm:$0xf]
        %v5451 = vld [vmem:[%s1155 + $0x3c] sm:$0xf]
        %v5452 = vld [vmem:[%s1155 + $0x40] sm:$0xf]
        %v5453 = vld [vmem:[%s1155 + $0x48] sm:$0xf]
        %v5454 = vld [vmem:[%s1155 + $0x4c] sm:$0xf]
        %v5455 = vld [vmem:[%s1155 + $0x54] sm:$0xf]
        %v5456 = vld [vmem:[%s1155 + $0x58] sm:$0xf]
        %v5457 = vld [vmem:[%s1155 + $0x60] sm:$0xf]
        %v5458 = vld [vmem:[%s1155 + $0x64] sm:$0xf]
        %v5459 = vld [vmem:[%s1155 + $0x6c] sm:$0xf]
        %v5460 = vld [vmem:[%s1155 + $0x70] sm:$0xf]
        %v5461 = vld [vmem:[%s1155 + $0x8] sm:$0x1]
        %v5462 = vld [vmem:[%s1155 + $0x14] sm:$0x1]
        %v5463 = vld [vmem:[%s1155 + $0x20] sm:$0x1]
        %v5464 = vld [vmem:[%s1155 + $0x2c] sm:$0x1]
        %v5465 = vld [vmem:[%s1155 + $0x38] sm:$0x1]
        %v5466 = vld [vmem:[%s1155 + $0x44] sm:$0x1]
        %v5467 = vld [vmem:[%s1155 + $0x50] sm:$0x1]
        %v5468 = vld [vmem:[%s1155 + $0x5c] sm:$0x1]
        %v5469 = vld [vmem:[%s1155 + $0x68] sm:$0x1]
        %v5470 = vld [vmem:[%s1155 + $0x74] sm:$0x1]
        %v5471 = vld [vmem:[%s1155] sm:$0xe]
        %v5472 = vld [vmem:[%s1155 + $0xc] sm:$0xe]
        %v5473 = vld [vmem:[%s1155 + $0x18] sm:$0xe]
        %v5474 = vld [vmem:[%s1155 + $0x24] sm:$0xe]
        %v5475 = vld [vmem:[%s1155 + $0x30] sm:$0xe]
        %v5476 = vld [vmem:[%s1155 + $0x3c] sm:$0xe]
        %v5477 = vld [vmem:[%s1155 + $0x48] sm:$0xe]
        %v5478 = vld [vmem:[%s1155 + $0x54] sm:$0xe]
        %v5479 = vld [vmem:[%s1155 + $0x60] sm:$0xe]
        %v5480 = vld [vmem:[%s1155 + $0x6c] sm:$0xe]
        %v5501 = vunpack.c.l.b16 %v5441
        %v5502 = vunpack.c.l.b16 %v5442
        %v5503 = vunpack.c.l.b16 %v5443
        %v5504 = vunpack.c.l.b16 %v5444
        %v5505 = vunpack.c.l.b16 %v5445
        %v5506 = vunpack.c.l.b16 %v5446
        %v5507 = vunpack.c.l.b16 %v5447
        %v5508 = vunpack.c.l.b16 %v5448
        %v5509 = vunpack.c.l.b16 %v5449
        %v5510 = vunpack.c.l.b16 %v5450
        %v5511 = vunpack.c.l.b16 %v5451
        %v5512 = vunpack.c.l.b16 %v5452
        %v5513 = vunpack.c.l.b16 %v5453
        %v5514 = vunpack.c.l.b16 %v5454
        %v5515 = vunpack.c.l.b16 %v5455
        %v5516 = vunpack.c.l.b16 %v5456
        %v5517 = vunpack.c.l.b16 %v5457
        %v5518 = vunpack.c.l.b16 %v5458
        %v5519 = vunpack.c.l.b16 %v5459
        %v5520 = vunpack.c.l.b16 %v5460
        %v5521 = vpack.c.b16 %v5502, %v5501
        %v5522 = vpack.c.b16 %v5504, %v5503
        %v5523 = vpack.c.b16 %v5506, %v5505
        %v5524 = vpack.c.b16 %v5508, %v5507
        %v5525 = vpack.c.b16 %v5510, %v5509
        %v5526 = vpack.c.b16 %v5512, %v5511
        %v5527 = vpack.c.b16 %v5514, %v5513
        %v5528 = vpack.c.b16 %v5516, %v5515
        %v5529 = vpack.c.b16 %v5518, %v5517
        %v5530 = vpack.c.b16 %v5520, %v5519
        %v5551 = vunpack.c.l.b16 %v5461
        %v5552 = vunpack.c.l.b16 %v5462
        %v5553 = vunpack.c.l.b16 %v5463
        %v5554 = vunpack.c.l.b16 %v5464
        %v5555 = vunpack.c.l.b16 %v5465
        %v5556 = vunpack.c.l.b16 %v5466
        %v5557 = vunpack.c.l.b16 %v5467
        %v5558 = vunpack.c.l.b16 %v5468
        %v5559 = vunpack.c.l.b16 %v5469
        %v5560 = vunpack.c.l.b16 %v5470
        %v5561 = vpack.c.b16 %v5551, %v5551
        %v5562 = vpack.c.b16 %v5552, %v5552
        %v5563 = vpack.c.b16 %v5553, %v5553
        %v5564 = vpack.c.b16 %v5554, %v5554
        %v5565 = vpack.c.b16 %v5555, %v5555
        %v5566 = vpack.c.b16 %v5556, %v5556
        %v5567 = vpack.c.b16 %v5557, %v5557
        %v5568 = vpack.c.b16 %v5558, %v5558
        %v5569 = vpack.c.b16 %v5559, %v5559
        %v5570 = vpack.c.b16 %v5560, %v5560
        %v5572 = vshrl.u32 %v5521, 16
        %v5574 = vshll.u32 %v5521, 16
        %v5576 = vrot.slane %v5574, 1
        %v5577 = vor.u32 %v5572, %v5576
        %v5579 = vshll.u32 %v5561, 16
        %v5581 = vrot.slane %v5579, 1
        %v5582 = vsel %vm1581, %v5577, %v5581
        %v5584 = vshrl.u32 %v5522, 16
        %v5586 = vshll.u32 %v5522, 16
        %v5588 = vrot.slane %v5586, 1
        %v5589 = vor.u32 %v5584, %v5588
        %v5591 = vshll.u32 %v5562, 16
        %v5593 = vrot.slane %v5591, 1
        %v5594 = vsel %vm1581, %v5589, %v5593
        %v5596 = vshrl.u32 %v5523, 16
        %v5598 = vshll.u32 %v5523, 16
        %v5600 = vrot.slane %v5598, 1
        %v5601 = vor.u32 %v5596, %v5600
        %v5603 = vshll.u32 %v5563, 16
        %v5605 = vrot.slane %v5603, 1
        %v5606 = vsel %vm1581, %v5601, %v5605
        %v5608 = vshrl.u32 %v5524, 16
        %v5610 = vshll.u32 %v5524, 16
        %v5612 = vrot.slane %v5610, 1
        %v5613 = vor.u32 %v5608, %v5612
        %v5615 = vshll.u32 %v5564, 16
        %v5617 = vrot.slane %v5615, 1
        %v5618 = vsel %vm1581, %v5613, %v5617
        %v5620 = vshrl.u32 %v5525, 16
        %v5622 = vshll.u32 %v5525, 16
        %v5624 = vrot.slane %v5622, 1
        %v5625 = vor.u32 %v5620, %v5624
        %v5627 = vshll.u32 %v5565, 16
        %v5629 = vrot.slane %v5627, 1
        %v5630 = vsel %vm1581, %v5625, %v5629
        %v5632 = vshrl.u32 %v5526, 16
        %v5634 = vshll.u32 %v5526, 16
        %v5636 = vrot.slane %v5634, 1
        %v5637 = vor.u32 %v5632, %v5636
        %v5639 = vshll.u32 %v5566, 16
        %v5641 = vrot.slane %v5639, 1
        %v5642 = vsel %vm1581, %v5637, %v5641
        %v5644 = vshrl.u32 %v5527, 16
        %v5646 = vshll.u32 %v5527, 16
        %v5648 = vrot.slane %v5646, 1
        %v5649 = vor.u32 %v5644, %v5648
        %v5651 = vshll.u32 %v5567, 16
        %v5653 = vrot.slane %v5651, 1
        %v5654 = vsel %vm1581, %v5649, %v5653
        %v5656 = vshrl.u32 %v5528, 16
        %v5658 = vshll.u32 %v5528, 16
        %v5660 = vrot.slane %v5658, 1
        %v5661 = vor.u32 %v5656, %v5660
        %v5663 = vshll.u32 %v5568, 16
        %v5665 = vrot.slane %v5663, 1
        %v5666 = vsel %vm1581, %v5661, %v5665
        %v5668 = vshrl.u32 %v5529, 16
        %v5670 = vshll.u32 %v5529, 16
        %v5672 = vrot.slane %v5670, 1
        %v5673 = vor.u32 %v5668, %v5672
        %v5675 = vshll.u32 %v5569, 16
        %v5677 = vrot.slane %v5675, 1
        %v5678 = vsel %vm1581, %v5673, %v5677
        %v5680 = vshrl.u32 %v5530, 16
        %v5682 = vshll.u32 %v5530, 16
        %v5684 = vrot.slane %v5682, 1
        %v5685 = vor.u32 %v5680, %v5684
        %v5687 = vshll.u32 %v5570, 16
        %v5689 = vrot.slane %v5687, 1
        %v5690 = vsel %vm1581, %v5685, %v5689
        %v5711 = vunpack.c.l.b16 %v5471
        %v5712 = vunpack.c.l.b16 %v5472
        %v5713 = vunpack.c.l.b16 %v5473
        %v5714 = vunpack.c.l.b16 %v5474
        %v5715 = vunpack.c.l.b16 %v5475
        %v5716 = vunpack.c.l.b16 %v5476
        %v5717 = vunpack.c.l.b16 %v5477
        %v5718 = vunpack.c.l.b16 %v5478
        %v5719 = vunpack.c.l.b16 %v5479
        %v5720 = vunpack.c.l.b16 %v5480
        %v5721 = vpack.c.b16 %v5502, %v5711
        %v5722 = vpack.c.b16 %v5504, %v5712
        %v5723 = vpack.c.b16 %v5506, %v5713
        %v5724 = vpack.c.b16 %v5508, %v5714
        %v5725 = vpack.c.b16 %v5510, %v5715
        %v5726 = vpack.c.b16 %v5512, %v5716
        %v5727 = vpack.c.b16 %v5514, %v5717
        %v5728 = vpack.c.b16 %v5516, %v5718
        %v5729 = vpack.c.b16 %v5518, %v5719
        %v5730 = vpack.c.b16 %v5520, %v5720
        %v5731 = vrot.slane %v5721, 1
        %v5732 = vrot.slane %v5561, 1
        %v5733 = vsel %vm1742, %v5731, %v5732
        %v5734 = vrot.slane %v5722, 1
        %v5735 = vrot.slane %v5562, 1
        %v5736 = vsel %vm1742, %v5734, %v5735
        %v5737 = vrot.slane %v5723, 1
        %v5738 = vrot.slane %v5563, 1
        %v5739 = vsel %vm1742, %v5737, %v5738
        %v5740 = vrot.slane %v5724, 1
        %v5741 = vrot.slane %v5564, 1
        %v5742 = vsel %vm1742, %v5740, %v5741
        %v5743 = vrot.slane %v5725, 1
        %v5744 = vrot.slane %v5565, 1
        %v5745 = vsel %vm1742, %v5743, %v5744
        %v5746 = vrot.slane %v5726, 1
        %v5747 = vrot.slane %v5566, 1
        %v5748 = vsel %vm1742, %v5746, %v5747
        %v5749 = vrot.slane %v5727, 1
        %v5750 = vrot.slane %v5567, 1
        %v5751 = vsel %vm1742, %v5749, %v5750
        %v5752 = vrot.slane %v5728, 1
        %v5753 = vrot.slane %v5568, 1
        %v5754 = vsel %vm1742, %v5752, %v5753
        %v5755 = vrot.slane %v5729, 1
        %v5756 = vrot.slane %v5569, 1
        %v5757 = vsel %vm1742, %v5755, %v5756
        %v5758 = vrot.slane %v5730, 1
        %v5759 = vrot.slane %v5570, 1
        %v5760 = vsel %vm1742, %v5758, %v5759
        %s5771 = scalar_lea.vmem [#allocation9], 768
        %v5772 = vld [vmem:[%s5771] sm:$0xff]
        %v5773 = vld [vmem:[%s5771 + $0x8] sm:$0xff]
        %v5774 = vld [vmem:[%s5771 + $0x10] sm:$0xff]
        %v5775 = vld [vmem:[%s5771 + $0x18] sm:$0xff]
        %v5776 = vld [vmem:[%s5771 + $0x20] sm:$0xff]
        %v5777 = vld [vmem:[%s5771 + $0x28] sm:$0xff]
        %v5778 = vld [vmem:[%s5771 + $0x30] sm:$0xff]
        %v5779 = vld [vmem:[%s5771 + $0x38] sm:$0xff]
        %v5780 = vld [vmem:[%s5771 + $0x40] sm:$0xff]
        %v5781 = vld [vmem:[%s5771 + $0x48] sm:$0xff]
        %v5782 = vld [vmem:[%s5771 + $0x50] sm:$0xff]
        %v5783 = vld [vmem:[%s5771 + $0x58] sm:$0xff]
        %v5784 = vld [vmem:[%s5771 + $0x60] sm:$0xff]
        %v5785 = vld [vmem:[%s5771 + $0x68] sm:$0xff]
        %v5786 = vld [vmem:[%s5771 + $0x70] sm:$0xff]
        %v5787 = vld [vmem:[%s5771 + $0x78] sm:$0xff]
        %v5788 = vld [vmem:[%s5771 + $0x80] sm:$0xff]
        %v5789 = vld [vmem:[%s5771 + $0x88] sm:$0xff]
        %v5790 = vld [vmem:[%s5771 + $0x90] sm:$0xff]
        %v5791 = vld [vmem:[%s5771 + $0x98] sm:$0xff]
        %v5792 = vld [vmem:[%s5771 + $0xa0] sm:$0xff]
        %v5793 = vld [vmem:[%s5771 + $0xa8] sm:$0xff]
        %v5794 = vld [vmem:[%s5771 + $0xb0] sm:$0xff]
        %v5795 = vld [vmem:[%s5771 + $0xb8] sm:$0xff]
        %v5796 = vld [vmem:[%s5771 + $0xc0] sm:$0xff]
        %v5797 = vld [vmem:[%s5771 + $0xc8] sm:$0xff]
        %v5798 = vld [vmem:[%s5771 + $0xd0] sm:$0xff]
        %v5799 = vld [vmem:[%s5771 + $0xd8] sm:$0xff]
        %v5800 = vld [vmem:[%s5771 + $0xe0] sm:$0xff]
        %v5801 = vld [vmem:[%s5771 + $0xe8] sm:$0xff]
        %v5802 = vld [vmem:[%s5771 + $0xf0] sm:$0xff]
        %v5803 = vld [vmem:[%s5771 + $0xf8] sm:$0xff]
        %v5804 = vld [vmem:[%s5771 + $0x100] sm:$0xff]
        %v5805 = vld [vmem:[%s5771 + $0x108] sm:$0xff]
        %v5806 = vld [vmem:[%s5771 + $0x110] sm:$0xff]
        %v5807 = vld [vmem:[%s5771 + $0x118] sm:$0xff]
        %v5808 = vld [vmem:[%s5771 + $0x120] sm:$0xff]
        %v5809 = vld [vmem:[%s5771 + $0x128] sm:$0xff]
        %v5810 = vld [vmem:[%s5771 + $0x130] sm:$0xff]
        %v5811 = vld [vmem:[%s5771 + $0x138] sm:$0xff]
        %v5812 = vld [vmem:[%s5771 + $0x140] sm:$0xff]
        %v5813 = vld [vmem:[%s5771 + $0x148] sm:$0xff]
        %v5814 = vld [vmem:[%s5771 + $0x150] sm:$0xff]
        %v5815 = vld [vmem:[%s5771 + $0x158] sm:$0xff]
        %v5816 = vld [vmem:[%s5771 + $0x160] sm:$0xff]
        %v5817 = vld [vmem:[%s5771 + $0x168] sm:$0xff]
        %v5818 = vld [vmem:[%s5771 + $0x170] sm:$0xff]
        %v5819 = vld [vmem:[%s5771 + $0x178] sm:$0xff]
        %v5868 = vunpack.c.l.b16 %v5772
        %v5869 = vunpack.c.h.b16 %v5772
        %v5870 = vunpack.c.l.b16 %v5773
        %v5871 = vunpack.c.h.b16 %v5773
        %v5872 = vunpack.c.l.b16 %v5774
        %v5873 = vunpack.c.h.b16 %v5774
        %v5874 = vunpack.c.l.b16 %v5775
        %v5875 = vunpack.c.h.b16 %v5775
        %v5876 = vunpack.c.l.b16 %v5776
        %v5877 = vunpack.c.h.b16 %v5776
        %v5878 = vunpack.c.l.b16 %v5777
        %v5879 = vunpack.c.h.b16 %v5777
        %v5880 = vunpack.c.l.b16 %v5778
        %v5881 = vunpack.c.h.b16 %v5778
        %v5882 = vunpack.c.l.b16 %v5779
        %v5883 = vunpack.c.h.b16 %v5779
        %v5884 = vunpack.c.l.b16 %v5780
        %v5885 = vunpack.c.h.b16 %v5780
        %v5886 = vunpack.c.l.b16 %v5781
        %v5887 = vunpack.c.h.b16 %v5781
        %v5888 = vunpack.c.l.b16 %v5782
        %v5889 = vunpack.c.h.b16 %v5782
        %v5890 = vunpack.c.l.b16 %v5783
        %v5891 = vunpack.c.h.b16 %v5783
        %v5892 = vunpack.c.l.b16 %v5784
        %v5893 = vunpack.c.h.b16 %v5784
        %v5894 = vunpack.c.l.b16 %v5785
        %v5895 = vunpack.c.h.b16 %v5785
        %v5896 = vunpack.c.l.b16 %v5786
        %v5897 = vunpack.c.h.b16 %v5786
        %v5898 = vunpack.c.l.b16 %v5787
        %v5899 = vunpack.c.h.b16 %v5787
        %v5900 = vunpack.c.l.b16 %v5788
        %v5901 = vunpack.c.h.b16 %v5788
        %v5902 = vunpack.c.l.b16 %v5789
        %v5903 = vunpack.c.h.b16 %v5789
        %v5904 = vunpack.c.l.b16 %v5790
        %v5905 = vunpack.c.h.b16 %v5790
        %v5906 = vunpack.c.l.b16 %v5791
        %v5907 = vunpack.c.h.b16 %v5791
        %v5908 = vunpack.c.l.b16 %v5792
        %v5909 = vunpack.c.h.b16 %v5792
        %v5910 = vunpack.c.l.b16 %v5793
        %v5911 = vunpack.c.h.b16 %v5793
        %v5912 = vunpack.c.l.b16 %v5794
        %v5913 = vunpack.c.h.b16 %v5794
        %v5914 = vunpack.c.l.b16 %v5795
        %v5915 = vunpack.c.h.b16 %v5795
        %v5916 = vunpack.c.l.b16 %v5796
        %v5917 = vunpack.c.h.b16 %v5796
        %v5918 = vunpack.c.l.b16 %v5797
        %v5919 = vunpack.c.h.b16 %v5797
        %v5920 = vunpack.c.l.b16 %v5798
        %v5921 = vunpack.c.h.b16 %v5798
        %v5922 = vunpack.c.l.b16 %v5799
        %v5923 = vunpack.c.h.b16 %v5799
        %v5924 = vunpack.c.l.b16 %v5800
        %v5925 = vunpack.c.h.b16 %v5800
        %v5926 = vunpack.c.l.b16 %v5801
        %v5927 = vunpack.c.h.b16 %v5801
        %v5928 = vunpack.c.l.b16 %v5802
        %v5929 = vunpack.c.h.b16 %v5802
        %v5930 = vunpack.c.l.b16 %v5803
        %v5931 = vunpack.c.h.b16 %v5803
        %v5932 = vunpack.c.l.b16 %v5804
        %v5933 = vunpack.c.h.b16 %v5804
        %v5934 = vunpack.c.l.b16 %v5805
        %v5935 = vunpack.c.h.b16 %v5805
        %v5936 = vunpack.c.l.b16 %v5806
        %v5937 = vunpack.c.h.b16 %v5806
        %v5938 = vunpack.c.l.b16 %v5807
        %v5939 = vunpack.c.h.b16 %v5807
        %v5940 = vunpack.c.l.b16 %v5808
        %v5941 = vunpack.c.h.b16 %v5808
        %v5942 = vunpack.c.l.b16 %v5809
        %v5943 = vunpack.c.h.b16 %v5809
        %v5944 = vunpack.c.l.b16 %v5810
        %v5945 = vunpack.c.h.b16 %v5810
        %v5946 = vunpack.c.l.b16 %v5811
        %v5947 = vunpack.c.h.b16 %v5811
        %v5948 = vunpack.c.l.b16 %v5812
        %v5949 = vunpack.c.h.b16 %v5812
        %v5950 = vunpack.c.l.b16 %v5813
        %v5951 = vunpack.c.h.b16 %v5813
        %v5952 = vunpack.c.l.b16 %v5814
        %v5953 = vunpack.c.h.b16 %v5814
        %v5954 = vunpack.c.l.b16 %v5815
        %v5955 = vunpack.c.h.b16 %v5815
        %v5956 = vunpack.c.l.b16 %v5816
        %v5957 = vunpack.c.h.b16 %v5816
        %v5958 = vunpack.c.l.b16 %v5817
        %v5959 = vunpack.c.h.b16 %v5817
        %v5960 = vunpack.c.l.b16 %v5818
        %v5961 = vunpack.c.h.b16 %v5818
        %v5962 = vunpack.c.l.b16 %v5819
        %v5963 = vunpack.c.h.b16 %v5819
        %v5964 = vpack.c.b16 %v5870, %v5868
        %v5965 = vpack.c.b16 %v5871, %v5869
        %v5966 = vpack.c.b16 %v5874, %v5872
        %v5967 = vpack.c.b16 %v5875, %v5873
        %v5968 = vpack.c.b16 %v5878, %v5876
        %v5969 = vpack.c.b16 %v5879, %v5877
        %v5970 = vpack.c.b16 %v5882, %v5880
        %v5971 = vpack.c.b16 %v5883, %v5881
        %v5972 = vpack.c.b16 %v5886, %v5884
        %v5973 = vpack.c.b16 %v5887, %v5885
        %v5974 = vpack.c.b16 %v5890, %v5888
        %v5975 = vpack.c.b16 %v5891, %v5889
        %v5976 = vpack.c.b16 %v5894, %v5892
        %v5977 = vpack.c.b16 %v5895, %v5893
        %v5978 = vpack.c.b16 %v5898, %v5896
        %v5979 = vpack.c.b16 %v5899, %v5897
        %v5980 = vpack.c.b16 %v5902, %v5900
        %v5981 = vpack.c.b16 %v5903, %v5901
        %v5982 = vpack.c.b16 %v5906, %v5904
        %v5983 = vpack.c.b16 %v5907, %v5905
        %v5984 = vpack.c.b16 %v5910, %v5908
        %v5985 = vpack.c.b16 %v5911, %v5909
        %v5986 = vpack.c.b16 %v5914, %v5912
        %v5987 = vpack.c.b16 %v5915, %v5913
        %v5988 = vpack.c.b16 %v5918, %v5916
        %v5989 = vpack.c.b16 %v5919, %v5917
        %v5990 = vpack.c.b16 %v5922, %v5920
        %v5991 = vpack.c.b16 %v5923, %v5921
        %v5992 = vpack.c.b16 %v5926, %v5924
        %v5993 = vpack.c.b16 %v5927, %v5925
        %v5994 = vpack.c.b16 %v5930, %v5928
        %v5995 = vpack.c.b16 %v5931, %v5929
        %v5996 = vpack.c.b16 %v5934, %v5932
        %v5997 = vpack.c.b16 %v5935, %v5933
        %v5998 = vpack.c.b16 %v5938, %v5936
        %v5999 = vpack.c.b16 %v5939, %v5937
        %v6000 = vpack.c.b16 %v5942, %v5940
        %v6001 = vpack.c.b16 %v5943, %v5941
        %v6002 = vpack.c.b16 %v5946, %v5944
        %v6003 = vpack.c.b16 %v5947, %v5945
        %v6004 = vpack.c.b16 %v5950, %v5948
        %v6005 = vpack.c.b16 %v5951, %v5949
        %v6006 = vpack.c.b16 %v5954, %v5952
        %v6007 = vpack.c.b16 %v5955, %v5953
        %v6008 = vpack.c.b16 %v5958, %v5956
        %v6009 = vpack.c.b16 %v5959, %v5957
        %v6010 = vpack.c.b16 %v5962, %v5960
        %v6011 = vpack.c.b16 %v5963, %v5961
        %6060 = vmatpush.bf16.msra.mxu0 %v5978
        %6061 = vmatpush.bf16.msra.mxu0 %v5976
        %6062 = vmatpush.bf16.msra.mxu0 %v5974
        %6063 = vmatpush.bf16.msra.mxu0 %v5972
        %6064 = vmatpush.bf16.msra.mxu0 %v5970
        %6065 = vmatpush.bf16.msra.mxu0 %v5968
        %6066 = vmatpush.bf16.msra.mxu0 %v5966
        %6067 = vmatpush.bf16.msra.mxu0 %v5964
        %6068 = vmatmul.bf16.gmra.mxu0 %v5521
        %v6069 = vpop.f32.mrf.mxu0
        %v6070 = vpop.f32.mrf.mxu0
        %6071 = vmatmul.bf16.gmra.mxu0 %v5522
        %v6072 = vpop.f32.mrf.mxu0
        %v6073 = vadd.f32 0.0, %v6072
        %v6074 = vpop.f32.mrf.mxu0
        %v6075 = vadd.f32 0.0, %v6074
        %6076 = vmatmul.bf16.gmra.mxu0 %v5523
        %v6077 = vpop.f32.mrf.mxu0
        %v6078 = vadd.f32 0.0, %v6077
        %v6079 = vpop.f32.mrf.mxu0
        %v6080 = vadd.f32 0.0, %v6079
        %6081 = vmatmul.bf16.gmra.mxu0 %v5524
        %v6082 = vpop.f32.mrf.mxu0
        %v6083 = vadd.f32 0.0, %v6082
        %v6084 = vpop.f32.mrf.mxu0
        %v6085 = vadd.f32 0.0, %v6084
        %6086 = vmatmul.bf16.gmra.mxu0 %v5525
        %v6087 = vpop.f32.mrf.mxu0
        %v6088 = vadd.f32 0.0, %v6087
        %v6089 = vpop.f32.mrf.mxu0
        %v6090 = vadd.f32 0.0, %v6089
        %6091 = vmatmul.bf16.gmra.mxu0 %v5526
        %v6092 = vpop.f32.mrf.mxu0
        %v6093 = vadd.f32 0.0, %v6092
        %v6094 = vpop.f32.mrf.mxu0
        %v6095 = vadd.f32 0.0, %v6094
        %6096 = vmatmul.bf16.gmra.mxu0 %v5527
        %v6097 = vpop.f32.mrf.mxu0
        %v6098 = vadd.f32 0.0, %v6097
        %v6099 = vpop.f32.mrf.mxu0
        %v6100 = vadd.f32 0.0, %v6099
        %6101 = vmatmul.bf16.gmra.mxu0 %v5528
        %v6102 = vpop.f32.mrf.mxu0
        %v6103 = vadd.f32 0.0, %v6102
        %v6104 = vpop.f32.mrf.mxu0
        %v6105 = vadd.f32 0.0, %v6104
        %6106 = vmatmul.bf16.gmra.mxu0 %v5529
        %v6107 = vpop.f32.mrf.mxu0
        %v6108 = vadd.f32 0.0, %v6107
        %v6109 = vpop.f32.mrf.mxu0
        %v6110 = vadd.f32 0.0, %v6109
        %6111 = vmatmul.bf16.gmra.mxu0 %v5530
        %v6112 = vpop.f32.mrf.mxu0
        %v6113 = vpop.f32.mrf.mxu0
        %6114 = vdwg.mxu0
        %6115 = vmatpush.bf16.msra.mxu0 %v5994
        %6116 = vmatpush.bf16.msra.mxu0 %v5992
        %6117 = vmatpush.bf16.msra.mxu0 %v5990
        %6118 = vmatpush.bf16.msra.mxu0 %v5988
        %6119 = vmatpush.bf16.msra.mxu0 %v5986
        %6120 = vmatpush.bf16.msra.mxu0 %v5984
        %6121 = vmatpush.bf16.msra.mxu0 %v5982
        %6122 = vmatpush.bf16.msra.mxu0 %v5980
        %6123 = vmatmul.bf16.gmra.mxu0 %v5582
        %v6124 = vpop.f32.mrf.mxu0
        %v6125 = vpop.f32.mrf.mxu0
        %6126 = vmatmul.bf16.gmra.mxu0 %v5594
        %v6127 = vpop.f32.mrf.mxu0
        %v6128 = vadd.f32 %v6073, %v6127
        %v6129 = vpop.f32.mrf.mxu0
        %v6130 = vadd.f32 %v6075, %v6129
        %6131 = vmatmul.bf16.gmra.mxu0 %v5606
        %v6132 = vpop.f32.mrf.mxu0
        %v6133 = vadd.f32 %v6078, %v6132
        %v6134 = vpop.f32.mrf.mxu0
        %v6135 = vadd.f32 %v6080, %v6134
        %6136 = vmatmul.bf16.gmra.mxu0 %v5618
        %v6137 = vpop.f32.mrf.mxu0
        %v6138 = vadd.f32 %v6083, %v6137
        %v6139 = vpop.f32.mrf.mxu0
        %v6140 = vadd.f32 %v6085, %v6139
        %6141 = vmatmul.bf16.gmra.mxu0 %v5630
        %v6142 = vpop.f32.mrf.mxu0
        %v6143 = vadd.f32 %v6088, %v6142
        %v6144 = vpop.f32.mrf.mxu0
        %v6145 = vadd.f32 %v6090, %v6144
        %6146 = vmatmul.bf16.gmra.mxu0 %v5642
        %v6147 = vpop.f32.mrf.mxu0
        %v6148 = vadd.f32 %v6093, %v6147
        %v6149 = vpop.f32.mrf.mxu0
        %v6150 = vadd.f32 %v6095, %v6149
        %6151 = vmatmul.bf16.gmra.mxu0 %v5654
        %v6152 = vpop.f32.mrf.mxu0
        %v6153 = vadd.f32 %v6098, %v6152
        %v6154 = vpop.f32.mrf.mxu0
        %v6155 = vadd.f32 %v6100, %v6154
        %6156 = vmatmul.bf16.gmra.mxu0 %v5666
        %v6157 = vpop.f32.mrf.mxu0
        %v6158 = vadd.f32 %v6103, %v6157
        %v6159 = vpop.f32.mrf.mxu0
        %v6160 = vadd.f32 %v6105, %v6159
        %6161 = vmatmul.bf16.gmra.mxu0 %v5678
        %v6162 = vpop.f32.mrf.mxu0
        %v6163 = vadd.f32 %v6108, %v6162
        %v6164 = vpop.f32.mrf.mxu0
        %v6165 = vadd.f32 %v6110, %v6164
        %6166 = vmatmul.bf16.gmra.mxu0 %v5690
        %v6167 = vpop.f32.mrf.mxu0
        %v6168 = vpop.f32.mrf.mxu0
        %6169 = vdwg.mxu0
        %6170 = vmatpush.bf16.msra.mxu0 %v6010
        %6171 = vmatpush.bf16.msra.mxu0 %v6008
        %6172 = vmatpush.bf16.msra.mxu0 %v6006
        %6173 = vmatpush.bf16.msra.mxu0 %v6004
        %6174 = vmatpush.bf16.msra.mxu0 %v6002
        %6175 = vmatpush.bf16.msra.mxu0 %v6000
        %6176 = vmatpush.bf16.msra.mxu0 %v5998
        %6177 = vmatpush.bf16.msra.mxu0 %v5996
        %6178 = vmatmul.bf16.gmra.mxu0 %v5733
        %v6179 = vpop.f32.mrf.mxu0
        %v6180 = vpop.f32.mrf.mxu0
        %6181 = vmatmul.bf16.gmra.mxu0 %v5736
        %v6182 = vpop.f32.mrf.mxu0
        %v6183 = vadd.f32 %v6128, %v6182
        %v6184 = vpop.f32.mrf.mxu0
        %v6185 = vadd.f32 %v6130, %v6184
        %6186 = vmatmul.bf16.gmra.mxu0 %v5739
        %v6187 = vpop.f32.mrf.mxu0
        %v6188 = vadd.f32 %v6133, %v6187
        %v6189 = vpop.f32.mrf.mxu0
        %v6190 = vadd.f32 %v6135, %v6189
        %6191 = vmatmul.bf16.gmra.mxu0 %v5742
        %v6192 = vpop.f32.mrf.mxu0
        %v6193 = vadd.f32 %v6138, %v6192
        %v6194 = vpop.f32.mrf.mxu0
        %v6195 = vadd.f32 %v6140, %v6194
        %6196 = vmatmul.bf16.gmra.mxu0 %v5745
        %v6197 = vpop.f32.mrf.mxu0
        %v6198 = vadd.f32 %v6143, %v6197
        %v6199 = vpop.f32.mrf.mxu0
        %v6200 = vadd.f32 %v6145, %v6199
        %6201 = vmatmul.bf16.gmra.mxu0 %v5748
        %v6202 = vpop.f32.mrf.mxu0
        %v6203 = vadd.f32 %v6148, %v6202
        %v6204 = vpop.f32.mrf.mxu0
        %v6205 = vadd.f32 %v6150, %v6204
        %6206 = vmatmul.bf16.gmra.mxu0 %v5751
        %v6207 = vpop.f32.mrf.mxu0
        %v6208 = vadd.f32 %v6153, %v6207
        %v6209 = vpop.f32.mrf.mxu0
        %v6210 = vadd.f32 %v6155, %v6209
        %6211 = vmatmul.bf16.gmra.mxu0 %v5754
        %v6212 = vpop.f32.mrf.mxu0
        %v6213 = vadd.f32 %v6158, %v6212
        %v6214 = vpop.f32.mrf.mxu0
        %v6215 = vadd.f32 %v6160, %v6214
        %6216 = vmatmul.bf16.gmra.mxu0 %v5757
        %v6217 = vpop.f32.mrf.mxu0
        %v6218 = vadd.f32 %v6163, %v6217
        %v6219 = vpop.f32.mrf.mxu0
        %v6220 = vadd.f32 %v6165, %v6219
        %6221 = vmatmul.bf16.gmra.mxu0 %v5760
        %v6222 = vpop.f32.mrf.mxu0
        %v6223 = vpop.f32.mrf.mxu0
        %6224 = vdwg.mxu0
        %6225 = vmatpush.bf16.msra.mxu0 %v5979
        %6226 = vmatpush.bf16.msra.mxu0 %v5977
        %6227 = vmatpush.bf16.msra.mxu0 %v5975
        %6228 = vmatpush.bf16.msra.mxu0 %v5973
        %6229 = vmatpush.bf16.msra.mxu0 %v5971
        %6230 = vmatpush.bf16.msra.mxu0 %v5969
        %6231 = vmatpush.bf16.msra.mxu0 %v5967
        %6232 = vmatpush.bf16.msra.mxu0 %v5965
        %6233 = vmatmul.bf16.gmra.mxu0 %v5521
        %v6234 = vpop.f32.mrf.mxu0
        %v6235 = vadd.f32 0.0, %v6234
        %v6236 = vpop.f32.mrf.mxu0
        %v6237 = vadd.f32 0.0, %v6236
        %6238 = vmatmul.bf16.gmra.mxu0 %v5522
        %v6239 = vpop.f32.mrf.mxu0
        %v6240 = vadd.f32 0.0, %v6239
        %v6241 = vpop.f32.mrf.mxu0
        %v6242 = vadd.f32 0.0, %v6241
        %6243 = vmatmul.bf16.gmra.mxu0 %v5523
        %v6244 = vpop.f32.mrf.mxu0
        %v6245 = vadd.f32 0.0, %v6244
        %v6246 = vpop.f32.mrf.mxu0
        %v6247 = vadd.f32 0.0, %v6246
        %6248 = vmatmul.bf16.gmra.mxu0 %v5524
        %v6249 = vpop.f32.mrf.mxu0
        %v6250 = vadd.f32 0.0, %v6249
        %v6251 = vpop.f32.mrf.mxu0
        %v6252 = vadd.f32 0.0, %v6251
        %6253 = vmatmul.bf16.gmra.mxu0 %v5525
        %v6254 = vpop.f32.mrf.mxu0
        %v6255 = vadd.f32 0.0, %v6254
        %v6256 = vpop.f32.mrf.mxu0
        %v6257 = vadd.f32 0.0, %v6256
        %6258 = vmatmul.bf16.gmra.mxu0 %v5526
        %v6259 = vpop.f32.mrf.mxu0
        %v6260 = vadd.f32 0.0, %v6259
        %v6261 = vpop.f32.mrf.mxu0
        %v6262 = vadd.f32 0.0, %v6261
        %6263 = vmatmul.bf16.gmra.mxu0 %v5527
        %v6264 = vpop.f32.mrf.mxu0
        %v6265 = vadd.f32 0.0, %v6264
        %v6266 = vpop.f32.mrf.mxu0
        %v6267 = vadd.f32 0.0, %v6266
        %6268 = vmatmul.bf16.gmra.mxu0 %v5528
        %v6269 = vpop.f32.mrf.mxu0
        %v6270 = vadd.f32 0.0, %v6269
        %v6271 = vpop.f32.mrf.mxu0
        %v6272 = vadd.f32 0.0, %v6271
        %6273 = vmatmul.bf16.gmra.mxu0 %v5529
        %v6274 = vpop.f32.mrf.mxu0
        %v6275 = vadd.f32 0.0, %v6274
        %v6276 = vpop.f32.mrf.mxu0
        %v6277 = vadd.f32 0.0, %v6276
        %6278 = vmatmul.bf16.gmra.mxu0 %v5530
        %v6279 = vpop.f32.mrf.mxu0
        %v6280 = vadd.f32 0.0, %v6279
        %v6281 = vpop.f32.mrf.mxu0
        %v6282 = vadd.f32 0.0, %v6281
        %6283 = vdwg.mxu0
        %6284 = vmatpush.bf16.msra.mxu0 %v5995
        %6285 = vmatpush.bf16.msra.mxu0 %v5993
        %6286 = vmatpush.bf16.msra.mxu0 %v5991
        %6287 = vmatpush.bf16.msra.mxu0 %v5989
        %6288 = vmatpush.bf16.msra.mxu0 %v5987
        %6289 = vmatpush.bf16.msra.mxu0 %v5985
        %6290 = vmatpush.bf16.msra.mxu0 %v5983
        %6291 = vmatpush.bf16.msra.mxu0 %v5981
        %6292 = vmatmul.bf16.gmra.mxu0 %v5582
        %v6293 = vpop.f32.mrf.mxu0
        %v6294 = vadd.f32 %v6235, %v6293
        %v6295 = vpop.f32.mrf.mxu0
        %v6296 = vadd.f32 %v6237, %v6295
        %6297 = vmatmul.bf16.gmra.mxu0 %v5594
        %v6298 = vpop.f32.mrf.mxu0
        %v6299 = vadd.f32 %v6240, %v6298
        %v6300 = vpop.f32.mrf.mxu0
        %v6301 = vadd.f32 %v6242, %v6300
        %6302 = vmatmul.bf16.gmra.mxu0 %v5606
        %v6303 = vpop.f32.mrf.mxu0
        %v6304 = vadd.f32 %v6245, %v6303
        %v6305 = vpop.f32.mrf.mxu0
        %v6306 = vadd.f32 %v6247, %v6305
        %6307 = vmatmul.bf16.gmra.mxu0 %v5618
        %v6308 = vpop.f32.mrf.mxu0
        %v6309 = vadd.f32 %v6250, %v6308
        %v6310 = vpop.f32.mrf.mxu0
        %v6311 = vadd.f32 %v6252, %v6310
        %6312 = vmatmul.bf16.gmra.mxu0 %v5630
        %v6313 = vpop.f32.mrf.mxu0
        %v6314 = vadd.f32 %v6255, %v6313
        %v6315 = vpop.f32.mrf.mxu0
        %v6316 = vadd.f32 %v6257, %v6315
        %6317 = vmatmul.bf16.gmra.mxu0 %v5642
        %v6318 = vpop.f32.mrf.mxu0
        %v6319 = vadd.f32 %v6260, %v6318
        %v6320 = vpop.f32.mrf.mxu0
        %v6321 = vadd.f32 %v6262, %v6320
        %6322 = vmatmul.bf16.gmra.mxu0 %v5654
        %v6323 = vpop.f32.mrf.mxu0
        %v6324 = vadd.f32 %v6265, %v6323
        %v6325 = vpop.f32.mrf.mxu0
        %v6326 = vadd.f32 %v6267, %v6325
        %6327 = vmatmul.bf16.gmra.mxu0 %v5666
        %v6328 = vpop.f32.mrf.mxu0
        %v6329 = vadd.f32 %v6270, %v6328
        %v6330 = vpop.f32.mrf.mxu0
        %v6331 = vadd.f32 %v6272, %v6330
        %6332 = vmatmul.bf16.gmra.mxu0 %v5678
        %v6333 = vpop.f32.mrf.mxu0
        %v6334 = vadd.f32 %v6275, %v6333
        %v6335 = vpop.f32.mrf.mxu0
        %v6336 = vadd.f32 %v6277, %v6335
        %6337 = vmatmul.bf16.gmra.mxu0 %v5690
        %v6338 = vpop.f32.mrf.mxu0
        %v6339 = vadd.f32 %v6280, %v6338
        %v6340 = vpop.f32.mrf.mxu0
        %v6341 = vadd.f32 %v6282, %v6340
        %6342 = vdwg.mxu0
        %6343 = vmatpush.bf16.msra.mxu0 %v6011
        %6344 = vmatpush.bf16.msra.mxu0 %v6009
        %6345 = vmatpush.bf16.msra.mxu0 %v6007
        %6346 = vmatpush.bf16.msra.mxu0 %v6005
        %6347 = vmatpush.bf16.msra.mxu0 %v6003
        %6348 = vmatpush.bf16.msra.mxu0 %v6001
        %6349 = vmatpush.bf16.msra.mxu0 %v5999
        %6350 = vmatpush.bf16.msra.mxu0 %v5997
        %6351 = vmatmul.bf16.gmra.mxu0 %v5733
        %v6352 = vpop.f32.mrf.mxu0
        %v6353 = vadd.f32 %v6294, %v6352
        %v6354 = vpop.f32.mrf.mxu0
        %v6355 = vadd.f32 %v6296, %v6354
        %6356 = vmatmul.bf16.gmra.mxu0 %v5736
        %v6357 = vpop.f32.mrf.mxu0
        %v6358 = vadd.f32 %v6299, %v6357
        %v6359 = vpop.f32.mrf.mxu0
        %v6360 = vadd.f32 %v6301, %v6359
        %6361 = vmatmul.bf16.gmra.mxu0 %v5739
        %v6362 = vpop.f32.mrf.mxu0
        %v6363 = vadd.f32 %v6304, %v6362
        %v6364 = vpop.f32.mrf.mxu0
        %v6365 = vadd.f32 %v6306, %v6364
        %6366 = vmatmul.bf16.gmra.mxu0 %v5742
        %v6367 = vpop.f32.mrf.mxu0
        %v6368 = vadd.f32 %v6309, %v6367
        %v6369 = vpop.f32.mrf.mxu0
        %v6370 = vadd.f32 %v6311, %v6369
        %6371 = vmatmul.bf16.gmra.mxu0 %v5745
        %v6372 = vpop.f32.mrf.mxu0
        %v6373 = vadd.f32 %v6314, %v6372
        %v6374 = vpop.f32.mrf.mxu0
        %v6375 = vadd.f32 %v6316, %v6374
        %6376 = vmatmul.bf16.gmra.mxu0 %v5748
        %v6377 = vpop.f32.mrf.mxu0
        %v6378 = vadd.f32 %v6319, %v6377
        %v6379 = vpop.f32.mrf.mxu0
        %v6380 = vadd.f32 %v6321, %v6379
        %6381 = vmatmul.bf16.gmra.mxu0 %v5751
        %v6382 = vpop.f32.mrf.mxu0
        %v6383 = vadd.f32 %v6324, %v6382
        %v6384 = vpop.f32.mrf.mxu0
        %v6385 = vadd.f32 %v6326, %v6384
        %6386 = vmatmul.bf16.gmra.mxu0 %v5754
        %v6387 = vpop.f32.mrf.mxu0
        %v6388 = vadd.f32 %v6329, %v6387
        %v6389 = vpop.f32.mrf.mxu0
        %v6390 = vadd.f32 %v6331, %v6389
        %6391 = vmatmul.bf16.gmra.mxu0 %v5757
        %v6392 = vpop.f32.mrf.mxu0
        %v6393 = vadd.f32 %v6334, %v6392
        %v6394 = vpop.f32.mrf.mxu0
        %v6395 = vadd.f32 %v6336, %v6394
        %6396 = vmatmul.bf16.gmra.mxu0 %v5760
        %v6397 = vpop.f32.mrf.mxu0
        %v6398 = vadd.f32 %v6339, %v6397
        %v6399 = vpop.f32.mrf.mxu0
        %v6400 = vadd.f32 %v6341, %v6399
        %6401 = vdwg.mxu0
        %v6402 = vadd.f32 %v5405, %v6353
        %v6403 = vadd.f32 %v5406, %v6355
        %v6404 = vadd.f32 %v5407, %v6183
        %v6405 = vadd.f32 %v5408, %v6358
        %v6406 = vadd.f32 %v5409, %v6185
        %v6407 = vadd.f32 %v5410, %v6360
        %v6408 = vadd.f32 %v5411, %v6188
        %v6409 = vadd.f32 %v5412, %v6363
        %v6410 = vadd.f32 %v5413, %v6190
        %v6411 = vadd.f32 %v5414, %v6365
        %v6412 = vadd.f32 %v5415, %v6193
        %v6413 = vadd.f32 %v5416, %v6368
        %v6414 = vadd.f32 %v5417, %v6195
        %v6415 = vadd.f32 %v5418, %v6370
        %v6416 = vadd.f32 %v5419, %v6198
        %v6417 = vadd.f32 %v5420, %v6373
        %v6418 = vadd.f32 %v5421, %v6200
        %v6419 = vadd.f32 %v5422, %v6375
        %v6420 = vadd.f32 %v5423, %v6203
        %v6421 = vadd.f32 %v5424, %v6378
        %v6422 = vadd.f32 %v5425, %v6205
        %v6423 = vadd.f32 %v5426, %v6380
        %v6424 = vadd.f32 %v5427, %v6208
        %v6425 = vadd.f32 %v5428, %v6383
        %v6426 = vadd.f32 %v5429, %v6210
        %v6427 = vadd.f32 %v5430, %v6385
        %v6428 = vadd.f32 %v5431, %v6213
        %v6429 = vadd.f32 %v5432, %v6388
        %v6430 = vadd.f32 %v5433, %v6215
        %v6431 = vadd.f32 %v5434, %v6390
        %v6432 = vadd.f32 %v5435, %v6218
        %v6433 = vadd.f32 %v5436, %v6393
        %v6434 = vadd.f32 %v5437, %v6220
        %v6435 = vadd.f32 %v5438, %v6395
        %v6436 = vadd.f32 %v5439, %v6398
        %v6437 = vadd.f32 %v5440, %v6400
        %v6438 = vld [vmem:[%s1388] sm:$0xf]
        %v6439 = vld [vmem:[%s1388 + $0x4] sm:$0xf]
        %v6440 = vld [vmem:[%s1388 + $0xc] sm:$0xf]
        %v6441 = vld [vmem:[%s1388 + $0x10] sm:$0xf]
        %v6442 = vld [vmem:[%s1388 + $0x18] sm:$0xf]
        %v6443 = vld [vmem:[%s1388 + $0x1c] sm:$0xf]
        %v6444 = vld [vmem:[%s1388 + $0x24] sm:$0xf]
        %v6445 = vld [vmem:[%s1388 + $0x28] sm:$0xf]
        %v6446 = vld [vmem:[%s1388 + $0x30] sm:$0xf]
        %v6447 = vld [vmem:[%s1388 + $0x34] sm:$0xf]
        %v6448 = vld [vmem:[%s1388 + $0x3c] sm:$0xf]
        %v6449 = vld [vmem:[%s1388 + $0x40] sm:$0xf]
        %v6450 = vld [vmem:[%s1388 + $0x48] sm:$0xf]
        %v6451 = vld [vmem:[%s1388 + $0x4c] sm:$0xf]
        %v6452 = vld [vmem:[%s1388 + $0x54] sm:$0xf]
        %v6453 = vld [vmem:[%s1388 + $0x58] sm:$0xf]
        %v6454 = vld [vmem:[%s1388 + $0x60] sm:$0xf]
        %v6455 = vld [vmem:[%s1388 + $0x64] sm:$0xf]
        %v6456 = vld [vmem:[%s1388 + $0x6c] sm:$0xf]
        %v6457 = vld [vmem:[%s1388 + $0x70] sm:$0xf]
        %v6458 = vld [vmem:[%s1388 + $0x8] sm:$0x1]
        %v6459 = vld [vmem:[%s1388 + $0x14] sm:$0x1]
        %v6460 = vld [vmem:[%s1388 + $0x20] sm:$0x1]
        %v6461 = vld [vmem:[%s1388 + $0x2c] sm:$0x1]
        %v6462 = vld [vmem:[%s1388 + $0x38] sm:$0x1]
        %v6463 = vld [vmem:[%s1388 + $0x44] sm:$0x1]
        %v6464 = vld [vmem:[%s1388 + $0x50] sm:$0x1]
        %v6465 = vld [vmem:[%s1388 + $0x5c] sm:$0x1]
        %v6466 = vld [vmem:[%s1388 + $0x68] sm:$0x1]
        %v6467 = vld [vmem:[%s1388 + $0x74] sm:$0x1]
        %v6468 = vld [vmem:[%s1388] sm:$0xe]
        %v6469 = vld [vmem:[%s1388 + $0xc] sm:$0xe]
        %v6470 = vld [vmem:[%s1388 + $0x18] sm:$0xe]
        %v6471 = vld [vmem:[%s1388 + $0x24] sm:$0xe]
        %v6472 = vld [vmem:[%s1388 + $0x30] sm:$0xe]
        %v6473 = vld [vmem:[%s1388 + $0x3c] sm:$0xe]
        %v6474 = vld [vmem:[%s1388 + $0x48] sm:$0xe]
        %v6475 = vld [vmem:[%s1388 + $0x54] sm:$0xe]
        %v6476 = vld [vmem:[%s1388 + $0x60] sm:$0xe]
        %v6477 = vld [vmem:[%s1388 + $0x6c] sm:$0xe]
        %v6498 = vunpack.c.l.b16 %v6438
        %v6499 = vunpack.c.l.b16 %v6439
        %v6500 = vunpack.c.l.b16 %v6440
        %v6501 = vunpack.c.l.b16 %v6441
        %v6502 = vunpack.c.l.b16 %v6442
        %v6503 = vunpack.c.l.b16 %v6443
        %v6504 = vunpack.c.l.b16 %v6444
        %v6505 = vunpack.c.l.b16 %v6445
        %v6506 = vunpack.c.l.b16 %v6446
        %v6507 = vunpack.c.l.b16 %v6447
        %v6508 = vunpack.c.l.b16 %v6448
        %v6509 = vunpack.c.l.b16 %v6449
        %v6510 = vunpack.c.l.b16 %v6450
        %v6511 = vunpack.c.l.b16 %v6451
        %v6512 = vunpack.c.l.b16 %v6452
        %v6513 = vunpack.c.l.b16 %v6453
        %v6514 = vunpack.c.l.b16 %v6454
        %v6515 = vunpack.c.l.b16 %v6455
        %v6516 = vunpack.c.l.b16 %v6456
        %v6517 = vunpack.c.l.b16 %v6457
        %v6518 = vpack.c.b16 %v6499, %v6498
        %v6519 = vpack.c.b16 %v6501, %v6500
        %v6520 = vpack.c.b16 %v6503, %v6502
        %v6521 = vpack.c.b16 %v6505, %v6504
        %v6522 = vpack.c.b16 %v6507, %v6506
        %v6523 = vpack.c.b16 %v6509, %v6508
        %v6524 = vpack.c.b16 %v6511, %v6510
        %v6525 = vpack.c.b16 %v6513, %v6512
        %v6526 = vpack.c.b16 %v6515, %v6514
        %v6527 = vpack.c.b16 %v6517, %v6516
        %v6548 = vunpack.c.l.b16 %v6458
        %v6549 = vunpack.c.l.b16 %v6459
        %v6550 = vunpack.c.l.b16 %v6460
        %v6551 = vunpack.c.l.b16 %v6461
        %v6552 = vunpack.c.l.b16 %v6462
        %v6553 = vunpack.c.l.b16 %v6463
        %v6554 = vunpack.c.l.b16 %v6464
        %v6555 = vunpack.c.l.b16 %v6465
        %v6556 = vunpack.c.l.b16 %v6466
        %v6557 = vunpack.c.l.b16 %v6467
        %v6558 = vpack.c.b16 %v6548, %v6548
        %v6559 = vpack.c.b16 %v6549, %v6549
        %v6560 = vpack.c.b16 %v6550, %v6550
        %v6561 = vpack.c.b16 %v6551, %v6551
        %v6562 = vpack.c.b16 %v6552, %v6552
        %v6563 = vpack.c.b16 %v6553, %v6553
        %v6564 = vpack.c.b16 %v6554, %v6554
        %v6565 = vpack.c.b16 %v6555, %v6555
        %v6566 = vpack.c.b16 %v6556, %v6556
        %v6567 = vpack.c.b16 %v6557, %v6557
        %v6569 = vshrl.u32 %v6518, 16
        %v6571 = vshll.u32 %v6518, 16
        %v6573 = vrot.slane %v6571, 1
        %v6574 = vor.u32 %v6569, %v6573
        %v6576 = vshll.u32 %v6558, 16
        %v6578 = vrot.slane %v6576, 1
        %v6579 = vsel %vm1581, %v6574, %v6578
        %v6581 = vshrl.u32 %v6519, 16
        %v6583 = vshll.u32 %v6519, 16
        %v6585 = vrot.slane %v6583, 1
        %v6586 = vor.u32 %v6581, %v6585
        %v6588 = vshll.u32 %v6559, 16
        %v6590 = vrot.slane %v6588, 1
        %v6591 = vsel %vm1581, %v6586, %v6590
        %v6593 = vshrl.u32 %v6520, 16
        %v6595 = vshll.u32 %v6520, 16
        %v6597 = vrot.slane %v6595, 1
        %v6598 = vor.u32 %v6593, %v6597
        %v6600 = vshll.u32 %v6560, 16
        %v6602 = vrot.slane %v6600, 1
        %v6603 = vsel %vm1581, %v6598, %v6602
        %v6605 = vshrl.u32 %v6521, 16
        %v6607 = vshll.u32 %v6521, 16
        %v6609 = vrot.slane %v6607, 1
        %v6610 = vor.u32 %v6605, %v6609
        %v6612 = vshll.u32 %v6561, 16
        %v6614 = vrot.slane %v6612, 1
        %v6615 = vsel %vm1581, %v6610, %v6614
        %v6617 = vshrl.u32 %v6522, 16
        %v6619 = vshll.u32 %v6522, 16
        %v6621 = vrot.slane %v6619, 1
        %v6622 = vor.u32 %v6617, %v6621
        %v6624 = vshll.u32 %v6562, 16
        %v6626 = vrot.slane %v6624, 1
        %v6627 = vsel %vm1581, %v6622, %v6626
        %v6629 = vshrl.u32 %v6523, 16
        %v6631 = vshll.u32 %v6523, 16
        %v6633 = vrot.slane %v6631, 1
        %v6634 = vor.u32 %v6629, %v6633
        %v6636 = vshll.u32 %v6563, 16
        %v6638 = vrot.slane %v6636, 1
        %v6639 = vsel %vm1581, %v6634, %v6638
        %v6641 = vshrl.u32 %v6524, 16
        %v6643 = vshll.u32 %v6524, 16
        %v6645 = vrot.slane %v6643, 1
        %v6646 = vor.u32 %v6641, %v6645
        %v6648 = vshll.u32 %v6564, 16
        %v6650 = vrot.slane %v6648, 1
        %v6651 = vsel %vm1581, %v6646, %v6650
        %v6653 = vshrl.u32 %v6525, 16
        %v6655 = vshll.u32 %v6525, 16
        %v6657 = vrot.slane %v6655, 1
        %v6658 = vor.u32 %v6653, %v6657
        %v6660 = vshll.u32 %v6565, 16
        %v6662 = vrot.slane %v6660, 1
        %v6663 = vsel %vm1581, %v6658, %v6662
        %v6665 = vshrl.u32 %v6526, 16
        %v6667 = vshll.u32 %v6526, 16
        %v6669 = vrot.slane %v6667, 1
        %v6670 = vor.u32 %v6665, %v6669
        %v6672 = vshll.u32 %v6566, 16
        %v6674 = vrot.slane %v6672, 1
        %v6675 = vsel %vm1581, %v6670, %v6674
        %v6677 = vshrl.u32 %v6527, 16
        %v6679 = vshll.u32 %v6527, 16
        %v6681 = vrot.slane %v6679, 1
        %v6682 = vor.u32 %v6677, %v6681
        %v6684 = vshll.u32 %v6567, 16
        %v6686 = vrot.slane %v6684, 1
        %v6687 = vsel %vm1581, %v6682, %v6686
        %v6708 = vunpack.c.l.b16 %v6468
        %v6709 = vunpack.c.l.b16 %v6469
        %v6710 = vunpack.c.l.b16 %v6470
        %v6711 = vunpack.c.l.b16 %v6471
        %v6712 = vunpack.c.l.b16 %v6472
        %v6713 = vunpack.c.l.b16 %v6473
        %v6714 = vunpack.c.l.b16 %v6474
        %v6715 = vunpack.c.l.b16 %v6475
        %v6716 = vunpack.c.l.b16 %v6476
        %v6717 = vunpack.c.l.b16 %v6477
        %v6718 = vpack.c.b16 %v6499, %v6708
        %v6719 = vpack.c.b16 %v6501, %v6709
        %v6720 = vpack.c.b16 %v6503, %v6710
        %v6721 = vpack.c.b16 %v6505, %v6711
        %v6722 = vpack.c.b16 %v6507, %v6712
        %v6723 = vpack.c.b16 %v6509, %v6713
        %v6724 = vpack.c.b16 %v6511, %v6714
        %v6725 = vpack.c.b16 %v6513, %v6715
        %v6726 = vpack.c.b16 %v6515, %v6716
        %v6727 = vpack.c.b16 %v6517, %v6717
        %v6728 = vrot.slane %v6718, 1
        %v6729 = vrot.slane %v6558, 1
        %v6730 = vsel %vm1742, %v6728, %v6729
        %v6731 = vrot.slane %v6719, 1
        %v6732 = vrot.slane %v6559, 1
        %v6733 = vsel %vm1742, %v6731, %v6732
        %v6734 = vrot.slane %v6720, 1
        %v6735 = vrot.slane %v6560, 1
        %v6736 = vsel %vm1742, %v6734, %v6735
        %v6737 = vrot.slane %v6721, 1
        %v6738 = vrot.slane %v6561, 1
        %v6739 = vsel %vm1742, %v6737, %v6738
        %v6740 = vrot.slane %v6722, 1
        %v6741 = vrot.slane %v6562, 1
        %v6742 = vsel %vm1742, %v6740, %v6741
        %v6743 = vrot.slane %v6723, 1
        %v6744 = vrot.slane %v6563, 1
        %v6745 = vsel %vm1742, %v6743, %v6744
        %v6746 = vrot.slane %v6724, 1
        %v6747 = vrot.slane %v6564, 1
        %v6748 = vsel %vm1742, %v6746, %v6747
        %v6749 = vrot.slane %v6725, 1
        %v6750 = vrot.slane %v6565, 1
        %v6751 = vsel %vm1742, %v6749, %v6750
        %v6752 = vrot.slane %v6726, 1
        %v6753 = vrot.slane %v6566, 1
        %v6754 = vsel %vm1742, %v6752, %v6753
        %v6755 = vrot.slane %v6727, 1
        %v6756 = vrot.slane %v6567, 1
        %v6757 = vsel %vm1742, %v6755, %v6756
        %s6768 = scalar_lea.vmem [#allocation10], 768
        %v6769 = vld [vmem:[%s6768] sm:$0xff]
        %v6770 = vld [vmem:[%s6768 + $0x8] sm:$0xff]
        %v6771 = vld [vmem:[%s6768 + $0x10] sm:$0xff]
        %v6772 = vld [vmem:[%s6768 + $0x18] sm:$0xff]
        %v6773 = vld [vmem:[%s6768 + $0x20] sm:$0xff]
        %v6774 = vld [vmem:[%s6768 + $0x28] sm:$0xff]
        %v6775 = vld [vmem:[%s6768 + $0x30] sm:$0xff]
        %v6776 = vld [vmem:[%s6768 + $0x38] sm:$0xff]
        %v6777 = vld [vmem:[%s6768 + $0x40] sm:$0xff]
        %v6778 = vld [vmem:[%s6768 + $0x48] sm:$0xff]
        %v6779 = vld [vmem:[%s6768 + $0x50] sm:$0xff]
        %v6780 = vld [vmem:[%s6768 + $0x58] sm:$0xff]
        %v6781 = vld [vmem:[%s6768 + $0x60] sm:$0xff]
        %v6782 = vld [vmem:[%s6768 + $0x68] sm:$0xff]
        %v6783 = vld [vmem:[%s6768 + $0x70] sm:$0xff]
        %v6784 = vld [vmem:[%s6768 + $0x78] sm:$0xff]
        %v6785 = vld [vmem:[%s6768 + $0x80] sm:$0xff]
        %v6786 = vld [vmem:[%s6768 + $0x88] sm:$0xff]
        %v6787 = vld [vmem:[%s6768 + $0x90] sm:$0xff]
        %v6788 = vld [vmem:[%s6768 + $0x98] sm:$0xff]
        %v6789 = vld [vmem:[%s6768 + $0xa0] sm:$0xff]
        %v6790 = vld [vmem:[%s6768 + $0xa8] sm:$0xff]
        %v6791 = vld [vmem:[%s6768 + $0xb0] sm:$0xff]
        %v6792 = vld [vmem:[%s6768 + $0xb8] sm:$0xff]
        %v6793 = vld [vmem:[%s6768 + $0xc0] sm:$0xff]
        %v6794 = vld [vmem:[%s6768 + $0xc8] sm:$0xff]
        %v6795 = vld [vmem:[%s6768 + $0xd0] sm:$0xff]
        %v6796 = vld [vmem:[%s6768 + $0xd8] sm:$0xff]
        %v6797 = vld [vmem:[%s6768 + $0xe0] sm:$0xff]
        %v6798 = vld [vmem:[%s6768 + $0xe8] sm:$0xff]
        %v6799 = vld [vmem:[%s6768 + $0xf0] sm:$0xff]
        %v6800 = vld [vmem:[%s6768 + $0xf8] sm:$0xff]
        %v6801 = vld [vmem:[%s6768 + $0x100] sm:$0xff]
        %v6802 = vld [vmem:[%s6768 + $0x108] sm:$0xff]
        %v6803 = vld [vmem:[%s6768 + $0x110] sm:$0xff]
        %v6804 = vld [vmem:[%s6768 + $0x118] sm:$0xff]
        %v6805 = vld [vmem:[%s6768 + $0x120] sm:$0xff]
        %v6806 = vld [vmem:[%s6768 + $0x128] sm:$0xff]
        %v6807 = vld [vmem:[%s6768 + $0x130] sm:$0xff]
        %v6808 = vld [vmem:[%s6768 + $0x138] sm:$0xff]
        %v6809 = vld [vmem:[%s6768 + $0x140] sm:$0xff]
        %v6810 = vld [vmem:[%s6768 + $0x148] sm:$0xff]
        %v6811 = vld [vmem:[%s6768 + $0x150] sm:$0xff]
        %v6812 = vld [vmem:[%s6768 + $0x158] sm:$0xff]
        %v6813 = vld [vmem:[%s6768 + $0x160] sm:$0xff]
        %v6814 = vld [vmem:[%s6768 + $0x168] sm:$0xff]
        %v6815 = vld [vmem:[%s6768 + $0x170] sm:$0xff]
        %v6816 = vld [vmem:[%s6768 + $0x178] sm:$0xff]
        %v6865 = vunpack.c.l.b16 %v6769
        %v6866 = vunpack.c.h.b16 %v6769
        %v6867 = vunpack.c.l.b16 %v6770
        %v6868 = vunpack.c.h.b16 %v6770
        %v6869 = vunpack.c.l.b16 %v6771
        %v6870 = vunpack.c.h.b16 %v6771
        %v6871 = vunpack.c.l.b16 %v6772
        %v6872 = vunpack.c.h.b16 %v6772
        %v6873 = vunpack.c.l.b16 %v6773
        %v6874 = vunpack.c.h.b16 %v6773
        %v6875 = vunpack.c.l.b16 %v6774
        %v6876 = vunpack.c.h.b16 %v6774
        %v6877 = vunpack.c.l.b16 %v6775
        %v6878 = vunpack.c.h.b16 %v6775
        %v6879 = vunpack.c.l.b16 %v6776
        %v6880 = vunpack.c.h.b16 %v6776
        %v6881 = vunpack.c.l.b16 %v6777
        %v6882 = vunpack.c.h.b16 %v6777
        %v6883 = vunpack.c.l.b16 %v6778
        %v6884 = vunpack.c.h.b16 %v6778
        %v6885 = vunpack.c.l.b16 %v6779
        %v6886 = vunpack.c.h.b16 %v6779
        %v6887 = vunpack.c.l.b16 %v6780
        %v6888 = vunpack.c.h.b16 %v6780
        %v6889 = vunpack.c.l.b16 %v6781
        %v6890 = vunpack.c.h.b16 %v6781
        %v6891 = vunpack.c.l.b16 %v6782
        %v6892 = vunpack.c.h.b16 %v6782
        %v6893 = vunpack.c.l.b16 %v6783
        %v6894 = vunpack.c.h.b16 %v6783
        %v6895 = vunpack.c.l.b16 %v6784
        %v6896 = vunpack.c.h.b16 %v6784
        %v6897 = vunpack.c.l.b16 %v6785
        %v6898 = vunpack.c.h.b16 %v6785
        %v6899 = vunpack.c.l.b16 %v6786
        %v6900 = vunpack.c.h.b16 %v6786
        %v6901 = vunpack.c.l.b16 %v6787
        %v6902 = vunpack.c.h.b16 %v6787
        %v6903 = vunpack.c.l.b16 %v6788
        %v6904 = vunpack.c.h.b16 %v6788
        %v6905 = vunpack.c.l.b16 %v6789
        %v6906 = vunpack.c.h.b16 %v6789
        %v6907 = vunpack.c.l.b16 %v6790
        %v6908 = vunpack.c.h.b16 %v6790
        %v6909 = vunpack.c.l.b16 %v6791
        %v6910 = vunpack.c.h.b16 %v6791
        %v6911 = vunpack.c.l.b16 %v6792
        %v6912 = vunpack.c.h.b16 %v6792
        %v6913 = vunpack.c.l.b16 %v6793
        %v6914 = vunpack.c.h.b16 %v6793
        %v6915 = vunpack.c.l.b16 %v6794
        %v6916 = vunpack.c.h.b16 %v6794
        %v6917 = vunpack.c.l.b16 %v6795
        %v6918 = vunpack.c.h.b16 %v6795
        %v6919 = vunpack.c.l.b16 %v6796
        %v6920 = vunpack.c.h.b16 %v6796
        %v6921 = vunpack.c.l.b16 %v6797
        %v6922 = vunpack.c.h.b16 %v6797
        %v6923 = vunpack.c.l.b16 %v6798
        %v6924 = vunpack.c.h.b16 %v6798
        %v6925 = vunpack.c.l.b16 %v6799
        %v6926 = vunpack.c.h.b16 %v6799
        %v6927 = vunpack.c.l.b16 %v6800
        %v6928 = vunpack.c.h.b16 %v6800
        %v6929 = vunpack.c.l.b16 %v6801
        %v6930 = vunpack.c.h.b16 %v6801
        %v6931 = vunpack.c.l.b16 %v6802
        %v6932 = vunpack.c.h.b16 %v6802
        %v6933 = vunpack.c.l.b16 %v6803
        %v6934 = vunpack.c.h.b16 %v6803
        %v6935 = vunpack.c.l.b16 %v6804
        %v6936 = vunpack.c.h.b16 %v6804
        %v6937 = vunpack.c.l.b16 %v6805
        %v6938 = vunpack.c.h.b16 %v6805
        %v6939 = vunpack.c.l.b16 %v6806
        %v6940 = vunpack.c.h.b16 %v6806
        %v6941 = vunpack.c.l.b16 %v6807
        %v6942 = vunpack.c.h.b16 %v6807
        %v6943 = vunpack.c.l.b16 %v6808
        %v6944 = vunpack.c.h.b16 %v6808
        %v6945 = vunpack.c.l.b16 %v6809
        %v6946 = vunpack.c.h.b16 %v6809
        %v6947 = vunpack.c.l.b16 %v6810
        %v6948 = vunpack.c.h.b16 %v6810
        %v6949 = vunpack.c.l.b16 %v6811
        %v6950 = vunpack.c.h.b16 %v6811
        %v6951 = vunpack.c.l.b16 %v6812
        %v6952 = vunpack.c.h.b16 %v6812
        %v6953 = vunpack.c.l.b16 %v6813
        %v6954 = vunpack.c.h.b16 %v6813
        %v6955 = vunpack.c.l.b16 %v6814
        %v6956 = vunpack.c.h.b16 %v6814
        %v6957 = vunpack.c.l.b16 %v6815
        %v6958 = vunpack.c.h.b16 %v6815
        %v6959 = vunpack.c.l.b16 %v6816
        %v6960 = vunpack.c.h.b16 %v6816
        %v6961 = vpack.c.b16 %v6867, %v6865
        %v6962 = vpack.c.b16 %v6868, %v6866
        %v6963 = vpack.c.b16 %v6871, %v6869
        %v6964 = vpack.c.b16 %v6872, %v6870
        %v6965 = vpack.c.b16 %v6875, %v6873
        %v6966 = vpack.c.b16 %v6876, %v6874
        %v6967 = vpack.c.b16 %v6879, %v6877
        %v6968 = vpack.c.b16 %v6880, %v6878
        %v6969 = vpack.c.b16 %v6883, %v6881
        %v6970 = vpack.c.b16 %v6884, %v6882
        %v6971 = vpack.c.b16 %v6887, %v6885
        %v6972 = vpack.c.b16 %v6888, %v6886
        %v6973 = vpack.c.b16 %v6891, %v6889
        %v6974 = vpack.c.b16 %v6892, %v6890
        %v6975 = vpack.c.b16 %v6895, %v6893
        %v6976 = vpack.c.b16 %v6896, %v6894
        %v6977 = vpack.c.b16 %v6899, %v6897
        %v6978 = vpack.c.b16 %v6900, %v6898
        %v6979 = vpack.c.b16 %v6903, %v6901
        %v6980 = vpack.c.b16 %v6904, %v6902
        %v6981 = vpack.c.b16 %v6907, %v6905
        %v6982 = vpack.c.b16 %v6908, %v6906
        %v6983 = vpack.c.b16 %v6911, %v6909
        %v6984 = vpack.c.b16 %v6912, %v6910
        %v6985 = vpack.c.b16 %v6915, %v6913
        %v6986 = vpack.c.b16 %v6916, %v6914
        %v6987 = vpack.c.b16 %v6919, %v6917
        %v6988 = vpack.c.b16 %v6920, %v6918
        %v6989 = vpack.c.b16 %v6923, %v6921
        %v6990 = vpack.c.b16 %v6924, %v6922
        %v6991 = vpack.c.b16 %v6927, %v6925
        %v6992 = vpack.c.b16 %v6928, %v6926
        %v6993 = vpack.c.b16 %v6931, %v6929
        %v6994 = vpack.c.b16 %v6932, %v6930
        %v6995 = vpack.c.b16 %v6935, %v6933
        %v6996 = vpack.c.b16 %v6936, %v6934
        %v6997 = vpack.c.b16 %v6939, %v6937
        %v6998 = vpack.c.b16 %v6940, %v6938
        %v6999 = vpack.c.b16 %v6943, %v6941
        %v7000 = vpack.c.b16 %v6944, %v6942
        %v7001 = vpack.c.b16 %v6947, %v6945
        %v7002 = vpack.c.b16 %v6948, %v6946
        %v7003 = vpack.c.b16 %v6951, %v6949
        %v7004 = vpack.c.b16 %v6952, %v6950
        %v7005 = vpack.c.b16 %v6955, %v6953
        %v7006 = vpack.c.b16 %v6956, %v6954
        %v7007 = vpack.c.b16 %v6959, %v6957
        %v7008 = vpack.c.b16 %v6960, %v6958
        %7057 = vmatpush.bf16.msra.mxu0 %v6975
        %7058 = vmatpush.bf16.msra.mxu0 %v6973
        %7059 = vmatpush.bf16.msra.mxu0 %v6971
        %7060 = vmatpush.bf16.msra.mxu0 %v6969
        %7061 = vmatpush.bf16.msra.mxu0 %v6967
        %7062 = vmatpush.bf16.msra.mxu0 %v6965
        %7063 = vmatpush.bf16.msra.mxu0 %v6963
        %7064 = vmatpush.bf16.msra.mxu0 %v6961
        %7065 = vmatmul.bf16.gmra.mxu0 %v6518
        %v7066 = vpop.f32.mrf.mxu0
        %v7067 = vpop.f32.mrf.mxu0
        %7068 = vmatmul.bf16.gmra.mxu0 %v6519
        %v7069 = vpop.f32.mrf.mxu0
        %v7070 = vadd.f32 0.0, %v7069
        %v7071 = vpop.f32.mrf.mxu0
        %v7072 = vadd.f32 0.0, %v7071
        %7073 = vmatmul.bf16.gmra.mxu0 %v6520
        %v7074 = vpop.f32.mrf.mxu0
        %v7075 = vadd.f32 0.0, %v7074
        %v7076 = vpop.f32.mrf.mxu0
        %v7077 = vadd.f32 0.0, %v7076
        %7078 = vmatmul.bf16.gmra.mxu0 %v6521
        %v7079 = vpop.f32.mrf.mxu0
        %v7080 = vadd.f32 0.0, %v7079
        %v7081 = vpop.f32.mrf.mxu0
        %v7082 = vadd.f32 0.0, %v7081
        %7083 = vmatmul.bf16.gmra.mxu0 %v6522
        %v7084 = vpop.f32.mrf.mxu0
        %v7085 = vadd.f32 0.0, %v7084
        %v7086 = vpop.f32.mrf.mxu0
        %v7087 = vadd.f32 0.0, %v7086
        %7088 = vmatmul.bf16.gmra.mxu0 %v6523
        %v7089 = vpop.f32.mrf.mxu0
        %v7090 = vadd.f32 0.0, %v7089
        %v7091 = vpop.f32.mrf.mxu0
        %v7092 = vadd.f32 0.0, %v7091
        %7093 = vmatmul.bf16.gmra.mxu0 %v6524
        %v7094 = vpop.f32.mrf.mxu0
        %v7095 = vadd.f32 0.0, %v7094
        %v7096 = vpop.f32.mrf.mxu0
        %v7097 = vadd.f32 0.0, %v7096
        %7098 = vmatmul.bf16.gmra.mxu0 %v6525
        %v7099 = vpop.f32.mrf.mxu0
        %v7100 = vadd.f32 0.0, %v7099
        %v7101 = vpop.f32.mrf.mxu0
        %v7102 = vadd.f32 0.0, %v7101
        %7103 = vmatmul.bf16.gmra.mxu0 %v6526
        %v7104 = vpop.f32.mrf.mxu0
        %v7105 = vadd.f32 0.0, %v7104
        %v7106 = vpop.f32.mrf.mxu0
        %v7107 = vadd.f32 0.0, %v7106
        %7108 = vmatmul.bf16.gmra.mxu0 %v6527
        %v7109 = vpop.f32.mrf.mxu0
        %v7110 = vpop.f32.mrf.mxu0
        %7111 = vdwg.mxu0
        %7112 = vmatpush.bf16.msra.mxu0 %v6991
        %7113 = vmatpush.bf16.msra.mxu0 %v6989
        %7114 = vmatpush.bf16.msra.mxu0 %v6987
        %7115 = vmatpush.bf16.msra.mxu0 %v6985
        %7116 = vmatpush.bf16.msra.mxu0 %v6983
        %7117 = vmatpush.bf16.msra.mxu0 %v6981
        %7118 = vmatpush.bf16.msra.mxu0 %v6979
        %7119 = vmatpush.bf16.msra.mxu0 %v6977
        %7120 = vmatmul.bf16.gmra.mxu0 %v6579
        %v7121 = vpop.f32.mrf.mxu0
        %v7122 = vpop.f32.mrf.mxu0
        %7123 = vmatmul.bf16.gmra.mxu0 %v6591
        %v7124 = vpop.f32.mrf.mxu0
        %v7125 = vadd.f32 %v7070, %v7124
        %v7126 = vpop.f32.mrf.mxu0
        %v7127 = vadd.f32 %v7072, %v7126
        %7128 = vmatmul.bf16.gmra.mxu0 %v6603
        %v7129 = vpop.f32.mrf.mxu0
        %v7130 = vadd.f32 %v7075, %v7129
        %v7131 = vpop.f32.mrf.mxu0
        %v7132 = vadd.f32 %v7077, %v7131
        %7133 = vmatmul.bf16.gmra.mxu0 %v6615
        %v7134 = vpop.f32.mrf.mxu0
        %v7135 = vadd.f32 %v7080, %v7134
        %v7136 = vpop.f32.mrf.mxu0
        %v7137 = vadd.f32 %v7082, %v7136
        %7138 = vmatmul.bf16.gmra.mxu0 %v6627
        %v7139 = vpop.f32.mrf.mxu0
        %v7140 = vadd.f32 %v7085, %v7139
        %v7141 = vpop.f32.mrf.mxu0
        %v7142 = vadd.f32 %v7087, %v7141
        %7143 = vmatmul.bf16.gmra.mxu0 %v6639
        %v7144 = vpop.f32.mrf.mxu0
        %v7145 = vadd.f32 %v7090, %v7144
        %v7146 = vpop.f32.mrf.mxu0
        %v7147 = vadd.f32 %v7092, %v7146
        %7148 = vmatmul.bf16.gmra.mxu0 %v6651
        %v7149 = vpop.f32.mrf.mxu0
        %v7150 = vadd.f32 %v7095, %v7149
        %v7151 = vpop.f32.mrf.mxu0
        %v7152 = vadd.f32 %v7097, %v7151
        %7153 = vmatmul.bf16.gmra.mxu0 %v6663
        %v7154 = vpop.f32.mrf.mxu0
        %v7155 = vadd.f32 %v7100, %v7154
        %v7156 = vpop.f32.mrf.mxu0
        %v7157 = vadd.f32 %v7102, %v7156
        %7158 = vmatmul.bf16.gmra.mxu0 %v6675
        %v7159 = vpop.f32.mrf.mxu0
        %v7160 = vadd.f32 %v7105, %v7159
        %v7161 = vpop.f32.mrf.mxu0
        %v7162 = vadd.f32 %v7107, %v7161
        %7163 = vmatmul.bf16.gmra.mxu0 %v6687
        %v7164 = vpop.f32.mrf.mxu0
        %v7165 = vpop.f32.mrf.mxu0
        %7166 = vdwg.mxu0
        %7167 = vmatpush.bf16.msra.mxu0 %v7007
        %7168 = vmatpush.bf16.msra.mxu0 %v7005
        %7169 = vmatpush.bf16.msra.mxu0 %v7003
        %7170 = vmatpush.bf16.msra.mxu0 %v7001
        %7171 = vmatpush.bf16.msra.mxu0 %v6999
        %7172 = vmatpush.bf16.msra.mxu0 %v6997
        %7173 = vmatpush.bf16.msra.mxu0 %v6995
        %7174 = vmatpush.bf16.msra.mxu0 %v6993
        %7175 = vmatmul.bf16.gmra.mxu0 %v6730
        %v7176 = vpop.f32.mrf.mxu0
        %v7177 = vpop.f32.mrf.mxu0
        %7178 = vmatmul.bf16.gmra.mxu0 %v6733
        %v7179 = vpop.f32.mrf.mxu0
        %v7180 = vadd.f32 %v7125, %v7179
        %v7181 = vpop.f32.mrf.mxu0
        %v7182 = vadd.f32 %v7127, %v7181
        %7183 = vmatmul.bf16.gmra.mxu0 %v6736
        %v7184 = vpop.f32.mrf.mxu0
        %v7185 = vadd.f32 %v7130, %v7184
        %v7186 = vpop.f32.mrf.mxu0
        %v7187 = vadd.f32 %v7132, %v7186
        %7188 = vmatmul.bf16.gmra.mxu0 %v6739
        %v7189 = vpop.f32.mrf.mxu0
        %v7190 = vadd.f32 %v7135, %v7189
        %v7191 = vpop.f32.mrf.mxu0
        %v7192 = vadd.f32 %v7137, %v7191
        %7193 = vmatmul.bf16.gmra.mxu0 %v6742
        %v7194 = vpop.f32.mrf.mxu0
        %v7195 = vadd.f32 %v7140, %v7194
        %v7196 = vpop.f32.mrf.mxu0
        %v7197 = vadd.f32 %v7142, %v7196
        %7198 = vmatmul.bf16.gmra.mxu0 %v6745
        %v7199 = vpop.f32.mrf.mxu0
        %v7200 = vadd.f32 %v7145, %v7199
        %v7201 = vpop.f32.mrf.mxu0
        %v7202 = vadd.f32 %v7147, %v7201
        %7203 = vmatmul.bf16.gmra.mxu0 %v6748
        %v7204 = vpop.f32.mrf.mxu0
        %v7205 = vadd.f32 %v7150, %v7204
        %v7206 = vpop.f32.mrf.mxu0
        %v7207 = vadd.f32 %v7152, %v7206
        %7208 = vmatmul.bf16.gmra.mxu0 %v6751
        %v7209 = vpop.f32.mrf.mxu0
        %v7210 = vadd.f32 %v7155, %v7209
        %v7211 = vpop.f32.mrf.mxu0
        %v7212 = vadd.f32 %v7157, %v7211
        %7213 = vmatmul.bf16.gmra.mxu0 %v6754
        %v7214 = vpop.f32.mrf.mxu0
        %v7215 = vadd.f32 %v7160, %v7214
        %v7216 = vpop.f32.mrf.mxu0
        %v7217 = vadd.f32 %v7162, %v7216
        %7218 = vmatmul.bf16.gmra.mxu0 %v6757
        %v7219 = vpop.f32.mrf.mxu0
        %v7220 = vpop.f32.mrf.mxu0
        %7221 = vdwg.mxu0
        %7222 = vmatpush.bf16.msra.mxu0 %v6976
        %7223 = vmatpush.bf16.msra.mxu0 %v6974
        %7224 = vmatpush.bf16.msra.mxu0 %v6972
        %7225 = vmatpush.bf16.msra.mxu0 %v6970
        %7226 = vmatpush.bf16.msra.mxu0 %v6968
        %7227 = vmatpush.bf16.msra.mxu0 %v6966
        %7228 = vmatpush.bf16.msra.mxu0 %v6964
        %7229 = vmatpush.bf16.msra.mxu0 %v6962
        %7230 = vmatmul.bf16.gmra.mxu0 %v6518
        %v7231 = vpop.f32.mrf.mxu0
        %v7232 = vadd.f32 0.0, %v7231
        %v7233 = vpop.f32.mrf.mxu0
        %v7234 = vadd.f32 0.0, %v7233
        %7235 = vmatmul.bf16.gmra.mxu0 %v6519
        %v7236 = vpop.f32.mrf.mxu0
        %v7237 = vadd.f32 0.0, %v7236
        %v7238 = vpop.f32.mrf.mxu0
        %v7239 = vadd.f32 0.0, %v7238
        %7240 = vmatmul.bf16.gmra.mxu0 %v6520
        %v7241 = vpop.f32.mrf.mxu0
        %v7242 = vadd.f32 0.0, %v7241
        %v7243 = vpop.f32.mrf.mxu0
        %v7244 = vadd.f32 0.0, %v7243
        %7245 = vmatmul.bf16.gmra.mxu0 %v6521
        %v7246 = vpop.f32.mrf.mxu0
        %v7247 = vadd.f32 0.0, %v7246
        %v7248 = vpop.f32.mrf.mxu0
        %v7249 = vadd.f32 0.0, %v7248
        %7250 = vmatmul.bf16.gmra.mxu0 %v6522
        %v7251 = vpop.f32.mrf.mxu0
        %v7252 = vadd.f32 0.0, %v7251
        %v7253 = vpop.f32.mrf.mxu0
        %v7254 = vadd.f32 0.0, %v7253
        %7255 = vmatmul.bf16.gmra.mxu0 %v6523
        %v7256 = vpop.f32.mrf.mxu0
        %v7257 = vadd.f32 0.0, %v7256
        %v7258 = vpop.f32.mrf.mxu0
        %v7259 = vadd.f32 0.0, %v7258
        %7260 = vmatmul.bf16.gmra.mxu0 %v6524
        %v7261 = vpop.f32.mrf.mxu0
        %v7262 = vadd.f32 0.0, %v7261
        %v7263 = vpop.f32.mrf.mxu0
        %v7264 = vadd.f32 0.0, %v7263
        %7265 = vmatmul.bf16.gmra.mxu0 %v6525
        %v7266 = vpop.f32.mrf.mxu0
        %v7267 = vadd.f32 0.0, %v7266
        %v7268 = vpop.f32.mrf.mxu0
        %v7269 = vadd.f32 0.0, %v7268
        %7270 = vmatmul.bf16.gmra.mxu0 %v6526
        %v7271 = vpop.f32.mrf.mxu0
        %v7272 = vadd.f32 0.0, %v7271
        %v7273 = vpop.f32.mrf.mxu0
        %v7274 = vadd.f32 0.0, %v7273
        %7275 = vmatmul.bf16.gmra.mxu0 %v6527
        %v7276 = vpop.f32.mrf.mxu0
        %v7277 = vadd.f32 0.0, %v7276
        %v7278 = vpop.f32.mrf.mxu0
        %v7279 = vadd.f32 0.0, %v7278
        %7280 = vdwg.mxu0
        %7281 = vmatpush.bf16.msra.mxu0 %v6992
        %7282 = vmatpush.bf16.msra.mxu0 %v6990
        %7283 = vmatpush.bf16.msra.mxu0 %v6988
        %7284 = vmatpush.bf16.msra.mxu0 %v6986
        %7285 = vmatpush.bf16.msra.mxu0 %v6984
        %7286 = vmatpush.bf16.msra.mxu0 %v6982
        %7287 = vmatpush.bf16.msra.mxu0 %v6980
        %7288 = vmatpush.bf16.msra.mxu0 %v6978
        %7289 = vmatmul.bf16.gmra.mxu0 %v6579
        %v7290 = vpop.f32.mrf.mxu0
        %v7291 = vadd.f32 %v7232, %v7290
        %v7292 = vpop.f32.mrf.mxu0
        %v7293 = vadd.f32 %v7234, %v7292
        %7294 = vmatmul.bf16.gmra.mxu0 %v6591
        %v7295 = vpop.f32.mrf.mxu0
        %v7296 = vadd.f32 %v7237, %v7295
        %v7297 = vpop.f32.mrf.mxu0
        %v7298 = vadd.f32 %v7239, %v7297
        %7299 = vmatmul.bf16.gmra.mxu0 %v6603
        %v7300 = vpop.f32.mrf.mxu0
        %v7301 = vadd.f32 %v7242, %v7300
        %v7302 = vpop.f32.mrf.mxu0
        %v7303 = vadd.f32 %v7244, %v7302
        %7304 = vmatmul.bf16.gmra.mxu0 %v6615
        %v7305 = vpop.f32.mrf.mxu0
        %v7306 = vadd.f32 %v7247, %v7305
        %v7307 = vpop.f32.mrf.mxu0
        %v7308 = vadd.f32 %v7249, %v7307
        %7309 = vmatmul.bf16.gmra.mxu0 %v6627
        %v7310 = vpop.f32.mrf.mxu0
        %v7311 = vadd.f32 %v7252, %v7310
        %v7312 = vpop.f32.mrf.mxu0
        %v7313 = vadd.f32 %v7254, %v7312
        %7314 = vmatmul.bf16.gmra.mxu0 %v6639
        %v7315 = vpop.f32.mrf.mxu0
        %v7316 = vadd.f32 %v7257, %v7315
        %v7317 = vpop.f32.mrf.mxu0
        %v7318 = vadd.f32 %v7259, %v7317
        %7319 = vmatmul.bf16.gmra.mxu0 %v6651
        %v7320 = vpop.f32.mrf.mxu0
        %v7321 = vadd.f32 %v7262, %v7320
        %v7322 = vpop.f32.mrf.mxu0
        %v7323 = vadd.f32 %v7264, %v7322
        %7324 = vmatmul.bf16.gmra.mxu0 %v6663
        %v7325 = vpop.f32.mrf.mxu0
        %v7326 = vadd.f32 %v7267, %v7325
        %v7327 = vpop.f32.mrf.mxu0
        %v7328 = vadd.f32 %v7269, %v7327
        %7329 = vmatmul.bf16.gmra.mxu0 %v6675
        %v7330 = vpop.f32.mrf.mxu0
        %v7331 = vadd.f32 %v7272, %v7330
        %v7332 = vpop.f32.mrf.mxu0
        %v7333 = vadd.f32 %v7274, %v7332
        %7334 = vmatmul.bf16.gmra.mxu0 %v6687
        %v7335 = vpop.f32.mrf.mxu0
        %v7336 = vadd.f32 %v7277, %v7335
        %v7337 = vpop.f32.mrf.mxu0
        %v7338 = vadd.f32 %v7279, %v7337
        %7339 = vdwg.mxu0
        %7340 = vmatpush.bf16.msra.mxu0 %v7008
        %7341 = vmatpush.bf16.msra.mxu0 %v7006
        %7342 = vmatpush.bf16.msra.mxu0 %v7004
        %7343 = vmatpush.bf16.msra.mxu0 %v7002
        %7344 = vmatpush.bf16.msra.mxu0 %v7000
        %7345 = vmatpush.bf16.msra.mxu0 %v6998
        %7346 = vmatpush.bf16.msra.mxu0 %v6996
        %7347 = vmatpush.bf16.msra.mxu0 %v6994
        %7348 = vmatmul.bf16.gmra.mxu0 %v6730
        %v7349 = vpop.f32.mrf.mxu0
        %v7350 = vadd.f32 %v7291, %v7349
        %v7351 = vpop.f32.mrf.mxu0
        %v7352 = vadd.f32 %v7293, %v7351
        %7353 = vmatmul.bf16.gmra.mxu0 %v6733
        %v7354 = vpop.f32.mrf.mxu0
        %v7355 = vadd.f32 %v7296, %v7354
        %v7356 = vpop.f32.mrf.mxu0
        %v7357 = vadd.f32 %v7298, %v7356
        %7358 = vmatmul.bf16.gmra.mxu0 %v6736
        %v7359 = vpop.f32.mrf.mxu0
        %v7360 = vadd.f32 %v7301, %v7359
        %v7361 = vpop.f32.mrf.mxu0
        %v7362 = vadd.f32 %v7303, %v7361
        %7363 = vmatmul.bf16.gmra.mxu0 %v6739
        %v7364 = vpop.f32.mrf.mxu0
        %v7365 = vadd.f32 %v7306, %v7364
        %v7366 = vpop.f32.mrf.mxu0
        %v7367 = vadd.f32 %v7308, %v7366
        %7368 = vmatmul.bf16.gmra.mxu0 %v6742
        %v7369 = vpop.f32.mrf.mxu0
        %v7370 = vadd.f32 %v7311, %v7369
        %v7371 = vpop.f32.mrf.mxu0
        %v7372 = vadd.f32 %v7313, %v7371
        %7373 = vmatmul.bf16.gmra.mxu0 %v6745
        %v7374 = vpop.f32.mrf.mxu0
        %v7375 = vadd.f32 %v7316, %v7374
        %v7376 = vpop.f32.mrf.mxu0
        %v7377 = vadd.f32 %v7318, %v7376
        %7378 = vmatmul.bf16.gmra.mxu0 %v6748
        %v7379 = vpop.f32.mrf.mxu0
        %v7380 = vadd.f32 %v7321, %v7379
        %v7381 = vpop.f32.mrf.mxu0
        %v7382 = vadd.f32 %v7323, %v7381
        %7383 = vmatmul.bf16.gmra.mxu0 %v6751
        %v7384 = vpop.f32.mrf.mxu0
        %v7385 = vadd.f32 %v7326, %v7384
        %v7386 = vpop.f32.mrf.mxu0
        %v7387 = vadd.f32 %v7328, %v7386
        %7388 = vmatmul.bf16.gmra.mxu0 %v6754
        %v7389 = vpop.f32.mrf.mxu0
        %v7390 = vadd.f32 %v7331, %v7389
        %v7391 = vpop.f32.mrf.mxu0
        %v7392 = vadd.f32 %v7333, %v7391
        %7393 = vmatmul.bf16.gmra.mxu0 %v6757
        %v7394 = vpop.f32.mrf.mxu0
        %v7395 = vadd.f32 %v7336, %v7394
        %v7396 = vpop.f32.mrf.mxu0
        %v7397 = vadd.f32 %v7338, %v7396
        %7398 = vdwg.mxu0
        %v7399 = vadd.f32 %v6402, %v7350
        %v7400 = vadd.f32 %v6403, %v7352
        %v7401 = vadd.f32 %v6404, %v7180
        %v7402 = vadd.f32 %v6405, %v7355
        %v7403 = vadd.f32 %v6406, %v7182
        %v7404 = vadd.f32 %v6407, %v7357
        %v7405 = vadd.f32 %v6408, %v7185
        %v7406 = vadd.f32 %v6409, %v7360
        %v7407 = vadd.f32 %v6410, %v7187
        %v7408 = vadd.f32 %v6411, %v7362
        %v7409 = vadd.f32 %v6412, %v7190
        %v7410 = vadd.f32 %v6413, %v7365
        %v7411 = vadd.f32 %v6414, %v7192
        %v7412 = vadd.f32 %v6415, %v7367
        %v7413 = vadd.f32 %v6416, %v7195
        %v7414 = vadd.f32 %v6417, %v7370
        %v7415 = vadd.f32 %v6418, %v7197
        %v7416 = vadd.f32 %v6419, %v7372
        %v7417 = vadd.f32 %v6420, %v7200
        %v7418 = vadd.f32 %v6421, %v7375
        %v7419 = vadd.f32 %v6422, %v7202
        %v7420 = vadd.f32 %v6423, %v7377
        %v7421 = vadd.f32 %v6424, %v7205
        %v7422 = vadd.f32 %v6425, %v7380
        %v7423 = vadd.f32 %v6426, %v7207
        %v7424 = vadd.f32 %v6427, %v7382
        %v7425 = vadd.f32 %v6428, %v7210
        %v7426 = vadd.f32 %v6429, %v7385
        %v7427 = vadd.f32 %v6430, %v7212
        %v7428 = vadd.f32 %v6431, %v7387
        %v7429 = vadd.f32 %v6432, %v7215
        %v7430 = vadd.f32 %v6433, %v7390
        %v7431 = vadd.f32 %v6434, %v7217
        %v7432 = vadd.f32 %v6435, %v7392
        %v7433 = vadd.f32 %v6436, %v7395
        %v7434 = vadd.f32 %v6437, %v7397
        %v7435 = vxor.u32 %v7401, 2147483648
        %v7436 = vxor.u32 %v7403, 2147483648
        %v7437 = vxor.u32 %v7405, 2147483648
        %v7438 = vxor.u32 %v7407, 2147483648
        %v7439 = vxor.u32 %v7409, 2147483648
        %v7440 = vxor.u32 %v7411, 2147483648
        %v7441 = vxor.u32 %v7413, 2147483648
        %v7442 = vxor.u32 %v7415, 2147483648
        %v7443 = vxor.u32 %v7417, 2147483648
        %v7444 = vxor.u32 %v7419, 2147483648
        %v7445 = vxor.u32 %v7421, 2147483648
        %v7446 = vxor.u32 %v7423, 2147483648
        %v7447 = vxor.u32 %v7425, 2147483648
        %v7448 = vxor.u32 %v7427, 2147483648
        %v7449 = vxor.u32 %v7429, 2147483648
        %v7450 = vxor.u32 %v7431, 2147483648
        %v7451 = vmul.f32 %v7435, 1.442695
        %v7452 = vpow.pop %v7451
        %v7453 = vmul.f32 %v7436, 1.442695
        %v7454 = vpow.pop %v7453
        %v7455 = vmul.f32 %v7437, 1.442695
        %v7456 = vpow.pop %v7455
        %v7457 = vmul.f32 %v7438, 1.442695
        %v7458 = vpow.pop %v7457
        %v7459 = vmul.f32 %v7439, 1.442695
        %v7460 = vpow.pop %v7459
        %v7461 = vmul.f32 %v7440, 1.442695
        %v7462 = vpow.pop %v7461
        %v7463 = vmul.f32 %v7441, 1.442695
        %v7464 = vpow.pop %v7463
        %v7465 = vmul.f32 %v7442, 1.442695
        %v7466 = vpow.pop %v7465
        %v7467 = vmul.f32 %v7443, 1.442695
        %v7468 = vpow.pop %v7467
        %v7469 = vmul.f32 %v7444, 1.442695
        %v7470 = vpow.pop %v7469
        %v7471 = vmul.f32 %v7445, 1.442695
        %v7472 = vpow.pop %v7471
        %v7473 = vmul.f32 %v7446, 1.442695
        %v7474 = vpow.pop %v7473
        %v7475 = vmul.f32 %v7447, 1.442695
        %v7476 = vpow.pop %v7475
        %v7477 = vmul.f32 %v7448, 1.442695
        %v7478 = vpow.pop %v7477
        %v7479 = vmul.f32 %v7449, 1.442695
        %v7480 = vpow.pop %v7479
        %v7481 = vmul.f32 %v7450, 1.442695
        %v7482 = vpow.pop %v7481
        %v7483 = vadd.f32 %v7452, 1.0
        %v7484 = vadd.f32 %v7454, 1.0
        %v7485 = vadd.f32 %v7456, 1.0
        %v7486 = vadd.f32 %v7458, 1.0
        %v7487 = vadd.f32 %v7460, 1.0
        %v7488 = vadd.f32 %v7462, 1.0
        %v7489 = vadd.f32 %v7464, 1.0
        %v7490 = vadd.f32 %v7466, 1.0
        %v7491 = vadd.f32 %v7468, 1.0
        %v7492 = vadd.f32 %v7470, 1.0
        %v7493 = vadd.f32 %v7472, 1.0
        %v7494 = vadd.f32 %v7474, 1.0
        %v7495 = vadd.f32 %v7476, 1.0
        %v7496 = vadd.f32 %v7478, 1.0
        %v7497 = vadd.f32 %v7480, 1.0
        %v7498 = vadd.f32 %v7482, 1.0
        %v7499 = vrcp.pop %v7483
        %v7500 = vmul.f32 %v7483, %v7499
        %v7501 = vsub.f32 1.0, %v7500
        %v7502 = vmul.f32 %v7499, %v7501
        %v7503 = vadd.f32 %v7499, %v7502
        %vm7504 = vweird.f32 %v7483
        %vm7505 = vweird.f32 %v7499
        %vm7506 = vmor %vm7504, %vm7505
        %v7507 = vsel %vm7506, %v7499, %v7503
        %v7508 = vand.u32 2147483647, %v7483
        %vm7509 = vcmp.eq.f32.partialorder %v7508, 8.507059e+37
        %v7510 = vand.u32 %v7483, 2147483648
        %v7511 = vor.u32 1.1754944e-38, %v7510
        %v7512 = vsel %vm7509, %v7511, %v7507
        %v7513 = vmul.f32 1.0, %v7512
        %v7514 = vrcp.pop %v7484
        %v7515 = vmul.f32 %v7484, %v7514
        %v7516 = vsub.f32 1.0, %v7515
        %v7517 = vmul.f32 %v7514, %v7516
        %v7518 = vadd.f32 %v7514, %v7517
        %vm7519 = vweird.f32 %v7484
        %vm7520 = vweird.f32 %v7514
        %vm7521 = vmor %vm7519, %vm7520
        %v7522 = vsel %vm7521, %v7514, %v7518
        %v7523 = vand.u32 2147483647, %v7484
        %vm7524 = vcmp.eq.f32.partialorder %v7523, 8.507059e+37
        %v7525 = vand.u32 %v7484, 2147483648
        %v7526 = vor.u32 1.1754944e-38, %v7525
        %v7527 = vsel %vm7524, %v7526, %v7522
        %v7528 = vmul.f32 1.0, %v7527
        %v7529 = vrcp.pop %v7485
        %v7530 = vmul.f32 %v7485, %v7529
        %v7531 = vsub.f32 1.0, %v7530
        %v7532 = vmul.f32 %v7529, %v7531
        %v7533 = vadd.f32 %v7529, %v7532
        %vm7534 = vweird.f32 %v7485
        %vm7535 = vweird.f32 %v7529
        %vm7536 = vmor %vm7534, %vm7535
        %v7537 = vsel %vm7536, %v7529, %v7533
        %v7538 = vand.u32 2147483647, %v7485
        %vm7539 = vcmp.eq.f32.partialorder %v7538, 8.507059e+37
        %v7540 = vand.u32 %v7485, 2147483648
        %v7541 = vor.u32 1.1754944e-38, %v7540
        %v7542 = vsel %vm7539, %v7541, %v7537
        %v7543 = vmul.f32 1.0, %v7542
        %v7544 = vrcp.pop %v7486
        %v7545 = vmul.f32 %v7486, %v7544
        %v7546 = vsub.f32 1.0, %v7545
        %v7547 = vmul.f32 %v7544, %v7546
        %v7548 = vadd.f32 %v7544, %v7547
        %vm7549 = vweird.f32 %v7486
        %vm7550 = vweird.f32 %v7544
        %vm7551 = vmor %vm7549, %vm7550
        %v7552 = vsel %vm7551, %v7544, %v7548
        %v7553 = vand.u32 2147483647, %v7486
        %vm7554 = vcmp.eq.f32.partialorder %v7553, 8.507059e+37
        %v7555 = vand.u32 %v7486, 2147483648
        %v7556 = vor.u32 1.1754944e-38, %v7555
        %v7557 = vsel %vm7554, %v7556, %v7552
        %v7558 = vmul.f32 1.0, %v7557
        %v7559 = vrcp.pop %v7487
        %v7560 = vmul.f32 %v7487, %v7559
        %v7561 = vsub.f32 1.0, %v7560
        %v7562 = vmul.f32 %v7559, %v7561
        %v7563 = vadd.f32 %v7559, %v7562
        %vm7564 = vweird.f32 %v7487
        %vm7565 = vweird.f32 %v7559
        %vm7566 = vmor %vm7564, %vm7565
        %v7567 = vsel %vm7566, %v7559, %v7563
        %v7568 = vand.u32 2147483647, %v7487
        %vm7569 = vcmp.eq.f32.partialorder %v7568, 8.507059e+37
        %v7570 = vand.u32 %v7487, 2147483648
        %v7571 = vor.u32 1.1754944e-38, %v7570
        %v7572 = vsel %vm7569, %v7571, %v7567
        %v7573 = vmul.f32 1.0, %v7572
        %v7574 = vrcp.pop %v7488
        %v7575 = vmul.f32 %v7488, %v7574
        %v7576 = vsub.f32 1.0, %v7575
        %v7577 = vmul.f32 %v7574, %v7576
        %v7578 = vadd.f32 %v7574, %v7577
        %vm7579 = vweird.f32 %v7488
        %vm7580 = vweird.f32 %v7574
        %vm7581 = vmor %vm7579, %vm7580
        %v7582 = vsel %vm7581, %v7574, %v7578
        %v7583 = vand.u32 2147483647, %v7488
        %vm7584 = vcmp.eq.f32.partialorder %v7583, 8.507059e+37
        %v7585 = vand.u32 %v7488, 2147483648
        %v7586 = vor.u32 1.1754944e-38, %v7585
        %v7587 = vsel %vm7584, %v7586, %v7582
        %v7588 = vmul.f32 1.0, %v7587
        %v7589 = vrcp.pop %v7489
        %v7590 = vmul.f32 %v7489, %v7589
        %v7591 = vsub.f32 1.0, %v7590
        %v7592 = vmul.f32 %v7589, %v7591
        %v7593 = vadd.f32 %v7589, %v7592
        %vm7594 = vweird.f32 %v7489
        %vm7595 = vweird.f32 %v7589
        %vm7596 = vmor %vm7594, %vm7595
        %v7597 = vsel %vm7596, %v7589, %v7593
        %v7598 = vand.u32 2147483647, %v7489
        %vm7599 = vcmp.eq.f32.partialorder %v7598, 8.507059e+37
        %v7600 = vand.u32 %v7489, 2147483648
        %v7601 = vor.u32 1.1754944e-38, %v7600
        %v7602 = vsel %vm7599, %v7601, %v7597
        %v7603 = vmul.f32 1.0, %v7602
        %v7604 = vrcp.pop %v7490
        %v7605 = vmul.f32 %v7490, %v7604
        %v7606 = vsub.f32 1.0, %v7605
        %v7607 = vmul.f32 %v7604, %v7606
        %v7608 = vadd.f32 %v7604, %v7607
        %vm7609 = vweird.f32 %v7490
        %vm7610 = vweird.f32 %v7604
        %vm7611 = vmor %vm7609, %vm7610
        %v7612 = vsel %vm7611, %v7604, %v7608
        %v7613 = vand.u32 2147483647, %v7490
        %vm7614 = vcmp.eq.f32.partialorder %v7613, 8.507059e+37
        %v7615 = vand.u32 %v7490, 2147483648
        %v7616 = vor.u32 1.1754944e-38, %v7615
        %v7617 = vsel %vm7614, %v7616, %v7612
        %v7618 = vmul.f32 1.0, %v7617
        %v7619 = vrcp.pop %v7491
        %v7620 = vmul.f32 %v7491, %v7619
        %v7621 = vsub.f32 1.0, %v7620
        %v7622 = vmul.f32 %v7619, %v7621
        %v7623 = vadd.f32 %v7619, %v7622
        %vm7624 = vweird.f32 %v7491
        %vm7625 = vweird.f32 %v7619
        %vm7626 = vmor %vm7624, %vm7625
        %v7627 = vsel %vm7626, %v7619, %v7623
        %v7628 = vand.u32 2147483647, %v7491
        %vm7629 = vcmp.eq.f32.partialorder %v7628, 8.507059e+37
        %v7630 = vand.u32 %v7491, 2147483648
        %v7631 = vor.u32 1.1754944e-38, %v7630
        %v7632 = vsel %vm7629, %v7631, %v7627
        %v7633 = vmul.f32 1.0, %v7632
        %v7634 = vrcp.pop %v7492
        %v7635 = vmul.f32 %v7492, %v7634
        %v7636 = vsub.f32 1.0, %v7635
        %v7637 = vmul.f32 %v7634, %v7636
        %v7638 = vadd.f32 %v7634, %v7637
        %vm7639 = vweird.f32 %v7492
        %vm7640 = vweird.f32 %v7634
        %vm7641 = vmor %vm7639, %vm7640
        %v7642 = vsel %vm7641, %v7634, %v7638
        %v7643 = vand.u32 2147483647, %v7492
        %vm7644 = vcmp.eq.f32.partialorder %v7643, 8.507059e+37
        %v7645 = vand.u32 %v7492, 2147483648
        %v7646 = vor.u32 1.1754944e-38, %v7645
        %v7647 = vsel %vm7644, %v7646, %v7642
        %v7648 = vmul.f32 1.0, %v7647
        %v7649 = vrcp.pop %v7493
        %v7650 = vmul.f32 %v7493, %v7649
        %v7651 = vsub.f32 1.0, %v7650
        %v7652 = vmul.f32 %v7649, %v7651
        %v7653 = vadd.f32 %v7649, %v7652
        %vm7654 = vweird.f32 %v7493
        %vm7655 = vweird.f32 %v7649
        %vm7656 = vmor %vm7654, %vm7655
        %v7657 = vsel %vm7656, %v7649, %v7653
        %v7658 = vand.u32 2147483647, %v7493
        %vm7659 = vcmp.eq.f32.partialorder %v7658, 8.507059e+37
        %v7660 = vand.u32 %v7493, 2147483648
        %v7661 = vor.u32 1.1754944e-38, %v7660
        %v7662 = vsel %vm7659, %v7661, %v7657
        %v7663 = vmul.f32 1.0, %v7662
        %v7664 = vrcp.pop %v7494
        %v7665 = vmul.f32 %v7494, %v7664
        %v7666 = vsub.f32 1.0, %v7665
        %v7667 = vmul.f32 %v7664, %v7666
        %v7668 = vadd.f32 %v7664, %v7667
        %vm7669 = vweird.f32 %v7494
        %vm7670 = vweird.f32 %v7664
        %vm7671 = vmor %vm7669, %vm7670
        %v7672 = vsel %vm7671, %v7664, %v7668
        %v7673 = vand.u32 2147483647, %v7494
        %vm7674 = vcmp.eq.f32.partialorder %v7673, 8.507059e+37
        %v7675 = vand.u32 %v7494, 2147483648
        %v7676 = vor.u32 1.1754944e-38, %v7675
        %v7677 = vsel %vm7674, %v7676, %v7672
        %v7678 = vmul.f32 1.0, %v7677
        %v7679 = vrcp.pop %v7495
        %v7680 = vmul.f32 %v7495, %v7679
        %v7681 = vsub.f32 1.0, %v7680
        %v7682 = vmul.f32 %v7679, %v7681
        %v7683 = vadd.f32 %v7679, %v7682
        %vm7684 = vweird.f32 %v7495
        %vm7685 = vweird.f32 %v7679
        %vm7686 = vmor %vm7684, %vm7685
        %v7687 = vsel %vm7686, %v7679, %v7683
        %v7688 = vand.u32 2147483647, %v7495
        %vm7689 = vcmp.eq.f32.partialorder %v7688, 8.507059e+37
        %v7690 = vand.u32 %v7495, 2147483648
        %v7691 = vor.u32 1.1754944e-38, %v7690
        %v7692 = vsel %vm7689, %v7691, %v7687
        %v7693 = vmul.f32 1.0, %v7692
        %v7694 = vrcp.pop %v7496
        %v7695 = vmul.f32 %v7496, %v7694
        %v7696 = vsub.f32 1.0, %v7695
        %v7697 = vmul.f32 %v7694, %v7696
        %v7698 = vadd.f32 %v7694, %v7697
        %vm7699 = vweird.f32 %v7496
        %vm7700 = vweird.f32 %v7694
        %vm7701 = vmor %vm7699, %vm7700
        %v7702 = vsel %vm7701, %v7694, %v7698
        %v7703 = vand.u32 2147483647, %v7496
        %vm7704 = vcmp.eq.f32.partialorder %v7703, 8.507059e+37
        %v7705 = vand.u32 %v7496, 2147483648
        %v7706 = vor.u32 1.1754944e-38, %v7705
        %v7707 = vsel %vm7704, %v7706, %v7702
        %v7708 = vmul.f32 1.0, %v7707
        %v7709 = vrcp.pop %v7497
        %v7710 = vmul.f32 %v7497, %v7709
        %v7711 = vsub.f32 1.0, %v7710
        %v7712 = vmul.f32 %v7709, %v7711
        %v7713 = vadd.f32 %v7709, %v7712
        %vm7714 = vweird.f32 %v7497
        %vm7715 = vweird.f32 %v7709
        %vm7716 = vmor %vm7714, %vm7715
        %v7717 = vsel %vm7716, %v7709, %v7713
        %v7718 = vand.u32 2147483647, %v7497
        %vm7719 = vcmp.eq.f32.partialorder %v7718, 8.507059e+37
        %v7720 = vand.u32 %v7497, 2147483648
        %v7721 = vor.u32 1.1754944e-38, %v7720
        %v7722 = vsel %vm7719, %v7721, %v7717
        %v7723 = vmul.f32 1.0, %v7722
        %v7724 = vrcp.pop %v7498
        %v7725 = vmul.f32 %v7498, %v7724
        %v7726 = vsub.f32 1.0, %v7725
        %v7727 = vmul.f32 %v7724, %v7726
        %v7728 = vadd.f32 %v7724, %v7727
        %vm7729 = vweird.f32 %v7498
        %vm7730 = vweird.f32 %v7724
        %vm7731 = vmor %vm7729, %vm7730
        %v7732 = vsel %vm7731, %v7724, %v7728
        %v7733 = vand.u32 2147483647, %v7498
        %vm7734 = vcmp.eq.f32.partialorder %v7733, 8.507059e+37
        %v7735 = vand.u32 %v7498, 2147483648
        %v7736 = vor.u32 1.1754944e-38, %v7735
        %v7737 = vsel %vm7734, %v7736, %v7732
        %v7738 = vmul.f32 1.0, %v7737
        %v7739 = vxor.u32 %v7399, 2147483648
        %v7740 = vxor.u32 %v7400, 2147483648
        %v7741 = vxor.u32 %v7402, 2147483648
        %v7742 = vxor.u32 %v7404, 2147483648
        %v7743 = vxor.u32 %v7406, 2147483648
        %v7744 = vxor.u32 %v7408, 2147483648
        %v7745 = vxor.u32 %v7410, 2147483648
        %v7746 = vxor.u32 %v7412, 2147483648
        %v7747 = vxor.u32 %v7414, 2147483648
        %v7748 = vxor.u32 %v7416, 2147483648
        %v7749 = vxor.u32 %v7418, 2147483648
        %v7750 = vxor.u32 %v7420, 2147483648
        %v7751 = vxor.u32 %v7422, 2147483648
        %v7752 = vxor.u32 %v7424, 2147483648
        %v7753 = vxor.u32 %v7426, 2147483648
        %v7754 = vxor.u32 %v7428, 2147483648
        %v7755 = vxor.u32 %v7430, 2147483648
        %v7756 = vxor.u32 %v7432, 2147483648
        %v7757 = vxor.u32 %v7433, 2147483648
        %v7758 = vxor.u32 %v7434, 2147483648
        %v7759 = vmul.f32 %v7739, 1.442695
        %v7760 = vpow.pop %v7759
        %v7761 = vmul.f32 %v7740, 1.442695
        %v7762 = vpow.pop %v7761
        %v7763 = vmul.f32 %v7741, 1.442695
        %v7764 = vpow.pop %v7763
        %v7765 = vmul.f32 %v7742, 1.442695
        %v7766 = vpow.pop %v7765
        %v7767 = vmul.f32 %v7743, 1.442695
        %v7768 = vpow.pop %v7767
        %v7769 = vmul.f32 %v7744, 1.442695
        %v7770 = vpow.pop %v7769
        %v7771 = vmul.f32 %v7745, 1.442695
        %v7772 = vpow.pop %v7771
        %v7773 = vmul.f32 %v7746, 1.442695
        %v7774 = vpow.pop %v7773
        %v7775 = vmul.f32 %v7747, 1.442695
        %v7776 = vpow.pop %v7775
        %v7777 = vmul.f32 %v7748, 1.442695
        %v7778 = vpow.pop %v7777
        %v7779 = vmul.f32 %v7749, 1.442695
        %v7780 = vpow.pop %v7779
        %v7781 = vmul.f32 %v7750, 1.442695
        %v7782 = vpow.pop %v7781
        %v7783 = vmul.f32 %v7751, 1.442695
        %v7784 = vpow.pop %v7783
        %v7785 = vmul.f32 %v7752, 1.442695
        %v7786 = vpow.pop %v7785
        %v7787 = vmul.f32 %v7753, 1.442695
        %v7788 = vpow.pop %v7787
        %v7789 = vmul.f32 %v7754, 1.442695
        %v7790 = vpow.pop %v7789
        %v7791 = vmul.f32 %v7755, 1.442695
        %v7792 = vpow.pop %v7791
        %v7793 = vmul.f32 %v7756, 1.442695
        %v7794 = vpow.pop %v7793
        %v7795 = vmul.f32 %v7757, 1.442695
        %v7796 = vpow.pop %v7795
        %v7797 = vmul.f32 %v7758, 1.442695
        %v7798 = vpow.pop %v7797
        %v7799 = vadd.f32 %v7760, 1.0
        %v7800 = vadd.f32 %v7762, 1.0
        %v7801 = vadd.f32 %v7764, 1.0
        %v7802 = vadd.f32 %v7766, 1.0
        %v7803 = vadd.f32 %v7768, 1.0
        %v7804 = vadd.f32 %v7770, 1.0
        %v7805 = vadd.f32 %v7772, 1.0
        %v7806 = vadd.f32 %v7774, 1.0
        %v7807 = vadd.f32 %v7776, 1.0
        %v7808 = vadd.f32 %v7778, 1.0
        %v7809 = vadd.f32 %v7780, 1.0
        %v7810 = vadd.f32 %v7782, 1.0
        %v7811 = vadd.f32 %v7784, 1.0
        %v7812 = vadd.f32 %v7786, 1.0
        %v7813 = vadd.f32 %v7788, 1.0
        %v7814 = vadd.f32 %v7790, 1.0
        %v7815 = vadd.f32 %v7792, 1.0
        %v7816 = vadd.f32 %v7794, 1.0
        %v7817 = vadd.f32 %v7796, 1.0
        %v7818 = vadd.f32 %v7798, 1.0
        %v7819 = vrcp.pop %v7799
        %v7820 = vmul.f32 %v7799, %v7819
        %v7821 = vsub.f32 1.0, %v7820
        %v7822 = vmul.f32 %v7819, %v7821
        %v7823 = vadd.f32 %v7819, %v7822
        %vm7824 = vweird.f32 %v7799
        %vm7825 = vweird.f32 %v7819
        %vm7826 = vmor %vm7824, %vm7825
        %v7827 = vsel %vm7826, %v7819, %v7823
        %v7828 = vand.u32 2147483647, %v7799
        %vm7829 = vcmp.eq.f32.partialorder %v7828, 8.507059e+37
        %v7830 = vand.u32 %v7799, 2147483648
        %v7831 = vor.u32 1.1754944e-38, %v7830
        %v7832 = vsel %vm7829, %v7831, %v7827
        %v7833 = vmul.f32 1.0, %v7832
        %v7834 = vrcp.pop %v7800
        %v7835 = vmul.f32 %v7800, %v7834
        %v7836 = vsub.f32 1.0, %v7835
        %v7837 = vmul.f32 %v7834, %v7836
        %v7838 = vadd.f32 %v7834, %v7837
        %vm7839 = vweird.f32 %v7800
        %vm7840 = vweird.f32 %v7834
        %vm7841 = vmor %vm7839, %vm7840
        %v7842 = vsel %vm7841, %v7834, %v7838
        %v7843 = vand.u32 2147483647, %v7800
        %vm7844 = vcmp.eq.f32.partialorder %v7843, 8.507059e+37
        %v7845 = vand.u32 %v7800, 2147483648
        %v7846 = vor.u32 1.1754944e-38, %v7845
        %v7847 = vsel %vm7844, %v7846, %v7842
        %v7848 = vmul.f32 1.0, %v7847
        %v7849 = vrcp.pop %v7801
        %v7850 = vmul.f32 %v7801, %v7849
        %v7851 = vsub.f32 1.0, %v7850
        %v7852 = vmul.f32 %v7849, %v7851
        %v7853 = vadd.f32 %v7849, %v7852
        %vm7854 = vweird.f32 %v7801
        %vm7855 = vweird.f32 %v7849
        %vm7856 = vmor %vm7854, %vm7855
        %v7857 = vsel %vm7856, %v7849, %v7853
        %v7858 = vand.u32 2147483647, %v7801
        %vm7859 = vcmp.eq.f32.partialorder %v7858, 8.507059e+37
        %v7860 = vand.u32 %v7801, 2147483648
        %v7861 = vor.u32 1.1754944e-38, %v7860
        %v7862 = vsel %vm7859, %v7861, %v7857
        %v7863 = vmul.f32 1.0, %v7862
        %v7864 = vrcp.pop %v7802
        %v7865 = vmul.f32 %v7802, %v7864
        %v7866 = vsub.f32 1.0, %v7865
        %v7867 = vmul.f32 %v7864, %v7866
        %v7868 = vadd.f32 %v7864, %v7867
        %vm7869 = vweird.f32 %v7802
        %vm7870 = vweird.f32 %v7864
        %vm7871 = vmor %vm7869, %vm7870
        %v7872 = vsel %vm7871, %v7864, %v7868
        %v7873 = vand.u32 2147483647, %v7802
        %vm7874 = vcmp.eq.f32.partialorder %v7873, 8.507059e+37
        %v7875 = vand.u32 %v7802, 2147483648
        %v7876 = vor.u32 1.1754944e-38, %v7875
        %v7877 = vsel %vm7874, %v7876, %v7872
        %v7878 = vmul.f32 1.0, %v7877
        %v7879 = vrcp.pop %v7803
        %v7880 = vmul.f32 %v7803, %v7879
        %v7881 = vsub.f32 1.0, %v7880
        %v7882 = vmul.f32 %v7879, %v7881
        %v7883 = vadd.f32 %v7879, %v7882
        %vm7884 = vweird.f32 %v7803
        %vm7885 = vweird.f32 %v7879
        %vm7886 = vmor %vm7884, %vm7885
        %v7887 = vsel %vm7886, %v7879, %v7883
        %v7888 = vand.u32 2147483647, %v7803
        %vm7889 = vcmp.eq.f32.partialorder %v7888, 8.507059e+37
        %v7890 = vand.u32 %v7803, 2147483648
        %v7891 = vor.u32 1.1754944e-38, %v7890
        %v7892 = vsel %vm7889, %v7891, %v7887
        %v7893 = vmul.f32 1.0, %v7892
        %v7894 = vrcp.pop %v7804
        %v7895 = vmul.f32 %v7804, %v7894
        %v7896 = vsub.f32 1.0, %v7895
        %v7897 = vmul.f32 %v7894, %v7896
        %v7898 = vadd.f32 %v7894, %v7897
        %vm7899 = vweird.f32 %v7804
        %vm7900 = vweird.f32 %v7894
        %vm7901 = vmor %vm7899, %vm7900
        %v7902 = vsel %vm7901, %v7894, %v7898
        %v7903 = vand.u32 2147483647, %v7804
        %vm7904 = vcmp.eq.f32.partialorder %v7903, 8.507059e+37
        %v7905 = vand.u32 %v7804, 2147483648
        %v7906 = vor.u32 1.1754944e-38, %v7905
        %v7907 = vsel %vm7904, %v7906, %v7902
        %v7908 = vmul.f32 1.0, %v7907
        %v7909 = vrcp.pop %v7805
        %v7910 = vmul.f32 %v7805, %v7909
        %v7911 = vsub.f32 1.0, %v7910
        %v7912 = vmul.f32 %v7909, %v7911
        %v7913 = vadd.f32 %v7909, %v7912
        %vm7914 = vweird.f32 %v7805
        %vm7915 = vweird.f32 %v7909
        %vm7916 = vmor %vm7914, %vm7915
        %v7917 = vsel %vm7916, %v7909, %v7913
        %v7918 = vand.u32 2147483647, %v7805
        %vm7919 = vcmp.eq.f32.partialorder %v7918, 8.507059e+37
        %v7920 = vand.u32 %v7805, 2147483648
        %v7921 = vor.u32 1.1754944e-38, %v7920
        %v7922 = vsel %vm7919, %v7921, %v7917
        %v7923 = vmul.f32 1.0, %v7922
        %v7924 = vrcp.pop %v7806
        %v7925 = vmul.f32 %v7806, %v7924
        %v7926 = vsub.f32 1.0, %v7925
        %v7927 = vmul.f32 %v7924, %v7926
        %v7928 = vadd.f32 %v7924, %v7927
        %vm7929 = vweird.f32 %v7806
        %vm7930 = vweird.f32 %v7924
        %vm7931 = vmor %vm7929, %vm7930
        %v7932 = vsel %vm7931, %v7924, %v7928
        %v7933 = vand.u32 2147483647, %v7806
        %vm7934 = vcmp.eq.f32.partialorder %v7933, 8.507059e+37
        %v7935 = vand.u32 %v7806, 2147483648
        %v7936 = vor.u32 1.1754944e-38, %v7935
        %v7937 = vsel %vm7934, %v7936, %v7932
        %v7938 = vmul.f32 1.0, %v7937
        %v7939 = vrcp.pop %v7807
        %v7940 = vmul.f32 %v7807, %v7939
        %v7941 = vsub.f32 1.0, %v7940
        %v7942 = vmul.f32 %v7939, %v7941
        %v7943 = vadd.f32 %v7939, %v7942
        %vm7944 = vweird.f32 %v7807
        %vm7945 = vweird.f32 %v7939
        %vm7946 = vmor %vm7944, %vm7945
        %v7947 = vsel %vm7946, %v7939, %v7943
        %v7948 = vand.u32 2147483647, %v7807
        %vm7949 = vcmp.eq.f32.partialorder %v7948, 8.507059e+37
        %v7950 = vand.u32 %v7807, 2147483648
        %v7951 = vor.u32 1.1754944e-38, %v7950
        %v7952 = vsel %vm7949, %v7951, %v7947
        %v7953 = vmul.f32 1.0, %v7952
        %v7954 = vrcp.pop %v7808
        %v7955 = vmul.f32 %v7808, %v7954
        %v7956 = vsub.f32 1.0, %v7955
        %v7957 = vmul.f32 %v7954, %v7956
        %v7958 = vadd.f32 %v7954, %v7957
        %vm7959 = vweird.f32 %v7808
        %vm7960 = vweird.f32 %v7954
        %vm7961 = vmor %vm7959, %vm7960
        %v7962 = vsel %vm7961, %v7954, %v7958
        %v7963 = vand.u32 2147483647, %v7808
        %vm7964 = vcmp.eq.f32.partialorder %v7963, 8.507059e+37
        %v7965 = vand.u32 %v7808, 2147483648
        %v7966 = vor.u32 1.1754944e-38, %v7965
        %v7967 = vsel %vm7964, %v7966, %v7962
        %v7968 = vmul.f32 1.0, %v7967
        %v7969 = vrcp.pop %v7809
        %v7970 = vmul.f32 %v7809, %v7969
        %v7971 = vsub.f32 1.0, %v7970
        %v7972 = vmul.f32 %v7969, %v7971
        %v7973 = vadd.f32 %v7969, %v7972
        %vm7974 = vweird.f32 %v7809
        %vm7975 = vweird.f32 %v7969
        %vm7976 = vmor %vm7974, %vm7975
        %v7977 = vsel %vm7976, %v7969, %v7973
        %v7978 = vand.u32 2147483647, %v7809
        %vm7979 = vcmp.eq.f32.partialorder %v7978, 8.507059e+37
        %v7980 = vand.u32 %v7809, 2147483648
        %v7981 = vor.u32 1.1754944e-38, %v7980
        %v7982 = vsel %vm7979, %v7981, %v7977
        %v7983 = vmul.f32 1.0, %v7982
        %v7984 = vrcp.pop %v7810
        %v7985 = vmul.f32 %v7810, %v7984
        %v7986 = vsub.f32 1.0, %v7985
        %v7987 = vmul.f32 %v7984, %v7986
        %v7988 = vadd.f32 %v7984, %v7987
        %vm7989 = vweird.f32 %v7810
        %vm7990 = vweird.f32 %v7984
        %vm7991 = vmor %vm7989, %vm7990
        %v7992 = vsel %vm7991, %v7984, %v7988
        %v7993 = vand.u32 2147483647, %v7810
        %vm7994 = vcmp.eq.f32.partialorder %v7993, 8.507059e+37
        %v7995 = vand.u32 %v7810, 2147483648
        %v7996 = vor.u32 1.1754944e-38, %v7995
        %v7997 = vsel %vm7994, %v7996, %v7992
        %v7998 = vmul.f32 1.0, %v7997
        %v7999 = vrcp.pop %v7811
        %v8000 = vmul.f32 %v7811, %v7999
        %v8001 = vsub.f32 1.0, %v8000
        %v8002 = vmul.f32 %v7999, %v8001
        %v8003 = vadd.f32 %v7999, %v8002
        %vm8004 = vweird.f32 %v7811
        %vm8005 = vweird.f32 %v7999
        %vm8006 = vmor %vm8004, %vm8005
        %v8007 = vsel %vm8006, %v7999, %v8003
        %v8008 = vand.u32 2147483647, %v7811
        %vm8009 = vcmp.eq.f32.partialorder %v8008, 8.507059e+37
        %v8010 = vand.u32 %v7811, 2147483648
        %v8011 = vor.u32 1.1754944e-38, %v8010
        %v8012 = vsel %vm8009, %v8011, %v8007
        %v8013 = vmul.f32 1.0, %v8012
        %v8014 = vrcp.pop %v7812
        %v8015 = vmul.f32 %v7812, %v8014
        %v8016 = vsub.f32 1.0, %v8015
        %v8017 = vmul.f32 %v8014, %v8016
        %v8018 = vadd.f32 %v8014, %v8017
        %vm8019 = vweird.f32 %v7812
        %vm8020 = vweird.f32 %v8014
        %vm8021 = vmor %vm8019, %vm8020
        %v8022 = vsel %vm8021, %v8014, %v8018
        %v8023 = vand.u32 2147483647, %v7812
        %vm8024 = vcmp.eq.f32.partialorder %v8023, 8.507059e+37
        %v8025 = vand.u32 %v7812, 2147483648
        %v8026 = vor.u32 1.1754944e-38, %v8025
        %v8027 = vsel %vm8024, %v8026, %v8022
        %v8028 = vmul.f32 1.0, %v8027
        %v8029 = vrcp.pop %v7813
        %v8030 = vmul.f32 %v7813, %v8029
        %v8031 = vsub.f32 1.0, %v8030
        %v8032 = vmul.f32 %v8029, %v8031
        %v8033 = vadd.f32 %v8029, %v8032
        %vm8034 = vweird.f32 %v7813
        %vm8035 = vweird.f32 %v8029
        %vm8036 = vmor %vm8034, %vm8035
        %v8037 = vsel %vm8036, %v8029, %v8033
        %v8038 = vand.u32 2147483647, %v7813
        %vm8039 = vcmp.eq.f32.partialorder %v8038, 8.507059e+37
        %v8040 = vand.u32 %v7813, 2147483648
        %v8041 = vor.u32 1.1754944e-38, %v8040
        %v8042 = vsel %vm8039, %v8041, %v8037
        %v8043 = vmul.f32 1.0, %v8042
        %v8044 = vrcp.pop %v7814
        %v8045 = vmul.f32 %v7814, %v8044
        %v8046 = vsub.f32 1.0, %v8045
        %v8047 = vmul.f32 %v8044, %v8046
        %v8048 = vadd.f32 %v8044, %v8047
        %vm8049 = vweird.f32 %v7814
        %vm8050 = vweird.f32 %v8044
        %vm8051 = vmor %vm8049, %vm8050
        %v8052 = vsel %vm8051, %v8044, %v8048
        %v8053 = vand.u32 2147483647, %v7814
        %vm8054 = vcmp.eq.f32.partialorder %v8053, 8.507059e+37
        %v8055 = vand.u32 %v7814, 2147483648
        %v8056 = vor.u32 1.1754944e-38, %v8055
        %v8057 = vsel %vm8054, %v8056, %v8052
        %v8058 = vmul.f32 1.0, %v8057
        %v8059 = vrcp.pop %v7815
        %v8060 = vmul.f32 %v7815, %v8059
        %v8061 = vsub.f32 1.0, %v8060
        %v8062 = vmul.f32 %v8059, %v8061
        %v8063 = vadd.f32 %v8059, %v8062
        %vm8064 = vweird.f32 %v7815
        %vm8065 = vweird.f32 %v8059
        %vm8066 = vmor %vm8064, %vm8065
        %v8067 = vsel %vm8066, %v8059, %v8063
        %v8068 = vand.u32 2147483647, %v7815
        %vm8069 = vcmp.eq.f32.partialorder %v8068, 8.507059e+37
        %v8070 = vand.u32 %v7815, 2147483648
        %v8071 = vor.u32 1.1754944e-38, %v8070
        %v8072 = vsel %vm8069, %v8071, %v8067
        %v8073 = vmul.f32 1.0, %v8072
        %v8074 = vrcp.pop %v7816
        %v8075 = vmul.f32 %v7816, %v8074
        %v8076 = vsub.f32 1.0, %v8075
        %v8077 = vmul.f32 %v8074, %v8076
        %v8078 = vadd.f32 %v8074, %v8077
        %vm8079 = vweird.f32 %v7816
        %vm8080 = vweird.f32 %v8074
        %vm8081 = vmor %vm8079, %vm8080
        %v8082 = vsel %vm8081, %v8074, %v8078
        %v8083 = vand.u32 2147483647, %v7816
        %vm8084 = vcmp.eq.f32.partialorder %v8083, 8.507059e+37
        %v8085 = vand.u32 %v7816, 2147483648
        %v8086 = vor.u32 1.1754944e-38, %v8085
        %v8087 = vsel %vm8084, %v8086, %v8082
        %v8088 = vmul.f32 1.0, %v8087
        %v8089 = vrcp.pop %v7817
        %v8090 = vmul.f32 %v7817, %v8089
        %v8091 = vsub.f32 1.0, %v8090
        %v8092 = vmul.f32 %v8089, %v8091
        %v8093 = vadd.f32 %v8089, %v8092
        %vm8094 = vweird.f32 %v7817
        %vm8095 = vweird.f32 %v8089
        %vm8096 = vmor %vm8094, %vm8095
        %v8097 = vsel %vm8096, %v8089, %v8093
        %v8098 = vand.u32 2147483647, %v7817
        %vm8099 = vcmp.eq.f32.partialorder %v8098, 8.507059e+37
        %v8100 = vand.u32 %v7817, 2147483648
        %v8101 = vor.u32 1.1754944e-38, %v8100
        %v8102 = vsel %vm8099, %v8101, %v8097
        %v8103 = vmul.f32 1.0, %v8102
        %v8104 = vrcp.pop %v7818
        %v8105 = vmul.f32 %v7818, %v8104
        %v8106 = vsub.f32 1.0, %v8105
        %v8107 = vmul.f32 %v8104, %v8106
        %v8108 = vadd.f32 %v8104, %v8107
        %vm8109 = vweird.f32 %v7818
        %vm8110 = vweird.f32 %v8104
        %vm8111 = vmor %vm8109, %vm8110
        %v8112 = vsel %vm8111, %v8104, %v8108
        %v8113 = vand.u32 2147483647, %v7818
        %vm8114 = vcmp.eq.f32.partialorder %v8113, 8.507059e+37
        %v8115 = vand.u32 %v7818, 2147483648
        %v8116 = vor.u32 1.1754944e-38, %v8115
        %v8117 = vsel %vm8114, %v8116, %v8112
        %v8118 = vmul.f32 1.0, %v8117
        %v8119 = vunpack.c.l.bf16 %v3446
        %v8120 = vunpack.c.l.bf16 %v3447
        %v8121 = vunpack.c.l.bf16 %v3466
        %v8122 = vunpack.c.l.bf16 %v3448
        %v8123 = vunpack.c.l.bf16 %v3449
        %v8124 = vunpack.c.l.bf16 %v3467
        %v8125 = vunpack.c.l.bf16 %v3450
        %v8126 = vunpack.c.l.bf16 %v3451
        %v8127 = vunpack.c.l.bf16 %v3468
        %v8128 = vunpack.c.l.bf16 %v3452
        %v8129 = vunpack.c.l.bf16 %v3453
        %v8130 = vunpack.c.l.bf16 %v3469
        %v8131 = vunpack.c.l.bf16 %v3454
        %v8132 = vunpack.c.l.bf16 %v3455
        %v8133 = vunpack.c.l.bf16 %v3470
        %v8134 = vunpack.c.l.bf16 %v3456
        %v8135 = vunpack.c.l.bf16 %v3457
        %v8136 = vunpack.c.l.bf16 %v3471
        %v8137 = vunpack.c.l.bf16 %v3458
        %v8138 = vunpack.c.l.bf16 %v3459
        %v8139 = vunpack.c.l.bf16 %v3472
        %v8140 = vunpack.c.l.bf16 %v3460
        %v8141 = vunpack.c.l.bf16 %v3461
        %v8142 = vunpack.c.l.bf16 %v3473
        %v8143 = vunpack.c.l.bf16 %v3462
        %v8144 = vunpack.c.l.bf16 %v3463
        %v8145 = vunpack.c.l.bf16 %v3474
        %v8146 = vunpack.c.l.bf16 %v3464
        %v8147 = vunpack.c.l.bf16 %v3465
        %v8148 = vunpack.c.l.bf16 %v3475
        %vm8179 = vcmask 1046528
        %v8180 = vrot.slane %v8119, 1
        %v8181 = vrot.slane %v8120, 1
        %v8182 = vsel %vm8179, %v8180, %v8181
        %v8183 = vrot.slane %v8121, 1
        %v8184 = vsel %vm8179, %v8181, %v8183
        %v8185 = vrot.slane %v8122, 1
        %v8186 = vrot.slane %v8123, 1
        %v8187 = vsel %vm8179, %v8185, %v8186
        %v8188 = vrot.slane %v8124, 1
        %v8189 = vsel %vm8179, %v8186, %v8188
        %v8190 = vrot.slane %v8125, 1
        %v8191 = vrot.slane %v8126, 1
        %v8192 = vsel %vm8179, %v8190, %v8191
        %v8193 = vrot.slane %v8127, 1
        %v8194 = vsel %vm8179, %v8191, %v8193
        %v8195 = vrot.slane %v8128, 1
        %v8196 = vrot.slane %v8129, 1
        %v8197 = vsel %vm8179, %v8195, %v8196
        %v8198 = vrot.slane %v8130, 1
        %v8199 = vsel %vm8179, %v8196, %v8198
        %v8200 = vrot.slane %v8131, 1
        %v8201 = vrot.slane %v8132, 1
        %v8202 = vsel %vm8179, %v8200, %v8201
        %v8203 = vrot.slane %v8133, 1
        %v8204 = vsel %vm8179, %v8201, %v8203
        %v8205 = vrot.slane %v8134, 1
        %v8206 = vrot.slane %v8135, 1
        %v8207 = vsel %vm8179, %v8205, %v8206
        %v8208 = vrot.slane %v8136, 1
        %v8209 = vsel %vm8179, %v8206, %v8208
        %v8210 = vrot.slane %v8137, 1
        %v8211 = vrot.slane %v8138, 1
        %v8212 = vsel %vm8179, %v8210, %v8211
        %v8213 = vrot.slane %v8139, 1
        %v8214 = vsel %vm8179, %v8211, %v8213
        %v8215 = vrot.slane %v8140, 1
        %v8216 = vrot.slane %v8141, 1
        %v8217 = vsel %vm8179, %v8215, %v8216
        %v8218 = vrot.slane %v8142, 1
        %v8219 = vsel %vm8179, %v8216, %v8218
        %v8220 = vrot.slane %v8143, 1
        %v8221 = vrot.slane %v8144, 1
        %v8222 = vsel %vm8179, %v8220, %v8221
        %v8223 = vrot.slane %v8145, 1
        %v8224 = vsel %vm8179, %v8221, %v8223
        %v8225 = vrot.slane %v8146, 1
        %v8226 = vrot.slane %v8147, 1
        %v8227 = vsel %vm8179, %v8225, %v8226
        %v8228 = vrot.slane %v8148, 1
        %v8229 = vsel %vm8179, %v8226, %v8228
        %v8250 = vmul.f32 %v7833, %v8182
        %v8251 = vmul.f32 %v7848, %v8184
        %v8252 = vmul.f32 %v7863, %v8187
        %v8253 = vmul.f32 %v7878, %v8189
        %v8254 = vmul.f32 %v7893, %v8192
        %v8255 = vmul.f32 %v7908, %v8194
        %v8256 = vmul.f32 %v7923, %v8197
        %v8257 = vmul.f32 %v7938, %v8199
        %v8258 = vmul.f32 %v7953, %v8202
        %v8259 = vmul.f32 %v7968, %v8204
        %v8260 = vmul.f32 %v7983, %v8207
        %v8261 = vmul.f32 %v7998, %v8209
        %v8262 = vmul.f32 %v8013, %v8212
        %v8263 = vmul.f32 %v8028, %v8214
        %v8264 = vmul.f32 %v8043, %v8217
        %v8265 = vmul.f32 %v8058, %v8219
        %v8266 = vmul.f32 %v8073, %v8222
        %v8267 = vmul.f32 %v8088, %v8224
        %v8268 = vmul.f32 %v8103, %v8227
        %v8269 = vmul.f32 %v8118, %v8229
        %v8270 = vpack.c.bf16 %v8250, %v8250
        %v8271 = vpack.c.bf16 %v8251, %v8251
        %v8272 = vpack.c.bf16 %v8252, %v8252
        %v8273 = vpack.c.bf16 %v8253, %v8253
        %v8274 = vpack.c.bf16 %v8254, %v8254
        %v8275 = vpack.c.bf16 %v8255, %v8255
        %v8276 = vpack.c.bf16 %v8256, %v8256
        %v8277 = vpack.c.bf16 %v8257, %v8257
        %v8278 = vpack.c.bf16 %v8258, %v8258
        %v8279 = vpack.c.bf16 %v8259, %v8259
        %v8280 = vpack.c.bf16 %v8260, %v8260
        %v8281 = vpack.c.bf16 %v8261, %v8261
        %v8282 = vpack.c.bf16 %v8262, %v8262
        %v8283 = vpack.c.bf16 %v8263, %v8263
        %v8284 = vpack.c.bf16 %v8264, %v8264
        %v8285 = vpack.c.bf16 %v8265, %v8265
        %v8286 = vpack.c.bf16 %v8266, %v8266
        %v8287 = vpack.c.bf16 %v8267, %v8267
        %v8288 = vpack.c.bf16 %v8268, %v8268
        %v8289 = vpack.c.bf16 %v8269, %v8269
        %v8291 = vshrl.u32 %v8270, 16
        %v8293 = vrot.slane %v8291, 7
        %v8294 = vshll.u32 %v8270, 16
        %v8296 = vor.u32 %v8293, %v8294
        %v8297 = vrot.slane %v8293, 4
        %v8299 = vshrl.u32 %v8271, 16
        %v8301 = vrot.slane %v8299, 7
        %v8302 = vshll.u32 %v8271, 16
        %v8304 = vor.u32 %v8301, %v8302
        %v8305 = vsel %vm728, %v8297, %v8304
        %v8306 = vrot.slane %v8301, 4
        %v8308 = vshrl.u32 %v8272, 16
        %v8310 = vrot.slane %v8308, 7
        %v8311 = vshll.u32 %v8272, 16
        %v8313 = vor.u32 %v8310, %v8311
        %v8314 = vrot.slane %v8310, 4
        %v8316 = vshrl.u32 %v8273, 16
        %v8318 = vrot.slane %v8316, 7
        %v8319 = vshll.u32 %v8273, 16
        %v8321 = vor.u32 %v8318, %v8319
        %v8322 = vsel %vm728, %v8314, %v8321
        %v8323 = vrot.slane %v8318, 4
        %v8325 = vshrl.u32 %v8274, 16
        %v8327 = vrot.slane %v8325, 7
        %v8328 = vshll.u32 %v8274, 16
        %v8330 = vor.u32 %v8327, %v8328
        %v8331 = vrot.slane %v8327, 4
        %v8333 = vshrl.u32 %v8275, 16
        %v8335 = vrot.slane %v8333, 7
        %v8336 = vshll.u32 %v8275, 16
        %v8338 = vor.u32 %v8335, %v8336
        %v8339 = vsel %vm728, %v8331, %v8338
        %v8340 = vrot.slane %v8335, 4
        %v8342 = vshrl.u32 %v8276, 16
        %v8344 = vrot.slane %v8342, 7
        %v8345 = vshll.u32 %v8276, 16
        %v8347 = vor.u32 %v8344, %v8345
        %v8348 = vrot.slane %v8344, 4
        %v8350 = vshrl.u32 %v8277, 16
        %v8352 = vrot.slane %v8350, 7
        %v8353 = vshll.u32 %v8277, 16
        %v8355 = vor.u32 %v8352, %v8353
        %v8356 = vsel %vm728, %v8348, %v8355
        %v8357 = vrot.slane %v8352, 4
        %v8359 = vshrl.u32 %v8278, 16
        %v8361 = vrot.slane %v8359, 7
        %v8362 = vshll.u32 %v8278, 16
        %v8364 = vor.u32 %v8361, %v8362
        %v8365 = vrot.slane %v8361, 4
        %v8367 = vshrl.u32 %v8279, 16
        %v8369 = vrot.slane %v8367, 7
        %v8370 = vshll.u32 %v8279, 16
        %v8372 = vor.u32 %v8369, %v8370
        %v8373 = vsel %vm728, %v8365, %v8372
        %v8374 = vrot.slane %v8369, 4
        %v8376 = vshrl.u32 %v8280, 16
        %v8378 = vrot.slane %v8376, 7
        %v8379 = vshll.u32 %v8280, 16
        %v8381 = vor.u32 %v8378, %v8379
        %v8382 = vrot.slane %v8378, 4
        %v8384 = vshrl.u32 %v8281, 16
        %v8386 = vrot.slane %v8384, 7
        %v8387 = vshll.u32 %v8281, 16
        %v8389 = vor.u32 %v8386, %v8387
        %v8390 = vsel %vm728, %v8382, %v8389
        %v8391 = vrot.slane %v8386, 4
        %v8393 = vshrl.u32 %v8282, 16
        %v8395 = vrot.slane %v8393, 7
        %v8396 = vshll.u32 %v8282, 16
        %v8398 = vor.u32 %v8395, %v8396
        %v8399 = vrot.slane %v8395, 4
        %v8401 = vshrl.u32 %v8283, 16
        %v8403 = vrot.slane %v8401, 7
        %v8404 = vshll.u32 %v8283, 16
        %v8406 = vor.u32 %v8403, %v8404
        %v8407 = vsel %vm728, %v8399, %v8406
        %v8408 = vrot.slane %v8403, 4
        %v8410 = vshrl.u32 %v8284, 16
        %v8412 = vrot.slane %v8410, 7
        %v8413 = vshll.u32 %v8284, 16
        %v8415 = vor.u32 %v8412, %v8413
        %v8416 = vrot.slane %v8412, 4
        %v8418 = vshrl.u32 %v8285, 16
        %v8420 = vrot.slane %v8418, 7
        %v8421 = vshll.u32 %v8285, 16
        %v8423 = vor.u32 %v8420, %v8421
        %v8424 = vsel %vm728, %v8416, %v8423
        %v8425 = vrot.slane %v8420, 4
        %v8427 = vshrl.u32 %v8286, 16
        %v8429 = vrot.slane %v8427, 7
        %v8430 = vshll.u32 %v8286, 16
        %v8432 = vor.u32 %v8429, %v8430
        %v8433 = vrot.slane %v8429, 4
        %v8435 = vshrl.u32 %v8287, 16
        %v8437 = vrot.slane %v8435, 7
        %v8438 = vshll.u32 %v8287, 16
        %v8440 = vor.u32 %v8437, %v8438
        %v8441 = vsel %vm728, %v8433, %v8440
        %v8442 = vrot.slane %v8437, 4
        %v8444 = vshrl.u32 %v8288, 16
        %v8446 = vrot.slane %v8444, 7
        %v8447 = vshll.u32 %v8288, 16
        %v8449 = vor.u32 %v8446, %v8447
        %v8450 = vrot.slane %v8446, 4
        %v8452 = vshrl.u32 %v8289, 16
        %v8454 = vrot.slane %v8452, 7
        %v8455 = vshll.u32 %v8289, 16
        %v8457 = vor.u32 %v8454, %v8455
        %v8458 = vsel %vm728, %v8450, %v8457
        %v8459 = vrot.slane %v8454, 4
        %v8490 = vsel %vm770, %v8296, %v3446
        %8491 = vst [vmem:[%s3445] sm:$0xf] %v8490
        %8492 = vst [vmem:[%s3445 + $0x4] sm:$0xf] %v8305
        %v8493 = vld [vmem:[%s3445 + $0x8] sm:$0x1]
        %v8494 = vsel %vm576, %v8306, %v8493
        %8495 = vst [vmem:[%s3445 + $0x8] sm:$0x1] %v8494
        %v8496 = vld [vmem:[%s3445 + $0xc] sm:$0xf]
        %v8497 = vsel %vm770, %v8313, %v8496
        %8498 = vst [vmem:[%s3445 + $0xc] sm:$0xf] %v8497
        %8499 = vst [vmem:[%s3445 + $0x10] sm:$0xf] %v8322
        %v8500 = vld [vmem:[%s3445 + $0x14] sm:$0x1]
        %v8501 = vsel %vm576, %v8323, %v8500
        %8502 = vst [vmem:[%s3445 + $0x14] sm:$0x1] %v8501
        %v8503 = vld [vmem:[%s3445 + $0x18] sm:$0xf]
        %v8504 = vsel %vm770, %v8330, %v8503
        %8505 = vst [vmem:[%s3445 + $0x18] sm:$0xf] %v8504
        %8506 = vst [vmem:[%s3445 + $0x1c] sm:$0xf] %v8339
        %v8507 = vld [vmem:[%s3445 + $0x20] sm:$0x1]
        %v8508 = vsel %vm576, %v8340, %v8507
        %8509 = vst [vmem:[%s3445 + $0x20] sm:$0x1] %v8508
        %v8510 = vld [vmem:[%s3445 + $0x24] sm:$0xf]
        %v8511 = vsel %vm770, %v8347, %v8510
        %8512 = vst [vmem:[%s3445 + $0x24] sm:$0xf] %v8511
        %8513 = vst [vmem:[%s3445 + $0x28] sm:$0xf] %v8356
        %v8514 = vld [vmem:[%s3445 + $0x2c] sm:$0x1]
        %v8515 = vsel %vm576, %v8357, %v8514
        %8516 = vst [vmem:[%s3445 + $0x2c] sm:$0x1] %v8515
        %v8517 = vld [vmem:[%s3445 + $0x30] sm:$0xf]
        %v8518 = vsel %vm770, %v8364, %v8517
        %8519 = vst [vmem:[%s3445 + $0x30] sm:$0xf] %v8518
        %8520 = vst [vmem:[%s3445 + $0x34] sm:$0xf] %v8373
        %v8521 = vld [vmem:[%s3445 + $0x38] sm:$0x1]
        %v8522 = vsel %vm576, %v8374, %v8521
        %8523 = vst [vmem:[%s3445 + $0x38] sm:$0x1] %v8522
        %v8524 = vld [vmem:[%s3445 + $0x3c] sm:$0xf]
        %v8525 = vsel %vm770, %v8381, %v8524
        %8526 = vst [vmem:[%s3445 + $0x3c] sm:$0xf] %v8525
        %8527 = vst [vmem:[%s3445 + $0x40] sm:$0xf] %v8390
        %v8528 = vld [vmem:[%s3445 + $0x44] sm:$0x1]
        %v8529 = vsel %vm576, %v8391, %v8528
        %8530 = vst [vmem:[%s3445 + $0x44] sm:$0x1] %v8529
        %v8531 = vld [vmem:[%s3445 + $0x48] sm:$0xf]
        %v8532 = vsel %vm770, %v8398, %v8531
        %8533 = vst [vmem:[%s3445 + $0x48] sm:$0xf] %v8532
        %8534 = vst [vmem:[%s3445 + $0x4c] sm:$0xf] %v8407
        %v8535 = vld [vmem:[%s3445 + $0x50] sm:$0x1]
        %v8536 = vsel %vm576, %v8408, %v8535
        %8537 = vst [vmem:[%s3445 + $0x50] sm:$0x1] %v8536
        %v8538 = vld [vmem:[%s3445 + $0x54] sm:$0xf]
        %v8539 = vsel %vm770, %v8415, %v8538
        %8540 = vst [vmem:[%s3445 + $0x54] sm:$0xf] %v8539
        %8541 = vst [vmem:[%s3445 + $0x58] sm:$0xf] %v8424
        %v8542 = vld [vmem:[%s3445 + $0x5c] sm:$0x1]
        %v8543 = vsel %vm576, %v8425, %v8542
        %8544 = vst [vmem:[%s3445 + $0x5c] sm:$0x1] %v8543
        %v8545 = vld [vmem:[%s3445 + $0x60] sm:$0xf]
        %v8546 = vsel %vm770, %v8432, %v8545
        %8547 = vst [vmem:[%s3445 + $0x60] sm:$0xf] %v8546
        %8548 = vst [vmem:[%s3445 + $0x64] sm:$0xf] %v8441
        %v8549 = vld [vmem:[%s3445 + $0x68] sm:$0x1]
        %v8550 = vsel %vm576, %v8442, %v8549
        %8551 = vst [vmem:[%s3445 + $0x68] sm:$0x1] %v8550
        %v8552 = vld [vmem:[%s3445 + $0x6c] sm:$0xf]
        %v8553 = vsel %vm770, %v8449, %v8552
        %8554 = vst [vmem:[%s3445 + $0x6c] sm:$0xf] %v8553
        %8555 = vst [vmem:[%s3445 + $0x70] sm:$0xf] %v8458
        %v8556 = vld [vmem:[%s3445 + $0x74] sm:$0x1]
        %v8557 = vsel %vm576, %v8459, %v8556
        %8558 = vst [vmem:[%s3445 + $0x74] sm:$0x1] %v8557
        %v8559 = vld [vmem:[%s9] sm:$0x1]
        %v8561 = vperm.slane %v8559, 0
        %v8563 = vld [vmem:[%s3445] sm:$0xf]
        %v8564 = vld [vmem:[%s3445 + $0x4] sm:$0xf]
        %v8565 = vld [vmem:[%s3445 + $0xc] sm:$0xf]
        %v8566 = vld [vmem:[%s3445 + $0x10] sm:$0xf]
        %v8567 = vld [vmem:[%s3445 + $0x18] sm:$0xf]
        %v8568 = vld [vmem:[%s3445 + $0x1c] sm:$0xf]
        %v8569 = vld [vmem:[%s3445 + $0x24] sm:$0xf]
        %v8570 = vld [vmem:[%s3445 + $0x28] sm:$0xf]
        %v8571 = vld [vmem:[%s3445 + $0x30] sm:$0xf]
        %v8572 = vld [vmem:[%s3445 + $0x34] sm:$0xf]
        %v8573 = vld [vmem:[%s3445 + $0x3c] sm:$0xf]
        %v8574 = vld [vmem:[%s3445 + $0x40] sm:$0xf]
        %v8575 = vld [vmem:[%s3445 + $0x48] sm:$0xf]
        %v8576 = vld [vmem:[%s3445 + $0x4c] sm:$0xf]
        %v8577 = vld [vmem:[%s3445 + $0x54] sm:$0xf]
        %v8578 = vld [vmem:[%s3445 + $0x58] sm:$0xf]
        %v8579 = vld [vmem:[%s3445 + $0x8] sm:$0x1]
        %v8580 = vld [vmem:[%s3445 + $0x14] sm:$0x1]
        %v8581 = vld [vmem:[%s3445 + $0x20] sm:$0x1]
        %v8582 = vld [vmem:[%s3445 + $0x2c] sm:$0x1]
        %v8583 = vld [vmem:[%s3445 + $0x38] sm:$0x1]
        %v8584 = vld [vmem:[%s3445 + $0x44] sm:$0x1]
        %v8585 = vld [vmem:[%s3445 + $0x50] sm:$0x1]
        %v8586 = vld [vmem:[%s3445 + $0x5c] sm:$0x1]
        %v8587 = vld [vmem:[%s3445] sm:$0xe]
        %v8588 = vld [vmem:[%s3445 + $0xc] sm:$0xe]
        %v8589 = vld [vmem:[%s3445 + $0x18] sm:$0xe]
        %v8590 = vld [vmem:[%s3445 + $0x24] sm:$0xe]
        %v8591 = vld [vmem:[%s3445 + $0x30] sm:$0xe]
        %v8592 = vld [vmem:[%s3445 + $0x3c] sm:$0xe]
        %v8593 = vld [vmem:[%s3445 + $0x48] sm:$0xe]
        %v8594 = vld [vmem:[%s3445 + $0x54] sm:$0xe]
        %v8611 = vunpack.c.l.b16 %v8563
        %v8612 = vunpack.c.l.b16 %v8564
        %v8613 = vunpack.c.l.b16 %v8565
        %v8614 = vunpack.c.l.b16 %v8566
        %v8615 = vunpack.c.l.b16 %v8567
        %v8616 = vunpack.c.l.b16 %v8568
        %v8617 = vunpack.c.l.b16 %v8569
        %v8618 = vunpack.c.l.b16 %v8570
        %v8619 = vunpack.c.l.b16 %v8571
        %v8620 = vunpack.c.l.b16 %v8572
        %v8621 = vunpack.c.l.b16 %v8573
        %v8622 = vunpack.c.l.b16 %v8574
        %v8623 = vunpack.c.l.b16 %v8575
        %v8624 = vunpack.c.l.b16 %v8576
        %v8625 = vunpack.c.l.b16 %v8577
        %v8626 = vunpack.c.l.b16 %v8578
        %v8627 = vpack.c.b16 %v8612, %v8611
        %v8628 = vpack.c.b16 %v8614, %v8613
        %v8629 = vpack.c.b16 %v8616, %v8615
        %v8630 = vpack.c.b16 %v8618, %v8617
        %v8631 = vpack.c.b16 %v8620, %v8619
        %v8632 = vpack.c.b16 %v8622, %v8621
        %v8633 = vpack.c.b16 %v8624, %v8623
        %v8634 = vpack.c.b16 %v8626, %v8625
        %v8651 = vunpack.c.l.b16 %v8579
        %v8652 = vunpack.c.l.b16 %v8580
        %v8653 = vunpack.c.l.b16 %v8581
        %v8654 = vunpack.c.l.b16 %v8582
        %v8655 = vunpack.c.l.b16 %v8583
        %v8656 = vunpack.c.l.b16 %v8584
        %v8657 = vunpack.c.l.b16 %v8585
        %v8658 = vunpack.c.l.b16 %v8586
        %v8659 = vpack.c.b16 %v8651, %v8651
        %v8660 = vpack.c.b16 %v8652, %v8652
        %v8661 = vpack.c.b16 %v8653, %v8653
        %v8662 = vpack.c.b16 %v8654, %v8654
        %v8663 = vpack.c.b16 %v8655, %v8655
        %v8664 = vpack.c.b16 %v8656, %v8656
        %v8665 = vpack.c.b16 %v8657, %v8657
        %v8666 = vpack.c.b16 %v8658, %v8658
        %v8668 = vshrl.u32 %v8627, 16
        %v8670 = vshll.u32 %v8627, 16
        %v8672 = vrot.slane %v8670, 1
        %v8673 = vor.u32 %v8668, %v8672
        %v8675 = vshll.u32 %v8659, 16
        %v8677 = vrot.slane %v8675, 1
        %v8678 = vsel %vm1581, %v8673, %v8677
        %v8680 = vshrl.u32 %v8628, 16
        %v8682 = vshll.u32 %v8628, 16
        %v8684 = vrot.slane %v8682, 1
        %v8685 = vor.u32 %v8680, %v8684
        %v8687 = vshll.u32 %v8660, 16
        %v8689 = vrot.slane %v8687, 1
        %v8690 = vsel %vm1581, %v8685, %v8689
        %v8692 = vshrl.u32 %v8629, 16
        %v8694 = vshll.u32 %v8629, 16
        %v8696 = vrot.slane %v8694, 1
        %v8697 = vor.u32 %v8692, %v8696
        %v8699 = vshll.u32 %v8661, 16
        %v8701 = vrot.slane %v8699, 1
        %v8702 = vsel %vm1581, %v8697, %v8701
        %v8704 = vshrl.u32 %v8630, 16
        %v8706 = vshll.u32 %v8630, 16
        %v8708 = vrot.slane %v8706, 1
        %v8709 = vor.u32 %v8704, %v8708
        %v8711 = vshll.u32 %v8662, 16
        %v8713 = vrot.slane %v8711, 1
        %v8714 = vsel %vm1581, %v8709, %v8713
        %v8716 = vshrl.u32 %v8631, 16
        %v8718 = vshll.u32 %v8631, 16
        %v8720 = vrot.slane %v8718, 1
        %v8721 = vor.u32 %v8716, %v8720
        %v8723 = vshll.u32 %v8663, 16
        %v8725 = vrot.slane %v8723, 1
        %v8726 = vsel %vm1581, %v8721, %v8725
        %v8728 = vshrl.u32 %v8632, 16
        %v8730 = vshll.u32 %v8632, 16
        %v8732 = vrot.slane %v8730, 1
        %v8733 = vor.u32 %v8728, %v8732
        %v8735 = vshll.u32 %v8664, 16
        %v8737 = vrot.slane %v8735, 1
        %v8738 = vsel %vm1581, %v8733, %v8737
        %v8740 = vshrl.u32 %v8633, 16
        %v8742 = vshll.u32 %v8633, 16
        %v8744 = vrot.slane %v8742, 1
        %v8745 = vor.u32 %v8740, %v8744
        %v8747 = vshll.u32 %v8665, 16
        %v8749 = vrot.slane %v8747, 1
        %v8750 = vsel %vm1581, %v8745, %v8749
        %v8752 = vshrl.u32 %v8634, 16
        %v8754 = vshll.u32 %v8634, 16
        %v8756 = vrot.slane %v8754, 1
        %v8757 = vor.u32 %v8752, %v8756
        %v8759 = vshll.u32 %v8666, 16
        %v8761 = vrot.slane %v8759, 1
        %v8762 = vsel %vm1581, %v8757, %v8761
        %v8779 = vunpack.c.l.b16 %v8587
        %v8780 = vunpack.c.l.b16 %v8588
        %v8781 = vunpack.c.l.b16 %v8589
        %v8782 = vunpack.c.l.b16 %v8590
        %v8783 = vunpack.c.l.b16 %v8591
        %v8784 = vunpack.c.l.b16 %v8592
        %v8785 = vunpack.c.l.b16 %v8593
        %v8786 = vunpack.c.l.b16 %v8594
        %v8787 = vpack.c.b16 %v8612, %v8779
        %v8788 = vpack.c.b16 %v8614, %v8780
        %v8789 = vpack.c.b16 %v8616, %v8781
        %v8790 = vpack.c.b16 %v8618, %v8782
        %v8791 = vpack.c.b16 %v8620, %v8783
        %v8792 = vpack.c.b16 %v8622, %v8784
        %v8793 = vpack.c.b16 %v8624, %v8785
        %v8794 = vpack.c.b16 %v8626, %v8786
        %v8795 = vrot.slane %v8787, 1
        %v8796 = vrot.slane %v8659, 1
        %v8797 = vsel %vm1742, %v8795, %v8796
        %v8798 = vrot.slane %v8788, 1
        %v8799 = vrot.slane %v8660, 1
        %v8800 = vsel %vm1742, %v8798, %v8799
        %v8801 = vrot.slane %v8789, 1
        %v8802 = vrot.slane %v8661, 1
        %v8803 = vsel %vm1742, %v8801, %v8802
        %v8804 = vrot.slane %v8790, 1
        %v8805 = vrot.slane %v8662, 1
        %v8806 = vsel %vm1742, %v8804, %v8805
        %v8807 = vrot.slane %v8791, 1
        %v8808 = vrot.slane %v8663, 1
        %v8809 = vsel %vm1742, %v8807, %v8808
        %v8810 = vrot.slane %v8792, 1
        %v8811 = vrot.slane %v8664, 1
        %v8812 = vsel %vm1742, %v8810, %v8811
        %v8813 = vrot.slane %v8793, 1
        %v8814 = vrot.slane %v8665, 1
        %v8815 = vsel %vm1742, %v8813, %v8814
        %v8816 = vrot.slane %v8794, 1
        %v8817 = vrot.slane %v8666, 1
        %v8818 = vsel %vm1742, %v8816, %v8817
        %v8827 = vld [vmem:[%s6] sm:$0xf]
        %v8828 = vld [vmem:[%s6 + $0x4] sm:$0xf]
        %v8829 = vld [vmem:[%s6 + $0x8] sm:$0xf]
        %v8830 = vld [vmem:[%s6 + $0xc] sm:$0xf]
        %v8831 = vld [vmem:[%s6 + $0x10] sm:$0xf]
        %v8832 = vld [vmem:[%s6 + $0x14] sm:$0xf]
        %v8833 = vld [vmem:[%s6 + $0x18] sm:$0xf]
        %v8834 = vld [vmem:[%s6 + $0x1c] sm:$0xf]
        %v8835 = vld [vmem:[%s6 + $0x20] sm:$0xf]
        %v8836 = vld [vmem:[%s6 + $0x24] sm:$0xf]
        %v8837 = vld [vmem:[%s6 + $0x28] sm:$0xf]
        %v8838 = vld [vmem:[%s6 + $0x2c] sm:$0xf]
        %v8839 = vld [vmem:[%s6 + $0x30] sm:$0xf]
        %v8840 = vld [vmem:[%s6 + $0x34] sm:$0xf]
        %v8841 = vld [vmem:[%s6 + $0x38] sm:$0xf]
        %v8842 = vld [vmem:[%s6 + $0x3c] sm:$0xf]
        %v8843 = vld [vmem:[%s6 + $0x40] sm:$0xf]
        %v8844 = vld [vmem:[%s6 + $0x44] sm:$0xf]
        %v8845 = vld [vmem:[%s6 + $0x48] sm:$0xf]
        %v8846 = vld [vmem:[%s6 + $0x4c] sm:$0xf]
        %v8847 = vld [vmem:[%s6 + $0x50] sm:$0xf]
        %v8848 = vld [vmem:[%s6 + $0x54] sm:$0xf]
        %v8849 = vld [vmem:[%s6 + $0x58] sm:$0xf]
        %v8850 = vld [vmem:[%s6 + $0x5c] sm:$0xf]
        %v8851 = vld [vmem:[%s6 + $0x60] sm:$0xf]
        %v8852 = vld [vmem:[%s6 + $0x64] sm:$0xf]
        %v8853 = vld [vmem:[%s6 + $0x68] sm:$0xf]
        %v8854 = vld [vmem:[%s6 + $0x6c] sm:$0xf]
        %v8855 = vld [vmem:[%s6 + $0x70] sm:$0xf]
        %v8856 = vld [vmem:[%s6 + $0x74] sm:$0xf]
        %v8857 = vld [vmem:[%s6 + $0x78] sm:$0xf]
        %v8858 = vld [vmem:[%s6 + $0x7c] sm:$0xf]
        %v8859 = vld [vmem:[%s6 + $0x80] sm:$0xf]
        %v8860 = vld [vmem:[%s6 + $0x84] sm:$0xf]
        %v8861 = vld [vmem:[%s6 + $0x88] sm:$0xf]
        %v8862 = vld [vmem:[%s6 + $0x8c] sm:$0xf]
        %v8863 = vld [vmem:[%s6 + $0x90] sm:$0xf]
        %v8864 = vld [vmem:[%s6 + $0x94] sm:$0xf]
        %v8865 = vld [vmem:[%s6 + $0x98] sm:$0xf]
        %v8866 = vld [vmem:[%s6 + $0x9c] sm:$0xf]
        %v8867 = vld [vmem:[%s6 + $0xa0] sm:$0xf]
        %v8868 = vld [vmem:[%s6 + $0xa4] sm:$0xf]
        %v8869 = vld [vmem:[%s6 + $0xa8] sm:$0xf]
        %v8870 = vld [vmem:[%s6 + $0xac] sm:$0xf]
        %v8871 = vld [vmem:[%s6 + $0xb0] sm:$0xf]
        %v8872 = vld [vmem:[%s6 + $0xb4] sm:$0xf]
        %v8873 = vld [vmem:[%s6 + $0xb8] sm:$0xf]
        %v8874 = vld [vmem:[%s6 + $0xbc] sm:$0xf]
        %v8923 = vunpack.c.l.b16 %v8827
        %v8924 = vunpack.c.l.b16 %v8828
        %v8925 = vunpack.c.l.b16 %v8829
        %v8926 = vunpack.c.l.b16 %v8830
        %v8927 = vunpack.c.l.b16 %v8831
        %v8928 = vunpack.c.l.b16 %v8832
        %v8929 = vunpack.c.l.b16 %v8833
        %v8930 = vunpack.c.l.b16 %v8834
        %v8931 = vunpack.c.l.b16 %v8835
        %v8932 = vunpack.c.l.b16 %v8836
        %v8933 = vunpack.c.l.b16 %v8837
        %v8934 = vunpack.c.l.b16 %v8838
        %v8935 = vunpack.c.l.b16 %v8839
        %v8936 = vunpack.c.l.b16 %v8840
        %v8937 = vunpack.c.l.b16 %v8841
        %v8938 = vunpack.c.l.b16 %v8842
        %v8939 = vunpack.c.l.b16 %v8843
        %v8940 = vunpack.c.l.b16 %v8844
        %v8941 = vunpack.c.l.b16 %v8845
        %v8942 = vunpack.c.l.b16 %v8846
        %v8943 = vunpack.c.l.b16 %v8847
        %v8944 = vunpack.c.l.b16 %v8848
        %v8945 = vunpack.c.l.b16 %v8849
        %v8946 = vunpack.c.l.b16 %v8850
        %v8947 = vunpack.c.l.b16 %v8851
        %v8948 = vunpack.c.l.b16 %v8852
        %v8949 = vunpack.c.l.b16 %v8853
        %v8950 = vunpack.c.l.b16 %v8854
        %v8951 = vunpack.c.l.b16 %v8855
        %v8952 = vunpack.c.l.b16 %v8856
        %v8953 = vunpack.c.l.b16 %v8857
        %v8954 = vunpack.c.l.b16 %v8858
        %v8955 = vunpack.c.l.b16 %v8859
        %v8956 = vunpack.c.l.b16 %v8860
        %v8957 = vunpack.c.l.b16 %v8861
        %v8958 = vunpack.c.l.b16 %v8862
        %v8959 = vunpack.c.l.b16 %v8863
        %v8960 = vunpack.c.l.b16 %v8864
        %v8961 = vunpack.c.l.b16 %v8865
        %v8962 = vunpack.c.l.b16 %v8866
        %v8963 = vunpack.c.l.b16 %v8867
        %v8964 = vunpack.c.l.b16 %v8868
        %v8965 = vunpack.c.l.b16 %v8869
        %v8966 = vunpack.c.l.b16 %v8870
        %v8967 = vunpack.c.l.b16 %v8871
        %v8968 = vunpack.c.l.b16 %v8872
        %v8969 = vunpack.c.l.b16 %v8873
        %v8970 = vunpack.c.l.b16 %v8874
        %v8971 = vpack.c.b16 %v8924, %v8923
        %v8972 = vpack.c.b16 %v8926, %v8925
        %v8973 = vpack.c.b16 %v8928, %v8927
        %v8974 = vpack.c.b16 %v8930, %v8929
        %v8975 = vpack.c.b16 %v8932, %v8931
        %v8976 = vpack.c.b16 %v8934, %v8933
        %v8977 = vpack.c.b16 %v8936, %v8935
        %v8978 = vpack.c.b16 %v8938, %v8937
        %v8979 = vpack.c.b16 %v8940, %v8939
        %v8980 = vpack.c.b16 %v8942, %v8941
        %v8981 = vpack.c.b16 %v8944, %v8943
        %v8982 = vpack.c.b16 %v8946, %v8945
        %v8983 = vpack.c.b16 %v8948, %v8947
        %v8984 = vpack.c.b16 %v8950, %v8949
        %v8985 = vpack.c.b16 %v8952, %v8951
        %v8986 = vpack.c.b16 %v8954, %v8953
        %v8987 = vpack.c.b16 %v8956, %v8955
        %v8988 = vpack.c.b16 %v8958, %v8957
        %v8989 = vpack.c.b16 %v8960, %v8959
        %v8990 = vpack.c.b16 %v8962, %v8961
        %v8991 = vpack.c.b16 %v8964, %v8963
        %v8992 = vpack.c.b16 %v8966, %v8965
        %v8993 = vpack.c.b16 %v8968, %v8967
        %v8994 = vpack.c.b16 %v8970, %v8969
        %9019 = vmatpush.bf16.msra.mxu0 %v8978
        %9020 = vmatpush.bf16.msra.mxu0 %v8977
        %9021 = vmatpush.bf16.msra.mxu0 %v8976
        %9022 = vmatpush.bf16.msra.mxu0 %v8975
        %9023 = vmatpush.bf16.msra.mxu0 %v8974
        %9024 = vmatpush.bf16.msra.mxu0 %v8973
        %9025 = vmatpush.bf16.msra.mxu0 %v8972
        %9026 = vmatpush.bf16.msra.mxu0 %v8971
        %9027 = vmatmul.bf16.gmra.mxu0 %v8627
        %v9028 = vpop.f32.mrf.mxu0
        %v9029 = vadd.f32 0.0, %v9028
        %v9030 = vpop.f32.mrf.mxu0
        %v9031 = vadd.f32 0.0, %v9030
        %9032 = vmatmul.bf16.gmra.mxu0 %v8628
        %v9033 = vpop.f32.mrf.mxu0
        %v9034 = vadd.f32 0.0, %v9033
        %v9035 = vpop.f32.mrf.mxu0
        %v9036 = vadd.f32 0.0, %v9035
        %9037 = vmatmul.bf16.gmra.mxu0 %v8629
        %v9038 = vpop.f32.mrf.mxu0
        %v9039 = vadd.f32 0.0, %v9038
        %v9040 = vpop.f32.mrf.mxu0
        %v9041 = vadd.f32 0.0, %v9040
        %9042 = vmatmul.bf16.gmra.mxu0 %v8630
        %v9043 = vpop.f32.mrf.mxu0
        %v9044 = vadd.f32 0.0, %v9043
        %v9045 = vpop.f32.mrf.mxu0
        %v9046 = vadd.f32 0.0, %v9045
        %9047 = vmatmul.bf16.gmra.mxu0 %v8631
        %v9048 = vpop.f32.mrf.mxu0
        %v9049 = vadd.f32 0.0, %v9048
        %v9050 = vpop.f32.mrf.mxu0
        %v9051 = vadd.f32 0.0, %v9050
        %9052 = vmatmul.bf16.gmra.mxu0 %v8632
        %v9053 = vpop.f32.mrf.mxu0
        %v9054 = vadd.f32 0.0, %v9053
        %v9055 = vpop.f32.mrf.mxu0
        %v9056 = vadd.f32 0.0, %v9055
        %9057 = vmatmul.bf16.gmra.mxu0 %v8633
        %v9058 = vpop.f32.mrf.mxu0
        %v9059 = vadd.f32 0.0, %v9058
        %v9060 = vpop.f32.mrf.mxu0
        %v9061 = vadd.f32 0.0, %v9060
        %9062 = vmatmul.bf16.gmra.mxu0 %v8634
        %v9063 = vpop.f32.mrf.mxu0
        %v9064 = vadd.f32 0.0, %v9063
        %v9065 = vpop.f32.mrf.mxu0
        %v9066 = vadd.f32 0.0, %v9065
        %9067 = vdwg.mxu0
        %9068 = vmatpush.bf16.msra.mxu0 %v8986
        %9069 = vmatpush.bf16.msra.mxu0 %v8985
        %9070 = vmatpush.bf16.msra.mxu0 %v8984
        %9071 = vmatpush.bf16.msra.mxu0 %v8983
        %9072 = vmatpush.bf16.msra.mxu0 %v8982
        %9073 = vmatpush.bf16.msra.mxu0 %v8981
        %9074 = vmatpush.bf16.msra.mxu0 %v8980
        %9075 = vmatpush.bf16.msra.mxu0 %v8979
        %9076 = vmatmul.bf16.gmra.mxu0 %v8678
        %v9077 = vpop.f32.mrf.mxu0
        %v9078 = vadd.f32 %v9029, %v9077
        %v9079 = vpop.f32.mrf.mxu0
        %v9080 = vadd.f32 %v9031, %v9079
        %9081 = vmatmul.bf16.gmra.mxu0 %v8690
        %v9082 = vpop.f32.mrf.mxu0
        %v9083 = vadd.f32 %v9034, %v9082
        %v9084 = vpop.f32.mrf.mxu0
        %v9085 = vadd.f32 %v9036, %v9084
        %9086 = vmatmul.bf16.gmra.mxu0 %v8702
        %v9087 = vpop.f32.mrf.mxu0
        %v9088 = vadd.f32 %v9039, %v9087
        %v9089 = vpop.f32.mrf.mxu0
        %v9090 = vadd.f32 %v9041, %v9089
        %9091 = vmatmul.bf16.gmra.mxu0 %v8714
        %v9092 = vpop.f32.mrf.mxu0
        %v9093 = vadd.f32 %v9044, %v9092
        %v9094 = vpop.f32.mrf.mxu0
        %v9095 = vadd.f32 %v9046, %v9094
        %9096 = vmatmul.bf16.gmra.mxu0 %v8726
        %v9097 = vpop.f32.mrf.mxu0
        %v9098 = vadd.f32 %v9049, %v9097
        %v9099 = vpop.f32.mrf.mxu0
        %v9100 = vadd.f32 %v9051, %v9099
        %9101 = vmatmul.bf16.gmra.mxu0 %v8738
        %v9102 = vpop.f32.mrf.mxu0
        %v9103 = vadd.f32 %v9054, %v9102
        %v9104 = vpop.f32.mrf.mxu0
        %v9105 = vadd.f32 %v9056, %v9104
        %9106 = vmatmul.bf16.gmra.mxu0 %v8750
        %v9107 = vpop.f32.mrf.mxu0
        %v9108 = vadd.f32 %v9059, %v9107
        %v9109 = vpop.f32.mrf.mxu0
        %v9110 = vadd.f32 %v9061, %v9109
        %9111 = vmatmul.bf16.gmra.mxu0 %v8762
        %v9112 = vpop.f32.mrf.mxu0
        %v9113 = vadd.f32 %v9064, %v9112
        %v9114 = vpop.f32.mrf.mxu0
        %v9115 = vadd.f32 %v9066, %v9114
        %9116 = vdwg.mxu0
        %9117 = vmatpush.bf16.msra.mxu0 %v8994
        %9118 = vmatpush.bf16.msra.mxu0 %v8993
        %9119 = vmatpush.bf16.msra.mxu0 %v8992
        %9120 = vmatpush.bf16.msra.mxu0 %v8991
        %9121 = vmatpush.bf16.msra.mxu0 %v8990
        %9122 = vmatpush.bf16.msra.mxu0 %v8989
        %9123 = vmatpush.bf16.msra.mxu0 %v8988
        %9124 = vmatpush.bf16.msra.mxu0 %v8987
        %9125 = vmatmul.bf16.gmra.mxu0 %v8797
        %v9126 = vpop.f32.mrf.mxu0
        %v9127 = vadd.f32 %v9078, %v9126
        %v9128 = vpop.f32.mrf.mxu0
        %v9129 = vadd.f32 %v9080, %v9128
        %9130 = vmatmul.bf16.gmra.mxu0 %v8800
        %v9131 = vpop.f32.mrf.mxu0
        %v9132 = vadd.f32 %v9083, %v9131
        %v9133 = vpop.f32.mrf.mxu0
        %v9134 = vadd.f32 %v9085, %v9133
        %9135 = vmatmul.bf16.gmra.mxu0 %v8803
        %v9136 = vpop.f32.mrf.mxu0
        %v9137 = vadd.f32 %v9088, %v9136
        %v9138 = vpop.f32.mrf.mxu0
        %v9139 = vadd.f32 %v9090, %v9138
        %9140 = vmatmul.bf16.gmra.mxu0 %v8806
        %v9141 = vpop.f32.mrf.mxu0
        %v9142 = vadd.f32 %v9093, %v9141
        %v9143 = vpop.f32.mrf.mxu0
        %v9144 = vadd.f32 %v9095, %v9143
        %9145 = vmatmul.bf16.gmra.mxu0 %v8809
        %v9146 = vpop.f32.mrf.mxu0
        %v9147 = vadd.f32 %v9098, %v9146
        %v9148 = vpop.f32.mrf.mxu0
        %v9149 = vadd.f32 %v9100, %v9148
        %9150 = vmatmul.bf16.gmra.mxu0 %v8812
        %v9151 = vpop.f32.mrf.mxu0
        %v9152 = vadd.f32 %v9103, %v9151
        %v9153 = vpop.f32.mrf.mxu0
        %v9154 = vadd.f32 %v9105, %v9153
        %9155 = vmatmul.bf16.gmra.mxu0 %v8815
        %v9156 = vpop.f32.mrf.mxu0
        %v9157 = vadd.f32 %v9108, %v9156
        %v9158 = vpop.f32.mrf.mxu0
        %v9159 = vadd.f32 %v9110, %v9158
        %9160 = vmatmul.bf16.gmra.mxu0 %v8818
        %v9161 = vpop.f32.mrf.mxu0
        %v9162 = vadd.f32 %v9113, %v9161
        %v9163 = vpop.f32.mrf.mxu0
        %v9164 = vadd.f32 %v9115, %v9163
        %9165 = vdwg.mxu0
        %v9166 = vadd.f32 %v8561, %v9127
        %v9167 = vadd.f32 %v8561, %v9129
        %v9168 = vadd.f32 %v8561, %v9132
        %v9169 = vadd.f32 %v8561, %v9134
        %v9170 = vadd.f32 %v8561, %v9137
        %v9171 = vadd.f32 %v8561, %v9139
        %v9172 = vadd.f32 %v8561, %v9142
        %v9173 = vadd.f32 %v8561, %v9144
        %v9174 = vadd.f32 %v8561, %v9147
        %v9175 = vadd.f32 %v8561, %v9149
        %v9176 = vadd.f32 %v8561, %v9152
        %v9177 = vadd.f32 %v8561, %v9154
        %v9178 = vadd.f32 %v8561, %v9157
        %v9179 = vadd.f32 %v8561, %v9159
        %v9180 = vadd.f32 %v8561, %v9162
        %v9181 = vadd.f32 %v8561, %v9164
        %v9182 = vld [vmem:[%s4443] sm:$0xf]
        %v9183 = vld [vmem:[%s4443 + $0x4] sm:$0xf]
        %v9184 = vld [vmem:[%s4443 + $0xc] sm:$0xf]
        %v9185 = vld [vmem:[%s4443 + $0x10] sm:$0xf]
        %v9186 = vld [vmem:[%s4443 + $0x18] sm:$0xf]
        %v9187 = vld [vmem:[%s4443 + $0x1c] sm:$0xf]
        %v9188 = vld [vmem:[%s4443 + $0x24] sm:$0xf]
        %v9189 = vld [vmem:[%s4443 + $0x28] sm:$0xf]
        %v9190 = vld [vmem:[%s4443 + $0x30] sm:$0xf]
        %v9191 = vld [vmem:[%s4443 + $0x34] sm:$0xf]
        %v9192 = vld [vmem:[%s4443 + $0x3c] sm:$0xf]
        %v9193 = vld [vmem:[%s4443 + $0x40] sm:$0xf]
        %v9194 = vld [vmem:[%s4443 + $0x48] sm:$0xf]
        %v9195 = vld [vmem:[%s4443 + $0x4c] sm:$0xf]
        %v9196 = vld [vmem:[%s4443 + $0x54] sm:$0xf]
        %v9197 = vld [vmem:[%s4443 + $0x58] sm:$0xf]
        %v9198 = vld [vmem:[%s4443 + $0x8] sm:$0x1]
        %v9199 = vld [vmem:[%s4443 + $0x14] sm:$0x1]
        %v9200 = vld [vmem:[%s4443 + $0x20] sm:$0x1]
        %v9201 = vld [vmem:[%s4443 + $0x2c] sm:$0x1]
        %v9202 = vld [vmem:[%s4443 + $0x38] sm:$0x1]
        %v9203 = vld [vmem:[%s4443 + $0x44] sm:$0x1]
        %v9204 = vld [vmem:[%s4443 + $0x50] sm:$0x1]
        %v9205 = vld [vmem:[%s4443 + $0x5c] sm:$0x1]
        %v9206 = vld [vmem:[%s4443] sm:$0xe]
        %v9207 = vld [vmem:[%s4443 + $0xc] sm:$0xe]
        %v9208 = vld [vmem:[%s4443 + $0x18] sm:$0xe]
        %v9209 = vld [vmem:[%s4443 + $0x24] sm:$0xe]
        %v9210 = vld [vmem:[%s4443 + $0x30] sm:$0xe]
        %v9211 = vld [vmem:[%s4443 + $0x3c] sm:$0xe]
        %v9212 = vld [vmem:[%s4443 + $0x48] sm:$0xe]
        %v9213 = vld [vmem:[%s4443 + $0x54] sm:$0xe]
        %v9230 = vunpack.c.l.b16 %v9182
        %v9231 = vunpack.c.l.b16 %v9183
        %v9232 = vunpack.c.l.b16 %v9184
        %v9233 = vunpack.c.l.b16 %v9185
        %v9234 = vunpack.c.l.b16 %v9186
        %v9235 = vunpack.c.l.b16 %v9187
        %v9236 = vunpack.c.l.b16 %v9188
        %v9237 = vunpack.c.l.b16 %v9189
        %v9238 = vunpack.c.l.b16 %v9190
        %v9239 = vunpack.c.l.b16 %v9191
        %v9240 = vunpack.c.l.b16 %v9192
        %v9241 = vunpack.c.l.b16 %v9193
        %v9242 = vunpack.c.l.b16 %v9194
        %v9243 = vunpack.c.l.b16 %v9195
        %v9244 = vunpack.c.l.b16 %v9196
        %v9245 = vunpack.c.l.b16 %v9197
        %v9246 = vpack.c.b16 %v9231, %v9230
        %v9247 = vpack.c.b16 %v9233, %v9232
        %v9248 = vpack.c.b16 %v9235, %v9234
        %v9249 = vpack.c.b16 %v9237, %v9236
        %v9250 = vpack.c.b16 %v9239, %v9238
        %v9251 = vpack.c.b16 %v9241, %v9240
        %v9252 = vpack.c.b16 %v9243, %v9242
        %v9253 = vpack.c.b16 %v9245, %v9244
        %v9270 = vunpack.c.l.b16 %v9198
        %v9271 = vunpack.c.l.b16 %v9199
        %v9272 = vunpack.c.l.b16 %v9200
        %v9273 = vunpack.c.l.b16 %v9201
        %v9274 = vunpack.c.l.b16 %v9202
        %v9275 = vunpack.c.l.b16 %v9203
        %v9276 = vunpack.c.l.b16 %v9204
        %v9277 = vunpack.c.l.b16 %v9205
        %v9278 = vpack.c.b16 %v9270, %v9270
        %v9279 = vpack.c.b16 %v9271, %v9271
        %v9280 = vpack.c.b16 %v9272, %v9272
        %v9281 = vpack.c.b16 %v9273, %v9273
        %v9282 = vpack.c.b16 %v9274, %v9274
        %v9283 = vpack.c.b16 %v9275, %v9275
        %v9284 = vpack.c.b16 %v9276, %v9276
        %v9285 = vpack.c.b16 %v9277, %v9277
        %v9287 = vshrl.u32 %v9246, 16
        %v9289 = vshll.u32 %v9246, 16
        %v9291 = vrot.slane %v9289, 1
        %v9292 = vor.u32 %v9287, %v9291
        %v9294 = vshll.u32 %v9278, 16
        %v9296 = vrot.slane %v9294, 1
        %v9297 = vsel %vm1581, %v9292, %v9296
        %v9299 = vshrl.u32 %v9247, 16
        %v9301 = vshll.u32 %v9247, 16
        %v9303 = vrot.slane %v9301, 1
        %v9304 = vor.u32 %v9299, %v9303
        %v9306 = vshll.u32 %v9279, 16
        %v9308 = vrot.slane %v9306, 1
        %v9309 = vsel %vm1581, %v9304, %v9308
        %v9311 = vshrl.u32 %v9248, 16
        %v9313 = vshll.u32 %v9248, 16
        %v9315 = vrot.slane %v9313, 1
        %v9316 = vor.u32 %v9311, %v9315
        %v9318 = vshll.u32 %v9280, 16
        %v9320 = vrot.slane %v9318, 1
        %v9321 = vsel %vm1581, %v9316, %v9320
        %v9323 = vshrl.u32 %v9249, 16
        %v9325 = vshll.u32 %v9249, 16
        %v9327 = vrot.slane %v9325, 1
        %v9328 = vor.u32 %v9323, %v9327
        %v9330 = vshll.u32 %v9281, 16
        %v9332 = vrot.slane %v9330, 1
        %v9333 = vsel %vm1581, %v9328, %v9332
        %v9335 = vshrl.u32 %v9250, 16
        %v9337 = vshll.u32 %v9250, 16
        %v9339 = vrot.slane %v9337, 1
        %v9340 = vor.u32 %v9335, %v9339
        %v9342 = vshll.u32 %v9282, 16
        %v9344 = vrot.slane %v9342, 1
        %v9345 = vsel %vm1581, %v9340, %v9344
        %v9347 = vshrl.u32 %v9251, 16
        %v9349 = vshll.u32 %v9251, 16
        %v9351 = vrot.slane %v9349, 1
        %v9352 = vor.u32 %v9347, %v9351
        %v9354 = vshll.u32 %v9283, 16
        %v9356 = vrot.slane %v9354, 1
        %v9357 = vsel %vm1581, %v9352, %v9356
        %v9359 = vshrl.u32 %v9252, 16
        %v9361 = vshll.u32 %v9252, 16
        %v9363 = vrot.slane %v9361, 1
        %v9364 = vor.u32 %v9359, %v9363
        %v9366 = vshll.u32 %v9284, 16
        %v9368 = vrot.slane %v9366, 1
        %v9369 = vsel %vm1581, %v9364, %v9368
        %v9371 = vshrl.u32 %v9253, 16
        %v9373 = vshll.u32 %v9253, 16
        %v9375 = vrot.slane %v9373, 1
        %v9376 = vor.u32 %v9371, %v9375
        %v9378 = vshll.u32 %v9285, 16
        %v9380 = vrot.slane %v9378, 1
        %v9381 = vsel %vm1581, %v9376, %v9380
        %v9398 = vunpack.c.l.b16 %v9206
        %v9399 = vunpack.c.l.b16 %v9207
        %v9400 = vunpack.c.l.b16 %v9208
        %v9401 = vunpack.c.l.b16 %v9209
        %v9402 = vunpack.c.l.b16 %v9210
        %v9403 = vunpack.c.l.b16 %v9211
        %v9404 = vunpack.c.l.b16 %v9212
        %v9405 = vunpack.c.l.b16 %v9213
        %v9406 = vpack.c.b16 %v9231, %v9398
        %v9407 = vpack.c.b16 %v9233, %v9399
        %v9408 = vpack.c.b16 %v9235, %v9400
        %v9409 = vpack.c.b16 %v9237, %v9401
        %v9410 = vpack.c.b16 %v9239, %v9402
        %v9411 = vpack.c.b16 %v9241, %v9403
        %v9412 = vpack.c.b16 %v9243, %v9404
        %v9413 = vpack.c.b16 %v9245, %v9405
        %v9414 = vrot.slane %v9406, 1
        %v9415 = vrot.slane %v9278, 1
        %v9416 = vsel %vm1742, %v9414, %v9415
        %v9417 = vrot.slane %v9407, 1
        %v9418 = vrot.slane %v9279, 1
        %v9419 = vsel %vm1742, %v9417, %v9418
        %v9420 = vrot.slane %v9408, 1
        %v9421 = vrot.slane %v9280, 1
        %v9422 = vsel %vm1742, %v9420, %v9421
        %v9423 = vrot.slane %v9409, 1
        %v9424 = vrot.slane %v9281, 1
        %v9425 = vsel %vm1742, %v9423, %v9424
        %v9426 = vrot.slane %v9410, 1
        %v9427 = vrot.slane %v9282, 1
        %v9428 = vsel %vm1742, %v9426, %v9427
        %v9429 = vrot.slane %v9411, 1
        %v9430 = vrot.slane %v9283, 1
        %v9431 = vsel %vm1742, %v9429, %v9430
        %v9432 = vrot.slane %v9412, 1
        %v9433 = vrot.slane %v9284, 1
        %v9434 = vsel %vm1742, %v9432, %v9433
        %v9435 = vrot.slane %v9413, 1
        %v9436 = vrot.slane %v9285, 1
        %v9437 = vsel %vm1742, %v9435, %v9436
        %v9446 = vld [vmem:[#allocation12] sm:$0xf]
        %v9447 = vld [vmem:[#allocation12 + $0x4] sm:$0xf]
        %v9448 = vld [vmem:[#allocation12 + $0x8] sm:$0xf]
        %v9449 = vld [vmem:[#allocation12 + $0xc] sm:$0xf]
        %v9450 = vld [vmem:[#allocation12 + $0x10] sm:$0xf]
        %v9451 = vld [vmem:[#allocation12 + $0x14] sm:$0xf]
        %v9452 = vld [vmem:[#allocation12 + $0x18] sm:$0xf]
        %v9453 = vld [vmem:[#allocation12 + $0x1c] sm:$0xf]
        %v9454 = vld [vmem:[#allocation12 + $0x20] sm:$0xf]
        %v9455 = vld [vmem:[#allocation12 + $0x24] sm:$0xf]
        %v9456 = vld [vmem:[#allocation12 + $0x28] sm:$0xf]
        %v9457 = vld [vmem:[#allocation12 + $0x2c] sm:$0xf]
        %v9458 = vld [vmem:[#allocation12 + $0x30] sm:$0xf]
        %v9459 = vld [vmem:[#allocation12 + $0x34] sm:$0xf]
        %v9460 = vld [vmem:[#allocation12 + $0x38] sm:$0xf]
        %v9461 = vld [vmem:[#allocation12 + $0x3c] sm:$0xf]
        %v9462 = vld [vmem:[#allocation12 + $0x40] sm:$0xf]
        %v9463 = vld [vmem:[#allocation12 + $0x44] sm:$0xf]
        %v9464 = vld [vmem:[#allocation12 + $0x48] sm:$0xf]
        %v9465 = vld [vmem:[#allocation12 + $0x4c] sm:$0xf]
        %v9466 = vld [vmem:[#allocation12 + $0x50] sm:$0xf]
        %v9467 = vld [vmem:[#allocation12 + $0x54] sm:$0xf]
        %v9468 = vld [vmem:[#allocation12 + $0x58] sm:$0xf]
        %v9469 = vld [vmem:[#allocation12 + $0x5c] sm:$0xf]
        %v9470 = vld [vmem:[#allocation12 + $0x60] sm:$0xf]
        %v9471 = vld [vmem:[#allocation12 + $0x64] sm:$0xf]
        %v9472 = vld [vmem:[#allocation12 + $0x68] sm:$0xf]
        %v9473 = vld [vmem:[#allocation12 + $0x6c] sm:$0xf]
        %v9474 = vld [vmem:[#allocation12 + $0x70] sm:$0xf]
        %v9475 = vld [vmem:[#allocation12 + $0x74] sm:$0xf]
        %v9476 = vld [vmem:[#allocation12 + $0x78] sm:$0xf]
        %v9477 = vld [vmem:[#allocation12 + $0x7c] sm:$0xf]
        %v9478 = vld [vmem:[#allocation12 + $0x80] sm:$0xf]
        %v9479 = vld [vmem:[#allocation12 + $0x84] sm:$0xf]
        %v9480 = vld [vmem:[#allocation12 + $0x88] sm:$0xf]
        %v9481 = vld [vmem:[#allocation12 + $0x8c] sm:$0xf]
        %v9482 = vld [vmem:[#allocation12 + $0x90] sm:$0xf]
        %v9483 = vld [vmem:[#allocation12 + $0x94] sm:$0xf]
        %v9484 = vld [vmem:[#allocation12 + $0x98] sm:$0xf]
        %v9485 = vld [vmem:[#allocation12 + $0x9c] sm:$0xf]
        %v9486 = vld [vmem:[#allocation12 + $0xa0] sm:$0xf]
        %v9487 = vld [vmem:[#allocation12 + $0xa4] sm:$0xf]
        %v9488 = vld [vmem:[#allocation12 + $0xa8] sm:$0xf]
        %v9489 = vld [vmem:[#allocation12 + $0xac] sm:$0xf]
        %v9490 = vld [vmem:[#allocation12 + $0xb0] sm:$0xf]
        %v9491 = vld [vmem:[#allocation12 + $0xb4] sm:$0xf]
        %v9492 = vld [vmem:[#allocation12 + $0xb8] sm:$0xf]
        %v9493 = vld [vmem:[#allocation12 + $0xbc] sm:$0xf]
        %v9542 = vunpack.c.l.b16 %v9446
        %v9543 = vunpack.c.l.b16 %v9447
        %v9544 = vunpack.c.l.b16 %v9448
        %v9545 = vunpack.c.l.b16 %v9449
        %v9546 = vunpack.c.l.b16 %v9450
        %v9547 = vunpack.c.l.b16 %v9451
        %v9548 = vunpack.c.l.b16 %v9452
        %v9549 = vunpack.c.l.b16 %v9453
        %v9550 = vunpack.c.l.b16 %v9454
        %v9551 = vunpack.c.l.b16 %v9455
        %v9552 = vunpack.c.l.b16 %v9456
        %v9553 = vunpack.c.l.b16 %v9457
        %v9554 = vunpack.c.l.b16 %v9458
        %v9555 = vunpack.c.l.b16 %v9459
        %v9556 = vunpack.c.l.b16 %v9460
        %v9557 = vunpack.c.l.b16 %v9461
        %v9558 = vunpack.c.l.b16 %v9462
        %v9559 = vunpack.c.l.b16 %v9463
        %v9560 = vunpack.c.l.b16 %v9464
        %v9561 = vunpack.c.l.b16 %v9465
        %v9562 = vunpack.c.l.b16 %v9466
        %v9563 = vunpack.c.l.b16 %v9467
        %v9564 = vunpack.c.l.b16 %v9468
        %v9565 = vunpack.c.l.b16 %v9469
        %v9566 = vunpack.c.l.b16 %v9470
        %v9567 = vunpack.c.l.b16 %v9471
        %v9568 = vunpack.c.l.b16 %v9472
        %v9569 = vunpack.c.l.b16 %v9473
        %v9570 = vunpack.c.l.b16 %v9474
        %v9571 = vunpack.c.l.b16 %v9475
        %v9572 = vunpack.c.l.b16 %v9476
        %v9573 = vunpack.c.l.b16 %v9477
        %v9574 = vunpack.c.l.b16 %v9478
        %v9575 = vunpack.c.l.b16 %v9479
        %v9576 = vunpack.c.l.b16 %v9480
        %v9577 = vunpack.c.l.b16 %v9481
        %v9578 = vunpack.c.l.b16 %v9482
        %v9579 = vunpack.c.l.b16 %v9483
        %v9580 = vunpack.c.l.b16 %v9484
        %v9581 = vunpack.c.l.b16 %v9485
        %v9582 = vunpack.c.l.b16 %v9486
        %v9583 = vunpack.c.l.b16 %v9487
        %v9584 = vunpack.c.l.b16 %v9488
        %v9585 = vunpack.c.l.b16 %v9489
        %v9586 = vunpack.c.l.b16 %v9490
        %v9587 = vunpack.c.l.b16 %v9491
        %v9588 = vunpack.c.l.b16 %v9492
        %v9589 = vunpack.c.l.b16 %v9493
        %v9590 = vpack.c.b16 %v9543, %v9542
        %v9591 = vpack.c.b16 %v9545, %v9544
        %v9592 = vpack.c.b16 %v9547, %v9546
        %v9593 = vpack.c.b16 %v9549, %v9548
        %v9594 = vpack.c.b16 %v9551, %v9550
        %v9595 = vpack.c.b16 %v9553, %v9552
        %v9596 = vpack.c.b16 %v9555, %v9554
        %v9597 = vpack.c.b16 %v9557, %v9556
        %v9598 = vpack.c.b16 %v9559, %v9558
        %v9599 = vpack.c.b16 %v9561, %v9560
        %v9600 = vpack.c.b16 %v9563, %v9562
        %v9601 = vpack.c.b16 %v9565, %v9564
        %v9602 = vpack.c.b16 %v9567, %v9566
        %v9603 = vpack.c.b16 %v9569, %v9568
        %v9604 = vpack.c.b16 %v9571, %v9570
        %v9605 = vpack.c.b16 %v9573, %v9572
        %v9606 = vpack.c.b16 %v9575, %v9574
        %v9607 = vpack.c.b16 %v9577, %v9576
        %v9608 = vpack.c.b16 %v9579, %v9578
        %v9609 = vpack.c.b16 %v9581, %v9580
        %v9610 = vpack.c.b16 %v9583, %v9582
        %v9611 = vpack.c.b16 %v9585, %v9584
        %v9612 = vpack.c.b16 %v9587, %v9586
        %v9613 = vpack.c.b16 %v9589, %v9588
        %9638 = vmatpush.bf16.msra.mxu0 %v9597
        %9639 = vmatpush.bf16.msra.mxu0 %v9596
        %9640 = vmatpush.bf16.msra.mxu0 %v9595
        %9641 = vmatpush.bf16.msra.mxu0 %v9594
        %9642 = vmatpush.bf16.msra.mxu0 %v9593
        %9643 = vmatpush.bf16.msra.mxu0 %v9592
        %9644 = vmatpush.bf16.msra.mxu0 %v9591
        %9645 = vmatpush.bf16.msra.mxu0 %v9590
        %9646 = vmatmul.bf16.gmra.mxu0 %v9246
        %v9647 = vpop.f32.mrf.mxu0
        %v9648 = vadd.f32 0.0, %v9647
        %v9649 = vpop.f32.mrf.mxu0
        %v9650 = vadd.f32 0.0, %v9649
        %9651 = vmatmul.bf16.gmra.mxu0 %v9247
        %v9652 = vpop.f32.mrf.mxu0
        %v9653 = vadd.f32 0.0, %v9652
        %v9654 = vpop.f32.mrf.mxu0
        %v9655 = vadd.f32 0.0, %v9654
        %9656 = vmatmul.bf16.gmra.mxu0 %v9248
        %v9657 = vpop.f32.mrf.mxu0
        %v9658 = vadd.f32 0.0, %v9657
        %v9659 = vpop.f32.mrf.mxu0
        %v9660 = vadd.f32 0.0, %v9659
        %9661 = vmatmul.bf16.gmra.mxu0 %v9249
        %v9662 = vpop.f32.mrf.mxu0
        %v9663 = vadd.f32 0.0, %v9662
        %v9664 = vpop.f32.mrf.mxu0
        %v9665 = vadd.f32 0.0, %v9664
        %9666 = vmatmul.bf16.gmra.mxu0 %v9250
        %v9667 = vpop.f32.mrf.mxu0
        %v9668 = vadd.f32 0.0, %v9667
        %v9669 = vpop.f32.mrf.mxu0
        %v9670 = vadd.f32 0.0, %v9669
        %9671 = vmatmul.bf16.gmra.mxu0 %v9251
        %v9672 = vpop.f32.mrf.mxu0
        %v9673 = vadd.f32 0.0, %v9672
        %v9674 = vpop.f32.mrf.mxu0
        %v9675 = vadd.f32 0.0, %v9674
        %9676 = vmatmul.bf16.gmra.mxu0 %v9252
        %v9677 = vpop.f32.mrf.mxu0
        %v9678 = vadd.f32 0.0, %v9677
        %v9679 = vpop.f32.mrf.mxu0
        %v9680 = vadd.f32 0.0, %v9679
        %9681 = vmatmul.bf16.gmra.mxu0 %v9253
        %v9682 = vpop.f32.mrf.mxu0
        %v9683 = vadd.f32 0.0, %v9682
        %v9684 = vpop.f32.mrf.mxu0
        %v9685 = vadd.f32 0.0, %v9684
        %9686 = vdwg.mxu0
        %9687 = vmatpush.bf16.msra.mxu0 %v9605
        %9688 = vmatpush.bf16.msra.mxu0 %v9604
        %9689 = vmatpush.bf16.msra.mxu0 %v9603
        %9690 = vmatpush.bf16.msra.mxu0 %v9602
        %9691 = vmatpush.bf16.msra.mxu0 %v9601
        %9692 = vmatpush.bf16.msra.mxu0 %v9600
        %9693 = vmatpush.bf16.msra.mxu0 %v9599
        %9694 = vmatpush.bf16.msra.mxu0 %v9598
        %9695 = vmatmul.bf16.gmra.mxu0 %v9297
        %v9696 = vpop.f32.mrf.mxu0
        %v9697 = vadd.f32 %v9648, %v9696
        %v9698 = vpop.f32.mrf.mxu0
        %v9699 = vadd.f32 %v9650, %v9698
        %9700 = vmatmul.bf16.gmra.mxu0 %v9309
        %v9701 = vpop.f32.mrf.mxu0
        %v9702 = vadd.f32 %v9653, %v9701
        %v9703 = vpop.f32.mrf.mxu0
        %v9704 = vadd.f32 %v9655, %v9703
        %9705 = vmatmul.bf16.gmra.mxu0 %v9321
        %v9706 = vpop.f32.mrf.mxu0
        %v9707 = vadd.f32 %v9658, %v9706
        %v9708 = vpop.f32.mrf.mxu0
        %v9709 = vadd.f32 %v9660, %v9708
        %9710 = vmatmul.bf16.gmra.mxu0 %v9333
        %v9711 = vpop.f32.mrf.mxu0
        %v9712 = vadd.f32 %v9663, %v9711
        %v9713 = vpop.f32.mrf.mxu0
        %v9714 = vadd.f32 %v9665, %v9713
        %9715 = vmatmul.bf16.gmra.mxu0 %v9345
        %v9716 = vpop.f32.mrf.mxu0
        %v9717 = vadd.f32 %v9668, %v9716
        %v9718 = vpop.f32.mrf.mxu0
        %v9719 = vadd.f32 %v9670, %v9718
        %9720 = vmatmul.bf16.gmra.mxu0 %v9357
        %v9721 = vpop.f32.mrf.mxu0
        %v9722 = vadd.f32 %v9673, %v9721
        %v9723 = vpop.f32.mrf.mxu0
        %v9724 = vadd.f32 %v9675, %v9723
        %9725 = vmatmul.bf16.gmra.mxu0 %v9369
        %v9726 = vpop.f32.mrf.mxu0
        %v9727 = vadd.f32 %v9678, %v9726
        %v9728 = vpop.f32.mrf.mxu0
        %v9729 = vadd.f32 %v9680, %v9728
        %9730 = vmatmul.bf16.gmra.mxu0 %v9381
        %v9731 = vpop.f32.mrf.mxu0
        %v9732 = vadd.f32 %v9683, %v9731
        %v9733 = vpop.f32.mrf.mxu0
        %v9734 = vadd.f32 %v9685, %v9733
        %9735 = vdwg.mxu0
        %9736 = vmatpush.bf16.msra.mxu0 %v9613
        %9737 = vmatpush.bf16.msra.mxu0 %v9612
        %9738 = vmatpush.bf16.msra.mxu0 %v9611
        %9739 = vmatpush.bf16.msra.mxu0 %v9610
        %9740 = vmatpush.bf16.msra.mxu0 %v9609
        %9741 = vmatpush.bf16.msra.mxu0 %v9608
        %9742 = vmatpush.bf16.msra.mxu0 %v9607
        %9743 = vmatpush.bf16.msra.mxu0 %v9606
        %9744 = vmatmul.bf16.gmra.mxu0 %v9416
        %v9745 = vpop.f32.mrf.mxu0
        %v9746 = vadd.f32 %v9697, %v9745
        %v9747 = vpop.f32.mrf.mxu0
        %v9748 = vadd.f32 %v9699, %v9747
        %9749 = vmatmul.bf16.gmra.mxu0 %v9419
        %v9750 = vpop.f32.mrf.mxu0
        %v9751 = vadd.f32 %v9702, %v9750
        %v9752 = vpop.f32.mrf.mxu0
        %v9753 = vadd.f32 %v9704, %v9752
        %9754 = vmatmul.bf16.gmra.mxu0 %v9422
        %v9755 = vpop.f32.mrf.mxu0
        %v9756 = vadd.f32 %v9707, %v9755
        %v9757 = vpop.f32.mrf.mxu0
        %v9758 = vadd.f32 %v9709, %v9757
        %9759 = vmatmul.bf16.gmra.mxu0 %v9425
        %v9760 = vpop.f32.mrf.mxu0
        %v9761 = vadd.f32 %v9712, %v9760
        %v9762 = vpop.f32.mrf.mxu0
        %v9763 = vadd.f32 %v9714, %v9762
        %9764 = vmatmul.bf16.gmra.mxu0 %v9428
        %v9765 = vpop.f32.mrf.mxu0
        %v9766 = vadd.f32 %v9717, %v9765
        %v9767 = vpop.f32.mrf.mxu0
        %v9768 = vadd.f32 %v9719, %v9767
        %9769 = vmatmul.bf16.gmra.mxu0 %v9431
        %v9770 = vpop.f32.mrf.mxu0
        %v9771 = vadd.f32 %v9722, %v9770
        %v9772 = vpop.f32.mrf.mxu0
        %v9773 = vadd.f32 %v9724, %v9772
        %9774 = vmatmul.bf16.gmra.mxu0 %v9434
        %v9775 = vpop.f32.mrf.mxu0
        %v9776 = vadd.f32 %v9727, %v9775
        %v9777 = vpop.f32.mrf.mxu0
        %v9778 = vadd.f32 %v9729, %v9777
        %9779 = vmatmul.bf16.gmra.mxu0 %v9437
        %v9780 = vpop.f32.mrf.mxu0
        %v9781 = vadd.f32 %v9732, %v9780
        %v9782 = vpop.f32.mrf.mxu0
        %v9783 = vadd.f32 %v9734, %v9782
        %9784 = vdwg.mxu0
        %v9785 = vadd.f32 %v9166, %v9746
        %v9786 = vadd.f32 %v9167, %v9748
        %v9787 = vadd.f32 %v9168, %v9751
        %v9788 = vadd.f32 %v9169, %v9753
        %v9789 = vadd.f32 %v9170, %v9756
        %v9790 = vadd.f32 %v9171, %v9758
        %v9791 = vadd.f32 %v9172, %v9761
        %v9792 = vadd.f32 %v9173, %v9763
        %v9793 = vadd.f32 %v9174, %v9766
        %v9794 = vadd.f32 %v9175, %v9768
        %v9795 = vadd.f32 %v9176, %v9771
        %v9796 = vadd.f32 %v9177, %v9773
        %v9797 = vadd.f32 %v9178, %v9776
        %v9798 = vadd.f32 %v9179, %v9778
        %v9799 = vadd.f32 %v9180, %v9781
        %v9800 = vadd.f32 %v9181, %v9783
        %v9801 = vld [vmem:[%s1155] sm:$0xf]
        %v9802 = vld [vmem:[%s1155 + $0x4] sm:$0xf]
        %v9803 = vld [vmem:[%s1155 + $0xc] sm:$0xf]
        %v9804 = vld [vmem:[%s1155 + $0x10] sm:$0xf]
        %v9805 = vld [vmem:[%s1155 + $0x18] sm:$0xf]
        %v9806 = vld [vmem:[%s1155 + $0x1c] sm:$0xf]
        %v9807 = vld [vmem:[%s1155 + $0x24] sm:$0xf]
        %v9808 = vld [vmem:[%s1155 + $0x28] sm:$0xf]
        %v9809 = vld [vmem:[%s1155 + $0x30] sm:$0xf]
        %v9810 = vld [vmem:[%s1155 + $0x34] sm:$0xf]
        %v9811 = vld [vmem:[%s1155 + $0x3c] sm:$0xf]
        %v9812 = vld [vmem:[%s1155 + $0x40] sm:$0xf]
        %v9813 = vld [vmem:[%s1155 + $0x48] sm:$0xf]
        %v9814 = vld [vmem:[%s1155 + $0x4c] sm:$0xf]
        %v9815 = vld [vmem:[%s1155 + $0x54] sm:$0xf]
        %v9816 = vld [vmem:[%s1155 + $0x58] sm:$0xf]
        %v9817 = vld [vmem:[%s1155 + $0x8] sm:$0x1]
        %v9818 = vld [vmem:[%s1155 + $0x14] sm:$0x1]
        %v9819 = vld [vmem:[%s1155 + $0x20] sm:$0x1]
        %v9820 = vld [vmem:[%s1155 + $0x2c] sm:$0x1]
        %v9821 = vld [vmem:[%s1155 + $0x38] sm:$0x1]
        %v9822 = vld [vmem:[%s1155 + $0x44] sm:$0x1]
        %v9823 = vld [vmem:[%s1155 + $0x50] sm:$0x1]
        %v9824 = vld [vmem:[%s1155 + $0x5c] sm:$0x1]
        %v9825 = vld [vmem:[%s1155] sm:$0xe]
        %v9826 = vld [vmem:[%s1155 + $0xc] sm:$0xe]
        %v9827 = vld [vmem:[%s1155 + $0x18] sm:$0xe]
        %v9828 = vld [vmem:[%s1155 + $0x24] sm:$0xe]
        %v9829 = vld [vmem:[%s1155 + $0x30] sm:$0xe]
        %v9830 = vld [vmem:[%s1155 + $0x3c] sm:$0xe]
        %v9831 = vld [vmem:[%s1155 + $0x48] sm:$0xe]
        %v9832 = vld [vmem:[%s1155 + $0x54] sm:$0xe]
        %v9849 = vunpack.c.l.b16 %v9801
        %v9850 = vunpack.c.l.b16 %v9802
        %v9851 = vunpack.c.l.b16 %v9803
        %v9852 = vunpack.c.l.b16 %v9804
        %v9853 = vunpack.c.l.b16 %v9805
        %v9854 = vunpack.c.l.b16 %v9806
        %v9855 = vunpack.c.l.b16 %v9807
        %v9856 = vunpack.c.l.b16 %v9808
        %v9857 = vunpack.c.l.b16 %v9809
        %v9858 = vunpack.c.l.b16 %v9810
        %v9859 = vunpack.c.l.b16 %v9811
        %v9860 = vunpack.c.l.b16 %v9812
        %v9861 = vunpack.c.l.b16 %v9813
        %v9862 = vunpack.c.l.b16 %v9814
        %v9863 = vunpack.c.l.b16 %v9815
        %v9864 = vunpack.c.l.b16 %v9816
        %v9865 = vpack.c.b16 %v9850, %v9849
        %v9866 = vpack.c.b16 %v9852, %v9851
        %v9867 = vpack.c.b16 %v9854, %v9853
        %v9868 = vpack.c.b16 %v9856, %v9855
        %v9869 = vpack.c.b16 %v9858, %v9857
        %v9870 = vpack.c.b16 %v9860, %v9859
        %v9871 = vpack.c.b16 %v9862, %v9861
        %v9872 = vpack.c.b16 %v9864, %v9863
        %v9889 = vunpack.c.l.b16 %v9817
        %v9890 = vunpack.c.l.b16 %v9818
        %v9891 = vunpack.c.l.b16 %v9819
        %v9892 = vunpack.c.l.b16 %v9820
        %v9893 = vunpack.c.l.b16 %v9821
        %v9894 = vunpack.c.l.b16 %v9822
        %v9895 = vunpack.c.l.b16 %v9823
        %v9896 = vunpack.c.l.b16 %v9824
        %v9897 = vpack.c.b16 %v9889, %v9889
        %v9898 = vpack.c.b16 %v9890, %v9890
        %v9899 = vpack.c.b16 %v9891, %v9891
        %v9900 = vpack.c.b16 %v9892, %v9892
        %v9901 = vpack.c.b16 %v9893, %v9893
        %v9902 = vpack.c.b16 %v9894, %v9894
        %v9903 = vpack.c.b16 %v9895, %v9895
        %v9904 = vpack.c.b16 %v9896, %v9896
        %v9906 = vshrl.u32 %v9865, 16
        %v9908 = vshll.u32 %v9865, 16
        %v9910 = vrot.slane %v9908, 1
        %v9911 = vor.u32 %v9906, %v9910
        %v9913 = vshll.u32 %v9897, 16
        %v9915 = vrot.slane %v9913, 1
        %v9916 = vsel %vm1581, %v9911, %v9915
        %v9918 = vshrl.u32 %v9866, 16
        %v9920 = vshll.u32 %v9866, 16
        %v9922 = vrot.slane %v9920, 1
        %v9923 = vor.u32 %v9918, %v9922
        %v9925 = vshll.u32 %v9898, 16
        %v9927 = vrot.slane %v9925, 1
        %v9928 = vsel %vm1581, %v9923, %v9927
        %v9930 = vshrl.u32 %v9867, 16
        %v9932 = vshll.u32 %v9867, 16
        %v9934 = vrot.slane %v9932, 1
        %v9935 = vor.u32 %v9930, %v9934
        %v9937 = vshll.u32 %v9899, 16
        %v9939 = vrot.slane %v9937, 1
        %v9940 = vsel %vm1581, %v9935, %v9939
        %v9942 = vshrl.u32 %v9868, 16
        %v9944 = vshll.u32 %v9868, 16
        %v9946 = vrot.slane %v9944, 1
        %v9947 = vor.u32 %v9942, %v9946
        %v9949 = vshll.u32 %v9900, 16
        %v9951 = vrot.slane %v9949, 1
        %v9952 = vsel %vm1581, %v9947, %v9951
        %v9954 = vshrl.u32 %v9869, 16
        %v9956 = vshll.u32 %v9869, 16
        %v9958 = vrot.slane %v9956, 1
        %v9959 = vor.u32 %v9954, %v9958
        %v9961 = vshll.u32 %v9901, 16
        %v9963 = vrot.slane %v9961, 1
        %v9964 = vsel %vm1581, %v9959, %v9963
        %v9966 = vshrl.u32 %v9870, 16
        %v9968 = vshll.u32 %v9870, 16
        %v9970 = vrot.slane %v9968, 1
        %v9971 = vor.u32 %v9966, %v9970
        %v9973 = vshll.u32 %v9902, 16
        %v9975 = vrot.slane %v9973, 1
        %v9976 = vsel %vm1581, %v9971, %v9975
        %v9978 = vshrl.u32 %v9871, 16
        %v9980 = vshll.u32 %v9871, 16
        %v9982 = vrot.slane %v9980, 1
        %v9983 = vor.u32 %v9978, %v9982
        %v9985 = vshll.u32 %v9903, 16
        %v9987 = vrot.slane %v9985, 1
        %v9988 = vsel %vm1581, %v9983, %v9987
        %v9990 = vshrl.u32 %v9872, 16
        %v9992 = vshll.u32 %v9872, 16
        %v9994 = vrot.slane %v9992, 1
        %v9995 = vor.u32 %v9990, %v9994
        %v9997 = vshll.u32 %v9904, 16
        %v9999 = vrot.slane %v9997, 1
        %v10000 = vsel %vm1581, %v9995, %v9999
        %v10017 = vunpack.c.l.b16 %v9825
        %v10018 = vunpack.c.l.b16 %v9826
        %v10019 = vunpack.c.l.b16 %v9827
        %v10020 = vunpack.c.l.b16 %v9828
        %v10021 = vunpack.c.l.b16 %v9829
        %v10022 = vunpack.c.l.b16 %v9830
        %v10023 = vunpack.c.l.b16 %v9831
        %v10024 = vunpack.c.l.b16 %v9832
        %v10025 = vpack.c.b16 %v9850, %v10017
        %v10026 = vpack.c.b16 %v9852, %v10018
        %v10027 = vpack.c.b16 %v9854, %v10019
        %v10028 = vpack.c.b16 %v9856, %v10020
        %v10029 = vpack.c.b16 %v9858, %v10021
        %v10030 = vpack.c.b16 %v9860, %v10022
        %v10031 = vpack.c.b16 %v9862, %v10023
        %v10032 = vpack.c.b16 %v9864, %v10024
        %v10033 = vrot.slane %v10025, 1
        %v10034 = vrot.slane %v9897, 1
        %v10035 = vsel %vm1742, %v10033, %v10034
        %v10036 = vrot.slane %v10026, 1
        %v10037 = vrot.slane %v9898, 1
        %v10038 = vsel %vm1742, %v10036, %v10037
        %v10039 = vrot.slane %v10027, 1
        %v10040 = vrot.slane %v9899, 1
        %v10041 = vsel %vm1742, %v10039, %v10040
        %v10042 = vrot.slane %v10028, 1
        %v10043 = vrot.slane %v9900, 1
        %v10044 = vsel %vm1742, %v10042, %v10043
        %v10045 = vrot.slane %v10029, 1
        %v10046 = vrot.slane %v9901, 1
        %v10047 = vsel %vm1742, %v10045, %v10046
        %v10048 = vrot.slane %v10030, 1
        %v10049 = vrot.slane %v9902, 1
        %v10050 = vsel %vm1742, %v10048, %v10049
        %v10051 = vrot.slane %v10031, 1
        %v10052 = vrot.slane %v9903, 1
        %v10053 = vsel %vm1742, %v10051, %v10052
        %v10054 = vrot.slane %v10032, 1
        %v10055 = vrot.slane %v9904, 1
        %v10056 = vsel %vm1742, %v10054, %v10055
        %s10065 = scalar_lea.vmem %s6, 192
        %v10066 = vld [vmem:[%s10065] sm:$0xf]
        %v10067 = vld [vmem:[%s10065 + $0x4] sm:$0xf]
        %v10068 = vld [vmem:[%s10065 + $0x8] sm:$0xf]
        %v10069 = vld [vmem:[%s10065 + $0xc] sm:$0xf]
        %v10070 = vld [vmem:[%s10065 + $0x10] sm:$0xf]
        %v10071 = vld [vmem:[%s10065 + $0x14] sm:$0xf]
        %v10072 = vld [vmem:[%s10065 + $0x18] sm:$0xf]
        %v10073 = vld [vmem:[%s10065 + $0x1c] sm:$0xf]
        %v10074 = vld [vmem:[%s10065 + $0x20] sm:$0xf]
        %v10075 = vld [vmem:[%s10065 + $0x24] sm:$0xf]
        %v10076 = vld [vmem:[%s10065 + $0x28] sm:$0xf]
        %v10077 = vld [vmem:[%s10065 + $0x2c] sm:$0xf]
        %v10078 = vld [vmem:[%s10065 + $0x30] sm:$0xf]
        %v10079 = vld [vmem:[%s10065 + $0x34] sm:$0xf]
        %v10080 = vld [vmem:[%s10065 + $0x38] sm:$0xf]
        %v10081 = vld [vmem:[%s10065 + $0x3c] sm:$0xf]
        %v10082 = vld [vmem:[%s10065 + $0x40] sm:$0xf]
        %v10083 = vld [vmem:[%s10065 + $0x44] sm:$0xf]
        %v10084 = vld [vmem:[%s10065 + $0x48] sm:$0xf]
        %v10085 = vld [vmem:[%s10065 + $0x4c] sm:$0xf]
        %v10086 = vld [vmem:[%s10065 + $0x50] sm:$0xf]
        %v10087 = vld [vmem:[%s10065 + $0x54] sm:$0xf]
        %v10088 = vld [vmem:[%s10065 + $0x58] sm:$0xf]
        %v10089 = vld [vmem:[%s10065 + $0x5c] sm:$0xf]
        %v10090 = vld [vmem:[%s10065 + $0x60] sm:$0xf]
        %v10091 = vld [vmem:[%s10065 + $0x64] sm:$0xf]
        %v10092 = vld [vmem:[%s10065 + $0x68] sm:$0xf]
        %v10093 = vld [vmem:[%s10065 + $0x6c] sm:$0xf]
        %v10094 = vld [vmem:[%s10065 + $0x70] sm:$0xf]
        %v10095 = vld [vmem:[%s10065 + $0x74] sm:$0xf]
        %v10096 = vld [vmem:[%s10065 + $0x78] sm:$0xf]
        %v10097 = vld [vmem:[%s10065 + $0x7c] sm:$0xf]
        %v10098 = vld [vmem:[%s10065 + $0x80] sm:$0xf]
        %v10099 = vld [vmem:[%s10065 + $0x84] sm:$0xf]
        %v10100 = vld [vmem:[%s10065 + $0x88] sm:$0xf]
        %v10101 = vld [vmem:[%s10065 + $0x8c] sm:$0xf]
        %v10102 = vld [vmem:[%s10065 + $0x90] sm:$0xf]
        %v10103 = vld [vmem:[%s10065 + $0x94] sm:$0xf]
        %v10104 = vld [vmem:[%s10065 + $0x98] sm:$0xf]
        %v10105 = vld [vmem:[%s10065 + $0x9c] sm:$0xf]
        %v10106 = vld [vmem:[%s10065 + $0xa0] sm:$0xf]
        %v10107 = vld [vmem:[%s10065 + $0xa4] sm:$0xf]
        %v10108 = vld [vmem:[%s10065 + $0xa8] sm:$0xf]
        %v10109 = vld [vmem:[%s10065 + $0xac] sm:$0xf]
        %v10110 = vld [vmem:[%s10065 + $0xb0] sm:$0xf]
        %v10111 = vld [vmem:[%s10065 + $0xb4] sm:$0xf]
        %v10112 = vld [vmem:[%s10065 + $0xb8] sm:$0xf]
        %v10113 = vld [vmem:[%s10065 + $0xbc] sm:$0xf]
        %v10162 = vunpack.c.l.b16 %v10066
        %v10163 = vunpack.c.l.b16 %v10067
        %v10164 = vunpack.c.l.b16 %v10068
        %v10165 = vunpack.c.l.b16 %v10069
        %v10166 = vunpack.c.l.b16 %v10070
        %v10167 = vunpack.c.l.b16 %v10071
        %v10168 = vunpack.c.l.b16 %v10072
        %v10169 = vunpack.c.l.b16 %v10073
        %v10170 = vunpack.c.l.b16 %v10074
        %v10171 = vunpack.c.l.b16 %v10075
        %v10172 = vunpack.c.l.b16 %v10076
        %v10173 = vunpack.c.l.b16 %v10077
        %v10174 = vunpack.c.l.b16 %v10078
        %v10175 = vunpack.c.l.b16 %v10079
        %v10176 = vunpack.c.l.b16 %v10080
        %v10177 = vunpack.c.l.b16 %v10081
        %v10178 = vunpack.c.l.b16 %v10082
        %v10179 = vunpack.c.l.b16 %v10083
        %v10180 = vunpack.c.l.b16 %v10084
        %v10181 = vunpack.c.l.b16 %v10085
        %v10182 = vunpack.c.l.b16 %v10086
        %v10183 = vunpack.c.l.b16 %v10087
        %v10184 = vunpack.c.l.b16 %v10088
        %v10185 = vunpack.c.l.b16 %v10089
        %v10186 = vunpack.c.l.b16 %v10090
        %v10187 = vunpack.c.l.b16 %v10091
        %v10188 = vunpack.c.l.b16 %v10092
        %v10189 = vunpack.c.l.b16 %v10093
        %v10190 = vunpack.c.l.b16 %v10094
        %v10191 = vunpack.c.l.b16 %v10095
        %v10192 = vunpack.c.l.b16 %v10096
        %v10193 = vunpack.c.l.b16 %v10097
        %v10194 = vunpack.c.l.b16 %v10098
        %v10195 = vunpack.c.l.b16 %v10099
        %v10196 = vunpack.c.l.b16 %v10100
        %v10197 = vunpack.c.l.b16 %v10101
        %v10198 = vunpack.c.l.b16 %v10102
        %v10199 = vunpack.c.l.b16 %v10103
        %v10200 = vunpack.c.l.b16 %v10104
        %v10201 = vunpack.c.l.b16 %v10105
        %v10202 = vunpack.c.l.b16 %v10106
        %v10203 = vunpack.c.l.b16 %v10107
        %v10204 = vunpack.c.l.b16 %v10108
        %v10205 = vunpack.c.l.b16 %v10109
        %v10206 = vunpack.c.l.b16 %v10110
        %v10207 = vunpack.c.l.b16 %v10111
        %v10208 = vunpack.c.l.b16 %v10112
        %v10209 = vunpack.c.l.b16 %v10113
        %v10210 = vpack.c.b16 %v10163, %v10162
        %v10211 = vpack.c.b16 %v10165, %v10164
        %v10212 = vpack.c.b16 %v10167, %v10166
        %v10213 = vpack.c.b16 %v10169, %v10168
        %v10214 = vpack.c.b16 %v10171, %v10170
        %v10215 = vpack.c.b16 %v10173, %v10172
        %v10216 = vpack.c.b16 %v10175, %v10174
        %v10217 = vpack.c.b16 %v10177, %v10176
        %v10218 = vpack.c.b16 %v10179, %v10178
        %v10219 = vpack.c.b16 %v10181, %v10180
        %v10220 = vpack.c.b16 %v10183, %v10182
        %v10221 = vpack.c.b16 %v10185, %v10184
        %v10222 = vpack.c.b16 %v10187, %v10186
        %v10223 = vpack.c.b16 %v10189, %v10188
        %v10224 = vpack.c.b16 %v10191, %v10190
        %v10225 = vpack.c.b16 %v10193, %v10192
        %v10226 = vpack.c.b16 %v10195, %v10194
        %v10227 = vpack.c.b16 %v10197, %v10196
        %v10228 = vpack.c.b16 %v10199, %v10198
        %v10229 = vpack.c.b16 %v10201, %v10200
        %v10230 = vpack.c.b16 %v10203, %v10202
        %v10231 = vpack.c.b16 %v10205, %v10204
        %v10232 = vpack.c.b16 %v10207, %v10206
        %v10233 = vpack.c.b16 %v10209, %v10208
        %10258 = vmatpush.bf16.msra.mxu0 %v10217
        %10259 = vmatpush.bf16.msra.mxu0 %v10216
        %10260 = vmatpush.bf16.msra.mxu0 %v10215
        %10261 = vmatpush.bf16.msra.mxu0 %v10214
        %10262 = vmatpush.bf16.msra.mxu0 %v10213
        %10263 = vmatpush.bf16.msra.mxu0 %v10212
        %10264 = vmatpush.bf16.msra.mxu0 %v10211
        %10265 = vmatpush.bf16.msra.mxu0 %v10210
        %10266 = vmatmul.bf16.gmra.mxu0 %v9865
        %v10267 = vpop.f32.mrf.mxu0
        %v10268 = vadd.f32 0.0, %v10267
        %v10269 = vpop.f32.mrf.mxu0
        %v10270 = vadd.f32 0.0, %v10269
        %10271 = vmatmul.bf16.gmra.mxu0 %v9866
        %v10272 = vpop.f32.mrf.mxu0
        %v10273 = vadd.f32 0.0, %v10272
        %v10274 = vpop.f32.mrf.mxu0
        %v10275 = vadd.f32 0.0, %v10274
        %10276 = vmatmul.bf16.gmra.mxu0 %v9867
        %v10277 = vpop.f32.mrf.mxu0
        %v10278 = vadd.f32 0.0, %v10277
        %v10279 = vpop.f32.mrf.mxu0
        %v10280 = vadd.f32 0.0, %v10279
        %10281 = vmatmul.bf16.gmra.mxu0 %v9868
        %v10282 = vpop.f32.mrf.mxu0
        %v10283 = vadd.f32 0.0, %v10282
        %v10284 = vpop.f32.mrf.mxu0
        %v10285 = vadd.f32 0.0, %v10284
        %10286 = vmatmul.bf16.gmra.mxu0 %v9869
        %v10287 = vpop.f32.mrf.mxu0
        %v10288 = vadd.f32 0.0, %v10287
        %v10289 = vpop.f32.mrf.mxu0
        %v10290 = vadd.f32 0.0, %v10289
        %10291 = vmatmul.bf16.gmra.mxu0 %v9870
        %v10292 = vpop.f32.mrf.mxu0
        %v10293 = vadd.f32 0.0, %v10292
        %v10294 = vpop.f32.mrf.mxu0
        %v10295 = vadd.f32 0.0, %v10294
        %10296 = vmatmul.bf16.gmra.mxu0 %v9871
        %v10297 = vpop.f32.mrf.mxu0
        %v10298 = vadd.f32 0.0, %v10297
        %v10299 = vpop.f32.mrf.mxu0
        %v10300 = vadd.f32 0.0, %v10299
        %10301 = vmatmul.bf16.gmra.mxu0 %v9872
        %v10302 = vpop.f32.mrf.mxu0
        %v10303 = vadd.f32 0.0, %v10302
        %v10304 = vpop.f32.mrf.mxu0
        %v10305 = vadd.f32 0.0, %v10304
        %10306 = vdwg.mxu0
        %10307 = vmatpush.bf16.msra.mxu0 %v10225
        %10308 = vmatpush.bf16.msra.mxu0 %v10224
        %10309 = vmatpush.bf16.msra.mxu0 %v10223
        %10310 = vmatpush.bf16.msra.mxu0 %v10222
        %10311 = vmatpush.bf16.msra.mxu0 %v10221
        %10312 = vmatpush.bf16.msra.mxu0 %v10220
        %10313 = vmatpush.bf16.msra.mxu0 %v10219
        %10314 = vmatpush.bf16.msra.mxu0 %v10218
        %10315 = vmatmul.bf16.gmra.mxu0 %v9916
        %v10316 = vpop.f32.mrf.mxu0
        %v10317 = vadd.f32 %v10268, %v10316
        %v10318 = vpop.f32.mrf.mxu0
        %v10319 = vadd.f32 %v10270, %v10318
        %10320 = vmatmul.bf16.gmra.mxu0 %v9928
        %v10321 = vpop.f32.mrf.mxu0
        %v10322 = vadd.f32 %v10273, %v10321
        %v10323 = vpop.f32.mrf.mxu0
        %v10324 = vadd.f32 %v10275, %v10323
        %10325 = vmatmul.bf16.gmra.mxu0 %v9940
        %v10326 = vpop.f32.mrf.mxu0
        %v10327 = vadd.f32 %v10278, %v10326
        %v10328 = vpop.f32.mrf.mxu0
        %v10329 = vadd.f32 %v10280, %v10328
        %10330 = vmatmul.bf16.gmra.mxu0 %v9952
        %v10331 = vpop.f32.mrf.mxu0
        %v10332 = vadd.f32 %v10283, %v10331
        %v10333 = vpop.f32.mrf.mxu0
        %v10334 = vadd.f32 %v10285, %v10333
        %10335 = vmatmul.bf16.gmra.mxu0 %v9964
        %v10336 = vpop.f32.mrf.mxu0
        %v10337 = vadd.f32 %v10288, %v10336
        %v10338 = vpop.f32.mrf.mxu0
        %v10339 = vadd.f32 %v10290, %v10338
        %10340 = vmatmul.bf16.gmra.mxu0 %v9976
        %v10341 = vpop.f32.mrf.mxu0
        %v10342 = vadd.f32 %v10293, %v10341
        %v10343 = vpop.f32.mrf.mxu0
        %v10344 = vadd.f32 %v10295, %v10343
        %10345 = vmatmul.bf16.gmra.mxu0 %v9988
        %v10346 = vpop.f32.mrf.mxu0
        %v10347 = vadd.f32 %v10298, %v10346
        %v10348 = vpop.f32.mrf.mxu0
        %v10349 = vadd.f32 %v10300, %v10348
        %10350 = vmatmul.bf16.gmra.mxu0 %v10000
        %v10351 = vpop.f32.mrf.mxu0
        %v10352 = vadd.f32 %v10303, %v10351
        %v10353 = vpop.f32.mrf.mxu0
        %v10354 = vadd.f32 %v10305, %v10353
        %10355 = vdwg.mxu0
        %10356 = vmatpush.bf16.msra.mxu0 %v10233
        %10357 = vmatpush.bf16.msra.mxu0 %v10232
        %10358 = vmatpush.bf16.msra.mxu0 %v10231
        %10359 = vmatpush.bf16.msra.mxu0 %v10230
        %10360 = vmatpush.bf16.msra.mxu0 %v10229
        %10361 = vmatpush.bf16.msra.mxu0 %v10228
        %10362 = vmatpush.bf16.msra.mxu0 %v10227
        %10363 = vmatpush.bf16.msra.mxu0 %v10226
        %10364 = vmatmul.bf16.gmra.mxu0 %v10035
        %v10365 = vpop.f32.mrf.mxu0
        %v10366 = vadd.f32 %v10317, %v10365
        %v10367 = vpop.f32.mrf.mxu0
        %v10368 = vadd.f32 %v10319, %v10367
        %10369 = vmatmul.bf16.gmra.mxu0 %v10038
        %v10370 = vpop.f32.mrf.mxu0
        %v10371 = vadd.f32 %v10322, %v10370
        %v10372 = vpop.f32.mrf.mxu0
        %v10373 = vadd.f32 %v10324, %v10372
        %10374 = vmatmul.bf16.gmra.mxu0 %v10041
        %v10375 = vpop.f32.mrf.mxu0
        %v10376 = vadd.f32 %v10327, %v10375
        %v10377 = vpop.f32.mrf.mxu0
        %v10378 = vadd.f32 %v10329, %v10377
        %10379 = vmatmul.bf16.gmra.mxu0 %v10044
        %v10380 = vpop.f32.mrf.mxu0
        %v10381 = vadd.f32 %v10332, %v10380
        %v10382 = vpop.f32.mrf.mxu0
        %v10383 = vadd.f32 %v10334, %v10382
        %10384 = vmatmul.bf16.gmra.mxu0 %v10047
        %v10385 = vpop.f32.mrf.mxu0
        %v10386 = vadd.f32 %v10337, %v10385
        %v10387 = vpop.f32.mrf.mxu0
        %v10388 = vadd.f32 %v10339, %v10387
        %10389 = vmatmul.bf16.gmra.mxu0 %v10050
        %v10390 = vpop.f32.mrf.mxu0
        %v10391 = vadd.f32 %v10342, %v10390
        %v10392 = vpop.f32.mrf.mxu0
        %v10393 = vadd.f32 %v10344, %v10392
        %10394 = vmatmul.bf16.gmra.mxu0 %v10053
        %v10395 = vpop.f32.mrf.mxu0
        %v10396 = vadd.f32 %v10347, %v10395
        %v10397 = vpop.f32.mrf.mxu0
        %v10398 = vadd.f32 %v10349, %v10397
        %10399 = vmatmul.bf16.gmra.mxu0 %v10056
        %v10400 = vpop.f32.mrf.mxu0
        %v10401 = vadd.f32 %v10352, %v10400
        %v10402 = vpop.f32.mrf.mxu0
        %v10403 = vadd.f32 %v10354, %v10402
        %10404 = vdwg.mxu0
        %v10405 = vadd.f32 %v9785, %v10366
        %v10406 = vadd.f32 %v9786, %v10368
        %v10407 = vadd.f32 %v9787, %v10371
        %v10408 = vadd.f32 %v9788, %v10373
        %v10409 = vadd.f32 %v9789, %v10376
        %v10410 = vadd.f32 %v9790, %v10378
        %v10411 = vadd.f32 %v9791, %v10381
        %v10412 = vadd.f32 %v9792, %v10383
        %v10413 = vadd.f32 %v9793, %v10386
        %v10414 = vadd.f32 %v9794, %v10388
        %v10415 = vadd.f32 %v9795, %v10391
        %v10416 = vadd.f32 %v9796, %v10393
        %v10417 = vadd.f32 %v9797, %v10396
        %v10418 = vadd.f32 %v9798, %v10398
        %v10419 = vadd.f32 %v9799, %v10401
        %v10420 = vadd.f32 %v9800, %v10403
        %v10421 = vld [vmem:[%s1388] sm:$0xf]
        %v10422 = vld [vmem:[%s1388 + $0x4] sm:$0xf]
        %v10423 = vld [vmem:[%s1388 + $0xc] sm:$0xf]
        %v10424 = vld [vmem:[%s1388 + $0x10] sm:$0xf]
        %v10425 = vld [vmem:[%s1388 + $0x18] sm:$0xf]
        %v10426 = vld [vmem:[%s1388 + $0x1c] sm:$0xf]
        %v10427 = vld [vmem:[%s1388 + $0x24] sm:$0xf]
        %v10428 = vld [vmem:[%s1388 + $0x28] sm:$0xf]
        %v10429 = vld [vmem:[%s1388 + $0x30] sm:$0xf]
        %v10430 = vld [vmem:[%s1388 + $0x34] sm:$0xf]
        %v10431 = vld [vmem:[%s1388 + $0x3c] sm:$0xf]
        %v10432 = vld [vmem:[%s1388 + $0x40] sm:$0xf]
        %v10433 = vld [vmem:[%s1388 + $0x48] sm:$0xf]
        %v10434 = vld [vmem:[%s1388 + $0x4c] sm:$0xf]
        %v10435 = vld [vmem:[%s1388 + $0x54] sm:$0xf]
        %v10436 = vld [vmem:[%s1388 + $0x58] sm:$0xf]
        %v10437 = vld [vmem:[%s1388 + $0x8] sm:$0x1]
        %v10438 = vld [vmem:[%s1388 + $0x14] sm:$0x1]
        %v10439 = vld [vmem:[%s1388 + $0x20] sm:$0x1]
        %v10440 = vld [vmem:[%s1388 + $0x2c] sm:$0x1]
        %v10441 = vld [vmem:[%s1388 + $0x38] sm:$0x1]
        %v10442 = vld [vmem:[%s1388 + $0x44] sm:$0x1]
        %v10443 = vld [vmem:[%s1388 + $0x50] sm:$0x1]
        %v10444 = vld [vmem:[%s1388 + $0x5c] sm:$0x1]
        %v10445 = vld [vmem:[%s1388] sm:$0xe]
        %v10446 = vld [vmem:[%s1388 + $0xc] sm:$0xe]
        %v10447 = vld [vmem:[%s1388 + $0x18] sm:$0xe]
        %v10448 = vld [vmem:[%s1388 + $0x24] sm:$0xe]
        %v10449 = vld [vmem:[%s1388 + $0x30] sm:$0xe]
        %v10450 = vld [vmem:[%s1388 + $0x3c] sm:$0xe]
        %v10451 = vld [vmem:[%s1388 + $0x48] sm:$0xe]
        %v10452 = vld [vmem:[%s1388 + $0x54] sm:$0xe]
        %v10469 = vunpack.c.l.b16 %v10421
        %v10470 = vunpack.c.l.b16 %v10422
        %v10471 = vunpack.c.l.b16 %v10423
        %v10472 = vunpack.c.l.b16 %v10424
        %v10473 = vunpack.c.l.b16 %v10425
        %v10474 = vunpack.c.l.b16 %v10426
        %v10475 = vunpack.c.l.b16 %v10427
        %v10476 = vunpack.c.l.b16 %v10428
        %v10477 = vunpack.c.l.b16 %v10429
        %v10478 = vunpack.c.l.b16 %v10430
        %v10479 = vunpack.c.l.b16 %v10431
        %v10480 = vunpack.c.l.b16 %v10432
        %v10481 = vunpack.c.l.b16 %v10433
        %v10482 = vunpack.c.l.b16 %v10434
        %v10483 = vunpack.c.l.b16 %v10435
        %v10484 = vunpack.c.l.b16 %v10436
        %v10485 = vpack.c.b16 %v10470, %v10469
        %v10486 = vpack.c.b16 %v10472, %v10471
        %v10487 = vpack.c.b16 %v10474, %v10473
        %v10488 = vpack.c.b16 %v10476, %v10475
        %v10489 = vpack.c.b16 %v10478, %v10477
        %v10490 = vpack.c.b16 %v10480, %v10479
        %v10491 = vpack.c.b16 %v10482, %v10481
        %v10492 = vpack.c.b16 %v10484, %v10483
        %v10509 = vunpack.c.l.b16 %v10437
        %v10510 = vunpack.c.l.b16 %v10438
        %v10511 = vunpack.c.l.b16 %v10439
        %v10512 = vunpack.c.l.b16 %v10440
        %v10513 = vunpack.c.l.b16 %v10441
        %v10514 = vunpack.c.l.b16 %v10442
        %v10515 = vunpack.c.l.b16 %v10443
        %v10516 = vunpack.c.l.b16 %v10444
        %v10517 = vpack.c.b16 %v10509, %v10509
        %v10518 = vpack.c.b16 %v10510, %v10510
        %v10519 = vpack.c.b16 %v10511, %v10511
        %v10520 = vpack.c.b16 %v10512, %v10512
        %v10521 = vpack.c.b16 %v10513, %v10513
        %v10522 = vpack.c.b16 %v10514, %v10514
        %v10523 = vpack.c.b16 %v10515, %v10515
        %v10524 = vpack.c.b16 %v10516, %v10516
        %v10526 = vshrl.u32 %v10485, 16
        %v10528 = vshll.u32 %v10485, 16
        %v10530 = vrot.slane %v10528, 1
        %v10531 = vor.u32 %v10526, %v10530
        %v10533 = vshll.u32 %v10517, 16
        %v10535 = vrot.slane %v10533, 1
        %v10536 = vsel %vm1581, %v10531, %v10535
        %v10538 = vshrl.u32 %v10486, 16
        %v10540 = vshll.u32 %v10486, 16
        %v10542 = vrot.slane %v10540, 1
        %v10543 = vor.u32 %v10538, %v10542
        %v10545 = vshll.u32 %v10518, 16
        %v10547 = vrot.slane %v10545, 1
        %v10548 = vsel %vm1581, %v10543, %v10547
        %v10550 = vshrl.u32 %v10487, 16
        %v10552 = vshll.u32 %v10487, 16
        %v10554 = vrot.slane %v10552, 1
        %v10555 = vor.u32 %v10550, %v10554
        %v10557 = vshll.u32 %v10519, 16
        %v10559 = vrot.slane %v10557, 1
        %v10560 = vsel %vm1581, %v10555, %v10559
        %v10562 = vshrl.u32 %v10488, 16
        %v10564 = vshll.u32 %v10488, 16
        %v10566 = vrot.slane %v10564, 1
        %v10567 = vor.u32 %v10562, %v10566
        %v10569 = vshll.u32 %v10520, 16
        %v10571 = vrot.slane %v10569, 1
        %v10572 = vsel %vm1581, %v10567, %v10571
        %v10574 = vshrl.u32 %v10489, 16
        %v10576 = vshll.u32 %v10489, 16
        %v10578 = vrot.slane %v10576, 1
        %v10579 = vor.u32 %v10574, %v10578
        %v10581 = vshll.u32 %v10521, 16
        %v10583 = vrot.slane %v10581, 1
        %v10584 = vsel %vm1581, %v10579, %v10583
        %v10586 = vshrl.u32 %v10490, 16
        %v10588 = vshll.u32 %v10490, 16
        %v10590 = vrot.slane %v10588, 1
        %v10591 = vor.u32 %v10586, %v10590
        %v10593 = vshll.u32 %v10522, 16
        %v10595 = vrot.slane %v10593, 1
        %v10596 = vsel %vm1581, %v10591, %v10595
        %v10598 = vshrl.u32 %v10491, 16
        %v10600 = vshll.u32 %v10491, 16
        %v10602 = vrot.slane %v10600, 1
        %v10603 = vor.u32 %v10598, %v10602
        %v10605 = vshll.u32 %v10523, 16
        %v10607 = vrot.slane %v10605, 1
        %v10608 = vsel %vm1581, %v10603, %v10607
        %v10610 = vshrl.u32 %v10492, 16
        %v10612 = vshll.u32 %v10492, 16
        %v10614 = vrot.slane %v10612, 1
        %v10615 = vor.u32 %v10610, %v10614
        %v10617 = vshll.u32 %v10524, 16
        %v10619 = vrot.slane %v10617, 1
        %v10620 = vsel %vm1581, %v10615, %v10619
        %v10637 = vunpack.c.l.b16 %v10445
        %v10638 = vunpack.c.l.b16 %v10446
        %v10639 = vunpack.c.l.b16 %v10447
        %v10640 = vunpack.c.l.b16 %v10448
        %v10641 = vunpack.c.l.b16 %v10449
        %v10642 = vunpack.c.l.b16 %v10450
        %v10643 = vunpack.c.l.b16 %v10451
        %v10644 = vunpack.c.l.b16 %v10452
        %v10645 = vpack.c.b16 %v10470, %v10637
        %v10646 = vpack.c.b16 %v10472, %v10638
        %v10647 = vpack.c.b16 %v10474, %v10639
        %v10648 = vpack.c.b16 %v10476, %v10640
        %v10649 = vpack.c.b16 %v10478, %v10641
        %v10650 = vpack.c.b16 %v10480, %v10642
        %v10651 = vpack.c.b16 %v10482, %v10643
        %v10652 = vpack.c.b16 %v10484, %v10644
        %v10653 = vrot.slane %v10645, 1
        %v10654 = vrot.slane %v10517, 1
        %v10655 = vsel %vm1742, %v10653, %v10654
        %v10656 = vrot.slane %v10646, 1
        %v10657 = vrot.slane %v10518, 1
        %v10658 = vsel %vm1742, %v10656, %v10657
        %v10659 = vrot.slane %v10647, 1
        %v10660 = vrot.slane %v10519, 1
        %v10661 = vsel %vm1742, %v10659, %v10660
        %v10662 = vrot.slane %v10648, 1
        %v10663 = vrot.slane %v10520, 1
        %v10664 = vsel %vm1742, %v10662, %v10663
        %v10665 = vrot.slane %v10649, 1
        %v10666 = vrot.slane %v10521, 1
        %v10667 = vsel %vm1742, %v10665, %v10666
        %v10668 = vrot.slane %v10650, 1
        %v10669 = vrot.slane %v10522, 1
        %v10670 = vsel %vm1742, %v10668, %v10669
        %v10671 = vrot.slane %v10651, 1
        %v10672 = vrot.slane %v10523, 1
        %v10673 = vsel %vm1742, %v10671, %v10672
        %v10674 = vrot.slane %v10652, 1
        %v10675 = vrot.slane %v10524, 1
        %v10676 = vsel %vm1742, %v10674, %v10675
        %s10685 = scalar_lea.vmem [#allocation12], 192
        %v10686 = vld [vmem:[%s10685] sm:$0xf]
        %v10687 = vld [vmem:[%s10685 + $0x4] sm:$0xf]
        %v10688 = vld [vmem:[%s10685 + $0x8] sm:$0xf]
        %v10689 = vld [vmem:[%s10685 + $0xc] sm:$0xf]
        %v10690 = vld [vmem:[%s10685 + $0x10] sm:$0xf]
        %v10691 = vld [vmem:[%s10685 + $0x14] sm:$0xf]
        %v10692 = vld [vmem:[%s10685 + $0x18] sm:$0xf]
        %v10693 = vld [vmem:[%s10685 + $0x1c] sm:$0xf]
        %v10694 = vld [vmem:[%s10685 + $0x20] sm:$0xf]
        %v10695 = vld [vmem:[%s10685 + $0x24] sm:$0xf]
        %v10696 = vld [vmem:[%s10685 + $0x28] sm:$0xf]
        %v10697 = vld [vmem:[%s10685 + $0x2c] sm:$0xf]
        %v10698 = vld [vmem:[%s10685 + $0x30] sm:$0xf]
        %v10699 = vld [vmem:[%s10685 + $0x34] sm:$0xf]
        %v10700 = vld [vmem:[%s10685 + $0x38] sm:$0xf]
        %v10701 = vld [vmem:[%s10685 + $0x3c] sm:$0xf]
        %v10702 = vld [vmem:[%s10685 + $0x40] sm:$0xf]
        %v10703 = vld [vmem:[%s10685 + $0x44] sm:$0xf]
        %v10704 = vld [vmem:[%s10685 + $0x48] sm:$0xf]
        %v10705 = vld [vmem:[%s10685 + $0x4c] sm:$0xf]
        %v10706 = vld [vmem:[%s10685 + $0x50] sm:$0xf]
        %v10707 = vld [vmem:[%s10685 + $0x54] sm:$0xf]
        %v10708 = vld [vmem:[%s10685 + $0x58] sm:$0xf]
        %v10709 = vld [vmem:[%s10685 + $0x5c] sm:$0xf]
        %v10710 = vld [vmem:[%s10685 + $0x60] sm:$0xf]
        %v10711 = vld [vmem:[%s10685 + $0x64] sm:$0xf]
        %v10712 = vld [vmem:[%s10685 + $0x68] sm:$0xf]
        %v10713 = vld [vmem:[%s10685 + $0x6c] sm:$0xf]
        %v10714 = vld [vmem:[%s10685 + $0x70] sm:$0xf]
        %v10715 = vld [vmem:[%s10685 + $0x74] sm:$0xf]
        %v10716 = vld [vmem:[%s10685 + $0x78] sm:$0xf]
        %v10717 = vld [vmem:[%s10685 + $0x7c] sm:$0xf]
        %v10718 = vld [vmem:[%s10685 + $0x80] sm:$0xf]
        %v10719 = vld [vmem:[%s10685 + $0x84] sm:$0xf]
        %v10720 = vld [vmem:[%s10685 + $0x88] sm:$0xf]
        %v10721 = vld [vmem:[%s10685 + $0x8c] sm:$0xf]
        %v10722 = vld [vmem:[%s10685 + $0x90] sm:$0xf]
        %v10723 = vld [vmem:[%s10685 + $0x94] sm:$0xf]
        %v10724 = vld [vmem:[%s10685 + $0x98] sm:$0xf]
        %v10725 = vld [vmem:[%s10685 + $0x9c] sm:$0xf]
        %v10726 = vld [vmem:[%s10685 + $0xa0] sm:$0xf]
        %v10727 = vld [vmem:[%s10685 + $0xa4] sm:$0xf]
        %v10728 = vld [vmem:[%s10685 + $0xa8] sm:$0xf]
        %v10729 = vld [vmem:[%s10685 + $0xac] sm:$0xf]
        %v10730 = vld [vmem:[%s10685 + $0xb0] sm:$0xf]
        %v10731 = vld [vmem:[%s10685 + $0xb4] sm:$0xf]
        %v10732 = vld [vmem:[%s10685 + $0xb8] sm:$0xf]
        %v10733 = vld [vmem:[%s10685 + $0xbc] sm:$0xf]
        %v10782 = vunpack.c.l.b16 %v10686
        %v10783 = vunpack.c.l.b16 %v10687
        %v10784 = vunpack.c.l.b16 %v10688
        %v10785 = vunpack.c.l.b16 %v10689
        %v10786 = vunpack.c.l.b16 %v10690
        %v10787 = vunpack.c.l.b16 %v10691
        %v10788 = vunpack.c.l.b16 %v10692
        %v10789 = vunpack.c.l.b16 %v10693
        %v10790 = vunpack.c.l.b16 %v10694
        %v10791 = vunpack.c.l.b16 %v10695
        %v10792 = vunpack.c.l.b16 %v10696
        %v10793 = vunpack.c.l.b16 %v10697
        %v10794 = vunpack.c.l.b16 %v10698
        %v10795 = vunpack.c.l.b16 %v10699
        %v10796 = vunpack.c.l.b16 %v10700
        %v10797 = vunpack.c.l.b16 %v10701
        %v10798 = vunpack.c.l.b16 %v10702
        %v10799 = vunpack.c.l.b16 %v10703
        %v10800 = vunpack.c.l.b16 %v10704
        %v10801 = vunpack.c.l.b16 %v10705
        %v10802 = vunpack.c.l.b16 %v10706
        %v10803 = vunpack.c.l.b16 %v10707
        %v10804 = vunpack.c.l.b16 %v10708
        %v10805 = vunpack.c.l.b16 %v10709
        %v10806 = vunpack.c.l.b16 %v10710
        %v10807 = vunpack.c.l.b16 %v10711
        %v10808 = vunpack.c.l.b16 %v10712
        %v10809 = vunpack.c.l.b16 %v10713
        %v10810 = vunpack.c.l.b16 %v10714
        %v10811 = vunpack.c.l.b16 %v10715
        %v10812 = vunpack.c.l.b16 %v10716
        %v10813 = vunpack.c.l.b16 %v10717
        %v10814 = vunpack.c.l.b16 %v10718
        %v10815 = vunpack.c.l.b16 %v10719
        %v10816 = vunpack.c.l.b16 %v10720
        %v10817 = vunpack.c.l.b16 %v10721
        %v10818 = vunpack.c.l.b16 %v10722
        %v10819 = vunpack.c.l.b16 %v10723
        %v10820 = vunpack.c.l.b16 %v10724
        %v10821 = vunpack.c.l.b16 %v10725
        %v10822 = vunpack.c.l.b16 %v10726
        %v10823 = vunpack.c.l.b16 %v10727
        %v10824 = vunpack.c.l.b16 %v10728
        %v10825 = vunpack.c.l.b16 %v10729
        %v10826 = vunpack.c.l.b16 %v10730
        %v10827 = vunpack.c.l.b16 %v10731
        %v10828 = vunpack.c.l.b16 %v10732
        %v10829 = vunpack.c.l.b16 %v10733
        %v10830 = vpack.c.b16 %v10783, %v10782
        %v10831 = vpack.c.b16 %v10785, %v10784
        %v10832 = vpack.c.b16 %v10787, %v10786
        %v10833 = vpack.c.b16 %v10789, %v10788
        %v10834 = vpack.c.b16 %v10791, %v10790
        %v10835 = vpack.c.b16 %v10793, %v10792
        %v10836 = vpack.c.b16 %v10795, %v10794
        %v10837 = vpack.c.b16 %v10797, %v10796
        %v10838 = vpack.c.b16 %v10799, %v10798
        %v10839 = vpack.c.b16 %v10801, %v10800
        %v10840 = vpack.c.b16 %v10803, %v10802
        %v10841 = vpack.c.b16 %v10805, %v10804
        %v10842 = vpack.c.b16 %v10807, %v10806
        %v10843 = vpack.c.b16 %v10809, %v10808
        %v10844 = vpack.c.b16 %v10811, %v10810
        %v10845 = vpack.c.b16 %v10813, %v10812
        %v10846 = vpack.c.b16 %v10815, %v10814
        %v10847 = vpack.c.b16 %v10817, %v10816
        %v10848 = vpack.c.b16 %v10819, %v10818
        %v10849 = vpack.c.b16 %v10821, %v10820
        %v10850 = vpack.c.b16 %v10823, %v10822
        %v10851 = vpack.c.b16 %v10825, %v10824
        %v10852 = vpack.c.b16 %v10827, %v10826
        %v10853 = vpack.c.b16 %v10829, %v10828
        %10878 = vmatpush.bf16.msra.mxu0 %v10837
        %10879 = vmatpush.bf16.msra.mxu0 %v10836
        %10880 = vmatpush.bf16.msra.mxu0 %v10835
        %10881 = vmatpush.bf16.msra.mxu0 %v10834
        %10882 = vmatpush.bf16.msra.mxu0 %v10833
        %10883 = vmatpush.bf16.msra.mxu0 %v10832
        %10884 = vmatpush.bf16.msra.mxu0 %v10831
        %10885 = vmatpush.bf16.msra.mxu0 %v10830
        %10886 = vmatmul.bf16.gmra.mxu0 %v10485
        %v10887 = vpop.f32.mrf.mxu0
        %v10888 = vadd.f32 0.0, %v10887
        %v10889 = vpop.f32.mrf.mxu0
        %v10890 = vadd.f32 0.0, %v10889
        %10891 = vmatmul.bf16.gmra.mxu0 %v10486
        %v10892 = vpop.f32.mrf.mxu0
        %v10893 = vadd.f32 0.0, %v10892
        %v10894 = vpop.f32.mrf.mxu0
        %v10895 = vadd.f32 0.0, %v10894
        %10896 = vmatmul.bf16.gmra.mxu0 %v10487
        %v10897 = vpop.f32.mrf.mxu0
        %v10898 = vadd.f32 0.0, %v10897
        %v10899 = vpop.f32.mrf.mxu0
        %v10900 = vadd.f32 0.0, %v10899
        %10901 = vmatmul.bf16.gmra.mxu0 %v10488
        %v10902 = vpop.f32.mrf.mxu0
        %v10903 = vadd.f32 0.0, %v10902
        %v10904 = vpop.f32.mrf.mxu0
        %v10905 = vadd.f32 0.0, %v10904
        %10906 = vmatmul.bf16.gmra.mxu0 %v10489
        %v10907 = vpop.f32.mrf.mxu0
        %v10908 = vadd.f32 0.0, %v10907
        %v10909 = vpop.f32.mrf.mxu0
        %v10910 = vadd.f32 0.0, %v10909
        %10911 = vmatmul.bf16.gmra.mxu0 %v10490
        %v10912 = vpop.f32.mrf.mxu0
        %v10913 = vadd.f32 0.0, %v10912
        %v10914 = vpop.f32.mrf.mxu0
        %v10915 = vadd.f32 0.0, %v10914
        %10916 = vmatmul.bf16.gmra.mxu0 %v10491
        %v10917 = vpop.f32.mrf.mxu0
        %v10918 = vadd.f32 0.0, %v10917
        %v10919 = vpop.f32.mrf.mxu0
        %v10920 = vadd.f32 0.0, %v10919
        %10921 = vmatmul.bf16.gmra.mxu0 %v10492
        %v10922 = vpop.f32.mrf.mxu0
        %v10923 = vadd.f32 0.0, %v10922
        %v10924 = vpop.f32.mrf.mxu0
        %v10925 = vadd.f32 0.0, %v10924
        %10926 = vdwg.mxu0
        %10927 = vmatpush.bf16.msra.mxu0 %v10845
        %10928 = vmatpush.bf16.msra.mxu0 %v10844
        %10929 = vmatpush.bf16.msra.mxu0 %v10843
        %10930 = vmatpush.bf16.msra.mxu0 %v10842
        %10931 = vmatpush.bf16.msra.mxu0 %v10841
        %10932 = vmatpush.bf16.msra.mxu0 %v10840
        %10933 = vmatpush.bf16.msra.mxu0 %v10839
        %10934 = vmatpush.bf16.msra.mxu0 %v10838
        %10935 = vmatmul.bf16.gmra.mxu0 %v10536
        %v10936 = vpop.f32.mrf.mxu0
        %v10937 = vadd.f32 %v10888, %v10936
        %v10938 = vpop.f32.mrf.mxu0
        %v10939 = vadd.f32 %v10890, %v10938
        %10940 = vmatmul.bf16.gmra.mxu0 %v10548
        %v10941 = vpop.f32.mrf.mxu0
        %v10942 = vadd.f32 %v10893, %v10941
        %v10943 = vpop.f32.mrf.mxu0
        %v10944 = vadd.f32 %v10895, %v10943
        %10945 = vmatmul.bf16.gmra.mxu0 %v10560
        %v10946 = vpop.f32.mrf.mxu0
        %v10947 = vadd.f32 %v10898, %v10946
        %v10948 = vpop.f32.mrf.mxu0
        %v10949 = vadd.f32 %v10900, %v10948
        %10950 = vmatmul.bf16.gmra.mxu0 %v10572
        %v10951 = vpop.f32.mrf.mxu0
        %v10952 = vadd.f32 %v10903, %v10951
        %v10953 = vpop.f32.mrf.mxu0
        %v10954 = vadd.f32 %v10905, %v10953
        %10955 = vmatmul.bf16.gmra.mxu0 %v10584
        %v10956 = vpop.f32.mrf.mxu0
        %v10957 = vadd.f32 %v10908, %v10956
        %v10958 = vpop.f32.mrf.mxu0
        %v10959 = vadd.f32 %v10910, %v10958
        %10960 = vmatmul.bf16.gmra.mxu0 %v10596
        %v10961 = vpop.f32.mrf.mxu0
        %v10962 = vadd.f32 %v10913, %v10961
        %v10963 = vpop.f32.mrf.mxu0
        %v10964 = vadd.f32 %v10915, %v10963
        %10965 = vmatmul.bf16.gmra.mxu0 %v10608
        %v10966 = vpop.f32.mrf.mxu0
        %v10967 = vadd.f32 %v10918, %v10966
        %v10968 = vpop.f32.mrf.mxu0
        %v10969 = vadd.f32 %v10920, %v10968
        %10970 = vmatmul.bf16.gmra.mxu0 %v10620
        %v10971 = vpop.f32.mrf.mxu0
        %v10972 = vadd.f32 %v10923, %v10971
        %v10973 = vpop.f32.mrf.mxu0
        %v10974 = vadd.f32 %v10925, %v10973
        %10975 = vdwg.mxu0
        %10976 = vmatpush.bf16.msra.mxu0 %v10853
        %10977 = vmatpush.bf16.msra.mxu0 %v10852
        %10978 = vmatpush.bf16.msra.mxu0 %v10851
        %10979 = vmatpush.bf16.msra.mxu0 %v10850
        %10980 = vmatpush.bf16.msra.mxu0 %v10849
        %10981 = vmatpush.bf16.msra.mxu0 %v10848
        %10982 = vmatpush.bf16.msra.mxu0 %v10847
        %10983 = vmatpush.bf16.msra.mxu0 %v10846
        %10984 = vmatmul.bf16.gmra.mxu0 %v10655
        %v10985 = vpop.f32.mrf.mxu0
        %v10986 = vadd.f32 %v10937, %v10985
        %v10987 = vpop.f32.mrf.mxu0
        %v10988 = vadd.f32 %v10939, %v10987
        %10989 = vmatmul.bf16.gmra.mxu0 %v10658
        %v10990 = vpop.f32.mrf.mxu0
        %v10991 = vadd.f32 %v10942, %v10990
        %v10992 = vpop.f32.mrf.mxu0
        %v10993 = vadd.f32 %v10944, %v10992
        %10994 = vmatmul.bf16.gmra.mxu0 %v10661
        %v10995 = vpop.f32.mrf.mxu0
        %v10996 = vadd.f32 %v10947, %v10995
        %v10997 = vpop.f32.mrf.mxu0
        %v10998 = vadd.f32 %v10949, %v10997
        %10999 = vmatmul.bf16.gmra.mxu0 %v10664
        %v11000 = vpop.f32.mrf.mxu0
        %v11001 = vadd.f32 %v10952, %v11000
        %v11002 = vpop.f32.mrf.mxu0
        %v11003 = vadd.f32 %v10954, %v11002
        %11004 = vmatmul.bf16.gmra.mxu0 %v10667
        %v11005 = vpop.f32.mrf.mxu0
        %v11006 = vadd.f32 %v10957, %v11005
        %v11007 = vpop.f32.mrf.mxu0
        %v11008 = vadd.f32 %v10959, %v11007
        %11009 = vmatmul.bf16.gmra.mxu0 %v10670
        %v11010 = vpop.f32.mrf.mxu0
        %v11011 = vadd.f32 %v10962, %v11010
        %v11012 = vpop.f32.mrf.mxu0
        %v11013 = vadd.f32 %v10964, %v11012
        %11014 = vmatmul.bf16.gmra.mxu0 %v10673
        %v11015 = vpop.f32.mrf.mxu0
        %v11016 = vadd.f32 %v10967, %v11015
        %v11017 = vpop.f32.mrf.mxu0
        %v11018 = vadd.f32 %v10969, %v11017
        %11019 = vmatmul.bf16.gmra.mxu0 %v10676
        %v11020 = vpop.f32.mrf.mxu0
        %v11021 = vadd.f32 %v10972, %v11020
        %v11022 = vpop.f32.mrf.mxu0
        %v11023 = vadd.f32 %v10974, %v11022
        %11024 = vdwg.mxu0
        %v11025 = vadd.f32 %v10405, %v10986
        %v11026 = vadd.f32 %v10406, %v10988
        %v11027 = vadd.f32 %v10407, %v10991
        %v11028 = vadd.f32 %v10408, %v10993
        %v11029 = vadd.f32 %v10409, %v10996
        %v11030 = vadd.f32 %v10410, %v10998
        %v11031 = vadd.f32 %v10411, %v11001
        %v11032 = vadd.f32 %v10412, %v11003
        %v11033 = vadd.f32 %v10413, %v11006
        %v11034 = vadd.f32 %v10414, %v11008
        %v11035 = vadd.f32 %v10415, %v11011
        %v11036 = vadd.f32 %v10416, %v11013
        %v11037 = vadd.f32 %v10417, %v11016
        %v11038 = vadd.f32 %v10418, %v11018
        %v11039 = vadd.f32 %v10419, %v11021
        %v11040 = vadd.f32 %v10420, %v11023
        %s11041 = scalar_lea.vmem [#allocation2], 36
        %v11042 = vld [vmem:[%s11041] sm:$0xf]
        %v11043 = vld [vmem:[%s11041 + $0x4] sm:$0xf]
        %v11044 = vld [vmem:[%s11041 + $0xc] sm:$0xf]
        %v11045 = vld [vmem:[%s11041 + $0x10] sm:$0xf]
        %v11046 = vld [vmem:[%s11041 + $0x18] sm:$0xf]
        %v11047 = vld [vmem:[%s11041 + $0x1c] sm:$0xf]
        %v11048 = vld [vmem:[%s11041 + $0x24] sm:$0xf]
        %v11049 = vld [vmem:[%s11041 + $0x28] sm:$0xf]
        %v11050 = vld [vmem:[%s11041 + $0x30] sm:$0xf]
        %v11051 = vld [vmem:[%s11041 + $0x34] sm:$0xf]
        %v11052 = vld [vmem:[%s11041 + $0x3c] sm:$0xf]
        %v11053 = vld [vmem:[%s11041 + $0x40] sm:$0xf]
        %v11054 = vld [vmem:[%s11041 + $0x48] sm:$0xf]
        %v11055 = vld [vmem:[%s11041 + $0x4c] sm:$0xf]
        %v11056 = vld [vmem:[%s11041 + $0x54] sm:$0xf]
        %v11057 = vld [vmem:[%s11041 + $0x58] sm:$0xf]
        %v11058 = vld [vmem:[%s11041 + $0x8] sm:$0x1]
        %v11059 = vld [vmem:[%s11041 + $0x14] sm:$0x1]
        %v11060 = vld [vmem:[%s11041 + $0x20] sm:$0x1]
        %v11061 = vld [vmem:[%s11041 + $0x2c] sm:$0x1]
        %v11062 = vld [vmem:[%s11041 + $0x38] sm:$0x1]
        %v11063 = vld [vmem:[%s11041 + $0x44] sm:$0x1]
        %v11064 = vld [vmem:[%s11041 + $0x50] sm:$0x1]
        %v11065 = vld [vmem:[%s11041 + $0x5c] sm:$0x1]
        %v11066 = vld [vmem:[%s11041] sm:$0xe]
        %v11067 = vld [vmem:[%s11041 + $0xc] sm:$0xe]
        %v11068 = vld [vmem:[%s11041 + $0x18] sm:$0xe]
        %v11069 = vld [vmem:[%s11041 + $0x24] sm:$0xe]
        %v11070 = vld [vmem:[%s11041 + $0x30] sm:$0xe]
        %v11071 = vld [vmem:[%s11041 + $0x3c] sm:$0xe]
        %v11072 = vld [vmem:[%s11041 + $0x48] sm:$0xe]
        %v11073 = vld [vmem:[%s11041 + $0x54] sm:$0xe]
        %v11090 = vunpack.c.l.b16 %v11042
        %v11091 = vunpack.c.l.b16 %v11043
        %v11092 = vunpack.c.l.b16 %v11044
        %v11093 = vunpack.c.l.b16 %v11045
        %v11094 = vunpack.c.l.b16 %v11046
        %v11095 = vunpack.c.l.b16 %v11047
        %v11096 = vunpack.c.l.b16 %v11048
        %v11097 = vunpack.c.l.b16 %v11049
        %v11098 = vunpack.c.l.b16 %v11050
        %v11099 = vunpack.c.l.b16 %v11051
        %v11100 = vunpack.c.l.b16 %v11052
        %v11101 = vunpack.c.l.b16 %v11053
        %v11102 = vunpack.c.l.b16 %v11054
        %v11103 = vunpack.c.l.b16 %v11055
        %v11104 = vunpack.c.l.b16 %v11056
        %v11105 = vunpack.c.l.b16 %v11057
        %v11106 = vpack.c.b16 %v11091, %v11090
        %v11107 = vpack.c.b16 %v11093, %v11092
        %v11108 = vpack.c.b16 %v11095, %v11094
        %v11109 = vpack.c.b16 %v11097, %v11096
        %v11110 = vpack.c.b16 %v11099, %v11098
        %v11111 = vpack.c.b16 %v11101, %v11100
        %v11112 = vpack.c.b16 %v11103, %v11102
        %v11113 = vpack.c.b16 %v11105, %v11104
        %v11130 = vunpack.c.l.b16 %v11058
        %v11131 = vunpack.c.l.b16 %v11059
        %v11132 = vunpack.c.l.b16 %v11060
        %v11133 = vunpack.c.l.b16 %v11061
        %v11134 = vunpack.c.l.b16 %v11062
        %v11135 = vunpack.c.l.b16 %v11063
        %v11136 = vunpack.c.l.b16 %v11064
        %v11137 = vunpack.c.l.b16 %v11065
        %v11138 = vpack.c.b16 %v11130, %v11130
        %v11139 = vpack.c.b16 %v11131, %v11131
        %v11140 = vpack.c.b16 %v11132, %v11132
        %v11141 = vpack.c.b16 %v11133, %v11133
        %v11142 = vpack.c.b16 %v11134, %v11134
        %v11143 = vpack.c.b16 %v11135, %v11135
        %v11144 = vpack.c.b16 %v11136, %v11136
        %v11145 = vpack.c.b16 %v11137, %v11137
        %v11147 = vshrl.u32 %v11106, 16
        %v11149 = vshll.u32 %v11106, 16
        %v11151 = vrot.slane %v11149, 1
        %v11152 = vor.u32 %v11147, %v11151
        %v11154 = vshll.u32 %v11138, 16
        %v11156 = vrot.slane %v11154, 1
        %v11157 = vsel %vm1581, %v11152, %v11156
        %v11159 = vshrl.u32 %v11107, 16
        %v11161 = vshll.u32 %v11107, 16
        %v11163 = vrot.slane %v11161, 1
        %v11164 = vor.u32 %v11159, %v11163
        %v11166 = vshll.u32 %v11139, 16
        %v11168 = vrot.slane %v11166, 1
        %v11169 = vsel %vm1581, %v11164, %v11168
        %v11171 = vshrl.u32 %v11108, 16
        %v11173 = vshll.u32 %v11108, 16
        %v11175 = vrot.slane %v11173, 1
        %v11176 = vor.u32 %v11171, %v11175
        %v11178 = vshll.u32 %v11140, 16
        %v11180 = vrot.slane %v11178, 1
        %v11181 = vsel %vm1581, %v11176, %v11180
        %v11183 = vshrl.u32 %v11109, 16
        %v11185 = vshll.u32 %v11109, 16
        %v11187 = vrot.slane %v11185, 1
        %v11188 = vor.u32 %v11183, %v11187
        %v11190 = vshll.u32 %v11141, 16
        %v11192 = vrot.slane %v11190, 1
        %v11193 = vsel %vm1581, %v11188, %v11192
        %v11195 = vshrl.u32 %v11110, 16
        %v11197 = vshll.u32 %v11110, 16
        %v11199 = vrot.slane %v11197, 1
        %v11200 = vor.u32 %v11195, %v11199
        %v11202 = vshll.u32 %v11142, 16
        %v11204 = vrot.slane %v11202, 1
        %v11205 = vsel %vm1581, %v11200, %v11204
        %v11207 = vshrl.u32 %v11111, 16
        %v11209 = vshll.u32 %v11111, 16
        %v11211 = vrot.slane %v11209, 1
        %v11212 = vor.u32 %v11207, %v11211
        %v11214 = vshll.u32 %v11143, 16
        %v11216 = vrot.slane %v11214, 1
        %v11217 = vsel %vm1581, %v11212, %v11216
        %v11219 = vshrl.u32 %v11112, 16
        %v11221 = vshll.u32 %v11112, 16
        %v11223 = vrot.slane %v11221, 1
        %v11224 = vor.u32 %v11219, %v11223
        %v11226 = vshll.u32 %v11144, 16
        %v11228 = vrot.slane %v11226, 1
        %v11229 = vsel %vm1581, %v11224, %v11228
        %v11231 = vshrl.u32 %v11113, 16
        %v11233 = vshll.u32 %v11113, 16
        %v11235 = vrot.slane %v11233, 1
        %v11236 = vor.u32 %v11231, %v11235
        %v11238 = vshll.u32 %v11145, 16
        %v11240 = vrot.slane %v11238, 1
        %v11241 = vsel %vm1581, %v11236, %v11240
        %v11258 = vunpack.c.l.b16 %v11066
        %v11259 = vunpack.c.l.b16 %v11067
        %v11260 = vunpack.c.l.b16 %v11068
        %v11261 = vunpack.c.l.b16 %v11069
        %v11262 = vunpack.c.l.b16 %v11070
        %v11263 = vunpack.c.l.b16 %v11071
        %v11264 = vunpack.c.l.b16 %v11072
        %v11265 = vunpack.c.l.b16 %v11073
        %v11266 = vpack.c.b16 %v11091, %v11258
        %v11267 = vpack.c.b16 %v11093, %v11259
        %v11268 = vpack.c.b16 %v11095, %v11260
        %v11269 = vpack.c.b16 %v11097, %v11261
        %v11270 = vpack.c.b16 %v11099, %v11262
        %v11271 = vpack.c.b16 %v11101, %v11263
        %v11272 = vpack.c.b16 %v11103, %v11264
        %v11273 = vpack.c.b16 %v11105, %v11265
        %v11274 = vrot.slane %v11266, 1
        %v11275 = vrot.slane %v11138, 1
        %v11276 = vsel %vm1742, %v11274, %v11275
        %v11277 = vrot.slane %v11267, 1
        %v11278 = vrot.slane %v11139, 1
        %v11279 = vsel %vm1742, %v11277, %v11278
        %v11280 = vrot.slane %v11268, 1
        %v11281 = vrot.slane %v11140, 1
        %v11282 = vsel %vm1742, %v11280, %v11281
        %v11283 = vrot.slane %v11269, 1
        %v11284 = vrot.slane %v11141, 1
        %v11285 = vsel %vm1742, %v11283, %v11284
        %v11286 = vrot.slane %v11270, 1
        %v11287 = vrot.slane %v11142, 1
        %v11288 = vsel %vm1742, %v11286, %v11287
        %v11289 = vrot.slane %v11271, 1
        %v11290 = vrot.slane %v11143, 1
        %v11291 = vsel %vm1742, %v11289, %v11290
        %v11292 = vrot.slane %v11272, 1
        %v11293 = vrot.slane %v11144, 1
        %v11294 = vsel %vm1742, %v11292, %v11293
        %v11295 = vrot.slane %v11273, 1
        %v11296 = vrot.slane %v11145, 1
        %v11297 = vsel %vm1742, %v11295, %v11296
        %s11306 = scalar_lea.vmem %s6, 384
        %v11307 = vld [vmem:[%s11306] sm:$0xf]
        %v11308 = vld [vmem:[%s11306 + $0x4] sm:$0xf]
        %v11309 = vld [vmem:[%s11306 + $0x8] sm:$0xf]
        %v11310 = vld [vmem:[%s11306 + $0xc] sm:$0xf]
        %v11311 = vld [vmem:[%s11306 + $0x10] sm:$0xf]
        %v11312 = vld [vmem:[%s11306 + $0x14] sm:$0xf]
        %v11313 = vld [vmem:[%s11306 + $0x18] sm:$0xf]
        %v11314 = vld [vmem:[%s11306 + $0x1c] sm:$0xf]
        %v11315 = vld [vmem:[%s11306 + $0x20] sm:$0xf]
        %v11316 = vld [vmem:[%s11306 + $0x24] sm:$0xf]
        %v11317 = vld [vmem:[%s11306 + $0x28] sm:$0xf]
        %v11318 = vld [vmem:[%s11306 + $0x2c] sm:$0xf]
        %v11319 = vld [vmem:[%s11306 + $0x30] sm:$0xf]
        %v11320 = vld [vmem:[%s11306 + $0x34] sm:$0xf]
        %v11321 = vld [vmem:[%s11306 + $0x38] sm:$0xf]
        %v11322 = vld [vmem:[%s11306 + $0x3c] sm:$0xf]
        %v11323 = vld [vmem:[%s11306 + $0x40] sm:$0xf]
        %v11324 = vld [vmem:[%s11306 + $0x44] sm:$0xf]
        %v11325 = vld [vmem:[%s11306 + $0x48] sm:$0xf]
        %v11326 = vld [vmem:[%s11306 + $0x4c] sm:$0xf]
        %v11327 = vld [vmem:[%s11306 + $0x50] sm:$0xf]
        %v11328 = vld [vmem:[%s11306 + $0x54] sm:$0xf]
        %v11329 = vld [vmem:[%s11306 + $0x58] sm:$0xf]
        %v11330 = vld [vmem:[%s11306 + $0x5c] sm:$0xf]
        %v11331 = vld [vmem:[%s11306 + $0x60] sm:$0xf]
        %v11332 = vld [vmem:[%s11306 + $0x64] sm:$0xf]
        %v11333 = vld [vmem:[%s11306 + $0x68] sm:$0xf]
        %v11334 = vld [vmem:[%s11306 + $0x6c] sm:$0xf]
        %v11335 = vld [vmem:[%s11306 + $0x70] sm:$0xf]
        %v11336 = vld [vmem:[%s11306 + $0x74] sm:$0xf]
        %v11337 = vld [vmem:[%s11306 + $0x78] sm:$0xf]
        %v11338 = vld [vmem:[%s11306 + $0x7c] sm:$0xf]
        %v11339 = vld [vmem:[%s11306 + $0x80] sm:$0xf]
        %v11340 = vld [vmem:[%s11306 + $0x84] sm:$0xf]
        %v11341 = vld [vmem:[%s11306 + $0x88] sm:$0xf]
        %v11342 = vld [vmem:[%s11306 + $0x8c] sm:$0xf]
        %v11343 = vld [vmem:[%s11306 + $0x90] sm:$0xf]
        %v11344 = vld [vmem:[%s11306 + $0x94] sm:$0xf]
        %v11345 = vld [vmem:[%s11306 + $0x98] sm:$0xf]
        %v11346 = vld [vmem:[%s11306 + $0x9c] sm:$0xf]
        %v11347 = vld [vmem:[%s11306 + $0xa0] sm:$0xf]
        %v11348 = vld [vmem:[%s11306 + $0xa4] sm:$0xf]
        %v11349 = vld [vmem:[%s11306 + $0xa8] sm:$0xf]
        %v11350 = vld [vmem:[%s11306 + $0xac] sm:$0xf]
        %v11351 = vld [vmem:[%s11306 + $0xb0] sm:$0xf]
        %v11352 = vld [vmem:[%s11306 + $0xb4] sm:$0xf]
        %v11353 = vld [vmem:[%s11306 + $0xb8] sm:$0xf]
        %v11354 = vld [vmem:[%s11306 + $0xbc] sm:$0xf]
        %v11403 = vunpack.c.l.b16 %v11307
        %v11404 = vunpack.c.l.b16 %v11308
        %v11405 = vunpack.c.l.b16 %v11309
        %v11406 = vunpack.c.l.b16 %v11310
        %v11407 = vunpack.c.l.b16 %v11311
        %v11408 = vunpack.c.l.b16 %v11312
        %v11409 = vunpack.c.l.b16 %v11313
        %v11410 = vunpack.c.l.b16 %v11314
        %v11411 = vunpack.c.l.b16 %v11315
        %v11412 = vunpack.c.l.b16 %v11316
        %v11413 = vunpack.c.l.b16 %v11317
        %v11414 = vunpack.c.l.b16 %v11318
        %v11415 = vunpack.c.l.b16 %v11319
        %v11416 = vunpack.c.l.b16 %v11320
        %v11417 = vunpack.c.l.b16 %v11321
        %v11418 = vunpack.c.l.b16 %v11322
        %v11419 = vunpack.c.l.b16 %v11323
        %v11420 = vunpack.c.l.b16 %v11324
        %v11421 = vunpack.c.l.b16 %v11325
        %v11422 = vunpack.c.l.b16 %v11326
        %v11423 = vunpack.c.l.b16 %v11327
        %v11424 = vunpack.c.l.b16 %v11328
        %v11425 = vunpack.c.l.b16 %v11329
        %v11426 = vunpack.c.l.b16 %v11330
        %v11427 = vunpack.c.l.b16 %v11331
        %v11428 = vunpack.c.l.b16 %v11332
        %v11429 = vunpack.c.l.b16 %v11333
        %v11430 = vunpack.c.l.b16 %v11334
        %v11431 = vunpack.c.l.b16 %v11335
        %v11432 = vunpack.c.l.b16 %v11336
        %v11433 = vunpack.c.l.b16 %v11337
        %v11434 = vunpack.c.l.b16 %v11338
        %v11435 = vunpack.c.l.b16 %v11339
        %v11436 = vunpack.c.l.b16 %v11340
        %v11437 = vunpack.c.l.b16 %v11341
        %v11438 = vunpack.c.l.b16 %v11342
        %v11439 = vunpack.c.l.b16 %v11343
        %v11440 = vunpack.c.l.b16 %v11344
        %v11441 = vunpack.c.l.b16 %v11345
        %v11442 = vunpack.c.l.b16 %v11346
        %v11443 = vunpack.c.l.b16 %v11347
        %v11444 = vunpack.c.l.b16 %v11348
        %v11445 = vunpack.c.l.b16 %v11349
        %v11446 = vunpack.c.l.b16 %v11350
        %v11447 = vunpack.c.l.b16 %v11351
        %v11448 = vunpack.c.l.b16 %v11352
        %v11449 = vunpack.c.l.b16 %v11353
        %v11450 = vunpack.c.l.b16 %v11354
        %v11451 = vpack.c.b16 %v11404, %v11403
        %v11452 = vpack.c.b16 %v11406, %v11405
        %v11453 = vpack.c.b16 %v11408, %v11407
        %v11454 = vpack.c.b16 %v11410, %v11409
        %v11455 = vpack.c.b16 %v11412, %v11411
        %v11456 = vpack.c.b16 %v11414, %v11413
        %v11457 = vpack.c.b16 %v11416, %v11415
        %v11458 = vpack.c.b16 %v11418, %v11417
        %v11459 = vpack.c.b16 %v11420, %v11419
        %v11460 = vpack.c.b16 %v11422, %v11421
        %v11461 = vpack.c.b16 %v11424, %v11423
        %v11462 = vpack.c.b16 %v11426, %v11425
        %v11463 = vpack.c.b16 %v11428, %v11427
        %v11464 = vpack.c.b16 %v11430, %v11429
        %v11465 = vpack.c.b16 %v11432, %v11431
        %v11466 = vpack.c.b16 %v11434, %v11433
        %v11467 = vpack.c.b16 %v11436, %v11435
        %v11468 = vpack.c.b16 %v11438, %v11437
        %v11469 = vpack.c.b16 %v11440, %v11439
        %v11470 = vpack.c.b16 %v11442, %v11441
        %v11471 = vpack.c.b16 %v11444, %v11443
        %v11472 = vpack.c.b16 %v11446, %v11445
        %v11473 = vpack.c.b16 %v11448, %v11447
        %v11474 = vpack.c.b16 %v11450, %v11449
        %11499 = vmatpush.bf16.msra.mxu0 %v11458
        %11500 = vmatpush.bf16.msra.mxu0 %v11457
        %11501 = vmatpush.bf16.msra.mxu0 %v11456
        %11502 = vmatpush.bf16.msra.mxu0 %v11455
        %11503 = vmatpush.bf16.msra.mxu0 %v11454
        %11504 = vmatpush.bf16.msra.mxu0 %v11453
        %11505 = vmatpush.bf16.msra.mxu0 %v11452
        %11506 = vmatpush.bf16.msra.mxu0 %v11451
        %11507 = vmatmul.bf16.gmra.mxu0 %v11106
        %v11508 = vpop.f32.mrf.mxu0
        %v11509 = vadd.f32 0.0, %v11508
        %v11510 = vpop.f32.mrf.mxu0
        %v11511 = vadd.f32 0.0, %v11510
        %11512 = vmatmul.bf16.gmra.mxu0 %v11107
        %v11513 = vpop.f32.mrf.mxu0
        %v11514 = vadd.f32 0.0, %v11513
        %v11515 = vpop.f32.mrf.mxu0
        %v11516 = vadd.f32 0.0, %v11515
        %11517 = vmatmul.bf16.gmra.mxu0 %v11108
        %v11518 = vpop.f32.mrf.mxu0
        %v11519 = vadd.f32 0.0, %v11518
        %v11520 = vpop.f32.mrf.mxu0
        %v11521 = vadd.f32 0.0, %v11520
        %11522 = vmatmul.bf16.gmra.mxu0 %v11109
        %v11523 = vpop.f32.mrf.mxu0
        %v11524 = vadd.f32 0.0, %v11523
        %v11525 = vpop.f32.mrf.mxu0
        %v11526 = vadd.f32 0.0, %v11525
        %11527 = vmatmul.bf16.gmra.mxu0 %v11110
        %v11528 = vpop.f32.mrf.mxu0
        %v11529 = vadd.f32 0.0, %v11528
        %v11530 = vpop.f32.mrf.mxu0
        %v11531 = vadd.f32 0.0, %v11530
        %11532 = vmatmul.bf16.gmra.mxu0 %v11111
        %v11533 = vpop.f32.mrf.mxu0
        %v11534 = vadd.f32 0.0, %v11533
        %v11535 = vpop.f32.mrf.mxu0
        %v11536 = vadd.f32 0.0, %v11535
        %11537 = vmatmul.bf16.gmra.mxu0 %v11112
        %v11538 = vpop.f32.mrf.mxu0
        %v11539 = vadd.f32 0.0, %v11538
        %v11540 = vpop.f32.mrf.mxu0
        %v11541 = vadd.f32 0.0, %v11540
        %11542 = vmatmul.bf16.gmra.mxu0 %v11113
        %v11543 = vpop.f32.mrf.mxu0
        %v11544 = vadd.f32 0.0, %v11543
        %v11545 = vpop.f32.mrf.mxu0
        %v11546 = vadd.f32 0.0, %v11545
        %11547 = vdwg.mxu0
        %11548 = vmatpush.bf16.msra.mxu0 %v11466
        %11549 = vmatpush.bf16.msra.mxu0 %v11465
        %11550 = vmatpush.bf16.msra.mxu0 %v11464
        %11551 = vmatpush.bf16.msra.mxu0 %v11463
        %11552 = vmatpush.bf16.msra.mxu0 %v11462
        %11553 = vmatpush.bf16.msra.mxu0 %v11461
        %11554 = vmatpush.bf16.msra.mxu0 %v11460
        %11555 = vmatpush.bf16.msra.mxu0 %v11459
        %11556 = vmatmul.bf16.gmra.mxu0 %v11157
        %v11557 = vpop.f32.mrf.mxu0
        %v11558 = vadd.f32 %v11509, %v11557
        %v11559 = vpop.f32.mrf.mxu0
        %v11560 = vadd.f32 %v11511, %v11559
        %11561 = vmatmul.bf16.gmra.mxu0 %v11169
        %v11562 = vpop.f32.mrf.mxu0
        %v11563 = vadd.f32 %v11514, %v11562
        %v11564 = vpop.f32.mrf.mxu0
        %v11565 = vadd.f32 %v11516, %v11564
        %11566 = vmatmul.bf16.gmra.mxu0 %v11181
        %v11567 = vpop.f32.mrf.mxu0
        %v11568 = vadd.f32 %v11519, %v11567
        %v11569 = vpop.f32.mrf.mxu0
        %v11570 = vadd.f32 %v11521, %v11569
        %11571 = vmatmul.bf16.gmra.mxu0 %v11193
        %v11572 = vpop.f32.mrf.mxu0
        %v11573 = vadd.f32 %v11524, %v11572
        %v11574 = vpop.f32.mrf.mxu0
        %v11575 = vadd.f32 %v11526, %v11574
        %11576 = vmatmul.bf16.gmra.mxu0 %v11205
        %v11577 = vpop.f32.mrf.mxu0
        %v11578 = vadd.f32 %v11529, %v11577
        %v11579 = vpop.f32.mrf.mxu0
        %v11580 = vadd.f32 %v11531, %v11579
        %11581 = vmatmul.bf16.gmra.mxu0 %v11217
        %v11582 = vpop.f32.mrf.mxu0
        %v11583 = vadd.f32 %v11534, %v11582
        %v11584 = vpop.f32.mrf.mxu0
        %v11585 = vadd.f32 %v11536, %v11584
        %11586 = vmatmul.bf16.gmra.mxu0 %v11229
        %v11587 = vpop.f32.mrf.mxu0
        %v11588 = vadd.f32 %v11539, %v11587
        %v11589 = vpop.f32.mrf.mxu0
        %v11590 = vadd.f32 %v11541, %v11589
        %11591 = vmatmul.bf16.gmra.mxu0 %v11241
        %v11592 = vpop.f32.mrf.mxu0
        %v11593 = vadd.f32 %v11544, %v11592
        %v11594 = vpop.f32.mrf.mxu0
        %v11595 = vadd.f32 %v11546, %v11594
        %11596 = vdwg.mxu0
        %11597 = vmatpush.bf16.msra.mxu0 %v11474
        %11598 = vmatpush.bf16.msra.mxu0 %v11473
        %11599 = vmatpush.bf16.msra.mxu0 %v11472
        %11600 = vmatpush.bf16.msra.mxu0 %v11471
        %11601 = vmatpush.bf16.msra.mxu0 %v11470
        %11602 = vmatpush.bf16.msra.mxu0 %v11469
        %11603 = vmatpush.bf16.msra.mxu0 %v11468
        %11604 = vmatpush.bf16.msra.mxu0 %v11467
        %11605 = vmatmul.bf16.gmra.mxu0 %v11276
        %v11606 = vpop.f32.mrf.mxu0
        %v11607 = vadd.f32 %v11558, %v11606
        %v11608 = vpop.f32.mrf.mxu0
        %v11609 = vadd.f32 %v11560, %v11608
        %11610 = vmatmul.bf16.gmra.mxu0 %v11279
        %v11611 = vpop.f32.mrf.mxu0
        %v11612 = vadd.f32 %v11563, %v11611
        %v11613 = vpop.f32.mrf.mxu0
        %v11614 = vadd.f32 %v11565, %v11613
        %11615 = vmatmul.bf16.gmra.mxu0 %v11282
        %v11616 = vpop.f32.mrf.mxu0
        %v11617 = vadd.f32 %v11568, %v11616
        %v11618 = vpop.f32.mrf.mxu0
        %v11619 = vadd.f32 %v11570, %v11618
        %11620 = vmatmul.bf16.gmra.mxu0 %v11285
        %v11621 = vpop.f32.mrf.mxu0
        %v11622 = vadd.f32 %v11573, %v11621
        %v11623 = vpop.f32.mrf.mxu0
        %v11624 = vadd.f32 %v11575, %v11623
        %11625 = vmatmul.bf16.gmra.mxu0 %v11288
        %v11626 = vpop.f32.mrf.mxu0
        %v11627 = vadd.f32 %v11578, %v11626
        %v11628 = vpop.f32.mrf.mxu0
        %v11629 = vadd.f32 %v11580, %v11628
        %11630 = vmatmul.bf16.gmra.mxu0 %v11291
        %v11631 = vpop.f32.mrf.mxu0
        %v11632 = vadd.f32 %v11583, %v11631
        %v11633 = vpop.f32.mrf.mxu0
        %v11634 = vadd.f32 %v11585, %v11633
        %11635 = vmatmul.bf16.gmra.mxu0 %v11294
        %v11636 = vpop.f32.mrf.mxu0
        %v11637 = vadd.f32 %v11588, %v11636
        %v11638 = vpop.f32.mrf.mxu0
        %v11639 = vadd.f32 %v11590, %v11638
        %11640 = vmatmul.bf16.gmra.mxu0 %v11297
        %v11641 = vpop.f32.mrf.mxu0
        %v11642 = vadd.f32 %v11593, %v11641
        %v11643 = vpop.f32.mrf.mxu0
        %v11644 = vadd.f32 %v11595, %v11643
        %11645 = vdwg.mxu0
        %v11646 = vadd.f32 %v11025, %v11607
        %v11647 = vadd.f32 %v11026, %v11609
        %v11648 = vadd.f32 %v11027, %v11612
        %v11649 = vadd.f32 %v11028, %v11614
        %v11650 = vadd.f32 %v11029, %v11617
        %v11651 = vadd.f32 %v11030, %v11619
        %v11652 = vadd.f32 %v11031, %v11622
        %v11653 = vadd.f32 %v11032, %v11624
        %v11654 = vadd.f32 %v11033, %v11627
        %v11655 = vadd.f32 %v11034, %v11629
        %v11656 = vadd.f32 %v11035, %v11632
        %v11657 = vadd.f32 %v11036, %v11634
        %v11658 = vadd.f32 %v11037, %v11637
        %v11659 = vadd.f32 %v11038, %v11639
        %v11660 = vadd.f32 %v11039, %v11642
        %v11661 = vadd.f32 %v11040, %v11644
        %s11662 = scalar_lea.vmem [#allocation3], 36
        %v11663 = vld [vmem:[%s11662] sm:$0xf]
        %v11664 = vld [vmem:[%s11662 + $0x4] sm:$0xf]
        %v11665 = vld [vmem:[%s11662 + $0xc] sm:$0xf]
        %v11666 = vld [vmem:[%s11662 + $0x10] sm:$0xf]
        %v11667 = vld [vmem:[%s11662 + $0x18] sm:$0xf]
        %v11668 = vld [vmem:[%s11662 + $0x1c] sm:$0xf]
        %v11669 = vld [vmem:[%s11662 + $0x24] sm:$0xf]
        %v11670 = vld [vmem:[%s11662 + $0x28] sm:$0xf]
        %v11671 = vld [vmem:[%s11662 + $0x30] sm:$0xf]
        %v11672 = vld [vmem:[%s11662 + $0x34] sm:$0xf]
        %v11673 = vld [vmem:[%s11662 + $0x3c] sm:$0xf]
        %v11674 = vld [vmem:[%s11662 + $0x40] sm:$0xf]
        %v11675 = vld [vmem:[%s11662 + $0x48] sm:$0xf]
        %v11676 = vld [vmem:[%s11662 + $0x4c] sm:$0xf]
        %v11677 = vld [vmem:[%s11662 + $0x54] sm:$0xf]
        %v11678 = vld [vmem:[%s11662 + $0x58] sm:$0xf]
        %v11679 = vld [vmem:[%s11662 + $0x8] sm:$0x1]
        %v11680 = vld [vmem:[%s11662 + $0x14] sm:$0x1]
        %v11681 = vld [vmem:[%s11662 + $0x20] sm:$0x1]
        %v11682 = vld [vmem:[%s11662 + $0x2c] sm:$0x1]
        %v11683 = vld [vmem:[%s11662 + $0x38] sm:$0x1]
        %v11684 = vld [vmem:[%s11662 + $0x44] sm:$0x1]
        %v11685 = vld [vmem:[%s11662 + $0x50] sm:$0x1]
        %v11686 = vld [vmem:[%s11662 + $0x5c] sm:$0x1]
        %v11687 = vld [vmem:[%s11662] sm:$0xe]
        %v11688 = vld [vmem:[%s11662 + $0xc] sm:$0xe]
        %v11689 = vld [vmem:[%s11662 + $0x18] sm:$0xe]
        %v11690 = vld [vmem:[%s11662 + $0x24] sm:$0xe]
        %v11691 = vld [vmem:[%s11662 + $0x30] sm:$0xe]
        %v11692 = vld [vmem:[%s11662 + $0x3c] sm:$0xe]
        %v11693 = vld [vmem:[%s11662 + $0x48] sm:$0xe]
        %v11694 = vld [vmem:[%s11662 + $0x54] sm:$0xe]
        %v11711 = vunpack.c.l.b16 %v11663
        %v11712 = vunpack.c.l.b16 %v11664
        %v11713 = vunpack.c.l.b16 %v11665
        %v11714 = vunpack.c.l.b16 %v11666
        %v11715 = vunpack.c.l.b16 %v11667
        %v11716 = vunpack.c.l.b16 %v11668
        %v11717 = vunpack.c.l.b16 %v11669
        %v11718 = vunpack.c.l.b16 %v11670
        %v11719 = vunpack.c.l.b16 %v11671
        %v11720 = vunpack.c.l.b16 %v11672
        %v11721 = vunpack.c.l.b16 %v11673
        %v11722 = vunpack.c.l.b16 %v11674
        %v11723 = vunpack.c.l.b16 %v11675
        %v11724 = vunpack.c.l.b16 %v11676
        %v11725 = vunpack.c.l.b16 %v11677
        %v11726 = vunpack.c.l.b16 %v11678
        %v11727 = vpack.c.b16 %v11712, %v11711
        %v11728 = vpack.c.b16 %v11714, %v11713
        %v11729 = vpack.c.b16 %v11716, %v11715
        %v11730 = vpack.c.b16 %v11718, %v11717
        %v11731 = vpack.c.b16 %v11720, %v11719
        %v11732 = vpack.c.b16 %v11722, %v11721
        %v11733 = vpack.c.b16 %v11724, %v11723
        %v11734 = vpack.c.b16 %v11726, %v11725
        %v11751 = vunpack.c.l.b16 %v11679
        %v11752 = vunpack.c.l.b16 %v11680
        %v11753 = vunpack.c.l.b16 %v11681
        %v11754 = vunpack.c.l.b16 %v11682
        %v11755 = vunpack.c.l.b16 %v11683
        %v11756 = vunpack.c.l.b16 %v11684
        %v11757 = vunpack.c.l.b16 %v11685
        %v11758 = vunpack.c.l.b16 %v11686
        %v11759 = vpack.c.b16 %v11751, %v11751
        %v11760 = vpack.c.b16 %v11752, %v11752
        %v11761 = vpack.c.b16 %v11753, %v11753
        %v11762 = vpack.c.b16 %v11754, %v11754
        %v11763 = vpack.c.b16 %v11755, %v11755
        %v11764 = vpack.c.b16 %v11756, %v11756
        %v11765 = vpack.c.b16 %v11757, %v11757
        %v11766 = vpack.c.b16 %v11758, %v11758
        %v11768 = vshrl.u32 %v11727, 16
        %v11770 = vshll.u32 %v11727, 16
        %v11772 = vrot.slane %v11770, 1
        %v11773 = vor.u32 %v11768, %v11772
        %v11775 = vshll.u32 %v11759, 16
        %v11777 = vrot.slane %v11775, 1
        %v11778 = vsel %vm1581, %v11773, %v11777
        %v11780 = vshrl.u32 %v11728, 16
        %v11782 = vshll.u32 %v11728, 16
        %v11784 = vrot.slane %v11782, 1
        %v11785 = vor.u32 %v11780, %v11784
        %v11787 = vshll.u32 %v11760, 16
        %v11789 = vrot.slane %v11787, 1
        %v11790 = vsel %vm1581, %v11785, %v11789
        %v11792 = vshrl.u32 %v11729, 16
        %v11794 = vshll.u32 %v11729, 16
        %v11796 = vrot.slane %v11794, 1
        %v11797 = vor.u32 %v11792, %v11796
        %v11799 = vshll.u32 %v11761, 16
        %v11801 = vrot.slane %v11799, 1
        %v11802 = vsel %vm1581, %v11797, %v11801
        %v11804 = vshrl.u32 %v11730, 16
        %v11806 = vshll.u32 %v11730, 16
        %v11808 = vrot.slane %v11806, 1
        %v11809 = vor.u32 %v11804, %v11808
        %v11811 = vshll.u32 %v11762, 16
        %v11813 = vrot.slane %v11811, 1
        %v11814 = vsel %vm1581, %v11809, %v11813
        %v11816 = vshrl.u32 %v11731, 16
        %v11818 = vshll.u32 %v11731, 16
        %v11820 = vrot.slane %v11818, 1
        %v11821 = vor.u32 %v11816, %v11820
        %v11823 = vshll.u32 %v11763, 16
        %v11825 = vrot.slane %v11823, 1
        %v11826 = vsel %vm1581, %v11821, %v11825
        %v11828 = vshrl.u32 %v11732, 16
        %v11830 = vshll.u32 %v11732, 16
        %v11832 = vrot.slane %v11830, 1
        %v11833 = vor.u32 %v11828, %v11832
        %v11835 = vshll.u32 %v11764, 16
        %v11837 = vrot.slane %v11835, 1
        %v11838 = vsel %vm1581, %v11833, %v11837
        %v11840 = vshrl.u32 %v11733, 16
        %v11842 = vshll.u32 %v11733, 16
        %v11844 = vrot.slane %v11842, 1
        %v11845 = vor.u32 %v11840, %v11844
        %v11847 = vshll.u32 %v11765, 16
        %v11849 = vrot.slane %v11847, 1
        %v11850 = vsel %vm1581, %v11845, %v11849
        %v11852 = vshrl.u32 %v11734, 16
        %v11854 = vshll.u32 %v11734, 16
        %v11856 = vrot.slane %v11854, 1
        %v11857 = vor.u32 %v11852, %v11856
        %v11859 = vshll.u32 %v11766, 16
        %v11861 = vrot.slane %v11859, 1
        %v11862 = vsel %vm1581, %v11857, %v11861
        %v11879 = vunpack.c.l.b16 %v11687
        %v11880 = vunpack.c.l.b16 %v11688
        %v11881 = vunpack.c.l.b16 %v11689
        %v11882 = vunpack.c.l.b16 %v11690
        %v11883 = vunpack.c.l.b16 %v11691
        %v11884 = vunpack.c.l.b16 %v11692
        %v11885 = vunpack.c.l.b16 %v11693
        %v11886 = vunpack.c.l.b16 %v11694
        %v11887 = vpack.c.b16 %v11712, %v11879
        %v11888 = vpack.c.b16 %v11714, %v11880
        %v11889 = vpack.c.b16 %v11716, %v11881
        %v11890 = vpack.c.b16 %v11718, %v11882
        %v11891 = vpack.c.b16 %v11720, %v11883
        %v11892 = vpack.c.b16 %v11722, %v11884
        %v11893 = vpack.c.b16 %v11724, %v11885
        %v11894 = vpack.c.b16 %v11726, %v11886
        %v11895 = vrot.slane %v11887, 1
        %v11896 = vrot.slane %v11759, 1
        %v11897 = vsel %vm1742, %v11895, %v11896
        %v11898 = vrot.slane %v11888, 1
        %v11899 = vrot.slane %v11760, 1
        %v11900 = vsel %vm1742, %v11898, %v11899
        %v11901 = vrot.slane %v11889, 1
        %v11902 = vrot.slane %v11761, 1
        %v11903 = vsel %vm1742, %v11901, %v11902
        %v11904 = vrot.slane %v11890, 1
        %v11905 = vrot.slane %v11762, 1
        %v11906 = vsel %vm1742, %v11904, %v11905
        %v11907 = vrot.slane %v11891, 1
        %v11908 = vrot.slane %v11763, 1
        %v11909 = vsel %vm1742, %v11907, %v11908
        %v11910 = vrot.slane %v11892, 1
        %v11911 = vrot.slane %v11764, 1
        %v11912 = vsel %vm1742, %v11910, %v11911
        %v11913 = vrot.slane %v11893, 1
        %v11914 = vrot.slane %v11765, 1
        %v11915 = vsel %vm1742, %v11913, %v11914
        %v11916 = vrot.slane %v11894, 1
        %v11917 = vrot.slane %v11766, 1
        %v11918 = vsel %vm1742, %v11916, %v11917
        %s11927 = scalar_lea.vmem [#allocation12], 384
        %v11928 = vld [vmem:[%s11927] sm:$0xf]
        %v11929 = vld [vmem:[%s11927 + $0x4] sm:$0xf]
        %v11930 = vld [vmem:[%s11927 + $0x8] sm:$0xf]
        %v11931 = vld [vmem:[%s11927 + $0xc] sm:$0xf]
        %v11932 = vld [vmem:[%s11927 + $0x10] sm:$0xf]
        %v11933 = vld [vmem:[%s11927 + $0x14] sm:$0xf]
        %v11934 = vld [vmem:[%s11927 + $0x18] sm:$0xf]
        %v11935 = vld [vmem:[%s11927 + $0x1c] sm:$0xf]
        %v11936 = vld [vmem:[%s11927 + $0x20] sm:$0xf]
        %v11937 = vld [vmem:[%s11927 + $0x24] sm:$0xf]
        %v11938 = vld [vmem:[%s11927 + $0x28] sm:$0xf]
        %v11939 = vld [vmem:[%s11927 + $0x2c] sm:$0xf]
        %v11940 = vld [vmem:[%s11927 + $0x30] sm:$0xf]
        %v11941 = vld [vmem:[%s11927 + $0x34] sm:$0xf]
        %v11942 = vld [vmem:[%s11927 + $0x38] sm:$0xf]
        %v11943 = vld [vmem:[%s11927 + $0x3c] sm:$0xf]
        %v11944 = vld [vmem:[%s11927 + $0x40] sm:$0xf]
        %v11945 = vld [vmem:[%s11927 + $0x44] sm:$0xf]
        %v11946 = vld [vmem:[%s11927 + $0x48] sm:$0xf]
        %v11947 = vld [vmem:[%s11927 + $0x4c] sm:$0xf]
        %v11948 = vld [vmem:[%s11927 + $0x50] sm:$0xf]
        %v11949 = vld [vmem:[%s11927 + $0x54] sm:$0xf]
        %v11950 = vld [vmem:[%s11927 + $0x58] sm:$0xf]
        %v11951 = vld [vmem:[%s11927 + $0x5c] sm:$0xf]
        %v11952 = vld [vmem:[%s11927 + $0x60] sm:$0xf]
        %v11953 = vld [vmem:[%s11927 + $0x64] sm:$0xf]
        %v11954 = vld [vmem:[%s11927 + $0x68] sm:$0xf]
        %v11955 = vld [vmem:[%s11927 + $0x6c] sm:$0xf]
        %v11956 = vld [vmem:[%s11927 + $0x70] sm:$0xf]
        %v11957 = vld [vmem:[%s11927 + $0x74] sm:$0xf]
        %v11958 = vld [vmem:[%s11927 + $0x78] sm:$0xf]
        %v11959 = vld [vmem:[%s11927 + $0x7c] sm:$0xf]
        %v11960 = vld [vmem:[%s11927 + $0x80] sm:$0xf]
        %v11961 = vld [vmem:[%s11927 + $0x84] sm:$0xf]
        %v11962 = vld [vmem:[%s11927 + $0x88] sm:$0xf]
        %v11963 = vld [vmem:[%s11927 + $0x8c] sm:$0xf]
        %v11964 = vld [vmem:[%s11927 + $0x90] sm:$0xf]
        %v11965 = vld [vmem:[%s11927 + $0x94] sm:$0xf]
        %v11966 = vld [vmem:[%s11927 + $0x98] sm:$0xf]
        %v11967 = vld [vmem:[%s11927 + $0x9c] sm:$0xf]
        %v11968 = vld [vmem:[%s11927 + $0xa0] sm:$0xf]
        %v11969 = vld [vmem:[%s11927 + $0xa4] sm:$0xf]
        %v11970 = vld [vmem:[%s11927 + $0xa8] sm:$0xf]
        %v11971 = vld [vmem:[%s11927 + $0xac] sm:$0xf]
        %v11972 = vld [vmem:[%s11927 + $0xb0] sm:$0xf]
        %v11973 = vld [vmem:[%s11927 + $0xb4] sm:$0xf]
        %v11974 = vld [vmem:[%s11927 + $0xb8] sm:$0xf]
        %v11975 = vld [vmem:[%s11927 + $0xbc] sm:$0xf]
        %v12024 = vunpack.c.l.b16 %v11928
        %v12025 = vunpack.c.l.b16 %v11929
        %v12026 = vunpack.c.l.b16 %v11930
        %v12027 = vunpack.c.l.b16 %v11931
        %v12028 = vunpack.c.l.b16 %v11932
        %v12029 = vunpack.c.l.b16 %v11933
        %v12030 = vunpack.c.l.b16 %v11934
        %v12031 = vunpack.c.l.b16 %v11935
        %v12032 = vunpack.c.l.b16 %v11936
        %v12033 = vunpack.c.l.b16 %v11937
        %v12034 = vunpack.c.l.b16 %v11938
        %v12035 = vunpack.c.l.b16 %v11939
        %v12036 = vunpack.c.l.b16 %v11940
        %v12037 = vunpack.c.l.b16 %v11941
        %v12038 = vunpack.c.l.b16 %v11942
        %v12039 = vunpack.c.l.b16 %v11943
        %v12040 = vunpack.c.l.b16 %v11944
        %v12041 = vunpack.c.l.b16 %v11945
        %v12042 = vunpack.c.l.b16 %v11946
        %v12043 = vunpack.c.l.b16 %v11947
        %v12044 = vunpack.c.l.b16 %v11948
        %v12045 = vunpack.c.l.b16 %v11949
        %v12046 = vunpack.c.l.b16 %v11950
        %v12047 = vunpack.c.l.b16 %v11951
        %v12048 = vunpack.c.l.b16 %v11952
        %v12049 = vunpack.c.l.b16 %v11953
        %v12050 = vunpack.c.l.b16 %v11954
        %v12051 = vunpack.c.l.b16 %v11955
        %v12052 = vunpack.c.l.b16 %v11956
        %v12053 = vunpack.c.l.b16 %v11957
        %v12054 = vunpack.c.l.b16 %v11958
        %v12055 = vunpack.c.l.b16 %v11959
        %v12056 = vunpack.c.l.b16 %v11960
        %v12057 = vunpack.c.l.b16 %v11961
        %v12058 = vunpack.c.l.b16 %v11962
        %v12059 = vunpack.c.l.b16 %v11963
        %v12060 = vunpack.c.l.b16 %v11964
        %v12061 = vunpack.c.l.b16 %v11965
        %v12062 = vunpack.c.l.b16 %v11966
        %v12063 = vunpack.c.l.b16 %v11967
        %v12064 = vunpack.c.l.b16 %v11968
        %v12065 = vunpack.c.l.b16 %v11969
        %v12066 = vunpack.c.l.b16 %v11970
        %v12067 = vunpack.c.l.b16 %v11971
        %v12068 = vunpack.c.l.b16 %v11972
        %v12069 = vunpack.c.l.b16 %v11973
        %v12070 = vunpack.c.l.b16 %v11974
        %v12071 = vunpack.c.l.b16 %v11975
        %v12072 = vpack.c.b16 %v12025, %v12024
        %v12073 = vpack.c.b16 %v12027, %v12026
        %v12074 = vpack.c.b16 %v12029, %v12028
        %v12075 = vpack.c.b16 %v12031, %v12030
        %v12076 = vpack.c.b16 %v12033, %v12032
        %v12077 = vpack.c.b16 %v12035, %v12034
        %v12078 = vpack.c.b16 %v12037, %v12036
        %v12079 = vpack.c.b16 %v12039, %v12038
        %v12080 = vpack.c.b16 %v12041, %v12040
        %v12081 = vpack.c.b16 %v12043, %v12042
        %v12082 = vpack.c.b16 %v12045, %v12044
        %v12083 = vpack.c.b16 %v12047, %v12046
        %v12084 = vpack.c.b16 %v12049, %v12048
        %v12085 = vpack.c.b16 %v12051, %v12050
        %v12086 = vpack.c.b16 %v12053, %v12052
        %v12087 = vpack.c.b16 %v12055, %v12054
        %v12088 = vpack.c.b16 %v12057, %v12056
        %v12089 = vpack.c.b16 %v12059, %v12058
        %v12090 = vpack.c.b16 %v12061, %v12060
        %v12091 = vpack.c.b16 %v12063, %v12062
        %v12092 = vpack.c.b16 %v12065, %v12064
        %v12093 = vpack.c.b16 %v12067, %v12066
        %v12094 = vpack.c.b16 %v12069, %v12068
        %v12095 = vpack.c.b16 %v12071, %v12070
        %12120 = vmatpush.bf16.msra.mxu0 %v12079
        %12121 = vmatpush.bf16.msra.mxu0 %v12078
        %12122 = vmatpush.bf16.msra.mxu0 %v12077
        %12123 = vmatpush.bf16.msra.mxu0 %v12076
        %12124 = vmatpush.bf16.msra.mxu0 %v12075
        %12125 = vmatpush.bf16.msra.mxu0 %v12074
        %12126 = vmatpush.bf16.msra.mxu0 %v12073
        %12127 = vmatpush.bf16.msra.mxu0 %v12072
        %12128 = vmatmul.bf16.gmra.mxu0 %v11727
        %v12129 = vpop.f32.mrf.mxu0
        %v12130 = vadd.f32 0.0, %v12129
        %v12131 = vpop.f32.mrf.mxu0
        %v12132 = vadd.f32 0.0, %v12131
        %12133 = vmatmul.bf16.gmra.mxu0 %v11728
        %v12134 = vpop.f32.mrf.mxu0
        %v12135 = vadd.f32 0.0, %v12134
        %v12136 = vpop.f32.mrf.mxu0
        %v12137 = vadd.f32 0.0, %v12136
        %12138 = vmatmul.bf16.gmra.mxu0 %v11729
        %v12139 = vpop.f32.mrf.mxu0
        %v12140 = vadd.f32 0.0, %v12139
        %v12141 = vpop.f32.mrf.mxu0
        %v12142 = vadd.f32 0.0, %v12141
        %12143 = vmatmul.bf16.gmra.mxu0 %v11730
        %v12144 = vpop.f32.mrf.mxu0
        %v12145 = vadd.f32 0.0, %v12144
        %v12146 = vpop.f32.mrf.mxu0
        %v12147 = vadd.f32 0.0, %v12146
        %12148 = vmatmul.bf16.gmra.mxu0 %v11731
        %v12149 = vpop.f32.mrf.mxu0
        %v12150 = vadd.f32 0.0, %v12149
        %v12151 = vpop.f32.mrf.mxu0
        %v12152 = vadd.f32 0.0, %v12151
        %12153 = vmatmul.bf16.gmra.mxu0 %v11732
        %v12154 = vpop.f32.mrf.mxu0
        %v12155 = vadd.f32 0.0, %v12154
        %v12156 = vpop.f32.mrf.mxu0
        %v12157 = vadd.f32 0.0, %v12156
        %12158 = vmatmul.bf16.gmra.mxu0 %v11733
        %v12159 = vpop.f32.mrf.mxu0
        %v12160 = vadd.f32 0.0, %v12159
        %v12161 = vpop.f32.mrf.mxu0
        %v12162 = vadd.f32 0.0, %v12161
        %12163 = vmatmul.bf16.gmra.mxu0 %v11734
        %v12164 = vpop.f32.mrf.mxu0
        %v12165 = vadd.f32 0.0, %v12164
        %v12166 = vpop.f32.mrf.mxu0
        %v12167 = vadd.f32 0.0, %v12166
        %12168 = vdwg.mxu0
        %12169 = vmatpush.bf16.msra.mxu0 %v12087
        %12170 = vmatpush.bf16.msra.mxu0 %v12086
        %12171 = vmatpush.bf16.msra.mxu0 %v12085
        %12172 = vmatpush.bf16.msra.mxu0 %v12084
        %12173 = vmatpush.bf16.msra.mxu0 %v12083
        %12174 = vmatpush.bf16.msra.mxu0 %v12082
        %12175 = vmatpush.bf16.msra.mxu0 %v12081
        %12176 = vmatpush.bf16.msra.mxu0 %v12080
        %12177 = vmatmul.bf16.gmra.mxu0 %v11778
        %v12178 = vpop.f32.mrf.mxu0
        %v12179 = vadd.f32 %v12130, %v12178
        %v12180 = vpop.f32.mrf.mxu0
        %v12181 = vadd.f32 %v12132, %v12180
        %12182 = vmatmul.bf16.gmra.mxu0 %v11790
        %v12183 = vpop.f32.mrf.mxu0
        %v12184 = vadd.f32 %v12135, %v12183
        %v12185 = vpop.f32.mrf.mxu0
        %v12186 = vadd.f32 %v12137, %v12185
        %12187 = vmatmul.bf16.gmra.mxu0 %v11802
        %v12188 = vpop.f32.mrf.mxu0
        %v12189 = vadd.f32 %v12140, %v12188
        %v12190 = vpop.f32.mrf.mxu0
        %v12191 = vadd.f32 %v12142, %v12190
        %12192 = vmatmul.bf16.gmra.mxu0 %v11814
        %v12193 = vpop.f32.mrf.mxu0
        %v12194 = vadd.f32 %v12145, %v12193
        %v12195 = vpop.f32.mrf.mxu0
        %v12196 = vadd.f32 %v12147, %v12195
        %12197 = vmatmul.bf16.gmra.mxu0 %v11826
        %v12198 = vpop.f32.mrf.mxu0
        %v12199 = vadd.f32 %v12150, %v12198
        %v12200 = vpop.f32.mrf.mxu0
        %v12201 = vadd.f32 %v12152, %v12200
        %12202 = vmatmul.bf16.gmra.mxu0 %v11838
        %v12203 = vpop.f32.mrf.mxu0
        %v12204 = vadd.f32 %v12155, %v12203
        %v12205 = vpop.f32.mrf.mxu0
        %v12206 = vadd.f32 %v12157, %v12205
        %12207 = vmatmul.bf16.gmra.mxu0 %v11850
        %v12208 = vpop.f32.mrf.mxu0
        %v12209 = vadd.f32 %v12160, %v12208
        %v12210 = vpop.f32.mrf.mxu0
        %v12211 = vadd.f32 %v12162, %v12210
        %12212 = vmatmul.bf16.gmra.mxu0 %v11862
        %v12213 = vpop.f32.mrf.mxu0
        %v12214 = vadd.f32 %v12165, %v12213
        %v12215 = vpop.f32.mrf.mxu0
        %v12216 = vadd.f32 %v12167, %v12215
        %12217 = vdwg.mxu0
        %12218 = vmatpush.bf16.msra.mxu0 %v12095
        %12219 = vmatpush.bf16.msra.mxu0 %v12094
        %12220 = vmatpush.bf16.msra.mxu0 %v12093
        %12221 = vmatpush.bf16.msra.mxu0 %v12092
        %12222 = vmatpush.bf16.msra.mxu0 %v12091
        %12223 = vmatpush.bf16.msra.mxu0 %v12090
        %12224 = vmatpush.bf16.msra.mxu0 %v12089
        %12225 = vmatpush.bf16.msra.mxu0 %v12088
        %12226 = vmatmul.bf16.gmra.mxu0 %v11897
        %v12227 = vpop.f32.mrf.mxu0
        %v12228 = vadd.f32 %v12179, %v12227
        %v12229 = vpop.f32.mrf.mxu0
        %v12230 = vadd.f32 %v12181, %v12229
        %12231 = vmatmul.bf16.gmra.mxu0 %v11900
        %v12232 = vpop.f32.mrf.mxu0
        %v12233 = vadd.f32 %v12184, %v12232
        %v12234 = vpop.f32.mrf.mxu0
        %v12235 = vadd.f32 %v12186, %v12234
        %12236 = vmatmul.bf16.gmra.mxu0 %v11903
        %v12237 = vpop.f32.mrf.mxu0
        %v12238 = vadd.f32 %v12189, %v12237
        %v12239 = vpop.f32.mrf.mxu0
        %v12240 = vadd.f32 %v12191, %v12239
        %12241 = vmatmul.bf16.gmra.mxu0 %v11906
        %v12242 = vpop.f32.mrf.mxu0
        %v12243 = vadd.f32 %v12194, %v12242
        %v12244 = vpop.f32.mrf.mxu0
        %v12245 = vadd.f32 %v12196, %v12244
        %12246 = vmatmul.bf16.gmra.mxu0 %v11909
        %v12247 = vpop.f32.mrf.mxu0
        %v12248 = vadd.f32 %v12199, %v12247
        %v12249 = vpop.f32.mrf.mxu0
        %v12250 = vadd.f32 %v12201, %v12249
        %12251 = vmatmul.bf16.gmra.mxu0 %v11912
        %v12252 = vpop.f32.mrf.mxu0
        %v12253 = vadd.f32 %v12204, %v12252
        %v12254 = vpop.f32.mrf.mxu0
        %v12255 = vadd.f32 %v12206, %v12254
        %12256 = vmatmul.bf16.gmra.mxu0 %v11915
        %v12257 = vpop.f32.mrf.mxu0
        %v12258 = vadd.f32 %v12209, %v12257
        %v12259 = vpop.f32.mrf.mxu0
        %v12260 = vadd.f32 %v12211, %v12259
        %12261 = vmatmul.bf16.gmra.mxu0 %v11918
        %v12262 = vpop.f32.mrf.mxu0
        %v12263 = vadd.f32 %v12214, %v12262
        %v12264 = vpop.f32.mrf.mxu0
        %v12265 = vadd.f32 %v12216, %v12264
        %12266 = vdwg.mxu0
        %v12267 = vadd.f32 %v11646, %v12228
        %v12268 = vadd.f32 %v11647, %v12230
        %v12269 = vadd.f32 %v11648, %v12233
        %v12270 = vadd.f32 %v11649, %v12235
        %v12271 = vadd.f32 %v11650, %v12238
        %v12272 = vadd.f32 %v11651, %v12240
        %v12273 = vadd.f32 %v11652, %v12243
        %v12274 = vadd.f32 %v11653, %v12245
        %v12275 = vadd.f32 %v11654, %v12248
        %v12276 = vadd.f32 %v11655, %v12250
        %v12277 = vadd.f32 %v11656, %v12253
        %v12278 = vadd.f32 %v11657, %v12255
        %v12279 = vadd.f32 %v11658, %v12258
        %v12280 = vadd.f32 %v11659, %v12260
        %v12281 = vadd.f32 %v11660, %v12263
        %v12282 = vadd.f32 %v11661, %v12265
        %v12283 = vtanh.pop %v12267
        %v12284 = vtanh.pop %v12268
        %v12285 = vtanh.pop %v12269
        %v12286 = vtanh.pop %v12270
        %v12287 = vtanh.pop %v12271
        %v12288 = vtanh.pop %v12272
        %v12289 = vtanh.pop %v12273
        %v12290 = vtanh.pop %v12274
        %v12291 = vtanh.pop %v12275
        %v12292 = vtanh.pop %v12276
        %v12293 = vtanh.pop %v12277
        %v12294 = vtanh.pop %v12278
        %v12295 = vtanh.pop %v12279
        %v12296 = vtanh.pop %v12280
        %v12297 = vtanh.pop %v12281
        %v12298 = vtanh.pop %v12282
        %v12299 = vsub.f32 1.0, %v7513
        %v12300 = vsub.f32 1.0, %v7528
        %v12301 = vsub.f32 1.0, %v7543
        %v12302 = vsub.f32 1.0, %v7558
        %v12303 = vsub.f32 1.0, %v7573
        %v12304 = vsub.f32 1.0, %v7588
        %v12305 = vsub.f32 1.0, %v7603
        %v12306 = vsub.f32 1.0, %v7618
        %v12307 = vsub.f32 1.0, %v7633
        %v12308 = vsub.f32 1.0, %v7648
        %v12309 = vsub.f32 1.0, %v7663
        %v12310 = vsub.f32 1.0, %v7678
        %v12311 = vsub.f32 1.0, %v7693
        %v12312 = vsub.f32 1.0, %v7708
        %v12313 = vsub.f32 1.0, %v7723
        %v12314 = vsub.f32 1.0, %v7738
        %v12315 = vmul.f32 %v12299, %v963
        %v12316 = vmul.f32 %v12300, %v964
        %v12317 = vmul.f32 %v12301, %v965
        %v12318 = vmul.f32 %v12302, %v966
        %v12319 = vmul.f32 %v12303, %v967
        %v12320 = vmul.f32 %v12304, %v968
        %v12321 = vmul.f32 %v12305, %v969
        %v12322 = vmul.f32 %v12306, %v970
        %v12323 = vmul.f32 %v12307, %v971
        %v12324 = vmul.f32 %v12308, %v972
        %v12325 = vmul.f32 %v12309, %v973
        %v12326 = vmul.f32 %v12310, %v974
        %v12327 = vmul.f32 %v12311, %v975
        %v12328 = vmul.f32 %v12312, %v976
        %v12329 = vmul.f32 %v12313, %v977
        %v12330 = vmul.f32 %v12314, %v978
        %v12331 = vmul.f32 %v7513, %v12283
        %v12332 = vmul.f32 %v7528, %v12284
        %v12333 = vmul.f32 %v7543, %v12285
        %v12334 = vmul.f32 %v7558, %v12286
        %v12335 = vmul.f32 %v7573, %v12287
        %v12336 = vmul.f32 %v7588, %v12288
        %v12337 = vmul.f32 %v7603, %v12289
        %v12338 = vmul.f32 %v7618, %v12290
        %v12339 = vmul.f32 %v7633, %v12291
        %v12340 = vmul.f32 %v7648, %v12292
        %v12341 = vmul.f32 %v7663, %v12293
        %v12342 = vmul.f32 %v7678, %v12294
        %v12343 = vmul.f32 %v7693, %v12295
        %v12344 = vmul.f32 %v7708, %v12296
        %v12345 = vmul.f32 %v7723, %v12297
        %v12346 = vmul.f32 %v7738, %v12298
        %v12347 = vadd.f32 %v12315, %v12331
        %v12348 = vadd.f32 %v12316, %v12332
        %v12349 = vadd.f32 %v12317, %v12333
        %v12350 = vadd.f32 %v12318, %v12334
        %v12351 = vadd.f32 %v12319, %v12335
        %v12352 = vadd.f32 %v12320, %v12336
        %v12353 = vadd.f32 %v12321, %v12337
        %v12354 = vadd.f32 %v12322, %v12338
        %v12355 = vadd.f32 %v12323, %v12339
        %v12356 = vadd.f32 %v12324, %v12340
        %v12357 = vadd.f32 %v12325, %v12341
        %v12358 = vadd.f32 %v12326, %v12342
        %v12359 = vadd.f32 %v12327, %v12343
        %v12360 = vadd.f32 %v12328, %v12344
        %v12361 = vadd.f32 %v12329, %v12345
        %v12362 = vadd.f32 %v12330, %v12346
        %12363 = vst [vmem:[%s548] sm:$0xff] %v12347
        %12364 = vst [vmem:[%s548 + $0x8] sm:$0xff] %v12348
        %12365 = vst [vmem:[%s548 + $0x10] sm:$0xff] %v12349
        %12366 = vst [vmem:[%s548 + $0x18] sm:$0xff] %v12350
        %12367 = vst [vmem:[%s548 + $0x20] sm:$0xff] %v12351
        %12368 = vst [vmem:[%s548 + $0x28] sm:$0xff] %v12352
        %12369 = vst [vmem:[%s548 + $0x30] sm:$0xff] %v12353
        %12370 = vst [vmem:[%s548 + $0x38] sm:$0xff] %v12354
        %12371 = vst [vmem:[%s548 + $0x40] sm:$0xff] %v12355
        %12372 = vst [vmem:[%s548 + $0x48] sm:$0xff] %v12356
        %12373 = vst [vmem:[%s548 + $0x50] sm:$0xff] %v12357
        %12374 = vst [vmem:[%s548 + $0x58] sm:$0xff] %v12358
        %12375 = vst [vmem:[%s548 + $0x60] sm:$0xff] %v12359
        %12376 = vst [vmem:[%s548 + $0x68] sm:$0xff] %v12360
        %12377 = vst [vmem:[%s548 + $0x70] sm:$0xff] %v12361
        %12378 = vst [vmem:[%s548 + $0x78] sm:$0xff] %v12362
        %s12379 = sand.u32 %s295, 1
        %s12380 = scalar_lea.sflag [#allocation6], %s12379
        %s12381 = sand.u32 %s295, 1
        %s12382 = smul.addr %s12381, 128
        %s12383 = scalar_lea.vmem [#allocation13], %s12382
        // Predicated region
        $region81: #{tpu_custom_call.1} parent=59 // pred_check
          %p12384 = pneg %p305
        $region82: #{tpu_custom_call.1} parent=59 // pred_check_branch
          %12386 = sbr.rel (%p12384) target = $region84
        $region83: #{tpu_custom_call.1} parent=59 // pred_region
          %s12387 = smul.u32 8, %s36
          %12389 = vsyncadd %s12380, 0
          %s12390 = smul.addr %s12387, 2
          %s12391 = smul.addr %s35, 32
          %s12392 = sadd.s32 %s12390, %s12391
          %s12393 = smul.addr %s12392, 8
          %s12394 = scalar_lea.hbm %s10, %s12393
          %s12395 = sshll.u32 %s12383, 4
          %s12396 = int_to_ptr.vmem [resolvable:$true] %s12395
          %s12397 = sshll.u32 %s12394, 4
          %s12398 = int_to_ptr.hbm [resolvable:$true] %s12397
          %12403 = dma.vmem_to_hbm [thread:$0]  %s12396, 2048, %s12398, %s12380, 128, 128, 8
        $region84: #{tpu_custom_call.1} parent=59 // pred_fallthru
          _
      $region60: #{tpu_custom_call.1} parent=5 // pred_fallthru
        _
      %p12404 = scmp.le.s32.totalorder 2, %s26
      // Predicated region
      $region85: #{tpu_custom_call.1} parent=5 // pred_check
        %p12405 = pneg %p12404
      $region86: #{tpu_custom_call.1} parent=5 // pred_check_branch
        %12407 = sbr.rel (%p12405) target = $region88
      $region87: #{tpu_custom_call.1} parent=5 // pred_region
        %s12408 = ssub.s32 %s26, 2
        // Predicated region
        $region89: #{tpu_custom_call.1} parent=87 // pred_check
          %p12409 = pneg %p311
        $region90: #{tpu_custom_call.1} parent=87 // pred_check_branch
          %12411 = sbr.rel (%p12409) target = $region92
        $region91: #{tpu_custom_call.1} parent=87 // pred_region
          %s12412 = sand.u32 %s296, 1
          %s12413 = scalar_lea.sflag [#allocation6], %s12412
          %s12414 = sand.u32 %s296, 1
          %s12415 = smul.addr %s12414, 128
          %s12416 = scalar_lea.vmem [#allocation13], %s12415
          %12418 = dma.done %s12413, 2048
        $region92: #{tpu_custom_call.1} parent=87 // pred_fallthru
          _
      $region88: #{tpu_custom_call.1} parent=5 // pred_fallthru
        _
    $region6: #{tpu_custom_call.1} parent=1 // loop_footer
      %s30 = sadd.s32 1, %s26
    $region7: #{tpu_custom_call.1} parent=1 // loop_footer_branch
      %25 = sbr.rel target = $region3
    $region8: #{tpu_custom_call.1} parent=1 // loop_exit
      _
    %12419 = vsyncpa [#allocation5], 1
    %s12420 = scalar_lea.sflag [#allocation5], 1
    %12421 = vsyncpa %s12420, 1
    %12422 = vsyncpa [#allocation8], 1
    %s12423 = scalar_lea.sflag [#allocation8], 1
    %12424 = vsyncpa %s12423, 1
    %12425 = vsyncpa [#allocation11], 1
    %12426 = vsyncpa [#allocation6], 1
    %s12427 = scalar_lea.sflag [#allocation6], 1
    %12428 = vsyncpa %s12427, 1

</llo_original>
